<compile_context>
chip_gen: v7x
topology: tpu7x:2x2x1
jax: 0.10.0
libtpu: 0.0.40
codegen_flags: <defaults>
</compile_context>

<pallas_src>
import jax
import jax.numpy as jnp
from jax import lax
from jax.experimental import pallas as pl
from jax.experimental.pallas import tpu as pltpu


def basic_block_kernel(xp_ref, w1_ref, s1_ref, b1_ref, w2_ref, s2_ref, b2_ref,
                       out_ref, mid_ref, acc_ref):
    """One image (one grid step) of the BasicBlock forward.

    xp_ref : (H+2, W+2, Cp)  input with 1-px zero halo, channels padded to Cp=128
    w1_ref : (9, Cp, Cp)     conv1 weights, tap index = kh*3 + kw
    w2_ref : (9, Cp, Cp)     conv2 weights
    s*_ref : (1, Cp)  f32    folded BN scale
    b*_ref : (1, Cp)  f32    folded BN bias
    out_ref: (H, W, Cp)
    mid_ref: (H+2, W+2, Cp) f32 VMEM scratch (padded conv1 output)
    acc_ref: (H*W, Cp)      f32 VMEM scratch (matmul accumulator)
    """
    H, W, Cp = out_ref.shape
    Hp, Wp = H + 2, W + 2
    M = H * W
    cdt = xp_ref.dtype                      # MXU compute dtype (f32 or bf16)

    # Keep the 1-pixel zero border of the conv1-output scratch.  Zeroed every
    # step (not only at step 0): with "parallel" grid semantics the batch axis
    # may be split across TensorCores, so a step-0-only init is not safe.
    # Border-only zeroing is ~1% of the cost of zeroing the whole scratch.
    zrow = jnp.zeros((1, Wp, Cp), mid_ref.dtype)
    zcol = jnp.zeros((Hp, 1, Cp), mid_ref.dtype)
    mid_ref[0:1, :, :] = zrow
    mid_ref[H + 1:H + 2, :, :] = zrow
    mid_ref[:, 0:1, :] = zcol
    mid_ref[:, W + 1:W + 2, :] = zcol

    def conv3x3(src_ref, w_ref):
        # 3x3 / stride 1 / pad 1 conv as 9 shifted-window matmuls accumulated
        # into the f32 VMEM scratch.  Each tap is sliced directly from the
        # (already VMEM-resident) ref -- no full-tensor value materialisation.
        # With channels padded to Cp=128 each matmul already runs at the MXU's
        # native contraction depth, so folding taps into K would not reduce
        # the number of MXU passes.
        for kh in range(3):
            for kw in range(3):
                patch = src_ref[kh:kh + H, kw:kw + W, :]
                patch = patch.reshape(M, Cp).astype(cdt)
                contrib = jnp.dot(patch, w_ref[kh * 3 + kw],
                                  preferred_element_type=jnp.float32)
                if kh == 0 and kw == 0:
                    acc_ref[...] = contrib
                else:
                    acc_ref[...] += contrib
        return acc_ref[...]

    # ---- conv1 -> bn1 (folded) -> relu, elementwise math in f32 on the VPU ----
    c1 = conv3x3(xp_ref, w1_ref)
    out1 = jnp.maximum(c1 * s1_ref[...] + b1_ref[...], 0.0)

    # Write only the interior of the padded scratch (border stays zero).
    mid_ref[1:H + 1, 1:W + 1, :] = out1.reshape(H, W, Cp)

    # ---- conv2 -> bn2 (folded) ----
    c2 = conv3x3(mid_ref, w2_ref)
    out2 = c2 * s2_ref[...] + b2_ref[...]

    # ---- residual add (identity = x, downsample=None) + relu ----
    # The identity tile is read from the already-resident input block; a
    # separate HBM stream for the unpadded x would cost more DMA bytes than
    # this single shifted VMEM read.
    identity = xp_ref[1:H + 1, 1:W + 1, :].reshape(M, Cp).astype(jnp.float32)
    res = jnp.maximum(out2 + identity, 0.0)
    out_ref[...] = res.reshape(H, W, Cp).astype(out_ref.dtype)


def basic_block_forward(x_nchw, w1, s1, b1, w2, s2, b2, *, compute_dtype=None):
    """BasicBlock forward.  NCHW in/out; NHWC, lane-dense channels inside.

    x_nchw : (N, C, H, W)
    w1     : (9, Cin, Cout)  tap index = kh*3 + kw
    w2     : (9, Cout, Cout)
    s*, b* : (Cout,) folded eval-mode BatchNorm scale / bias
    compute_dtype : dtype of the MXU matmul operands (jnp.float32 or
                    jnp.bfloat16 for the v6e/v7x fast path). Accumulation and
                    BN/ReLU/residual stay in f32.
    """
    N, C, H, W = x_nchw.shape
    Cin, Cout = w1.shape[1], w1.shape[2]
    assert C == Cin and Cin == Cout, (
        "identity residual requires inplanes == planes (stride=1, no downsample)")
    if compute_dtype is None:
        compute_dtype = x_nchw.dtype

    LANE = 128
    Cp = ((Cout + LANE - 1) // LANE) * LANE       # lane-dense channel padding

    # NCHW -> NHWC; channel pad to Cp AND the 1-pixel conv halo in ONE pass.
    # (The layout change / channel pad is required anyway, so the halo costs
    # no extra HBM round trip.)
    x_nhwc = jnp.transpose(x_nchw, (0, 2, 3, 1))
    xp = jnp.pad(x_nhwc, ((0, 0), (1, 1), (1, 1), (0, Cp - C))).astype(compute_dtype)

    w1p = jnp.pad(w1, ((0, 0), (0, Cp - Cin), (0, Cp - Cout))).astype(compute_dtype)
    w2p = jnp.pad(w2, ((0, 0), (0, Cp - Cout), (0, Cp - Cout))).astype(compute_dtype)
    s1p = jnp.pad(s1, (0, Cp - Cout)).reshape(1, Cp).astype(jnp.float32)
    b1p = jnp.pad(b1, (0, Cp - Cout)).reshape(1, Cp).astype(jnp.float32)
    s2p = jnp.pad(s2, (0, Cp - Cout)).reshape(1, Cp).astype(jnp.float32)
    b2p = jnp.pad(b2, (0, Cp - Cout)).reshape(1, Cp).astype(jnp.float32)

    out_nhwc = pl.pallas_call(
        basic_block_kernel,
        out_shape=jax.ShapeDtypeStruct((N, H, W, Cp), x_nchw.dtype),
        grid_spec=pltpu.PrefetchScalarGridSpec(
            num_scalar_prefetch=0,
            grid=(N,),                                  # one image per grid step
            in_specs=[
                pl.BlockSpec((None, H + 2, W + 2, Cp), lambda n: (n, 0, 0, 0)),
                pl.BlockSpec((9, Cp, Cp), lambda n: (0, 0, 0)),   # weights stay
                pl.BlockSpec((1, Cp), lambda n: (0, 0)),          # resident
                pl.BlockSpec((1, Cp), lambda n: (0, 0)),          # across steps
                pl.BlockSpec((9, Cp, Cp), lambda n: (0, 0, 0)),
                pl.BlockSpec((1, Cp), lambda n: (0, 0)),
                pl.BlockSpec((1, Cp), lambda n: (0, 0)),
            ],
            out_specs=pl.BlockSpec((None, H, W, Cp), lambda n: (n, 0, 0, 0)),
            scratch_shapes=[
                pltpu.VMEM((H + 2, W + 2, Cp), jnp.float32),   # padded conv1 out
                pltpu.VMEM((H * W, Cp), jnp.float32),          # matmul accumulator
            ],
        ),
        compiler_params=pltpu.CompilerParams(
            dimension_semantics=("parallel",),      # v7x: shard batch over 2 TCs
            vmem_limit_bytes=32 * 1024 * 1024,      # explicit, well under v7x cap
        ),
    )(xp, w1p, s1p, b1p, w2p, s2p, b2p)

    out_nhwc = out_nhwc[..., :Cout]                 # drop channel padding
    return jnp.transpose(out_nhwc, (0, 3, 1, 2))    # -> NCHW


def init_params(key, inplanes, planes, dtype=jnp.float32):
    """Deterministic synthetic parameters (eval-mode BN folded to scale/bias)."""
    ks = jax.random.split(key, 10)
    eps = 1e-5
    # conv weights, HWIO layout (kh, kw, Cin, Cout)
    w1_hwio = jax.random.normal(ks[0], (3, 3, inplanes, planes), dtype) * 0.1
    w2_hwio = jax.random.normal(ks[1], (3, 3, planes, planes), dtype) * 0.1
    # bn1
    g1 = 1.0 + 0.1 * jax.random.normal(ks[2], (planes,), dtype)
    be1 = 0.1 * jax.random.normal(ks[3], (planes,), dtype)
    m1 = 0.1 * jax.random.normal(ks[4], (planes,), dtype)
    v1 = jnp.abs(jax.random.normal(ks[5], (planes,), dtype)) + 0.5
    # bn2
    g2 = 1.0 + 0.1 * jax.random.normal(ks[6], (planes,), dtype)
    be2 = 0.1 * jax.random.normal(ks[7], (planes,), dtype)
    m2 = 0.1 * jax.random.normal(ks[8], (planes,), dtype)
    v2 = jnp.abs(jax.random.normal(ks[9], (planes,), dtype)) + 0.5

    s1 = g1 / jnp.sqrt(v1 + eps)
    b1 = be1 - m1 * s1
    s2 = g2 / jnp.sqrt(v2 + eps)
    b2 = be2 - m2 * s2

    # kernel-layout weights: (9, Cin, Cout), tap index kh*3+kw
    w1 = w1_hwio.reshape(9, inplanes, planes)
    w2 = w2_hwio.reshape(9, planes, planes)
    return (w1, s1, b1, w2, s2, b2), (w1_hwio, w2_hwio)


def reference(x_nchw, w1_hwio, s1, b1, w2_hwio, s2, b2):
    """Pure-JAX reference of BasicBlock.forward (eval-mode BN)."""
    x = jnp.transpose(x_nchw, (0, 2, 3, 1))
    dn = ('NHWC', 'HWIO', 'NHWC')
    o = lax.conv_general_dilated(x, w1_hwio, (1, 1), 'SAME', dimension_numbers=dn)
    o = o * s1 + b1
    o = jnp.maximum(o, 0.0)
    o = lax.conv_general_dilated(o, w2_hwio, (1, 1), 'SAME', dimension_numbers=dn)
    o = o * s2 + b2
    o = jnp.maximum(o + x, 0.0)
    return jnp.transpose(o, (0, 3, 1, 2))


if __name__ == "__main__":
    key = jax.random.PRNGKey(0)
    k_x, k_p = jax.random.split(key)

    N, C, H, W = 2, 4, 16, 16          # inplanes == planes == 4, stride=1
    x = jax.random.normal(k_x, (N, C, H, W), jnp.float32)   # PyTorch NCHW input

    (w1, s1, b1, w2, s2, b2), (w1_hwio, w2_hwio) = init_params(k_p, C, C)

    ref = reference(x, w1_hwio, s1, b1, w2_hwio, s2, b2)

    # ---- f32 compute path (tight correctness check) ----
    out = basic_block_forward(x, w1, s1, b1, w2, s2, b2)
    out = jax.block_until_ready(out)
    assert out.shape == (N, C, H, W)
    assert jnp.allclose(out, ref, atol=1e-4, rtol=1e-4), "f32 kernel mismatch"

    # ---- bf16 MXU path (v6e/v7x fast path): bf16 matmul operands, f32 accum ----
    out_bf16 = basic_block_forward(x, w1, s1, b1, w2, s2, b2,
                                   compute_dtype=jnp.bfloat16)
    out_bf16 = jax.block_until_ready(out_bf16)
    # compare against a reference that shares the bf16 input/weight quantization
    bf = lambda a: a.astype(jnp.bfloat16).astype(jnp.float32)
    ref_bf16 = reference(bf(x), bf(w1_hwio), s1, b1, bf(w2_hwio), s2, b2)
    assert jnp.allclose(out_bf16, ref_bf16, atol=1e-2, rtol=1e-2), "bf16 kernel mismatch"

    print("KERNEL_OK")
</pallas_src>

<mosaic_0001>
module attributes {stable_mosaic.version = 11 : i64} {
  func.func @basic_block_kernel(%arg0: i32, %arg1: memref<1x18x18x128xf32, #tpu.memory_space<vmem>>, %arg2: memref<9x128x128xf32, #tpu.memory_space<vmem>>, %arg3: memref<1x128xf32, #tpu.memory_space<vmem>>, %arg4: memref<1x128xf32, #tpu.memory_space<vmem>>, %arg5: memref<9x128x128xf32, #tpu.memory_space<vmem>>, %arg6: memref<1x128xf32, #tpu.memory_space<vmem>>, %arg7: memref<1x128xf32, #tpu.memory_space<vmem>>, %arg8: memref<1x16x16x128xf32, #tpu.memory_space<vmem>>, %arg9: memref<18x18x128xf32, #tpu.memory_space<vmem>>, %arg10: memref<256x128xf32, #tpu.memory_space<vmem>>) attributes {dimension_semantics = [#tpu.dimension_semantics<parallel>], iteration_bounds = array<i64: 2>, scalar_prefetch = 0 : i64, scratch_operands = 2 : i64, tpu.core_type = #tpu.core_type<tc>, window_params = [{transform_indices = @transform_0, window_bounds = array<i64: 1, 18, 18, 128>}, {pipeline_mode = #tpu.pipeline_mode<synchronous>, transform_indices = @transform_1, window_bounds = array<i64: 9, 128, 128>}, {pipeline_mode = #tpu.pipeline_mode<synchronous>, transform_indices = @transform_2, window_bounds = array<i64: 1, 128>}, {pipeline_mode = #tpu.pipeline_mode<synchronous>, transform_indices = @transform_3, window_bounds = array<i64: 1, 128>}, {pipeline_mode = #tpu.pipeline_mode<synchronous>, transform_indices = @transform_4, window_bounds = array<i64: 9, 128, 128>}, {pipeline_mode = #tpu.pipeline_mode<synchronous>, transform_indices = @transform_5, window_bounds = array<i64: 1, 128>}, {pipeline_mode = #tpu.pipeline_mode<synchronous>, transform_indices = @transform_6, window_bounds = array<i64: 1, 128>}, {transform_indices = @transform_7, window_bounds = array<i64: 1, 16, 16, 128>}]} {
    %cst = arith.constant 0.000000e+00 : f32
    %0 = vector.broadcast %cst : f32 to vector<1x18x128xf32>
    %cst_0 = arith.constant 0.000000e+00 : f32
    %1 = vector.broadcast %cst_0 : f32 to vector<18x1x128xf32>
    %c0 = arith.constant 0 : index
    %c0_1 = arith.constant 0 : index
    %c0_2 = arith.constant 0 : index
    %2 = vector.load %arg9[%c0, %c0_1, %c0_2] : memref<18x18x128xf32, #tpu.memory_space<vmem>>, vector<1x18x128xf32>
    tpu.vector_store %arg9[%c0, %c0_1, %c0_2], %0 {strides = array<i32>} : memref<18x18x128xf32, #tpu.memory_space<vmem>>, vector<1x18x128xf32>,
    %c17 = arith.constant 17 : index
    %c0_3 = arith.constant 0 : index
    %c0_4 = arith.constant 0 : index
    %3 = vector.load %arg9[%c17, %c0_3, %c0_4] : memref<18x18x128xf32, #tpu.memory_space<vmem>>, vector<1x18x128xf32>
    tpu.vector_store %arg9[%c17, %c0_3, %c0_4], %0 {strides = array<i32>} : memref<18x18x128xf32, #tpu.memory_space<vmem>>, vector<1x18x128xf32>,
    %c0_5 = arith.constant 0 : index
    %c0_6 = arith.constant 0 : index
    %c0_7 = arith.constant 0 : index
    %4 = vector.load %arg9[%c0_5, %c0_6, %c0_7] : memref<18x18x128xf32, #tpu.memory_space<vmem>>, vector<18x1x128xf32>
    tpu.vector_store %arg9[%c0_5, %c0_6, %c0_7], %1 {strides = array<i32>} : memref<18x18x128xf32, #tpu.memory_space<vmem>>, vector<18x1x128xf32>,
    %c0_8 = arith.constant 0 : index
    %c17_9 = arith.constant 17 : index
    %c0_10 = arith.constant 0 : index
    %5 = vector.load %arg9[%c0_8, %c17_9, %c0_10] : memref<18x18x128xf32, #tpu.memory_space<vmem>>, vector<18x1x128xf32>
    tpu.vector_store %arg9[%c0_8, %c17_9, %c0_10], %1 {strides = array<i32>} : memref<18x18x128xf32, #tpu.memory_space<vmem>>, vector<18x1x128xf32>,
    %c0_11 = arith.constant 0 : index
    %c0_12 = arith.constant 0 : index
    %c0_13 = arith.constant 0 : index
    %c0_14 = arith.constant 0 : index
    %6 = vector.load %arg1[%c0_11, %c0_12, %c0_13, %c0_14] : memref<1x18x18x128xf32, #tpu.memory_space<vmem>>, vector<1x16x16x128xf32>
    %7 = vector.shape_cast %6 : vector<1x16x16x128xf32> to vector<16x16x128xf32>
    %8 = vector.shape_cast %7 : vector<16x16x128xf32> to vector<256x128xf32>
    %c0_15 = arith.constant 0 : index
    %c0_16 = arith.constant 0 : index
    %c0_17 = arith.constant 0 : index
    %9 = vector.load %arg2[%c0_15, %c0_16, %c0_17] : memref<9x128x128xf32, #tpu.memory_space<vmem>>, vector<1x128x128xf32>
    %10 = vector.shape_cast %9 : vector<1x128x128xf32> to vector<128x128xf32>
    %cst_18 = arith.constant dense<0.000000e+00> : vector<256x128xf32>
    %11 = tpu.matmul %8, %10, %cst_18 {dimension_numbers = #tpu.dot_dimension_numbers<[1], [0], [0], [1], [0, 0, 1, 1], [], []>} : vector<256x128xf32>, vector<128x128xf32>, vector<256x128xf32> -> vector<256x128xf32>
    %c0_19 = arith.constant 0 : index
    %c0_20 = arith.constant 0 : index
    %12 = vector.load %arg10[%c0_19, %c0_20] : memref<256x128xf32, #tpu.memory_space<vmem>>, vector<256x128xf32>
    tpu.vector_store %arg10[%c0_19, %c0_20], %11 {strides = array<i32>} : memref<256x128xf32, #tpu.memory_space<vmem>>, vector<256x128xf32>,
    %c0_21 = arith.constant 0 : index
    %c0_22 = arith.constant 0 : index
    %c1 = arith.constant 1 : index
    %c0_23 = arith.constant 0 : index
    %13 = vector.load %arg1[%c0_21, %c0_22, %c1, %c0_23] : memref<1x18x18x128xf32, #tpu.memory_space<vmem>>, vector<1x16x16x128xf32>
    %14 = vector.shape_cast %13 : vector<1x16x16x128xf32> to vector<16x16x128xf32>
    %15 = vector.shape_cast %14 : vector<16x16x128xf32> to vector<256x128xf32>
    %c1_24 = arith.constant 1 : index
    %c0_25 = arith.constant 0 : index
    %c0_26 = arith.constant 0 : index
    %16 = vector.load %arg2[%c1_24, %c0_25, %c0_26] : memref<9x128x128xf32, #tpu.memory_space<vmem>>, vector<1x128x128xf32>
    %17 = vector.shape_cast %16 : vector<1x128x128xf32> to vector<128x128xf32>
    %cst_27 = arith.constant dense<0.000000e+00> : vector<256x128xf32>
    %18 = tpu.matmul %15, %17, %cst_27 {dimension_numbers = #tpu.dot_dimension_numbers<[1], [0], [0], [1], [0, 0, 1, 1], [], []>} : vector<256x128xf32>, vector<128x128xf32>, vector<256x128xf32> -> vector<256x128xf32>
    %c0_28 = arith.constant 0 : index
    %c0_29 = arith.constant 0 : index
    %19 = vector.load %arg10[%c0_28, %c0_29] : memref<256x128xf32, #tpu.memory_space<vmem>>, vector<256x128xf32>
    %20 = arith.addf %19, %18 : vector<256x128xf32>
    %c0_30 = arith.constant 0 : index
    %c0_31 = arith.constant 0 : index
    %21 = vector.load %arg10[%c0_30, %c0_31] : memref<256x128xf32, #tpu.memory_space<vmem>>, vector<256x128xf32>
    tpu.vector_store %arg10[%c0_30, %c0_31], %20 {strides = array<i32>} : memref<256x128xf32, #tpu.memory_space<vmem>>, vector<256x128xf32>,
    %c0_32 = arith.constant 0 : index
    %c0_33 = arith.constant 0 : index
    %c2 = arith.constant 2 : index
    %c0_34 = arith.constant 0 : index
    %22 = vector.load %arg1[%c0_32, %c0_33, %c2, %c0_34] : memref<1x18x18x128xf32, #tpu.memory_space<vmem>>, vector<1x16x16x128xf32>
    %23 = vector.shape_cast %22 : vector<1x16x16x128xf32> to vector<16x16x128xf32>
    %24 = vector.shape_cast %23 : vector<16x16x128xf32> to vector<256x128xf32>
    %c2_35 = arith.constant 2 : index
    %c0_36 = arith.constant 0 : index
    %c0_37 = arith.constant 0 : index
    %25 = vector.load %arg2[%c2_35, %c0_36, %c0_37] : memref<9x128x128xf32, #tpu.memory_space<vmem>>, vector<1x128x128xf32>
    %26 = vector.shape_cast %25 : vector<1x128x128xf32> to vector<128x128xf32>
    %cst_38 = arith.constant dense<0.000000e+00> : vector<256x128xf32>
    %27 = tpu.matmul %24, %26, %cst_38 {dimension_numbers = #tpu.dot_dimension_numbers<[1], [0], [0], [1], [0, 0, 1, 1], [], []>} : vector<256x128xf32>, vector<128x128xf32>, vector<256x128xf32> -> vector<256x128xf32>
    %c0_39 = arith.constant 0 : index
    %c0_40 = arith.constant 0 : index
    %28 = vector.load %arg10[%c0_39, %c0_40] : memref<256x128xf32, #tpu.memory_space<vmem>>, vector<256x128xf32>
    %29 = arith.addf %28, %27 : vector<256x128xf32>
    %c0_41 = arith.constant 0 : index
    %c0_42 = arith.constant 0 : index
    %30 = vector.load %arg10[%c0_41, %c0_42] : memref<256x128xf32, #tpu.memory_space<vmem>>, vector<256x128xf32>
    tpu.vector_store %arg10[%c0_41, %c0_42], %29 {strides = array<i32>} : memref<256x128xf32, #tpu.memory_space<vmem>>, vector<256x128xf32>,
    %c0_43 = arith.constant 0 : index
    %c1_44 = arith.constant 1 : index
    %c0_45 = arith.constant 0 : index
    %c0_46 = arith.constant 0 : index
    %31 = vector.load %arg1[%c0_43, %c1_44, %c0_45, %c0_46] : memref<1x18x18x128xf32, #tpu.memory_space<vmem>>, vector<1x16x16x128xf32>
    %32 = vector.shape_cast %31 : vector<1x16x16x128xf32> to vector<16x16x128xf32>
    %33 = vector.shape_cast %32 : vector<16x16x128xf32> to vector<256x128xf32>
    %c3 = arith.constant 3 : index
    %c0_47 = arith.constant 0 : index
    %c0_48 = arith.constant 0 : index
    %34 = vector.load %arg2[%c3, %c0_47, %c0_48] : memref<9x128x128xf32, #tpu.memory_space<vmem>>, vector<1x128x128xf32>
    %35 = vector.shape_cast %34 : vector<1x128x128xf32> to vector<128x128xf32>
    %cst_49 = arith.constant dense<0.000000e+00> : vector<256x128xf32>
    %36 = tpu.matmul %33, %35, %cst_49 {dimension_numbers = #tpu.dot_dimension_numbers<[1], [0], [0], [1], [0, 0, 1, 1], [], []>} : vector<256x128xf32>, vector<128x128xf32>, vector<256x128xf32> -> vector<256x128xf32>
    %c0_50 = arith.constant 0 : index
    %c0_51 = arith.constant 0 : index
    %37 = vector.load %arg10[%c0_50, %c0_51] : memref<256x128xf32, #tpu.memory_space<vmem>>, vector<256x128xf32>
    %38 = arith.addf %37, %36 : vector<256x128xf32>
    %c0_52 = arith.constant 0 : index
    %c0_53 = arith.constant 0 : index
    %39 = vector.load %arg10[%c0_52, %c0_53] : memref<256x128xf32, #tpu.memory_space<vmem>>, vector<256x128xf32>
    tpu.vector_store %arg10[%c0_52, %c0_53], %38 {strides = array<i32>} : memref<256x128xf32, #tpu.memory_space<vmem>>, vector<256x128xf32>,
    %c0_54 = arith.constant 0 : index
    %c1_55 = arith.constant 1 : index
    %c1_56 = arith.constant 1 : index
    %c0_57 = arith.constant 0 : index
    %40 = vector.load %arg1[%c0_54, %c1_55, %c1_56, %c0_57] : memref<1x18x18x128xf32, #tpu.memory_space<vmem>>, vector<1x16x16x128xf32>
    %41 = vector.shape_cast %40 : vector<1x16x16x128xf32> to vector<16x16x128xf32>
    %42 = vector.shape_cast %41 : vector<16x16x128xf32> to vector<256x128xf32>
    %c4 = arith.constant 4 : index
    %c0_58 = arith.constant 0 : index
    %c0_59 = arith.constant 0 : index
    %43 = vector.load %arg2[%c4, %c0_58, %c0_59] : memref<9x128x128xf32, #tpu.memory_space<vmem>>, vector<1x128x128xf32>
    %44 = vector.shape_cast %43 : vector<1x128x128xf32> to vector<128x128xf32>
    %cst_60 = arith.constant dense<0.000000e+00> : vector<256x128xf32>
    %45 = tpu.matmul %42, %44, %cst_60 {dimension_numbers = #tpu.dot_dimension_numbers<[1], [0], [0], [1], [0, 0, 1, 1], [], []>} : vector<256x128xf32>, vector<128x128xf32>, vector<256x128xf32> -> vector<256x128xf32>
    %c0_61 = arith.constant 0 : index
    %c0_62 = arith.constant 0 : index
    %46 = vector.load %arg10[%c0_61, %c0_62] : memref<256x128xf32, #tpu.memory_space<vmem>>, vector<256x128xf32>
    %47 = arith.addf %46, %45 : vector<256x128xf32>
    %c0_63 = arith.constant 0 : index
    %c0_64 = arith.constant 0 : index
    %48 = vector.load %arg10[%c0_63, %c0_64] : memref<256x128xf32, #tpu.memory_space<vmem>>, vector<256x128xf32>
    tpu.vector_store %arg10[%c0_63, %c0_64], %47 {strides = array<i32>} : memref<256x128xf32, #tpu.memory_space<vmem>>, vector<256x128xf32>,
    %c0_65 = arith.constant 0 : index
    %c1_66 = arith.constant 1 : index
    %c2_67 = arith.constant 2 : index
    %c0_68 = arith.constant 0 : index
    %49 = vector.load %arg1[%c0_65, %c1_66, %c2_67, %c0_68] : memref<1x18x18x128xf32, #tpu.memory_space<vmem>>, vector<1x16x16x128xf32>
    %50 = vector.shape_cast %49 : vector<1x16x16x128xf32> to vector<16x16x128xf32>
    %51 = vector.shape_cast %50 : vector<16x16x128xf32> to vector<256x128xf32>
    %c5 = arith.constant 5 : index
    %c0_69 = arith.constant 0 : index
    %c0_70 = arith.constant 0 : index
    %52 = vector.load %arg2[%c5, %c0_69, %c0_70] : memref<9x128x128xf32, #tpu.memory_space<vmem>>, vector<1x128x128xf32>
    %53 = vector.shape_cast %52 : vector<1x128x128xf32> to vector<128x128xf32>
    %cst_71 = arith.constant dense<0.000000e+00> : vector<256x128xf32>
    %54 = tpu.matmul %51, %53, %cst_71 {dimension_numbers = #tpu.dot_dimension_numbers<[1], [0], [0], [1], [0, 0, 1, 1], [], []>} : vector<256x128xf32>, vector<128x128xf32>, vector<256x128xf32> -> vector<256x128xf32>
    %c0_72 = arith.constant 0 : index
    %c0_73 = arith.constant 0 : index
    %55 = vector.load %arg10[%c0_72, %c0_73] : memref<256x128xf32, #tpu.memory_space<vmem>>, vector<256x128xf32>
    %56 = arith.addf %55, %54 : vector<256x128xf32>
    %c0_74 = arith.constant 0 : index
    %c0_75 = arith.constant 0 : index
    %57 = vector.load %arg10[%c0_74, %c0_75] : memref<256x128xf32, #tpu.memory_space<vmem>>, vector<256x128xf32>
    tpu.vector_store %arg10[%c0_74, %c0_75], %56 {strides = array<i32>} : memref<256x128xf32, #tpu.memory_space<vmem>>, vector<256x128xf32>,
    %c0_76 = arith.constant 0 : index
    %c2_77 = arith.constant 2 : index
    %c0_78 = arith.constant 0 : index
    %c0_79 = arith.constant 0 : index
    %58 = vector.load %arg1[%c0_76, %c2_77, %c0_78, %c0_79] : memref<1x18x18x128xf32, #tpu.memory_space<vmem>>, vector<1x16x16x128xf32>
    %59 = vector.shape_cast %58 : vector<1x16x16x128xf32> to vector<16x16x128xf32>
    %60 = vector.shape_cast %59 : vector<16x16x128xf32> to vector<256x128xf32>
    %c6 = arith.constant 6 : index
    %c0_80 = arith.constant 0 : index
    %c0_81 = arith.constant 0 : index
    %61 = vector.load %arg2[%c6, %c0_80, %c0_81] : memref<9x128x128xf32, #tpu.memory_space<vmem>>, vector<1x128x128xf32>
    %62 = vector.shape_cast %61 : vector<1x128x128xf32> to vector<128x128xf32>
    %cst_82 = arith.constant dense<0.000000e+00> : vector<256x128xf32>
    %63 = tpu.matmul %60, %62, %cst_82 {dimension_numbers = #tpu.dot_dimension_numbers<[1], [0], [0], [1], [0, 0, 1, 1], [], []>} : vector<256x128xf32>, vector<128x128xf32>, vector<256x128xf32> -> vector<256x128xf32>
    %c0_83 = arith.constant 0 : index
    %c0_84 = arith.constant 0 : index
    %64 = vector.load %arg10[%c0_83, %c0_84] : memref<256x128xf32, #tpu.memory_space<vmem>>, vector<256x128xf32>
    %65 = arith.addf %64, %63 : vector<256x128xf32>
    %c0_85 = arith.constant 0 : index
    %c0_86 = arith.constant 0 : index
    %66 = vector.load %arg10[%c0_85, %c0_86] : memref<256x128xf32, #tpu.memory_space<vmem>>, vector<256x128xf32>
    tpu.vector_store %arg10[%c0_85, %c0_86], %65 {strides = array<i32>} : memref<256x128xf32, #tpu.memory_space<vmem>>, vector<256x128xf32>,
    %c0_87 = arith.constant 0 : index
    %c2_88 = arith.constant 2 : index
    %c1_89 = arith.constant 1 : index
    %c0_90 = arith.constant 0 : index
    %67 = vector.load %arg1[%c0_87, %c2_88, %c1_89, %c0_90] : memref<1x18x18x128xf32, #tpu.memory_space<vmem>>, vector<1x16x16x128xf32>
    %68 = vector.shape_cast %67 : vector<1x16x16x128xf32> to vector<16x16x128xf32>
    %69 = vector.shape_cast %68 : vector<16x16x128xf32> to vector<256x128xf32>
    %c7 = arith.constant 7 : index
    %c0_91 = arith.constant 0 : index
    %c0_92 = arith.constant 0 : index
    %70 = vector.load %arg2[%c7, %c0_91, %c0_92] : memref<9x128x128xf32, #tpu.memory_space<vmem>>, vector<1x128x128xf32>
    %71 = vector.shape_cast %70 : vector<1x128x128xf32> to vector<128x128xf32>
    %cst_93 = arith.constant dense<0.000000e+00> : vector<256x128xf32>
    %72 = tpu.matmul %69, %71, %cst_93 {dimension_numbers = #tpu.dot_dimension_numbers<[1], [0], [0], [1], [0, 0, 1, 1], [], []>} : vector<256x128xf32>, vector<128x128xf32>, vector<256x128xf32> -> vector<256x128xf32>
    %c0_94 = arith.constant 0 : index
    %c0_95 = arith.constant 0 : index
    %73 = vector.load %arg10[%c0_94, %c0_95] : memref<256x128xf32, #tpu.memory_space<vmem>>, vector<256x128xf32>
    %74 = arith.addf %73, %72 : vector<256x128xf32>
    %c0_96 = arith.constant 0 : index
    %c0_97 = arith.constant 0 : index
    %75 = vector.load %arg10[%c0_96, %c0_97] : memref<256x128xf32, #tpu.memory_space<vmem>>, vector<256x128xf32>
    tpu.vector_store %arg10[%c0_96, %c0_97], %74 {strides = array<i32>} : memref<256x128xf32, #tpu.memory_space<vmem>>, vector<256x128xf32>,
    %c0_98 = arith.constant 0 : index
    %c2_99 = arith.constant 2 : index
    %c2_100 = arith.constant 2 : index
    %c0_101 = arith.constant 0 : index
    %76 = vector.load %arg1[%c0_98, %c2_99, %c2_100, %c0_101] : memref<1x18x18x128xf32, #tpu.memory_space<vmem>>, vector<1x16x16x128xf32>
    %77 = vector.shape_cast %76 : vector<1x16x16x128xf32> to vector<16x16x128xf32>
    %78 = vector.shape_cast %77 : vector<16x16x128xf32> to vector<256x128xf32>
    %c8 = arith.constant 8 : index
    %c0_102 = arith.constant 0 : index
    %c0_103 = arith.constant 0 : index
    %79 = vector.load %arg2[%c8, %c0_102, %c0_103] : memref<9x128x128xf32, #tpu.memory_space<vmem>>, vector<1x128x128xf32>
    %80 = vector.shape_cast %79 : vector<1x128x128xf32> to vector<128x128xf32>
    %cst_104 = arith.constant dense<0.000000e+00> : vector<256x128xf32>
    %81 = tpu.matmul %78, %80, %cst_104 {dimension_numbers = #tpu.dot_dimension_numbers<[1], [0], [0], [1], [0, 0, 1, 1], [], []>} : vector<256x128xf32>, vector<128x128xf32>, vector<256x128xf32> -> vector<256x128xf32>
    %c0_105 = arith.constant 0 : index
    %c0_106 = arith.constant 0 : index
    %82 = vector.load %arg10[%c0_105, %c0_106] : memref<256x128xf32, #tpu.memory_space<vmem>>, vector<256x128xf32>
    %83 = arith.addf %82, %81 : vector<256x128xf32>
    %c0_107 = arith.constant 0 : index
    %c0_108 = arith.constant 0 : index
    %84 = vector.load %arg10[%c0_107, %c0_108] : memref<256x128xf32, #tpu.memory_space<vmem>>, vector<256x128xf32>
    tpu.vector_store %arg10[%c0_107, %c0_108], %83 {strides = array<i32>} : memref<256x128xf32, #tpu.memory_space<vmem>>, vector<256x128xf32>,
    %c0_109 = arith.constant 0 : index
    %c0_110 = arith.constant 0 : index
    %85 = vector.load %arg10[%c0_109, %c0_110] : memref<256x128xf32, #tpu.memory_space<vmem>>, vector<256x128xf32>
    %c0_111 = arith.constant 0 : index
    %c0_112 = arith.constant 0 : index
    %86 = vector.load %arg3[%c0_111, %c0_112] : memref<1x128xf32, #tpu.memory_space<vmem>>, vector<1x128xf32>
    %87 = vector.broadcast %86 : vector<1x128xf32> to vector<256x128xf32>
    %88 = arith.mulf %85, %87 : vector<256x128xf32>
    %c0_113 = arith.constant 0 : index
    %c0_114 = arith.constant 0 : index
    %89 = vector.load %arg4[%c0_113, %c0_114] : memref<1x128xf32, #tpu.memory_space<vmem>>, vector<1x128xf32>
    %90 = vector.broadcast %89 : vector<1x128xf32> to vector<256x128xf32>
    %91 = arith.addf %88, %90 : vector<256x128xf32>
    %cst_115 = arith.constant 0.000000e+00 : f32
    %92 = vector.broadcast %cst_115 : f32 to vector<256x128xf32>
    %93 = arith.maximumf %91, %92 : vector<256x128xf32>
    %94 = vector.shape_cast %93 : vector<256x128xf32> to vector<16x16x128xf32>
    %c1_116 = arith.constant 1 : index
    %c1_117 = arith.constant 1 : index
    %c0_118 = arith.constant 0 : index
    %95 = vector.load %arg9[%c1_116, %c1_117, %c0_118] : memref<18x18x128xf32, #tpu.memory_space<vmem>>, vector<16x16x128xf32>
    tpu.vector_store %arg9[%c1_116, %c1_117, %c0_118], %94 {strides = array<i32>} : memref<18x18x128xf32, #tpu.memory_space<vmem>>, vector<16x16x128xf32>,
    %c0_119 = arith.constant 0 : index
    %c0_120 = arith.constant 0 : index
    %c0_121 = arith.constant 0 : index
    %96 = vector.load %arg9[%c0_119, %c0_120, %c0_121] : memref<18x18x128xf32, #tpu.memory_space<vmem>>, vector<16x16x128xf32>
    %97 = vector.shape_cast %96 : vector<16x16x128xf32> to vector<256x128xf32>
    %c0_122 = arith.constant 0 : index
    %c0_123 = arith.constant 0 : index
    %c0_124 = arith.constant 0 : index
    %98 = vector.load %arg5[%c0_122, %c0_123, %c0_124] : memref<9x128x128xf32, #tpu.memory_space<vmem>>, vector<1x128x128xf32>
    %99 = vector.shape_cast %98 : vector<1x128x128xf32> to vector<128x128xf32>
    %cst_125 = arith.constant dense<0.000000e+00> : vector<256x128xf32>
    %100 = tpu.matmul %97, %99, %cst_125 {dimension_numbers = #tpu.dot_dimension_numbers<[1], [0], [0], [1], [0, 0, 1, 1], [], []>} : vector<256x128xf32>, vector<128x128xf32>, vector<256x128xf32> -> vector<256x128xf32>
    %c0_126 = arith.constant 0 : index
    %c0_127 = arith.constant 0 : index
    %101 = vector.load %arg10[%c0_126, %c0_127] : memref<256x128xf32, #tpu.memory_space<vmem>>, vector<256x128xf32>
    tpu.vector_store %arg10[%c0_126, %c0_127], %100 {strides = array<i32>} : memref<256x128xf32, #tpu.memory_space<vmem>>, vector<256x128xf32>,
    %c0_128 = arith.constant 0 : index
    %c1_129 = arith.constant 1 : index
    %c0_130 = arith.constant 0 : index
    %102 = vector.load %arg9[%c0_128, %c1_129, %c0_130] : memref<18x18x128xf32, #tpu.memory_space<vmem>>, vector<16x16x128xf32>
    %103 = vector.shape_cast %102 : vector<16x16x128xf32> to vector<256x128xf32>
    %c1_131 = arith.constant 1 : index
    %c0_132 = arith.constant 0 : index
    %c0_133 = arith.constant 0 : index
    %104 = vector.load %arg5[%c1_131, %c0_132, %c0_133] : memref<9x128x128xf32, #tpu.memory_space<vmem>>, vector<1x128x128xf32>
    %105 = vector.shape_cast %104 : vector<1x128x128xf32> to vector<128x128xf32>
    %cst_134 = arith.constant dense<0.000000e+00> : vector<256x128xf32>
    %106 = tpu.matmul %103, %105, %cst_134 {dimension_numbers = #tpu.dot_dimension_numbers<[1], [0], [0], [1], [0, 0, 1, 1], [], []>} : vector<256x128xf32>, vector<128x128xf32>, vector<256x128xf32> -> vector<256x128xf32>
    %c0_135 = arith.constant 0 : index
    %c0_136 = arith.constant 0 : index
    %107 = vector.load %arg10[%c0_135, %c0_136] : memref<256x128xf32, #tpu.memory_space<vmem>>, vector<256x128xf32>
    %108 = arith.addf %107, %106 : vector<256x128xf32>
    %c0_137 = arith.constant 0 : index
    %c0_138 = arith.constant 0 : index
    %109 = vector.load %arg10[%c0_137, %c0_138] : memref<256x128xf32, #tpu.memory_space<vmem>>, vector<256x128xf32>
    tpu.vector_store %arg10[%c0_137, %c0_138], %108 {strides = array<i32>} : memref<256x128xf32, #tpu.memory_space<vmem>>, vector<256x128xf32>,
    %c0_139 = arith.constant 0 : index
    %c2_140 = arith.constant 2 : index
    %c0_141 = arith.constant 0 : index
    %110 = vector.load %arg9[%c0_139, %c2_140, %c0_141] : memref<18x18x128xf32, #tpu.memory_space<vmem>>, vector<16x16x128xf32>
    %111 = vector.shape_cast %110 : vector<16x16x128xf32> to vector<256x128xf32>
    %c2_142 = arith.constant 2 : index
    %c0_143 = arith.constant 0 : index
    %c0_144 = arith.constant 0 : index
    %112 = vector.load %arg5[%c2_142, %c0_143, %c0_144] : memref<9x128x128xf32, #tpu.memory_space<vmem>>, vector<1x128x128xf32>
    %113 = vector.shape_cast %112 : vector<1x128x128xf32> to vector<128x128xf32>
    %cst_145 = arith.constant dense<0.000000e+00> : vector<256x128xf32>
    %114 = tpu.matmul %111, %113, %cst_145 {dimension_numbers = #tpu.dot_dimension_numbers<[1], [0], [0], [1], [0, 0, 1, 1], [], []>} : vector<256x128xf32>, vector<128x128xf32>, vector<256x128xf32> -> vector<256x128xf32>
    %c0_146 = arith.constant 0 : index
    %c0_147 = arith.constant 0 : index
    %115 = vector.load %arg10[%c0_146, %c0_147] : memref<256x128xf32, #tpu.memory_space<vmem>>, vector<256x128xf32>
    %116 = arith.addf %115, %114 : vector<256x128xf32>
    %c0_148 = arith.constant 0 : index
    %c0_149 = arith.constant 0 : index
    %117 = vector.load %arg10[%c0_148, %c0_149] : memref<256x128xf32, #tpu.memory_space<vmem>>, vector<256x128xf32>
    tpu.vector_store %arg10[%c0_148, %c0_149], %116 {strides = array<i32>} : memref<256x128xf32, #tpu.memory_space<vmem>>, vector<256x128xf32>,
    %c1_150 = arith.constant 1 : index
    %c0_151 = arith.constant 0 : index
    %c0_152 = arith.constant 0 : index
    %118 = vector.load %arg9[%c1_150, %c0_151, %c0_152] : memref<18x18x128xf32, #tpu.memory_space<vmem>>, vector<16x16x128xf32>
    %119 = vector.shape_cast %118 : vector<16x16x128xf32> to vector<256x128xf32>
    %c3_153 = arith.constant 3 : index
    %c0_154 = arith.constant 0 : index
    %c0_155 = arith.constant 0 : index
    %120 = vector.load %arg5[%c3_153, %c0_154, %c0_155] : memref<9x128x128xf32, #tpu.memory_space<vmem>>, vector<1x128x128xf32>
    %121 = vector.shape_cast %120 : vector<1x128x128xf32> to vector<128x128xf32>
    %cst_156 = arith.constant dense<0.000000e+00> : vector<256x128xf32>
    %122 = tpu.matmul %119, %121, %cst_156 {dimension_numbers = #tpu.dot_dimension_numbers<[1], [0], [0], [1], [0, 0, 1, 1], [], []>} : vector<256x128xf32>, vector<128x128xf32>, vector<256x128xf32> -> vector<256x128xf32>
    %c0_157 = arith.constant 0 : index
    %c0_158 = arith.constant 0 : index
    %123 = vector.load %arg10[%c0_157, %c0_158] : memref<256x128xf32, #tpu.memory_space<vmem>>, vector<256x128xf32>
    %124 = arith.addf %123, %122 : vector<256x128xf32>
    %c0_159 = arith.constant 0 : index
    %c0_160 = arith.constant 0 : index
    %125 = vector.load %arg10[%c0_159, %c0_160] : memref<256x128xf32, #tpu.memory_space<vmem>>, vector<256x128xf32>
    tpu.vector_store %arg10[%c0_159, %c0_160], %124 {strides = array<i32>} : memref<256x128xf32, #tpu.memory_space<vmem>>, vector<256x128xf32>,
    %c1_161 = arith.constant 1 : index
    %c1_162 = arith.constant 1 : index
    %c0_163 = arith.constant 0 : index
    %126 = vector.load %arg9[%c1_161, %c1_162, %c0_163] : memref<18x18x128xf32, #tpu.memory_space<vmem>>, vector<16x16x128xf32>
    %127 = vector.shape_cast %126 : vector<16x16x128xf32> to vector<256x128xf32>
    %c4_164 = arith.constant 4 : index
    %c0_165 = arith.constant 0 : index
    %c0_166 = arith.constant 0 : index
    %128 = vector.load %arg5[%c4_164, %c0_165, %c0_166] : memref<9x128x128xf32, #tpu.memory_space<vmem>>, vector<1x128x128xf32>
    %129 = vector.shape_cast %128 : vector<1x128x128xf32> to vector<128x128xf32>
    %cst_167 = arith.constant dense<0.000000e+00> : vector<256x128xf32>
    %130 = tpu.matmul %127, %129, %cst_167 {dimension_numbers = #tpu.dot_dimension_numbers<[1], [0], [0], [1], [0, 0, 1, 1], [], []>} : vector<256x128xf32>, vector<128x128xf32>, vector<256x128xf32> -> vector<256x128xf32>
    %c0_168 = arith.constant 0 : index
    %c0_169 = arith.constant 0 : index
    %131 = vector.load %arg10[%c0_168, %c0_169] : memref<256x128xf32, #tpu.memory_space<vmem>>, vector<256x128xf32>
    %132 = arith.addf %131, %130 : vector<256x128xf32>
    %c0_170 = arith.constant 0 : index
    %c0_171 = arith.constant 0 : index
    %133 = vector.load %arg10[%c0_170, %c0_171] : memref<256x128xf32, #tpu.memory_space<vmem>>, vector<256x128xf32>
    tpu.vector_store %arg10[%c0_170, %c0_171], %132 {strides = array<i32>} : memref<256x128xf32, #tpu.memory_space<vmem>>, vector<256x128xf32>,
    %c1_172 = arith.constant 1 : index
    %c2_173 = arith.constant 2 : index
    %c0_174 = arith.constant 0 : index
    %134 = vector.load %arg9[%c1_172, %c2_173, %c0_174] : memref<18x18x128xf32, #tpu.memory_space<vmem>>, vector<16x16x128xf32>
    %135 = vector.shape_cast %134 : vector<16x16x128xf32> to vector<256x128xf32>
    %c5_175 = arith.constant 5 : index
    %c0_176 = arith.constant 0 : index
    %c0_177 = arith.constant 0 : index
    %136 = vector.load %arg5[%c5_175, %c0_176, %c0_177] : memref<9x128x128xf32, #tpu.memory_space<vmem>>, vector<1x128x128xf32>
    %137 = vector.shape_cast %136 : vector<1x128x128xf32> to vector<128x128xf32>
    %cst_178 = arith.constant dense<0.000000e+00> : vector<256x128xf32>
    %138 = tpu.matmul %135, %137, %cst_178 {dimension_numbers = #tpu.dot_dimension_numbers<[1], [0], [0], [1], [0, 0, 1, 1], [], []>} : vector<256x128xf32>, vector<128x128xf32>, vector<256x128xf32> -> vector<256x128xf32>
    %c0_179 = arith.constant 0 : index
    %c0_180 = arith.constant 0 : index
    %139 = vector.load %arg10[%c0_179, %c0_180] : memref<256x128xf32, #tpu.memory_space<vmem>>, vector<256x128xf32>
    %140 = arith.addf %139, %138 : vector<256x128xf32>
    %c0_181 = arith.constant 0 : index
    %c0_182 = arith.constant 0 : index
    %141 = vector.load %arg10[%c0_181, %c0_182] : memref<256x128xf32, #tpu.memory_space<vmem>>, vector<256x128xf32>
    tpu.vector_store %arg10[%c0_181, %c0_182], %140 {strides = array<i32>} : memref<256x128xf32, #tpu.memory_space<vmem>>, vector<256x128xf32>,
    %c2_183 = arith.constant 2 : index
    %c0_184 = arith.constant 0 : index
    %c0_185 = arith.constant 0 : index
    %142 = vector.load %arg9[%c2_183, %c0_184, %c0_185] : memref<18x18x128xf32, #tpu.memory_space<vmem>>, vector<16x16x128xf32>
    %143 = vector.shape_cast %142 : vector<16x16x128xf32> to vector<256x128xf32>
    %c6_186 = arith.constant 6 : index
    %c0_187 = arith.constant 0 : index
    %c0_188 = arith.constant 0 : index
    %144 = vector.load %arg5[%c6_186, %c0_187, %c0_188] : memref<9x128x128xf32, #tpu.memory_space<vmem>>, vector<1x128x128xf32>
    %145 = vector.shape_cast %144 : vector<1x128x128xf32> to vector<128x128xf32>
    %cst_189 = arith.constant dense<0.000000e+00> : vector<256x128xf32>
    %146 = tpu.matmul %143, %145, %cst_189 {dimension_numbers = #tpu.dot_dimension_numbers<[1], [0], [0], [1], [0, 0, 1, 1], [], []>} : vector<256x128xf32>, vector<128x128xf32>, vector<256x128xf32> -> vector<256x128xf32>
    %c0_190 = arith.constant 0 : index
    %c0_191 = arith.constant 0 : index
    %147 = vector.load %arg10[%c0_190, %c0_191] : memref<256x128xf32, #tpu.memory_space<vmem>>, vector<256x128xf32>
    %148 = arith.addf %147, %146 : vector<256x128xf32>
    %c0_192 = arith.constant 0 : index
    %c0_193 = arith.constant 0 : index
    %149 = vector.load %arg10[%c0_192, %c0_193] : memref<256x128xf32, #tpu.memory_space<vmem>>, vector<256x128xf32>
    tpu.vector_store %arg10[%c0_192, %c0_193], %148 {strides = array<i32>} : memref<256x128xf32, #tpu.memory_space<vmem>>, vector<256x128xf32>,
    %c2_194 = arith.constant 2 : index
    %c1_195 = arith.constant 1 : index
    %c0_196 = arith.constant 0 : index
    %150 = vector.load %arg9[%c2_194, %c1_195, %c0_196] : memref<18x18x128xf32, #tpu.memory_space<vmem>>, vector<16x16x128xf32>
    %151 = vector.shape_cast %150 : vector<16x16x128xf32> to vector<256x128xf32>
    %c7_197 = arith.constant 7 : index
    %c0_198 = arith.constant 0 : index
    %c0_199 = arith.constant 0 : index
    %152 = vector.load %arg5[%c7_197, %c0_198, %c0_199] : memref<9x128x128xf32, #tpu.memory_space<vmem>>, vector<1x128x128xf32>
    %153 = vector.shape_cast %152 : vector<1x128x128xf32> to vector<128x128xf32>
    %cst_200 = arith.constant dense<0.000000e+00> : vector<256x128xf32>
    %154 = tpu.matmul %151, %153, %cst_200 {dimension_numbers = #tpu.dot_dimension_numbers<[1], [0], [0], [1], [0, 0, 1, 1], [], []>} : vector<256x128xf32>, vector<128x128xf32>, vector<256x128xf32> -> vector<256x128xf32>
    %c0_201 = arith.constant 0 : index
    %c0_202 = arith.constant 0 : index
    %155 = vector.load %arg10[%c0_201, %c0_202] : memref<256x128xf32, #tpu.memory_space<vmem>>, vector<256x128xf32>
    %156 = arith.addf %155, %154 : vector<256x128xf32>
    %c0_203 = arith.constant 0 : index
    %c0_204 = arith.constant 0 : index
    %157 = vector.load %arg10[%c0_203, %c0_204] : memref<256x128xf32, #tpu.memory_space<vmem>>, vector<256x128xf32>
    tpu.vector_store %arg10[%c0_203, %c0_204], %156 {strides = array<i32>} : memref<256x128xf32, #tpu.memory_space<vmem>>, vector<256x128xf32>,
    %c2_205 = arith.constant 2 : index
    %c2_206 = arith.constant 2 : index
    %c0_207 = arith.constant 0 : index
    %158 = vector.load %arg9[%c2_205, %c2_206, %c0_207] : memref<18x18x128xf32, #tpu.memory_space<vmem>>, vector<16x16x128xf32>
    %159 = vector.shape_cast %158 : vector<16x16x128xf32> to vector<256x128xf32>
    %c8_208 = arith.constant 8 : index
    %c0_209 = arith.constant 0 : index
    %c0_210 = arith.constant 0 : index
    %160 = vector.load %arg5[%c8_208, %c0_209, %c0_210] : memref<9x128x128xf32, #tpu.memory_space<vmem>>, vector<1x128x128xf32>
    %161 = vector.shape_cast %160 : vector<1x128x128xf32> to vector<128x128xf32>
    %cst_211 = arith.constant dense<0.000000e+00> : vector<256x128xf32>
    %162 = tpu.matmul %159, %161, %cst_211 {dimension_numbers = #tpu.dot_dimension_numbers<[1], [0], [0], [1], [0, 0, 1, 1], [], []>} : vector<256x128xf32>, vector<128x128xf32>, vector<256x128xf32> -> vector<256x128xf32>
    %c0_212 = arith.constant 0 : index
    %c0_213 = arith.constant 0 : index
    %163 = vector.load %arg10[%c0_212, %c0_213] : memref<256x128xf32, #tpu.memory_space<vmem>>, vector<256x128xf32>
    %164 = arith.addf %163, %162 : vector<256x128xf32>
    %c0_214 = arith.constant 0 : index
    %c0_215 = arith.constant 0 : index
    %165 = vector.load %arg10[%c0_214, %c0_215] : memref<256x128xf32, #tpu.memory_space<vmem>>, vector<256x128xf32>
    tpu.vector_store %arg10[%c0_214, %c0_215], %164 {strides = array<i32>} : memref<256x128xf32, #tpu.memory_space<vmem>>, vector<256x128xf32>,
    %c0_216 = arith.constant 0 : index
    %c0_217 = arith.constant 0 : index
    %166 = vector.load %arg10[%c0_216, %c0_217] : memref<256x128xf32, #tpu.memory_space<vmem>>, vector<256x128xf32>
    %c0_218 = arith.constant 0 : index
    %c0_219 = arith.constant 0 : index
    %167 = vector.load %arg6[%c0_218, %c0_219] : memref<1x128xf32, #tpu.memory_space<vmem>>, vector<1x128xf32>
    %168 = vector.broadcast %167 : vector<1x128xf32> to vector<256x128xf32>
    %169 = arith.mulf %166, %168 : vector<256x128xf32>
    %c0_220 = arith.constant 0 : index
    %c0_221 = arith.constant 0 : index
    %170 = vector.load %arg7[%c0_220, %c0_221] : memref<1x128xf32, #tpu.memory_space<vmem>>, vector<1x128xf32>
    %171 = vector.broadcast %170 : vector<1x128xf32> to vector<256x128xf32>
    %172 = arith.addf %169, %171 : vector<256x128xf32>
    %c0_222 = arith.constant 0 : index
    %c1_223 = arith.constant 1 : index
    %c1_224 = arith.constant 1 : index
    %c0_225 = arith.constant 0 : index
    %173 = vector.load %arg1[%c0_222, %c1_223, %c1_224, %c0_225] : memref<1x18x18x128xf32, #tpu.memory_space<vmem>>, vector<1x16x16x128xf32>
    %174 = vector.shape_cast %173 : vector<1x16x16x128xf32> to vector<16x16x128xf32>
    %175 = vector.shape_cast %174 : vector<16x16x128xf32> to vector<256x128xf32>
    %176 = arith.addf %172, %175 : vector<256x128xf32>
    %cst_226 = arith.constant 0.000000e+00 : f32
    %177 = vector.broadcast %cst_226 : f32 to vector<256x128xf32>
    %178 = arith.maximumf %176, %177 : vector<256x128xf32>
    %179 = vector.shape_cast %178 : vector<256x128xf32> to vector<16x16x128xf32>
    %c0_227 = arith.constant 0 : index
    %c0_228 = arith.constant 0 : index
    %c0_229 = arith.constant 0 : index
    %c0_230 = arith.constant 0 : index
    %180 = vector.load %arg8[%c0_227, %c0_228, %c0_229, %c0_230] : memref<1x16x16x128xf32, #tpu.memory_space<vmem>>, vector<1x16x16x128xf32>
    %181 = vector.shape_cast %180 : vector<1x16x16x128xf32> to vector<16x16x128xf32>
    %182 = vector.shape_cast %179 : vector<16x16x128xf32> to vector<1x16x16x128xf32>
    tpu.vector_store %arg8[%c0_227, %c0_228, %c0_229, %c0_230], %182 {strides = array<i32>} : memref<1x16x16x128xf32, #tpu.memory_space<vmem>>, vector<1x16x16x128xf32>,
    return
  }
  func.func @transform_0(%arg0: i32) -> (i32, i32, i32, i32) {
    %c0_i32 = arith.constant 0 : i32
    %c0_i32_0 = arith.constant 0 : i32
    %c0_i32_1 = arith.constant 0 : i32
    %c0_i32_2 = arith.constant 0 : i32
    return %arg0, %c0_i32, %c0_i32_0, %c0_i32_1 : i32, i32, i32, i32
  }
  func.func @transform_1(%arg0: i32) -> (i32, i32, i32) {
    %c0_i32 = arith.constant 0 : i32
    %c0_i32_0 = arith.constant 0 : i32
    %c0_i32_1 = arith.constant 0 : i32
    %c0_i32_2 = arith.constant 0 : i32
    return %c0_i32, %c0_i32_0, %c0_i32_1 : i32, i32, i32
  }
  func.func @transform_2(%arg0: i32) -> (i32, i32) {
    %c0_i32 = arith.constant 0 : i32
    %c0_i32_0 = arith.constant 0 : i32
    %c0_i32_1 = arith.constant 0 : i32
    return %c0_i32, %c0_i32_0 : i32, i32
  }
  func.func @transform_3(%arg0: i32) -> (i32, i32) {
    %c0_i32 = arith.constant 0 : i32
    %c0_i32_0 = arith.constant 0 : i32
    %c0_i32_1 = arith.constant 0 : i32
    return %c0_i32, %c0_i32_0 : i32, i32
  }
  func.func @transform_4(%arg0: i32) -> (i32, i32, i32) {
    %c0_i32 = arith.constant 0 : i32
    %c0_i32_0 = arith.constant 0 : i32
    %c0_i32_1 = arith.constant 0 : i32
    %c0_i32_2 = arith.constant 0 : i32
    return %c0_i32, %c0_i32_0, %c0_i32_1 : i32, i32, i32
  }
  func.func @transform_5(%arg0: i32) -> (i32, i32) {
    %c0_i32 = arith.constant 0 : i32
    %c0_i32_0 = arith.constant 0 : i32
    %c0_i32_1 = arith.constant 0 : i32
    return %c0_i32, %c0_i32_0 : i32, i32
  }
  func.func @transform_6(%arg0: i32) -> (i32, i32) {
    %c0_i32 = arith.constant 0 : i32
    %c0_i32_0 = arith.constant 0 : i32
    %c0_i32_1 = arith.constant 0 : i32
    return %c0_i32, %c0_i32_0 : i32, i32
  }
  func.func @transform_7(%arg0: i32) -> (i32, i32, i32, i32) {
    %c0_i32 = arith.constant 0 : i32
    %c0_i32_0 = arith.constant 0 : i32
    %c0_i32_1 = arith.constant 0 : i32
    %c0_i32_2 = arith.constant 0 : i32
    return %arg0, %c0_i32, %c0_i32_0, %c0_i32_1 : i32, i32, i32, i32
  }
}

</mosaic_0001>

<llo_original>
// kernel: tpu_custom_call.1
$region0: #{tpu_custom_call.1}
  #allocation0 [shape = 'u32[]', space=smem, size = 0x4, offset = 0x4, fixed_abs, tag = 'smem constant byte address 0x4 - core index']
  #allocation1 [shape = 'u32[144,128]{1,0:T(1,128)}', space=vmem, size = 0x12000, scoped, tag = 'internal scratch']
  #allocation2 [shape = 'f32[18,18,128]{2,1,0:T(8,128)}', space=vmem, size = 0x36000, scoped, tag = 'scratch operand']
  #allocation3 [shape = 'f32[256,128]{1,0:T(8,128)}', space=vmem, size = 0x20000, scoped, tag = 'scratch operand']
  %s0 = inlined_call_operand.vmem [shape: f32[2,18,18,128], index: 0, kind: input, shape index: {}]
  %s1 = inlined_call_operand.vmem [shape: f32[9,128,128], index: 1, kind: input, shape index: {}]
  %s2 = inlined_call_operand.vmem [shape: f32[1,128], index: 2, kind: input, shape index: {}]
  %s3 = inlined_call_operand.vmem [shape: f32[1,128], index: 3, kind: input, shape index: {}]
  %s4 = inlined_call_operand.hbm [shape: f32[9,128,128], index: 4, kind: input, shape index: {}]
  %s5 = inlined_call_operand.vmem [shape: f32[1,128], index: 5, kind: input, shape index: {}]
  %s6 = inlined_call_operand.vmem [shape: f32[1,128], index: 6, kind: input, shape index: {}]
  %s7 = inlined_call_operand.hbm [shape: f32[2,16,16,128], index: 7, kind: output, shape index: {}]
  %s8 = sld [smem:[#allocation0]]
  $region65: #{tpu_custom_call.1} parent=0
    _
  %s10 = ssub.s32 1, %s8
  %s11 = scalar_select 0, %s10, %s8
  $region1: #{tpu_custom_call.1} parent=0
    #allocation4 [shape = 'u8[589824]{0}', space=vmem, size = 0x90000, scoped, tag = 'input window, operand 4, single buffered']
    #allocation5 [shape = 's32[2]{0}', space=sflag, size = 0x8, scoped, tag = 'scoped memory for tpu_custom_call.1']
    #allocation6 [shape = 's32[2]{0}', space=sflag, size = 0x8, scoped, tag = 'scoped memory for tpu_custom_call.1']
    #allocation7 [shape = 'u8[262144]{0}', space=vmem, size = 0x40000, scoped, tag = 'output window, operand 0']
    %12 = vsyncpa [#allocation5], 0
    %13 = vsyncpa [#allocation6], 0
    %s14 = scalar_lea.sflag [#allocation6], 1
    %15 = vsyncpa %s14, 0
    loop: start=0, step=1, limit=4
    $region2: #{tpu_custom_call.1} parent=1 // loop_pre_header
      _
    $region3: #{tpu_custom_call.1} parent=1 // loop_header
      %s17 = sphi 0, %s21
      %p18 = scmp.ge.s32.totalorder %s17, 4
      %s27 = sphi 0, %s29
      %s30 = sphi 0, %s27
      %s31 = sphi 0, %s30
      %s47 = sphi 0, %s31
      %s51 = sphi 0, %s51
      %s53 = sphi 0, %s51
      %s54 = sphi 0, %s53
      %s68 = sphi 0, %s54
      %s72 = sphi 0, %s72
      %s74 = sphi 0, %s72
      %s75 = sphi 0, %s74
      %s89 = sphi 0, %s75
      %s93 = sphi 0, %s93
      %s95 = sphi 0, %s93
      %s96 = sphi 0, %s95
      %s110 = sphi 0, %s96
      %s114 = sphi 0, %s114
      %s116 = sphi 0, %s114
      %s117 = sphi 0, %s116
      %s131 = sphi 0, %s117
      %s135 = sphi 0, %s135
      %s137 = sphi 0, %s135
      %s138 = sphi 0, %s137
      %s152 = sphi 0, %s138
      %s156 = sphi 0, %s156
      %s158 = sphi 0, %s156
      %s159 = sphi 0, %s158
      %s173 = sphi 0, %s159
      %s179 = sphi 0, %s181
      %s182 = sphi 0, %s179
      %s183 = sphi 0, %s182
      %s199 = sphi 0, %s183
    $region4: #{tpu_custom_call.1} parent=1 // loop_header_branch
      %20 = sbr.rel (%p18) target = $region8
    $region5: #{tpu_custom_call.1} parent=1 // loop_body
      %s22 = ssub.s32 %s17, 1
      %s23 = ssub.s32 %s17, 2
      %s24 = sadd.s32 %s17, 1
      %s25 = ssub.s32 %s17, %s24
      %p26 = scmp.eq.s32.totalorder %s25, 0
      %s28 = sadd.s32 %s27, 1
      %s29 = scalar_select %p26, %s27, %s28
      %p32 = pneg %p26
      %p33 = scmp.eq.s32.totalorder %s17, 1
      %p34 = por %p32, %p33
      %p35 = scmp.ne.s32.totalorder %s27, %s30
      %p36 = scmp.eq.s32.totalorder %s17, 0
      %p37 = por %p35, %p36
      %p38 = scmp.ne.s32.totalorder %s27, %s30
      %p39 = scmp.eq.s32.totalorder %s22, 1
      %p40 = por %p38, %p39
      %p41 = scmp.ne.s32.totalorder %s30, %s31
      %p42 = scmp.eq.s32.totalorder %s22, 0
      %p43 = por %p41, %p42
      %p44 = scmp.ne.s32.totalorder %s30, %s31
      %p45 = scmp.eq.s32.totalorder %s23, 1
      %p46 = por %p44, %p45
      %p48 = scmp.ne.s32.totalorder %s31, %s47
      %p49 = scmp.eq.s32.totalorder %s23, 0
      %p50 = por %p48, %p49
      %s52 = sadd.s32 %s51, 1
      %p55 = scmp.eq.s32.totalorder %s17, 1
      %p56 = scmp.ne.s32.totalorder %s51, %s53
      %p57 = scmp.eq.s32.totalorder %s17, 0
      %p58 = por %p56, %p57
      %p59 = scmp.ne.s32.totalorder %s51, %s53
      %p60 = scmp.eq.s32.totalorder %s22, 1
      %p61 = por %p59, %p60
      %p62 = scmp.ne.s32.totalorder %s53, %s54
      %p63 = scmp.eq.s32.totalorder %s22, 0
      %p64 = por %p62, %p63
      %p65 = scmp.ne.s32.totalorder %s53, %s54
      %p66 = scmp.eq.s32.totalorder %s23, 1
      %p67 = por %p65, %p66
      %p69 = scmp.ne.s32.totalorder %s54, %s68
      %p70 = scmp.eq.s32.totalorder %s23, 0
      %p71 = por %p69, %p70
      %s73 = sadd.s32 %s72, 1
      %p76 = scmp.eq.s32.totalorder %s17, 1
      %p77 = scmp.ne.s32.totalorder %s72, %s74
      %p78 = scmp.eq.s32.totalorder %s17, 0
      %p79 = por %p77, %p78
      %p80 = scmp.ne.s32.totalorder %s72, %s74
      %p81 = scmp.eq.s32.totalorder %s22, 1
      %p82 = por %p80, %p81
      %p83 = scmp.ne.s32.totalorder %s74, %s75
      %p84 = scmp.eq.s32.totalorder %s22, 0
      %p85 = por %p83, %p84
      %p86 = scmp.ne.s32.totalorder %s74, %s75
      %p87 = scmp.eq.s32.totalorder %s23, 1
      %p88 = por %p86, %p87
      %p90 = scmp.ne.s32.totalorder %s75, %s89
      %p91 = scmp.eq.s32.totalorder %s23, 0
      %p92 = por %p90, %p91
      %s94 = sadd.s32 %s93, 1
      %p97 = scmp.eq.s32.totalorder %s17, 1
      %p98 = scmp.ne.s32.totalorder %s93, %s95
      %p99 = scmp.eq.s32.totalorder %s17, 0
      %p100 = por %p98, %p99
      %p101 = scmp.ne.s32.totalorder %s93, %s95
      %p102 = scmp.eq.s32.totalorder %s22, 1
      %p103 = por %p101, %p102
      %p104 = scmp.ne.s32.totalorder %s95, %s96
      %p105 = scmp.eq.s32.totalorder %s22, 0
      %p106 = por %p104, %p105
      %p107 = scmp.ne.s32.totalorder %s95, %s96
      %p108 = scmp.eq.s32.totalorder %s23, 1
      %p109 = por %p107, %p108
      %p111 = scmp.ne.s32.totalorder %s96, %s110
      %p112 = scmp.eq.s32.totalorder %s23, 0
      %p113 = por %p111, %p112
      %s115 = sadd.s32 %s114, 1
      %p118 = scmp.eq.s32.totalorder %s17, 1
      %p119 = scmp.ne.s32.totalorder %s114, %s116
      %p120 = scmp.eq.s32.totalorder %s17, 0
      %p121 = por %p119, %p120
      %p122 = scmp.ne.s32.totalorder %s114, %s116
      %p123 = scmp.eq.s32.totalorder %s22, 1
      %p124 = por %p122, %p123
      %p125 = scmp.ne.s32.totalorder %s116, %s117
      %p126 = scmp.eq.s32.totalorder %s22, 0
      %p127 = por %p125, %p126
      %p128 = scmp.ne.s32.totalorder %s116, %s117
      %p129 = scmp.eq.s32.totalorder %s23, 1
      %p130 = por %p128, %p129
      %p132 = scmp.ne.s32.totalorder %s117, %s131
      %p133 = scmp.eq.s32.totalorder %s23, 0
      %p134 = por %p132, %p133
      %s136 = sadd.s32 %s135, 1
      %p139 = scmp.eq.s32.totalorder %s17, 1
      %p140 = scmp.ne.s32.totalorder %s135, %s137
      %p141 = scmp.eq.s32.totalorder %s17, 0
      %p142 = por %p140, %p141
      %p143 = scmp.ne.s32.totalorder %s135, %s137
      %p144 = scmp.eq.s32.totalorder %s22, 1
      %p145 = por %p143, %p144
      %p146 = scmp.ne.s32.totalorder %s137, %s138
      %p147 = scmp.eq.s32.totalorder %s22, 0
      %p148 = por %p146, %p147
      %p149 = scmp.ne.s32.totalorder %s137, %s138
      %p150 = scmp.eq.s32.totalorder %s23, 1
      %p151 = por %p149, %p150
      %p153 = scmp.ne.s32.totalorder %s138, %s152
      %p154 = scmp.eq.s32.totalorder %s23, 0
      %p155 = por %p153, %p154
      %s157 = sadd.s32 %s156, 1
      %p160 = scmp.eq.s32.totalorder %s17, 1
      %p161 = scmp.ne.s32.totalorder %s156, %s158
      %p162 = scmp.eq.s32.totalorder %s17, 0
      %p163 = por %p161, %p162
      %p164 = scmp.ne.s32.totalorder %s156, %s158
      %p165 = scmp.eq.s32.totalorder %s22, 1
      %p166 = por %p164, %p165
      %p167 = scmp.ne.s32.totalorder %s158, %s159
      %p168 = scmp.eq.s32.totalorder %s22, 0
      %p169 = por %p167, %p168
      %p170 = scmp.ne.s32.totalorder %s158, %s159
      %p171 = scmp.eq.s32.totalorder %s23, 1
      %p172 = por %p170, %p171
      %p174 = scmp.ne.s32.totalorder %s159, %s173
      %p175 = scmp.eq.s32.totalorder %s23, 0
      %p176 = por %p174, %p175
      %s177 = ssub.s32 %s17, %s24
      %p178 = scmp.eq.s32.totalorder %s177, 0
      %s180 = sadd.s32 %s179, 1
      %s181 = scalar_select %p178, %s179, %s180
      %p184 = pneg %p178
      %p185 = scmp.eq.s32.totalorder %s17, 1
      %p186 = por %p184, %p185
      %p187 = scmp.ne.s32.totalorder %s179, %s182
      %p188 = scmp.eq.s32.totalorder %s17, 0
      %p189 = por %p187, %p188
      %p190 = scmp.ne.s32.totalorder %s179, %s182
      %p191 = scmp.eq.s32.totalorder %s22, 1
      %p192 = por %p190, %p191
      %p193 = scmp.ne.s32.totalorder %s182, %s183
      %p194 = scmp.eq.s32.totalorder %s22, 0
      %p195 = por %p193, %p194
      %p196 = scmp.ne.s32.totalorder %s182, %s183
      %p197 = scmp.eq.s32.totalorder %s23, 1
      %p198 = por %p196, %p197
      %p200 = scmp.ne.s32.totalorder %s183, %s199
      %p201 = scmp.eq.s32.totalorder %s23, 0
      %p202 = por %p200, %p201
      %p203 = scmp.le.s32.totalorder 1, %s17
      %p204 = scmp.lt.s32.totalorder %s17, 3
      %p205 = pnand %p203, %p204
      %p206 = pneg %p205
      // Predicated region
      $region9: #{tpu_custom_call.1} parent=5 // pred_check
        _
      $region10: #{tpu_custom_call.1} parent=5 // pred_check_branch
        %208 = sbr.rel (%p205) target = $region12
      $region11: #{tpu_custom_call.1} parent=5 // pred_region
        %s209 = ssub.s32 %s17, 1
        // Predicated region
        $region13: #{tpu_custom_call.1} parent=11 // pred_check
          %p210 = pneg %p64
        $region14: #{tpu_custom_call.1} parent=11 // pred_check_branch
          %212 = sbr.rel (%p210) target = $region16
        $region15: #{tpu_custom_call.1} parent=11 // pred_region
          _
        $region16: #{tpu_custom_call.1} parent=11 // pred_fallthru
          _
        // Predicated region
        $region17: #{tpu_custom_call.1} parent=11 // pred_check
          %p213 = pneg %p85
        $region18: #{tpu_custom_call.1} parent=11 // pred_check_branch
          %215 = sbr.rel (%p213) target = $region20
        $region19: #{tpu_custom_call.1} parent=11 // pred_region
          _
        $region20: #{tpu_custom_call.1} parent=11 // pred_fallthru
          _
        // Predicated region
        $region21: #{tpu_custom_call.1} parent=11 // pred_check
          %p216 = pneg %p106
        $region22: #{tpu_custom_call.1} parent=11 // pred_check_branch
          %218 = sbr.rel (%p216) target = $region24
        $region23: #{tpu_custom_call.1} parent=11 // pred_region
          _
        $region24: #{tpu_custom_call.1} parent=11 // pred_fallthru
          _
        // Predicated region
        $region25: #{tpu_custom_call.1} parent=11 // pred_check
          %p219 = pneg %p127
        $region26: #{tpu_custom_call.1} parent=11 // pred_check_branch
          %221 = sbr.rel (%p219) target = $region28
        $region27: #{tpu_custom_call.1} parent=11 // pred_region
          %s223 = ssub.s32 18432, 18432
          %224 = vsyncadd [#allocation5], %s223
          %s225 = sshll.u32 [#allocation4], 4
          %s226 = int_to_ptr.vmem [resolvable:$true] %s225
          %231 = dma.hbm_to_vmem [thread:$0]  %s4, 18432, %s226, [#allocation5], 128, 128, 8
        $region28: #{tpu_custom_call.1} parent=11 // pred_fallthru
          _
        // Predicated region
        $region29: #{tpu_custom_call.1} parent=11 // pred_check
          %p232 = pneg %p148
        $region30: #{tpu_custom_call.1} parent=11 // pred_check_branch
          %234 = sbr.rel (%p232) target = $region32
        $region31: #{tpu_custom_call.1} parent=11 // pred_region
          _
        $region32: #{tpu_custom_call.1} parent=11 // pred_fallthru
          _
        // Predicated region
        $region33: #{tpu_custom_call.1} parent=11 // pred_check
          %p235 = pneg %p169
        $region34: #{tpu_custom_call.1} parent=11 // pred_check_branch
          %237 = sbr.rel (%p235) target = $region36
        $region35: #{tpu_custom_call.1} parent=11 // pred_region
          _
        $region36: #{tpu_custom_call.1} parent=11 // pred_fallthru
          _
      $region12: #{tpu_custom_call.1} parent=5 // pred_fallthru
        _
      %p238 = scmp.lt.s32.totalorder %s17, 2
      // Predicated region
      $region37: #{tpu_custom_call.1} parent=5 // pred_check
        %p239 = pneg %p238
      $region38: #{tpu_custom_call.1} parent=5 // pred_check_branch
        %241 = sbr.rel (%p239) target = $region40
      $region39: #{tpu_custom_call.1} parent=5 // pred_region
        // Predicated region
        $region41: #{tpu_custom_call.1} parent=39 // pred_check
          %p242 = pneg %p37
        $region42: #{tpu_custom_call.1} parent=39 // pred_check_branch
          %244 = sbr.rel (%p242) target = $region44
        $region43: #{tpu_custom_call.1} parent=39 // pred_region
          %p245 = scmp.lt.s32.totalorder %s17, 1
          %s246 = scalar_select %p245, %s17, 1
          %s247 = smul.addr %s246, 54
          %s248 = smul.addr %s247, 8
          %s249 = scalar_lea.vmem %s0, %s248
        $region44: #{tpu_custom_call.1} parent=39 // pred_fallthru
          _
      $region40: #{tpu_custom_call.1} parent=5 // pred_fallthru
        _
      %p250 = scmp.le.s32.totalorder 1, %s17
      %p251 = scmp.lt.s32.totalorder %s17, 3
      %p252 = pnand %p250, %p251
      %p253 = pneg %p252
      // Predicated region
      $region45: #{tpu_custom_call.1} parent=5 // pred_check
        _
      $region46: #{tpu_custom_call.1} parent=5 // pred_check_branch
        %255 = sbr.rel (%p252) target = $region48
      $region47: #{tpu_custom_call.1} parent=5 // pred_region
        %s256 = ssub.s32 %s17, 1
        // Predicated region
        $region49: #{tpu_custom_call.1} parent=47 // pred_check
          %p257 = pneg %p127
        $region50: #{tpu_custom_call.1} parent=47 // pred_check_branch
          %259 = sbr.rel (%p257) target = $region52
        $region51: #{tpu_custom_call.1} parent=47 // pred_region
          %260 = dma.done [#allocation5], 18432
        $region52: #{tpu_custom_call.1} parent=47 // pred_fallthru
          _
        %p261 = scmp.lt.s32.totalorder %s22, 1
        %s262 = scalar_select %p261, %s22, 1
        %s263 = smul.addr %s262, 54
        %s264 = smul.addr %s263, 8
        %s265 = scalar_lea.vmem %s0, %s264
        %p266 = pneg %p43
        %p267 = pneg %p40
        %p268 = pneg %p64
        %p269 = pneg %p61
        %p270 = pneg %p85
        %p271 = pneg %p82
        %p272 = pneg %p106
        %p273 = pneg %p103
        %p274 = pneg %p127
        %p275 = pneg %p124
        %p276 = pneg %p148
        %p277 = pneg %p145
        %p278 = pneg %p169
        %p279 = pneg %p166
        %p280 = pneg %p195
        %p281 = pneg %p192
        %s282 = sand.u32 %s182, 1
        %s283 = scalar_lea.sflag [#allocation6], %s282
        %s284 = sand.u32 %s182, 1
        %s285 = smul.addr %s284, 256
        %s286 = scalar_lea.vmem [#allocation7], %s285
        %p287 = scmp.lt.s32.totalorder %s22, 1
        %s288 = scalar_select %p287, %s22, 1
        %s289 = smul.addr %s288, 54
        %s290 = smul.addr %s289, 8
        %s291 = scalar_lea.vmem %s0, %s290
        %292 = vst [vmem:[#allocation2] sm:$0xff] 0.0
        %293 = vst [vmem:[#allocation2 + $0x8] sm:$0xff] 0.0
        %294 = vst [vmem:[#allocation2 + $0x10] sm:$0x3] 0.0
        %s295 = scalar_lea.vmem [#allocation2], 408
        %296 = vst [vmem:[%s295] sm:$0xff] 0.0
        %297 = vst [vmem:[%s295 + $0x8] sm:$0xff] 0.0
        %298 = vst [vmem:[%s295 + $0x10] sm:$0x3] 0.0
        %299 = vst [vmem:[#allocation2] sm:$0x1] 0.0
        %300 = vst [vmem:[#allocation2 + $0x18] sm:$0x1] 0.0
        %301 = vst [vmem:[#allocation2 + $0x30] sm:$0x1] 0.0
        %302 = vst [vmem:[#allocation2 + $0x48] sm:$0x1] 0.0
        %303 = vst [vmem:[#allocation2 + $0x60] sm:$0x1] 0.0
        %304 = vst [vmem:[#allocation2 + $0x78] sm:$0x1] 0.0
        %305 = vst [vmem:[#allocation2 + $0x90] sm:$0x1] 0.0
        %306 = vst [vmem:[#allocation2 + $0xa8] sm:$0x1] 0.0
        %307 = vst [vmem:[#allocation2 + $0xc0] sm:$0x1] 0.0
        %308 = vst [vmem:[#allocation2 + $0xd8] sm:$0x1] 0.0
        %309 = vst [vmem:[#allocation2 + $0xf0] sm:$0x1] 0.0
        %310 = vst [vmem:[#allocation2 + $0x108] sm:$0x1] 0.0
        %311 = vst [vmem:[#allocation2 + $0x120] sm:$0x1] 0.0
        %312 = vst [vmem:[#allocation2 + $0x138] sm:$0x1] 0.0
        %313 = vst [vmem:[#allocation2 + $0x150] sm:$0x1] 0.0
        %314 = vst [vmem:[#allocation2 + $0x168] sm:$0x1] 0.0
        %315 = vst [vmem:[#allocation2 + $0x180] sm:$0x1] 0.0
        %316 = vst [vmem:[#allocation2 + $0x198] sm:$0x1] 0.0
        %317 = vst [vmem:[#allocation2 + $0x11] sm:$0x1] 0.0
        %318 = vst [vmem:[#allocation2 + $0x29] sm:$0x1] 0.0
        %319 = vst [vmem:[#allocation2 + $0x41] sm:$0x1] 0.0
        %320 = vst [vmem:[#allocation2 + $0x59] sm:$0x1] 0.0
        %321 = vst [vmem:[#allocation2 + $0x71] sm:$0x1] 0.0
        %322 = vst [vmem:[#allocation2 + $0x89] sm:$0x1] 0.0
        %323 = vst [vmem:[#allocation2 + $0xa1] sm:$0x1] 0.0
        %324 = vst [vmem:[#allocation2 + $0xb9] sm:$0x1] 0.0
        %325 = vst [vmem:[#allocation2 + $0xd1] sm:$0x1] 0.0
        %326 = vst [vmem:[#allocation2 + $0xe9] sm:$0x1] 0.0
        %327 = vst [vmem:[#allocation2 + $0x101] sm:$0x1] 0.0
        %328 = vst [vmem:[#allocation2 + $0x119] sm:$0x1] 0.0
        %329 = vst [vmem:[#allocation2 + $0x131] sm:$0x1] 0.0
        %330 = vst [vmem:[#allocation2 + $0x149] sm:$0x1] 0.0
        %331 = vst [vmem:[#allocation2 + $0x161] sm:$0x1] 0.0
        %332 = vst [vmem:[#allocation2 + $0x179] sm:$0x1] 0.0
        %333 = vst [vmem:[#allocation2 + $0x191] sm:$0x1] 0.0
        %334 = vst [vmem:[#allocation2 + $0x1a9] sm:$0x1] 0.0
        %v335 = vld [vmem:[%s291] sm:$0xff]
        %v336 = vld [vmem:[%s291 + $0x8] sm:$0xff]
        %v337 = vld [vmem:[%s291 + $0x18] sm:$0xff]
        %v338 = vld [vmem:[%s291 + $0x20] sm:$0xff]
        %v339 = vld [vmem:[%s291 + $0x30] sm:$0xff]
        %v340 = vld [vmem:[%s291 + $0x38] sm:$0xff]
        %v341 = vld [vmem:[%s291 + $0x48] sm:$0xff]
        %v342 = vld [vmem:[%s291 + $0x50] sm:$0xff]
        %v343 = vld [vmem:[%s291 + $0x60] sm:$0xff]
        %v344 = vld [vmem:[%s291 + $0x68] sm:$0xff]
        %v345 = vld [vmem:[%s291 + $0x78] sm:$0xff]
        %v346 = vld [vmem:[%s291 + $0x80] sm:$0xff]
        %v347 = vld [vmem:[%s291 + $0x90] sm:$0xff]
        %v348 = vld [vmem:[%s291 + $0x98] sm:$0xff]
        %v349 = vld [vmem:[%s291 + $0xa8] sm:$0xff]
        %v350 = vld [vmem:[%s291 + $0xb0] sm:$0xff]
        %v351 = vld [vmem:[%s291 + $0xc0] sm:$0xff]
        %v352 = vld [vmem:[%s291 + $0xc8] sm:$0xff]
        %v353 = vld [vmem:[%s291 + $0xd8] sm:$0xff]
        %v354 = vld [vmem:[%s291 + $0xe0] sm:$0xff]
        %v355 = vld [vmem:[%s291 + $0xf0] sm:$0xff]
        %v356 = vld [vmem:[%s291 + $0xf8] sm:$0xff]
        %v357 = vld [vmem:[%s291 + $0x108] sm:$0xff]
        %v358 = vld [vmem:[%s291 + $0x110] sm:$0xff]
        %v359 = vld [vmem:[%s291 + $0x120] sm:$0xff]
        %v360 = vld [vmem:[%s291 + $0x128] sm:$0xff]
        %v361 = vld [vmem:[%s291 + $0x138] sm:$0xff]
        %v362 = vld [vmem:[%s291 + $0x140] sm:$0xff]
        %v363 = vld [vmem:[%s291 + $0x150] sm:$0xff]
        %v364 = vld [vmem:[%s291 + $0x158] sm:$0xff]
        %v365 = vld [vmem:[%s291 + $0x168] sm:$0xff]
        %v366 = vld [vmem:[%s291 + $0x170] sm:$0xff]
        %v367 = vld [vmem:[%s1] sm:$0xff]
        %v368 = vld [vmem:[%s1 + $0x8] sm:$0xff]
        %v369 = vld [vmem:[%s1 + $0x10] sm:$0xff]
        %v370 = vld [vmem:[%s1 + $0x18] sm:$0xff]
        %v371 = vld [vmem:[%s1 + $0x20] sm:$0xff]
        %v372 = vld [vmem:[%s1 + $0x28] sm:$0xff]
        %v373 = vld [vmem:[%s1 + $0x30] sm:$0xff]
        %v374 = vld [vmem:[%s1 + $0x38] sm:$0xff]
        %v375 = vld [vmem:[%s1 + $0x40] sm:$0xff]
        %v376 = vld [vmem:[%s1 + $0x48] sm:$0xff]
        %v377 = vld [vmem:[%s1 + $0x50] sm:$0xff]
        %v378 = vld [vmem:[%s1 + $0x58] sm:$0xff]
        %v379 = vld [vmem:[%s1 + $0x60] sm:$0xff]
        %v380 = vld [vmem:[%s1 + $0x68] sm:$0xff]
        %v381 = vld [vmem:[%s1 + $0x70] sm:$0xff]
        %v382 = vld [vmem:[%s1 + $0x78] sm:$0xff]
        %383 = vmatprep.subr.mxu0 0.0
        %384 = vmatpush1.msra.mxu0 %v367
        %385 = vmatprep.subr.mxu0 0.0
        %386 = vmatpush1.msra.mxu0 %v368
        %387 = vmatprep.subr.mxu0 0.0
        %388 = vmatpush1.msra.mxu0 %v369
        %389 = vmatprep.subr.mxu0 0.0
        %390 = vmatpush1.msra.mxu0 %v370
        %391 = vmatprep.subr.mxu0 0.0
        %392 = vmatpush1.msra.mxu0 %v371
        %393 = vmatprep.subr.mxu0 0.0
        %394 = vmatpush1.msra.mxu0 %v372
        %395 = vmatprep.subr.mxu0 0.0
        %396 = vmatpush1.msra.mxu0 %v373
        %397 = vmatprep.subr.mxu0 0.0
        %398 = vmatpush1.msra.mxu0 %v374
        %399 = vmatprep.subr.mxu0 0.0
        %400 = vmatpush1.msra.mxu0 %v375
        %401 = vmatprep.subr.mxu0 0.0
        %402 = vmatpush1.msra.mxu0 %v376
        %403 = vmatprep.subr.mxu0 0.0
        %404 = vmatpush1.msra.mxu0 %v377
        %405 = vmatprep.subr.mxu0 0.0
        %406 = vmatpush1.msra.mxu0 %v378
        %407 = vmatprep.subr.mxu0 0.0
        %408 = vmatpush1.msra.mxu0 %v379
        %409 = vmatprep.subr.mxu0 0.0
        %410 = vmatpush1.msra.mxu0 %v380
        %411 = vmatprep.subr.mxu0 0.0
        %412 = vmatpush1.msra.mxu0 %v381
        %413 = vmatprep.subr.mxu0 0.0
        %414 = vmatpush1.msra.mxu0 %v382
        %415 = vmatprep.subr.mxu0 0.0
        %416 = vmatpush1.msra.mxu0 0.0
        %417 = vmatprep.subr.mxu0 0.0
        %418 = vmatpush1.msra.mxu0 0.0
        %419 = vmatprep.subr.mxu0 0.0
        %420 = vmatpush1.msra.mxu0 0.0
        %421 = vmatprep.subr.mxu0 0.0
        %422 = vmatpush1.msra.mxu0 0.0
        %423 = vmatprep.subr.mxu0 0.0
        %424 = vmatpush1.msra.mxu0 0.0
        %425 = vmatprep.subr.mxu0 0.0
        %426 = vmatpush1.msra.mxu0 0.0
        %427 = vmatprep.subr.mxu0 0.0
        %428 = vmatpush1.msra.mxu0 0.0
        %429 = vmatprep.subr.mxu0 0.0
        %430 = vmatpush1.msra.mxu0 0.0
        %431 = vmatprep.subr.mxu0 0.0
        %432 = vmatpush1.msra.mxu0 0.0
        %433 = vmatprep.subr.mxu0 0.0
        %434 = vmatpush1.msra.mxu0 0.0
        %435 = vmatprep.subr.mxu0 0.0
        %436 = vmatpush1.msra.mxu0 0.0
        %437 = vmatprep.subr.mxu0 0.0
        %438 = vmatpush1.msra.mxu0 0.0
        %439 = vmatprep.subr.mxu0 0.0
        %440 = vmatpush1.msra.mxu0 0.0
        %441 = vmatprep.subr.mxu0 0.0
        %442 = vmatpush1.msra.mxu0 0.0
        %443 = vmatprep.subr.mxu0 0.0
        %444 = vmatpush1.msra.mxu0 0.0
        %445 = vmatprep.subr.mxu0 0.0
        %446 = vmatpush1.msra.mxu0 0.0
        %447 = vmatprep.mubr.f32.mxu0 0.0
        %448 = vmatmul.mubr.f32.gmra.mrb[0].mxu0 %v335
        %v449 = vpop.f32.mrb[0].mxu0
        %v450 = vadd.f32 0.0, %v449
        %v451 = vpop.f32.mrb[0].mxu0
        %452 = vmatprep.mubr.f32.mxu0 0.0
        %453 = vmatmul.mubr.f32.gmra.mrb[0].mxu0 %v336
        %v454 = vpop.f32.mrb[0].mxu0
        %v455 = vadd.f32 0.0, %v454
        %v456 = vpop.f32.mrb[0].mxu0
        %457 = vmatprep.mubr.f32.mxu0 0.0
        %458 = vmatmul.mubr.f32.gmra.mrb[0].mxu0 %v337
        %v459 = vpop.f32.mrb[0].mxu0
        %v460 = vadd.f32 0.0, %v459
        %v461 = vpop.f32.mrb[0].mxu0
        %462 = vmatprep.mubr.f32.mxu0 0.0
        %463 = vmatmul.mubr.f32.gmra.mrb[0].mxu0 %v338
        %v464 = vpop.f32.mrb[0].mxu0
        %v465 = vadd.f32 0.0, %v464
        %v466 = vpop.f32.mrb[0].mxu0
        %467 = vmatprep.mubr.f32.mxu0 0.0
        %468 = vmatmul.mubr.f32.gmra.mrb[0].mxu0 %v339
        %v469 = vpop.f32.mrb[0].mxu0
        %v470 = vadd.f32 0.0, %v469
        %v471 = vpop.f32.mrb[0].mxu0
        %472 = vmatprep.mubr.f32.mxu0 0.0
        %473 = vmatmul.mubr.f32.gmra.mrb[0].mxu0 %v340
        %v474 = vpop.f32.mrb[0].mxu0
        %v475 = vadd.f32 0.0, %v474
        %v476 = vpop.f32.mrb[0].mxu0
        %477 = vmatprep.mubr.f32.mxu0 0.0
        %478 = vmatmul.mubr.f32.gmra.mrb[0].mxu0 %v341
        %v479 = vpop.f32.mrb[0].mxu0
        %v480 = vadd.f32 0.0, %v479
        %v481 = vpop.f32.mrb[0].mxu0
        %482 = vmatprep.mubr.f32.mxu0 0.0
        %483 = vmatmul.mubr.f32.gmra.mrb[0].mxu0 %v342
        %v484 = vpop.f32.mrb[0].mxu0
        %v485 = vadd.f32 0.0, %v484
        %v486 = vpop.f32.mrb[0].mxu0
        %487 = vmatprep.mubr.f32.mxu0 0.0
        %488 = vmatmul.mubr.f32.gmra.mrb[0].mxu0 %v343
        %v489 = vpop.f32.mrb[0].mxu0
        %v490 = vadd.f32 0.0, %v489
        %v491 = vpop.f32.mrb[0].mxu0
        %492 = vmatprep.mubr.f32.mxu0 0.0
        %493 = vmatmul.mubr.f32.gmra.mrb[0].mxu0 %v344
        %v494 = vpop.f32.mrb[0].mxu0
        %v495 = vadd.f32 0.0, %v494
        %v496 = vpop.f32.mrb[0].mxu0
        %497 = vmatprep.mubr.f32.mxu0 0.0
        %498 = vmatmul.mubr.f32.gmra.mrb[0].mxu0 %v345
        %v499 = vpop.f32.mrb[0].mxu0
        %v500 = vadd.f32 0.0, %v499
        %v501 = vpop.f32.mrb[0].mxu0
        %502 = vmatprep.mubr.f32.mxu0 0.0
        %503 = vmatmul.mubr.f32.gmra.mrb[0].mxu0 %v346
        %v504 = vpop.f32.mrb[0].mxu0
        %v505 = vadd.f32 0.0, %v504
        %v506 = vpop.f32.mrb[0].mxu0
        %507 = vmatprep.mubr.f32.mxu0 0.0
        %508 = vmatmul.mubr.f32.gmra.mrb[0].mxu0 %v347
        %v509 = vpop.f32.mrb[0].mxu0
        %v510 = vadd.f32 0.0, %v509
        %v511 = vpop.f32.mrb[0].mxu0
        %512 = vmatprep.mubr.f32.mxu0 0.0
        %513 = vmatmul.mubr.f32.gmra.mrb[0].mxu0 %v348
        %v514 = vpop.f32.mrb[0].mxu0
        %v515 = vadd.f32 0.0, %v514
        %v516 = vpop.f32.mrb[0].mxu0
        %517 = vmatprep.mubr.f32.mxu0 0.0
        %518 = vmatmul.mubr.f32.gmra.mrb[0].mxu0 %v349
        %v519 = vpop.f32.mrb[0].mxu0
        %v520 = vadd.f32 0.0, %v519
        %v521 = vpop.f32.mrb[0].mxu0
        %522 = vmatprep.mubr.f32.mxu0 0.0
        %523 = vmatmul.mubr.f32.gmra.mrb[0].mxu0 %v350
        %v524 = vpop.f32.mrb[0].mxu0
        %v525 = vadd.f32 0.0, %v524
        %v526 = vpop.f32.mrb[0].mxu0
        %527 = vmatprep.mubr.f32.mxu0 0.0
        %528 = vmatmul.mubr.f32.gmra.mrb[0].mxu0 %v351
        %v529 = vpop.f32.mrb[0].mxu0
        %v530 = vadd.f32 0.0, %v529
        %v531 = vpop.f32.mrb[0].mxu0
        %532 = vmatprep.mubr.f32.mxu0 0.0
        %533 = vmatmul.mubr.f32.gmra.mrb[0].mxu0 %v352
        %v534 = vpop.f32.mrb[0].mxu0
        %v535 = vadd.f32 0.0, %v534
        %v536 = vpop.f32.mrb[0].mxu0
        %537 = vmatprep.mubr.f32.mxu0 0.0
        %538 = vmatmul.mubr.f32.gmra.mrb[0].mxu0 %v353
        %v539 = vpop.f32.mrb[0].mxu0
        %v540 = vadd.f32 0.0, %v539
        %v541 = vpop.f32.mrb[0].mxu0
        %542 = vmatprep.mubr.f32.mxu0 0.0
        %543 = vmatmul.mubr.f32.gmra.mrb[0].mxu0 %v354
        %v544 = vpop.f32.mrb[0].mxu0
        %v545 = vadd.f32 0.0, %v544
        %v546 = vpop.f32.mrb[0].mxu0
        %547 = vmatprep.mubr.f32.mxu0 0.0
        %548 = vmatmul.mubr.f32.gmra.mrb[0].mxu0 %v355
        %v549 = vpop.f32.mrb[0].mxu0
        %v550 = vadd.f32 0.0, %v549
        %v551 = vpop.f32.mrb[0].mxu0
        %552 = vmatprep.mubr.f32.mxu0 0.0
        %553 = vmatmul.mubr.f32.gmra.mrb[0].mxu0 %v356
        %v554 = vpop.f32.mrb[0].mxu0
        %v555 = vadd.f32 0.0, %v554
        %v556 = vpop.f32.mrb[0].mxu0
        %557 = vmatprep.mubr.f32.mxu0 0.0
        %558 = vmatmul.mubr.f32.gmra.mrb[0].mxu0 %v357
        %v559 = vpop.f32.mrb[0].mxu0
        %v560 = vadd.f32 0.0, %v559
        %v561 = vpop.f32.mrb[0].mxu0
        %562 = vmatprep.mubr.f32.mxu0 0.0
        %563 = vmatmul.mubr.f32.gmra.mrb[0].mxu0 %v358
        %v564 = vpop.f32.mrb[0].mxu0
        %v565 = vadd.f32 0.0, %v564
        %v566 = vpop.f32.mrb[0].mxu0
        %567 = vmatprep.mubr.f32.mxu0 0.0
        %568 = vmatmul.mubr.f32.gmra.mrb[0].mxu0 %v359
        %v569 = vpop.f32.mrb[0].mxu0
        %v570 = vadd.f32 0.0, %v569
        %v571 = vpop.f32.mrb[0].mxu0
        %572 = vmatprep.mubr.f32.mxu0 0.0
        %573 = vmatmul.mubr.f32.gmra.mrb[0].mxu0 %v360
        %v574 = vpop.f32.mrb[0].mxu0
        %v575 = vadd.f32 0.0, %v574
        %v576 = vpop.f32.mrb[0].mxu0
        %577 = vmatprep.mubr.f32.mxu0 0.0
        %578 = vmatmul.mubr.f32.gmra.mrb[0].mxu0 %v361
        %v579 = vpop.f32.mrb[0].mxu0
        %v580 = vadd.f32 0.0, %v579
        %v581 = vpop.f32.mrb[0].mxu0
        %582 = vmatprep.mubr.f32.mxu0 0.0
        %583 = vmatmul.mubr.f32.gmra.mrb[0].mxu0 %v362
        %v584 = vpop.f32.mrb[0].mxu0
        %v585 = vadd.f32 0.0, %v584
        %v586 = vpop.f32.mrb[0].mxu0
        %587 = vmatprep.mubr.f32.mxu0 0.0
        %588 = vmatmul.mubr.f32.gmra.mrb[0].mxu0 %v363
        %v589 = vpop.f32.mrb[0].mxu0
        %v590 = vadd.f32 0.0, %v589
        %v591 = vpop.f32.mrb[0].mxu0
        %592 = vmatprep.mubr.f32.mxu0 0.0
        %593 = vmatmul.mubr.f32.gmra.mrb[0].mxu0 %v364
        %v594 = vpop.f32.mrb[0].mxu0
        %v595 = vadd.f32 0.0, %v594
        %v596 = vpop.f32.mrb[0].mxu0
        %597 = vmatprep.mubr.f32.mxu0 0.0
        %598 = vmatmul.mubr.f32.gmra.mrb[0].mxu0 %v365
        %v599 = vpop.f32.mrb[0].mxu0
        %v600 = vadd.f32 0.0, %v599
        %v601 = vpop.f32.mrb[0].mxu0
        %602 = vmatprep.mubr.f32.mxu0 0.0
        %603 = vmatmul.mubr.f32.gmra.mrb[0].mxu0 %v366
        %v604 = vpop.f32.mrb[0].mxu0
        %v605 = vadd.f32 0.0, %v604
        %v606 = vpop.f32.mrb[0].mxu0
        %607 = vdwg.mxu0
        %608 = vst [vmem:[#allocation3] sm:$0xff] %v450
        %609 = vst [vmem:[#allocation3 + $0x8] sm:$0xff] %v455
        %610 = vst [vmem:[#allocation3 + $0x10] sm:$0xff] %v460
        %611 = vst [vmem:[#allocation3 + $0x18] sm:$0xff] %v465
        %612 = vst [vmem:[#allocation3 + $0x20] sm:$0xff] %v470
        %613 = vst [vmem:[#allocation3 + $0x28] sm:$0xff] %v475
        %614 = vst [vmem:[#allocation3 + $0x30] sm:$0xff] %v480
        %615 = vst [vmem:[#allocation3 + $0x38] sm:$0xff] %v485
        %616 = vst [vmem:[#allocation3 + $0x40] sm:$0xff] %v490
        %617 = vst [vmem:[#allocation3 + $0x48] sm:$0xff] %v495
        %618 = vst [vmem:[#allocation3 + $0x50] sm:$0xff] %v500
        %619 = vst [vmem:[#allocation3 + $0x58] sm:$0xff] %v505
        %620 = vst [vmem:[#allocation3 + $0x60] sm:$0xff] %v510
        %621 = vst [vmem:[#allocation3 + $0x68] sm:$0xff] %v515
        %622 = vst [vmem:[#allocation3 + $0x70] sm:$0xff] %v520
        %623 = vst [vmem:[#allocation3 + $0x78] sm:$0xff] %v525
        %624 = vst [vmem:[#allocation3 + $0x80] sm:$0xff] %v530
        %625 = vst [vmem:[#allocation3 + $0x88] sm:$0xff] %v535
        %626 = vst [vmem:[#allocation3 + $0x90] sm:$0xff] %v540
        %627 = vst [vmem:[#allocation3 + $0x98] sm:$0xff] %v545
        %628 = vst [vmem:[#allocation3 + $0xa0] sm:$0xff] %v550
        %629 = vst [vmem:[#allocation3 + $0xa8] sm:$0xff] %v555
        %630 = vst [vmem:[#allocation3 + $0xb0] sm:$0xff] %v560
        %631 = vst [vmem:[#allocation3 + $0xb8] sm:$0xff] %v565
        %632 = vst [vmem:[#allocation3 + $0xc0] sm:$0xff] %v570
        %633 = vst [vmem:[#allocation3 + $0xc8] sm:$0xff] %v575
        %634 = vst [vmem:[#allocation3 + $0xd0] sm:$0xff] %v580
        %635 = vst [vmem:[#allocation3 + $0xd8] sm:$0xff] %v585
        %636 = vst [vmem:[#allocation3 + $0xe0] sm:$0xff] %v590
        %637 = vst [vmem:[#allocation3 + $0xe8] sm:$0xff] %v595
        %638 = vst [vmem:[#allocation3 + $0xf0] sm:$0xff] %v600
        %639 = vst [vmem:[#allocation3 + $0xf8] sm:$0xff] %v605
        %v640 = vld [vmem:[%s291 + $0x1] sm:$0xff]
        %v641 = vld [vmem:[%s291 + $0x9] sm:$0xff]
        %v642 = vld [vmem:[%s291 + $0x19] sm:$0xff]
        %v643 = vld [vmem:[%s291 + $0x21] sm:$0xff]
        %v644 = vld [vmem:[%s291 + $0x31] sm:$0xff]
        %v645 = vld [vmem:[%s291 + $0x39] sm:$0xff]
        %v646 = vld [vmem:[%s291 + $0x49] sm:$0xff]
        %v647 = vld [vmem:[%s291 + $0x51] sm:$0xff]
        %v648 = vld [vmem:[%s291 + $0x61] sm:$0xff]
        %v649 = vld [vmem:[%s291 + $0x69] sm:$0xff]
        %v650 = vld [vmem:[%s291 + $0x79] sm:$0xff]
        %v651 = vld [vmem:[%s291 + $0x81] sm:$0xff]
        %v652 = vld [vmem:[%s291 + $0x91] sm:$0xff]
        %v653 = vld [vmem:[%s291 + $0x99] sm:$0xff]
        %v654 = vld [vmem:[%s291 + $0xa9] sm:$0xff]
        %v655 = vld [vmem:[%s291 + $0xb1] sm:$0xff]
        %v656 = vld [vmem:[%s291 + $0xc1] sm:$0xff]
        %v657 = vld [vmem:[%s291 + $0xc9] sm:$0xff]
        %v658 = vld [vmem:[%s291 + $0xd9] sm:$0xff]
        %v659 = vld [vmem:[%s291 + $0xe1] sm:$0xff]
        %v660 = vld [vmem:[%s291 + $0xf1] sm:$0xff]
        %v661 = vld [vmem:[%s291 + $0xf9] sm:$0xff]
        %v662 = vld [vmem:[%s291 + $0x109] sm:$0xff]
        %v663 = vld [vmem:[%s291 + $0x111] sm:$0xff]
        %v664 = vld [vmem:[%s291 + $0x121] sm:$0xff]
        %v665 = vld [vmem:[%s291 + $0x129] sm:$0xff]
        %v666 = vld [vmem:[%s291 + $0x139] sm:$0xff]
        %v667 = vld [vmem:[%s291 + $0x141] sm:$0xff]
        %v668 = vld [vmem:[%s291 + $0x151] sm:$0xff]
        %v669 = vld [vmem:[%s291 + $0x159] sm:$0xff]
        %v670 = vld [vmem:[%s291 + $0x169] sm:$0xff]
        %v671 = vld [vmem:[%s291 + $0x171] sm:$0xff]
        %s672 = scalar_lea.vmem %s1, 128
        %v673 = vld [vmem:[%s672] sm:$0xff]
        %v674 = vld [vmem:[%s672 + $0x8] sm:$0xff]
        %v675 = vld [vmem:[%s672 + $0x10] sm:$0xff]
        %v676 = vld [vmem:[%s672 + $0x18] sm:$0xff]
        %v677 = vld [vmem:[%s672 + $0x20] sm:$0xff]
        %v678 = vld [vmem:[%s672 + $0x28] sm:$0xff]
        %v679 = vld [vmem:[%s672 + $0x30] sm:$0xff]
        %v680 = vld [vmem:[%s672 + $0x38] sm:$0xff]
        %v681 = vld [vmem:[%s672 + $0x40] sm:$0xff]
        %v682 = vld [vmem:[%s672 + $0x48] sm:$0xff]
        %v683 = vld [vmem:[%s672 + $0x50] sm:$0xff]
        %v684 = vld [vmem:[%s672 + $0x58] sm:$0xff]
        %v685 = vld [vmem:[%s672 + $0x60] sm:$0xff]
        %v686 = vld [vmem:[%s672 + $0x68] sm:$0xff]
        %v687 = vld [vmem:[%s672 + $0x70] sm:$0xff]
        %v688 = vld [vmem:[%s672 + $0x78] sm:$0xff]
        %689 = vmatprep.subr.mxu0 0.0
        %690 = vmatpush1.msra.mxu0 %v673
        %691 = vmatprep.subr.mxu0 0.0
        %692 = vmatpush1.msra.mxu0 %v674
        %693 = vmatprep.subr.mxu0 0.0
        %694 = vmatpush1.msra.mxu0 %v675
        %695 = vmatprep.subr.mxu0 0.0
        %696 = vmatpush1.msra.mxu0 %v676
        %697 = vmatprep.subr.mxu0 0.0
        %698 = vmatpush1.msra.mxu0 %v677
        %699 = vmatprep.subr.mxu0 0.0
        %700 = vmatpush1.msra.mxu0 %v678
        %701 = vmatprep.subr.mxu0 0.0
        %702 = vmatpush1.msra.mxu0 %v679
        %703 = vmatprep.subr.mxu0 0.0
        %704 = vmatpush1.msra.mxu0 %v680
        %705 = vmatprep.subr.mxu0 0.0
        %706 = vmatpush1.msra.mxu0 %v681
        %707 = vmatprep.subr.mxu0 0.0
        %708 = vmatpush1.msra.mxu0 %v682
        %709 = vmatprep.subr.mxu0 0.0
        %710 = vmatpush1.msra.mxu0 %v683
        %711 = vmatprep.subr.mxu0 0.0
        %712 = vmatpush1.msra.mxu0 %v684
        %713 = vmatprep.subr.mxu0 0.0
        %714 = vmatpush1.msra.mxu0 %v685
        %715 = vmatprep.subr.mxu0 0.0
        %716 = vmatpush1.msra.mxu0 %v686
        %717 = vmatprep.subr.mxu0 0.0
        %718 = vmatpush1.msra.mxu0 %v687
        %719 = vmatprep.subr.mxu0 0.0
        %720 = vmatpush1.msra.mxu0 %v688
        %721 = vmatprep.subr.mxu0 0.0
        %722 = vmatpush1.msra.mxu0 0.0
        %723 = vmatprep.subr.mxu0 0.0
        %724 = vmatpush1.msra.mxu0 0.0
        %725 = vmatprep.subr.mxu0 0.0
        %726 = vmatpush1.msra.mxu0 0.0
        %727 = vmatprep.subr.mxu0 0.0
        %728 = vmatpush1.msra.mxu0 0.0
        %729 = vmatprep.subr.mxu0 0.0
        %730 = vmatpush1.msra.mxu0 0.0
        %731 = vmatprep.subr.mxu0 0.0
        %732 = vmatpush1.msra.mxu0 0.0
        %733 = vmatprep.subr.mxu0 0.0
        %734 = vmatpush1.msra.mxu0 0.0
        %735 = vmatprep.subr.mxu0 0.0
        %736 = vmatpush1.msra.mxu0 0.0
        %737 = vmatprep.subr.mxu0 0.0
        %738 = vmatpush1.msra.mxu0 0.0
        %739 = vmatprep.subr.mxu0 0.0
        %740 = vmatpush1.msra.mxu0 0.0
        %741 = vmatprep.subr.mxu0 0.0
        %742 = vmatpush1.msra.mxu0 0.0
        %743 = vmatprep.subr.mxu0 0.0
        %744 = vmatpush1.msra.mxu0 0.0
        %745 = vmatprep.subr.mxu0 0.0
        %746 = vmatpush1.msra.mxu0 0.0
        %747 = vmatprep.subr.mxu0 0.0
        %748 = vmatpush1.msra.mxu0 0.0
        %749 = vmatprep.subr.mxu0 0.0
        %750 = vmatpush1.msra.mxu0 0.0
        %751 = vmatprep.subr.mxu0 0.0
        %752 = vmatpush1.msra.mxu0 0.0
        %753 = vmatprep.mubr.f32.mxu0 0.0
        %754 = vmatmul.mubr.f32.gmra.mrb[0].mxu0 %v640
        %v755 = vpop.f32.mrb[0].mxu0
        %v756 = vadd.f32 0.0, %v755
        %v757 = vpop.f32.mrb[0].mxu0
        %758 = vmatprep.mubr.f32.mxu0 0.0
        %759 = vmatmul.mubr.f32.gmra.mrb[0].mxu0 %v641
        %v760 = vpop.f32.mrb[0].mxu0
        %v761 = vadd.f32 0.0, %v760
        %v762 = vpop.f32.mrb[0].mxu0
        %763 = vmatprep.mubr.f32.mxu0 0.0
        %764 = vmatmul.mubr.f32.gmra.mrb[0].mxu0 %v642
        %v765 = vpop.f32.mrb[0].mxu0
        %v766 = vadd.f32 0.0, %v765
        %v767 = vpop.f32.mrb[0].mxu0
        %768 = vmatprep.mubr.f32.mxu0 0.0
        %769 = vmatmul.mubr.f32.gmra.mrb[0].mxu0 %v643
        %v770 = vpop.f32.mrb[0].mxu0
        %v771 = vadd.f32 0.0, %v770
        %v772 = vpop.f32.mrb[0].mxu0
        %773 = vmatprep.mubr.f32.mxu0 0.0
        %774 = vmatmul.mubr.f32.gmra.mrb[0].mxu0 %v644
        %v775 = vpop.f32.mrb[0].mxu0
        %v776 = vadd.f32 0.0, %v775
        %v777 = vpop.f32.mrb[0].mxu0
        %778 = vmatprep.mubr.f32.mxu0 0.0
        %779 = vmatmul.mubr.f32.gmra.mrb[0].mxu0 %v645
        %v780 = vpop.f32.mrb[0].mxu0
        %v781 = vadd.f32 0.0, %v780
        %v782 = vpop.f32.mrb[0].mxu0
        %783 = vmatprep.mubr.f32.mxu0 0.0
        %784 = vmatmul.mubr.f32.gmra.mrb[0].mxu0 %v646
        %v785 = vpop.f32.mrb[0].mxu0
        %v786 = vadd.f32 0.0, %v785
        %v787 = vpop.f32.mrb[0].mxu0
        %788 = vmatprep.mubr.f32.mxu0 0.0
        %789 = vmatmul.mubr.f32.gmra.mrb[0].mxu0 %v647
        %v790 = vpop.f32.mrb[0].mxu0
        %v791 = vadd.f32 0.0, %v790
        %v792 = vpop.f32.mrb[0].mxu0
        %793 = vmatprep.mubr.f32.mxu0 0.0
        %794 = vmatmul.mubr.f32.gmra.mrb[0].mxu0 %v648
        %v795 = vpop.f32.mrb[0].mxu0
        %v796 = vadd.f32 0.0, %v795
        %v797 = vpop.f32.mrb[0].mxu0
        %798 = vmatprep.mubr.f32.mxu0 0.0
        %799 = vmatmul.mubr.f32.gmra.mrb[0].mxu0 %v649
        %v800 = vpop.f32.mrb[0].mxu0
        %v801 = vadd.f32 0.0, %v800
        %v802 = vpop.f32.mrb[0].mxu0
        %803 = vmatprep.mubr.f32.mxu0 0.0
        %804 = vmatmul.mubr.f32.gmra.mrb[0].mxu0 %v650
        %v805 = vpop.f32.mrb[0].mxu0
        %v806 = vadd.f32 0.0, %v805
        %v807 = vpop.f32.mrb[0].mxu0
        %808 = vmatprep.mubr.f32.mxu0 0.0
        %809 = vmatmul.mubr.f32.gmra.mrb[0].mxu0 %v651
        %v810 = vpop.f32.mrb[0].mxu0
        %v811 = vadd.f32 0.0, %v810
        %v812 = vpop.f32.mrb[0].mxu0
        %813 = vmatprep.mubr.f32.mxu0 0.0
        %814 = vmatmul.mubr.f32.gmra.mrb[0].mxu0 %v652
        %v815 = vpop.f32.mrb[0].mxu0
        %v816 = vadd.f32 0.0, %v815
        %v817 = vpop.f32.mrb[0].mxu0
        %818 = vmatprep.mubr.f32.mxu0 0.0
        %819 = vmatmul.mubr.f32.gmra.mrb[0].mxu0 %v653
        %v820 = vpop.f32.mrb[0].mxu0
        %v821 = vadd.f32 0.0, %v820
        %v822 = vpop.f32.mrb[0].mxu0
        %823 = vmatprep.mubr.f32.mxu0 0.0
        %824 = vmatmul.mubr.f32.gmra.mrb[0].mxu0 %v654
        %v825 = vpop.f32.mrb[0].mxu0
        %v826 = vadd.f32 0.0, %v825
        %v827 = vpop.f32.mrb[0].mxu0
        %828 = vmatprep.mubr.f32.mxu0 0.0
        %829 = vmatmul.mubr.f32.gmra.mrb[0].mxu0 %v655
        %v830 = vpop.f32.mrb[0].mxu0
        %v831 = vadd.f32 0.0, %v830
        %v832 = vpop.f32.mrb[0].mxu0
        %833 = vmatprep.mubr.f32.mxu0 0.0
        %834 = vmatmul.mubr.f32.gmra.mrb[0].mxu0 %v656
        %v835 = vpop.f32.mrb[0].mxu0
        %v836 = vadd.f32 0.0, %v835
        %v837 = vpop.f32.mrb[0].mxu0
        %838 = vmatprep.mubr.f32.mxu0 0.0
        %839 = vmatmul.mubr.f32.gmra.mrb[0].mxu0 %v657
        %v840 = vpop.f32.mrb[0].mxu0
        %v841 = vadd.f32 0.0, %v840
        %v842 = vpop.f32.mrb[0].mxu0
        %843 = vmatprep.mubr.f32.mxu0 0.0
        %844 = vmatmul.mubr.f32.gmra.mrb[0].mxu0 %v658
        %v845 = vpop.f32.mrb[0].mxu0
        %v846 = vadd.f32 0.0, %v845
        %v847 = vpop.f32.mrb[0].mxu0
        %848 = vmatprep.mubr.f32.mxu0 0.0
        %849 = vmatmul.mubr.f32.gmra.mrb[0].mxu0 %v659
        %v850 = vpop.f32.mrb[0].mxu0
        %v851 = vadd.f32 0.0, %v850
        %v852 = vpop.f32.mrb[0].mxu0
        %853 = vmatprep.mubr.f32.mxu0 0.0
        %854 = vmatmul.mubr.f32.gmra.mrb[0].mxu0 %v660
        %v855 = vpop.f32.mrb[0].mxu0
        %v856 = vadd.f32 0.0, %v855
        %v857 = vpop.f32.mrb[0].mxu0
        %858 = vmatprep.mubr.f32.mxu0 0.0
        %859 = vmatmul.mubr.f32.gmra.mrb[0].mxu0 %v661
        %v860 = vpop.f32.mrb[0].mxu0
        %v861 = vadd.f32 0.0, %v860
        %v862 = vpop.f32.mrb[0].mxu0
        %863 = vmatprep.mubr.f32.mxu0 0.0
        %864 = vmatmul.mubr.f32.gmra.mrb[0].mxu0 %v662
        %v865 = vpop.f32.mrb[0].mxu0
        %v866 = vadd.f32 0.0, %v865
        %v867 = vpop.f32.mrb[0].mxu0
        %868 = vmatprep.mubr.f32.mxu0 0.0
        %869 = vmatmul.mubr.f32.gmra.mrb[0].mxu0 %v663
        %v870 = vpop.f32.mrb[0].mxu0
        %v871 = vadd.f32 0.0, %v870
        %v872 = vpop.f32.mrb[0].mxu0
        %873 = vmatprep.mubr.f32.mxu0 0.0
        %874 = vmatmul.mubr.f32.gmra.mrb[0].mxu0 %v664
        %v875 = vpop.f32.mrb[0].mxu0
        %v876 = vadd.f32 0.0, %v875
        %v877 = vpop.f32.mrb[0].mxu0
        %878 = vmatprep.mubr.f32.mxu0 0.0
        %879 = vmatmul.mubr.f32.gmra.mrb[0].mxu0 %v665
        %v880 = vpop.f32.mrb[0].mxu0
        %v881 = vadd.f32 0.0, %v880
        %v882 = vpop.f32.mrb[0].mxu0
        %883 = vmatprep.mubr.f32.mxu0 0.0
        %884 = vmatmul.mubr.f32.gmra.mrb[0].mxu0 %v666
        %v885 = vpop.f32.mrb[0].mxu0
        %v886 = vadd.f32 0.0, %v885
        %v887 = vpop.f32.mrb[0].mxu0
        %888 = vmatprep.mubr.f32.mxu0 0.0
        %889 = vmatmul.mubr.f32.gmra.mrb[0].mxu0 %v667
        %v890 = vpop.f32.mrb[0].mxu0
        %v891 = vadd.f32 0.0, %v890
        %v892 = vpop.f32.mrb[0].mxu0
        %893 = vmatprep.mubr.f32.mxu0 0.0
        %894 = vmatmul.mubr.f32.gmra.mrb[0].mxu0 %v668
        %v895 = vpop.f32.mrb[0].mxu0
        %v896 = vadd.f32 0.0, %v895
        %v897 = vpop.f32.mrb[0].mxu0
        %898 = vmatprep.mubr.f32.mxu0 0.0
        %899 = vmatmul.mubr.f32.gmra.mrb[0].mxu0 %v669
        %v900 = vpop.f32.mrb[0].mxu0
        %v901 = vadd.f32 0.0, %v900
        %v902 = vpop.f32.mrb[0].mxu0
        %903 = vmatprep.mubr.f32.mxu0 0.0
        %904 = vmatmul.mubr.f32.gmra.mrb[0].mxu0 %v670
        %v905 = vpop.f32.mrb[0].mxu0
        %v906 = vadd.f32 0.0, %v905
        %v907 = vpop.f32.mrb[0].mxu0
        %908 = vmatprep.mubr.f32.mxu0 0.0
        %909 = vmatmul.mubr.f32.gmra.mrb[0].mxu0 %v671
        %v910 = vpop.f32.mrb[0].mxu0
        %v911 = vadd.f32 0.0, %v910
        %v912 = vpop.f32.mrb[0].mxu0
        %913 = vdwg.mxu0
        %v914 = vld [vmem:[#allocation3] sm:$0xff]
        %v915 = vld [vmem:[#allocation3 + $0x8] sm:$0xff]
        %v916 = vld [vmem:[#allocation3 + $0x10] sm:$0xff]
        %v917 = vld [vmem:[#allocation3 + $0x18] sm:$0xff]
        %v918 = vld [vmem:[#allocation3 + $0x20] sm:$0xff]
        %v919 = vld [vmem:[#allocation3 + $0x28] sm:$0xff]
        %v920 = vld [vmem:[#allocation3 + $0x30] sm:$0xff]
        %v921 = vld [vmem:[#allocation3 + $0x38] sm:$0xff]
        %v922 = vld [vmem:[#allocation3 + $0x40] sm:$0xff]
        %v923 = vld [vmem:[#allocation3 + $0x48] sm:$0xff]
        %v924 = vld [vmem:[#allocation3 + $0x50] sm:$0xff]
        %v925 = vld [vmem:[#allocation3 + $0x58] sm:$0xff]
        %v926 = vld [vmem:[#allocation3 + $0x60] sm:$0xff]
        %v927 = vld [vmem:[#allocation3 + $0x68] sm:$0xff]
        %v928 = vld [vmem:[#allocation3 + $0x70] sm:$0xff]
        %v929 = vld [vmem:[#allocation3 + $0x78] sm:$0xff]
        %v930 = vld [vmem:[#allocation3 + $0x80] sm:$0xff]
        %v931 = vld [vmem:[#allocation3 + $0x88] sm:$0xff]
        %v932 = vld [vmem:[#allocation3 + $0x90] sm:$0xff]
        %v933 = vld [vmem:[#allocation3 + $0x98] sm:$0xff]
        %v934 = vld [vmem:[#allocation3 + $0xa0] sm:$0xff]
        %v935 = vld [vmem:[#allocation3 + $0xa8] sm:$0xff]
        %v936 = vld [vmem:[#allocation3 + $0xb0] sm:$0xff]
        %v937 = vld [vmem:[#allocation3 + $0xb8] sm:$0xff]
        %v938 = vld [vmem:[#allocation3 + $0xc0] sm:$0xff]
        %v939 = vld [vmem:[#allocation3 + $0xc8] sm:$0xff]
        %v940 = vld [vmem:[#allocation3 + $0xd0] sm:$0xff]
        %v941 = vld [vmem:[#allocation3 + $0xd8] sm:$0xff]
        %v942 = vld [vmem:[#allocation3 + $0xe0] sm:$0xff]
        %v943 = vld [vmem:[#allocation3 + $0xe8] sm:$0xff]
        %v944 = vld [vmem:[#allocation3 + $0xf0] sm:$0xff]
        %v945 = vld [vmem:[#allocation3 + $0xf8] sm:$0xff]
        %v946 = vadd.f32 %v914, %v756
        %v947 = vadd.f32 %v915, %v761
        %v948 = vadd.f32 %v916, %v766
        %v949 = vadd.f32 %v917, %v771
        %v950 = vadd.f32 %v918, %v776
        %v951 = vadd.f32 %v919, %v781
        %v952 = vadd.f32 %v920, %v786
        %v953 = vadd.f32 %v921, %v791
        %v954 = vadd.f32 %v922, %v796
        %v955 = vadd.f32 %v923, %v801
        %v956 = vadd.f32 %v924, %v806
        %v957 = vadd.f32 %v925, %v811
        %v958 = vadd.f32 %v926, %v816
        %v959 = vadd.f32 %v927, %v821
        %v960 = vadd.f32 %v928, %v826
        %v961 = vadd.f32 %v929, %v831
        %v962 = vadd.f32 %v930, %v836
        %v963 = vadd.f32 %v931, %v841
        %v964 = vadd.f32 %v932, %v846
        %v965 = vadd.f32 %v933, %v851
        %v966 = vadd.f32 %v934, %v856
        %v967 = vadd.f32 %v935, %v861
        %v968 = vadd.f32 %v936, %v866
        %v969 = vadd.f32 %v937, %v871
        %v970 = vadd.f32 %v938, %v876
        %v971 = vadd.f32 %v939, %v881
        %v972 = vadd.f32 %v940, %v886
        %v973 = vadd.f32 %v941, %v891
        %v974 = vadd.f32 %v942, %v896
        %v975 = vadd.f32 %v943, %v901
        %v976 = vadd.f32 %v944, %v906
        %v977 = vadd.f32 %v945, %v911
        %978 = vst [vmem:[#allocation3] sm:$0xff] %v946
        %979 = vst [vmem:[#allocation3 + $0x8] sm:$0xff] %v947
        %980 = vst [vmem:[#allocation3 + $0x10] sm:$0xff] %v948
        %981 = vst [vmem:[#allocation3 + $0x18] sm:$0xff] %v949
        %982 = vst [vmem:[#allocation3 + $0x20] sm:$0xff] %v950
        %983 = vst [vmem:[#allocation3 + $0x28] sm:$0xff] %v951
        %984 = vst [vmem:[#allocation3 + $0x30] sm:$0xff] %v952
        %985 = vst [vmem:[#allocation3 + $0x38] sm:$0xff] %v953
        %986 = vst [vmem:[#allocation3 + $0x40] sm:$0xff] %v954
        %987 = vst [vmem:[#allocation3 + $0x48] sm:$0xff] %v955
        %988 = vst [vmem:[#allocation3 + $0x50] sm:$0xff] %v956
        %989 = vst [vmem:[#allocation3 + $0x58] sm:$0xff] %v957
        %990 = vst [vmem:[#allocation3 + $0x60] sm:$0xff] %v958
        %991 = vst [vmem:[#allocation3 + $0x68] sm:$0xff] %v959
        %992 = vst [vmem:[#allocation3 + $0x70] sm:$0xff] %v960
        %993 = vst [vmem:[#allocation3 + $0x78] sm:$0xff] %v961
        %994 = vst [vmem:[#allocation3 + $0x80] sm:$0xff] %v962
        %995 = vst [vmem:[#allocation3 + $0x88] sm:$0xff] %v963
        %996 = vst [vmem:[#allocation3 + $0x90] sm:$0xff] %v964
        %997 = vst [vmem:[#allocation3 + $0x98] sm:$0xff] %v965
        %998 = vst [vmem:[#allocation3 + $0xa0] sm:$0xff] %v966
        %999 = vst [vmem:[#allocation3 + $0xa8] sm:$0xff] %v967
        %1000 = vst [vmem:[#allocation3 + $0xb0] sm:$0xff] %v968
        %1001 = vst [vmem:[#allocation3 + $0xb8] sm:$0xff] %v969
        %1002 = vst [vmem:[#allocation3 + $0xc0] sm:$0xff] %v970
        %1003 = vst [vmem:[#allocation3 + $0xc8] sm:$0xff] %v971
        %1004 = vst [vmem:[#allocation3 + $0xd0] sm:$0xff] %v972
        %1005 = vst [vmem:[#allocation3 + $0xd8] sm:$0xff] %v973
        %1006 = vst [vmem:[#allocation3 + $0xe0] sm:$0xff] %v974
        %1007 = vst [vmem:[#allocation3 + $0xe8] sm:$0xff] %v975
        %1008 = vst [vmem:[#allocation3 + $0xf0] sm:$0xff] %v976
        %1009 = vst [vmem:[#allocation3 + $0xf8] sm:$0xff] %v977
        %v1010 = vld [vmem:[%s291 + $0x2] sm:$0xff]
        %v1011 = vld [vmem:[%s291 + $0xa] sm:$0xff]
        %v1012 = vld [vmem:[%s291 + $0x1a] sm:$0xff]
        %v1013 = vld [vmem:[%s291 + $0x22] sm:$0xff]
        %v1014 = vld [vmem:[%s291 + $0x32] sm:$0xff]
        %v1015 = vld [vmem:[%s291 + $0x3a] sm:$0xff]
        %v1016 = vld [vmem:[%s291 + $0x4a] sm:$0xff]
        %v1017 = vld [vmem:[%s291 + $0x52] sm:$0xff]
        %v1018 = vld [vmem:[%s291 + $0x62] sm:$0xff]
        %v1019 = vld [vmem:[%s291 + $0x6a] sm:$0xff]
        %v1020 = vld [vmem:[%s291 + $0x7a] sm:$0xff]
        %v1021 = vld [vmem:[%s291 + $0x82] sm:$0xff]
        %v1022 = vld [vmem:[%s291 + $0x92] sm:$0xff]
        %v1023 = vld [vmem:[%s291 + $0x9a] sm:$0xff]
        %v1024 = vld [vmem:[%s291 + $0xaa] sm:$0xff]
        %v1025 = vld [vmem:[%s291 + $0xb2] sm:$0xff]
        %v1026 = vld [vmem:[%s291 + $0xc2] sm:$0xff]
        %v1027 = vld [vmem:[%s291 + $0xca] sm:$0xff]
        %v1028 = vld [vmem:[%s291 + $0xda] sm:$0xff]
        %v1029 = vld [vmem:[%s291 + $0xe2] sm:$0xff]
        %v1030 = vld [vmem:[%s291 + $0xf2] sm:$0xff]
        %v1031 = vld [vmem:[%s291 + $0xfa] sm:$0xff]
        %v1032 = vld [vmem:[%s291 + $0x10a] sm:$0xff]
        %v1033 = vld [vmem:[%s291 + $0x112] sm:$0xff]
        %v1034 = vld [vmem:[%s291 + $0x122] sm:$0xff]
        %v1035 = vld [vmem:[%s291 + $0x12a] sm:$0xff]
        %v1036 = vld [vmem:[%s291 + $0x13a] sm:$0xff]
        %v1037 = vld [vmem:[%s291 + $0x142] sm:$0xff]
        %v1038 = vld [vmem:[%s291 + $0x152] sm:$0xff]
        %v1039 = vld [vmem:[%s291 + $0x15a] sm:$0xff]
        %v1040 = vld [vmem:[%s291 + $0x16a] sm:$0xff]
        %v1041 = vld [vmem:[%s291 + $0x172] sm:$0xff]
        %s1042 = scalar_lea.vmem %s1, 256
        %v1043 = vld [vmem:[%s1042] sm:$0xff]
        %v1044 = vld [vmem:[%s1042 + $0x8] sm:$0xff]
        %v1045 = vld [vmem:[%s1042 + $0x10] sm:$0xff]
        %v1046 = vld [vmem:[%s1042 + $0x18] sm:$0xff]
        %v1047 = vld [vmem:[%s1042 + $0x20] sm:$0xff]
        %v1048 = vld [vmem:[%s1042 + $0x28] sm:$0xff]
        %v1049 = vld [vmem:[%s1042 + $0x30] sm:$0xff]
        %v1050 = vld [vmem:[%s1042 + $0x38] sm:$0xff]
        %v1051 = vld [vmem:[%s1042 + $0x40] sm:$0xff]
        %v1052 = vld [vmem:[%s1042 + $0x48] sm:$0xff]
        %v1053 = vld [vmem:[%s1042 + $0x50] sm:$0xff]
        %v1054 = vld [vmem:[%s1042 + $0x58] sm:$0xff]
        %v1055 = vld [vmem:[%s1042 + $0x60] sm:$0xff]
        %v1056 = vld [vmem:[%s1042 + $0x68] sm:$0xff]
        %v1057 = vld [vmem:[%s1042 + $0x70] sm:$0xff]
        %v1058 = vld [vmem:[%s1042 + $0x78] sm:$0xff]
        %1059 = vmatprep.subr.mxu0 0.0
        %1060 = vmatpush1.msra.mxu0 %v1043
        %1061 = vmatprep.subr.mxu0 0.0
        %1062 = vmatpush1.msra.mxu0 %v1044
        %1063 = vmatprep.subr.mxu0 0.0
        %1064 = vmatpush1.msra.mxu0 %v1045
        %1065 = vmatprep.subr.mxu0 0.0
        %1066 = vmatpush1.msra.mxu0 %v1046
        %1067 = vmatprep.subr.mxu0 0.0
        %1068 = vmatpush1.msra.mxu0 %v1047
        %1069 = vmatprep.subr.mxu0 0.0
        %1070 = vmatpush1.msra.mxu0 %v1048
        %1071 = vmatprep.subr.mxu0 0.0
        %1072 = vmatpush1.msra.mxu0 %v1049
        %1073 = vmatprep.subr.mxu0 0.0
        %1074 = vmatpush1.msra.mxu0 %v1050
        %1075 = vmatprep.subr.mxu0 0.0
        %1076 = vmatpush1.msra.mxu0 %v1051
        %1077 = vmatprep.subr.mxu0 0.0
        %1078 = vmatpush1.msra.mxu0 %v1052
        %1079 = vmatprep.subr.mxu0 0.0
        %1080 = vmatpush1.msra.mxu0 %v1053
        %1081 = vmatprep.subr.mxu0 0.0
        %1082 = vmatpush1.msra.mxu0 %v1054
        %1083 = vmatprep.subr.mxu0 0.0
        %1084 = vmatpush1.msra.mxu0 %v1055
        %1085 = vmatprep.subr.mxu0 0.0
        %1086 = vmatpush1.msra.mxu0 %v1056
        %1087 = vmatprep.subr.mxu0 0.0
        %1088 = vmatpush1.msra.mxu0 %v1057
        %1089 = vmatprep.subr.mxu0 0.0
        %1090 = vmatpush1.msra.mxu0 %v1058
        %1091 = vmatprep.subr.mxu0 0.0
        %1092 = vmatpush1.msra.mxu0 0.0
        %1093 = vmatprep.subr.mxu0 0.0
        %1094 = vmatpush1.msra.mxu0 0.0
        %1095 = vmatprep.subr.mxu0 0.0
        %1096 = vmatpush1.msra.mxu0 0.0
        %1097 = vmatprep.subr.mxu0 0.0
        %1098 = vmatpush1.msra.mxu0 0.0
        %1099 = vmatprep.subr.mxu0 0.0
        %1100 = vmatpush1.msra.mxu0 0.0
        %1101 = vmatprep.subr.mxu0 0.0
        %1102 = vmatpush1.msra.mxu0 0.0
        %1103 = vmatprep.subr.mxu0 0.0
        %1104 = vmatpush1.msra.mxu0 0.0
        %1105 = vmatprep.subr.mxu0 0.0
        %1106 = vmatpush1.msra.mxu0 0.0
        %1107 = vmatprep.subr.mxu0 0.0
        %1108 = vmatpush1.msra.mxu0 0.0
        %1109 = vmatprep.subr.mxu0 0.0
        %1110 = vmatpush1.msra.mxu0 0.0
        %1111 = vmatprep.subr.mxu0 0.0
        %1112 = vmatpush1.msra.mxu0 0.0
        %1113 = vmatprep.subr.mxu0 0.0
        %1114 = vmatpush1.msra.mxu0 0.0
        %1115 = vmatprep.subr.mxu0 0.0
        %1116 = vmatpush1.msra.mxu0 0.0
        %1117 = vmatprep.subr.mxu0 0.0
        %1118 = vmatpush1.msra.mxu0 0.0
        %1119 = vmatprep.subr.mxu0 0.0
        %1120 = vmatpush1.msra.mxu0 0.0
        %1121 = vmatprep.subr.mxu0 0.0
        %1122 = vmatpush1.msra.mxu0 0.0
        %1123 = vmatprep.mubr.f32.mxu0 0.0
        %1124 = vmatmul.mubr.f32.gmra.mrb[0].mxu0 %v1010
        %v1125 = vpop.f32.mrb[0].mxu0
        %v1126 = vadd.f32 0.0, %v1125
        %v1127 = vpop.f32.mrb[0].mxu0
        %1128 = vmatprep.mubr.f32.mxu0 0.0
        %1129 = vmatmul.mubr.f32.gmra.mrb[0].mxu0 %v1011
        %v1130 = vpop.f32.mrb[0].mxu0
        %v1131 = vadd.f32 0.0, %v1130
        %v1132 = vpop.f32.mrb[0].mxu0
        %1133 = vmatprep.mubr.f32.mxu0 0.0
        %1134 = vmatmul.mubr.f32.gmra.mrb[0].mxu0 %v1012
        %v1135 = vpop.f32.mrb[0].mxu0
        %v1136 = vadd.f32 0.0, %v1135
        %v1137 = vpop.f32.mrb[0].mxu0
        %1138 = vmatprep.mubr.f32.mxu0 0.0
        %1139 = vmatmul.mubr.f32.gmra.mrb[0].mxu0 %v1013
        %v1140 = vpop.f32.mrb[0].mxu0
        %v1141 = vadd.f32 0.0, %v1140
        %v1142 = vpop.f32.mrb[0].mxu0
        %1143 = vmatprep.mubr.f32.mxu0 0.0
        %1144 = vmatmul.mubr.f32.gmra.mrb[0].mxu0 %v1014
        %v1145 = vpop.f32.mrb[0].mxu0
        %v1146 = vadd.f32 0.0, %v1145
        %v1147 = vpop.f32.mrb[0].mxu0
        %1148 = vmatprep.mubr.f32.mxu0 0.0
        %1149 = vmatmul.mubr.f32.gmra.mrb[0].mxu0 %v1015
        %v1150 = vpop.f32.mrb[0].mxu0
        %v1151 = vadd.f32 0.0, %v1150
        %v1152 = vpop.f32.mrb[0].mxu0
        %1153 = vmatprep.mubr.f32.mxu0 0.0
        %1154 = vmatmul.mubr.f32.gmra.mrb[0].mxu0 %v1016
        %v1155 = vpop.f32.mrb[0].mxu0
        %v1156 = vadd.f32 0.0, %v1155
        %v1157 = vpop.f32.mrb[0].mxu0
        %1158 = vmatprep.mubr.f32.mxu0 0.0
        %1159 = vmatmul.mubr.f32.gmra.mrb[0].mxu0 %v1017
        %v1160 = vpop.f32.mrb[0].mxu0
        %v1161 = vadd.f32 0.0, %v1160
        %v1162 = vpop.f32.mrb[0].mxu0
        %1163 = vmatprep.mubr.f32.mxu0 0.0
        %1164 = vmatmul.mubr.f32.gmra.mrb[0].mxu0 %v1018
        %v1165 = vpop.f32.mrb[0].mxu0
        %v1166 = vadd.f32 0.0, %v1165
        %v1167 = vpop.f32.mrb[0].mxu0
        %1168 = vmatprep.mubr.f32.mxu0 0.0
        %1169 = vmatmul.mubr.f32.gmra.mrb[0].mxu0 %v1019
        %v1170 = vpop.f32.mrb[0].mxu0
        %v1171 = vadd.f32 0.0, %v1170
        %v1172 = vpop.f32.mrb[0].mxu0
        %1173 = vmatprep.mubr.f32.mxu0 0.0
        %1174 = vmatmul.mubr.f32.gmra.mrb[0].mxu0 %v1020
        %v1175 = vpop.f32.mrb[0].mxu0
        %v1176 = vadd.f32 0.0, %v1175
        %v1177 = vpop.f32.mrb[0].mxu0
        %1178 = vmatprep.mubr.f32.mxu0 0.0
        %1179 = vmatmul.mubr.f32.gmra.mrb[0].mxu0 %v1021
        %v1180 = vpop.f32.mrb[0].mxu0
        %v1181 = vadd.f32 0.0, %v1180
        %v1182 = vpop.f32.mrb[0].mxu0
        %1183 = vmatprep.mubr.f32.mxu0 0.0
        %1184 = vmatmul.mubr.f32.gmra.mrb[0].mxu0 %v1022
        %v1185 = vpop.f32.mrb[0].mxu0
        %v1186 = vadd.f32 0.0, %v1185
        %v1187 = vpop.f32.mrb[0].mxu0
        %1188 = vmatprep.mubr.f32.mxu0 0.0
        %1189 = vmatmul.mubr.f32.gmra.mrb[0].mxu0 %v1023
        %v1190 = vpop.f32.mrb[0].mxu0
        %v1191 = vadd.f32 0.0, %v1190
        %v1192 = vpop.f32.mrb[0].mxu0
        %1193 = vmatprep.mubr.f32.mxu0 0.0
        %1194 = vmatmul.mubr.f32.gmra.mrb[0].mxu0 %v1024
        %v1195 = vpop.f32.mrb[0].mxu0
        %v1196 = vadd.f32 0.0, %v1195
        %v1197 = vpop.f32.mrb[0].mxu0
        %1198 = vmatprep.mubr.f32.mxu0 0.0
        %1199 = vmatmul.mubr.f32.gmra.mrb[0].mxu0 %v1025
        %v1200 = vpop.f32.mrb[0].mxu0
        %v1201 = vadd.f32 0.0, %v1200
        %v1202 = vpop.f32.mrb[0].mxu0
        %1203 = vmatprep.mubr.f32.mxu0 0.0
        %1204 = vmatmul.mubr.f32.gmra.mrb[0].mxu0 %v1026
        %v1205 = vpop.f32.mrb[0].mxu0
        %v1206 = vadd.f32 0.0, %v1205
        %v1207 = vpop.f32.mrb[0].mxu0
        %1208 = vmatprep.mubr.f32.mxu0 0.0
        %1209 = vmatmul.mubr.f32.gmra.mrb[0].mxu0 %v1027
        %v1210 = vpop.f32.mrb[0].mxu0
        %v1211 = vadd.f32 0.0, %v1210
        %v1212 = vpop.f32.mrb[0].mxu0
        %1213 = vmatprep.mubr.f32.mxu0 0.0
        %1214 = vmatmul.mubr.f32.gmra.mrb[0].mxu0 %v1028
        %v1215 = vpop.f32.mrb[0].mxu0
        %v1216 = vadd.f32 0.0, %v1215
        %v1217 = vpop.f32.mrb[0].mxu0
        %1218 = vmatprep.mubr.f32.mxu0 0.0
        %1219 = vmatmul.mubr.f32.gmra.mrb[0].mxu0 %v1029
        %v1220 = vpop.f32.mrb[0].mxu0
        %v1221 = vadd.f32 0.0, %v1220
        %v1222 = vpop.f32.mrb[0].mxu0
        %1223 = vmatprep.mubr.f32.mxu0 0.0
        %1224 = vmatmul.mubr.f32.gmra.mrb[0].mxu0 %v1030
        %v1225 = vpop.f32.mrb[0].mxu0
        %v1226 = vadd.f32 0.0, %v1225
        %v1227 = vpop.f32.mrb[0].mxu0
        %1228 = vmatprep.mubr.f32.mxu0 0.0
        %1229 = vmatmul.mubr.f32.gmra.mrb[0].mxu0 %v1031
        %v1230 = vpop.f32.mrb[0].mxu0
        %v1231 = vadd.f32 0.0, %v1230
        %v1232 = vpop.f32.mrb[0].mxu0
        %1233 = vmatprep.mubr.f32.mxu0 0.0
        %1234 = vmatmul.mubr.f32.gmra.mrb[0].mxu0 %v1032
        %v1235 = vpop.f32.mrb[0].mxu0
        %v1236 = vadd.f32 0.0, %v1235
        %v1237 = vpop.f32.mrb[0].mxu0
        %1238 = vmatprep.mubr.f32.mxu0 0.0
        %1239 = vmatmul.mubr.f32.gmra.mrb[0].mxu0 %v1033
        %v1240 = vpop.f32.mrb[0].mxu0
        %v1241 = vadd.f32 0.0, %v1240
        %v1242 = vpop.f32.mrb[0].mxu0
        %1243 = vmatprep.mubr.f32.mxu0 0.0
        %1244 = vmatmul.mubr.f32.gmra.mrb[0].mxu0 %v1034
        %v1245 = vpop.f32.mrb[0].mxu0
        %v1246 = vadd.f32 0.0, %v1245
        %v1247 = vpop.f32.mrb[0].mxu0
        %1248 = vmatprep.mubr.f32.mxu0 0.0
        %1249 = vmatmul.mubr.f32.gmra.mrb[0].mxu0 %v1035
        %v1250 = vpop.f32.mrb[0].mxu0
        %v1251 = vadd.f32 0.0, %v1250
        %v1252 = vpop.f32.mrb[0].mxu0
        %1253 = vmatprep.mubr.f32.mxu0 0.0
        %1254 = vmatmul.mubr.f32.gmra.mrb[0].mxu0 %v1036
        %v1255 = vpop.f32.mrb[0].mxu0
        %v1256 = vadd.f32 0.0, %v1255
        %v1257 = vpop.f32.mrb[0].mxu0
        %1258 = vmatprep.mubr.f32.mxu0 0.0
        %1259 = vmatmul.mubr.f32.gmra.mrb[0].mxu0 %v1037
        %v1260 = vpop.f32.mrb[0].mxu0
        %v1261 = vadd.f32 0.0, %v1260
        %v1262 = vpop.f32.mrb[0].mxu0
        %1263 = vmatprep.mubr.f32.mxu0 0.0
        %1264 = vmatmul.mubr.f32.gmra.mrb[0].mxu0 %v1038
        %v1265 = vpop.f32.mrb[0].mxu0
        %v1266 = vadd.f32 0.0, %v1265
        %v1267 = vpop.f32.mrb[0].mxu0
        %1268 = vmatprep.mubr.f32.mxu0 0.0
        %1269 = vmatmul.mubr.f32.gmra.mrb[0].mxu0 %v1039
        %v1270 = vpop.f32.mrb[0].mxu0
        %v1271 = vadd.f32 0.0, %v1270
        %v1272 = vpop.f32.mrb[0].mxu0
        %1273 = vmatprep.mubr.f32.mxu0 0.0
        %1274 = vmatmul.mubr.f32.gmra.mrb[0].mxu0 %v1040
        %v1275 = vpop.f32.mrb[0].mxu0
        %v1276 = vadd.f32 0.0, %v1275
        %v1277 = vpop.f32.mrb[0].mxu0
        %1278 = vmatprep.mubr.f32.mxu0 0.0
        %1279 = vmatmul.mubr.f32.gmra.mrb[0].mxu0 %v1041
        %v1280 = vpop.f32.mrb[0].mxu0
        %v1281 = vadd.f32 0.0, %v1280
        %v1282 = vpop.f32.mrb[0].mxu0
        %1283 = vdwg.mxu0
        %v1284 = vld [vmem:[#allocation3] sm:$0xff]
        %v1285 = vld [vmem:[#allocation3 + $0x8] sm:$0xff]
        %v1286 = vld [vmem:[#allocation3 + $0x10] sm:$0xff]
        %v1287 = vld [vmem:[#allocation3 + $0x18] sm:$0xff]
        %v1288 = vld [vmem:[#allocation3 + $0x20] sm:$0xff]
        %v1289 = vld [vmem:[#allocation3 + $0x28] sm:$0xff]
        %v1290 = vld [vmem:[#allocation3 + $0x30] sm:$0xff]
        %v1291 = vld [vmem:[#allocation3 + $0x38] sm:$0xff]
        %v1292 = vld [vmem:[#allocation3 + $0x40] sm:$0xff]
        %v1293 = vld [vmem:[#allocation3 + $0x48] sm:$0xff]
        %v1294 = vld [vmem:[#allocation3 + $0x50] sm:$0xff]
        %v1295 = vld [vmem:[#allocation3 + $0x58] sm:$0xff]
        %v1296 = vld [vmem:[#allocation3 + $0x60] sm:$0xff]
        %v1297 = vld [vmem:[#allocation3 + $0x68] sm:$0xff]
        %v1298 = vld [vmem:[#allocation3 + $0x70] sm:$0xff]
        %v1299 = vld [vmem:[#allocation3 + $0x78] sm:$0xff]
        %v1300 = vld [vmem:[#allocation3 + $0x80] sm:$0xff]
        %v1301 = vld [vmem:[#allocation3 + $0x88] sm:$0xff]
        %v1302 = vld [vmem:[#allocation3 + $0x90] sm:$0xff]
        %v1303 = vld [vmem:[#allocation3 + $0x98] sm:$0xff]
        %v1304 = vld [vmem:[#allocation3 + $0xa0] sm:$0xff]
        %v1305 = vld [vmem:[#allocation3 + $0xa8] sm:$0xff]
        %v1306 = vld [vmem:[#allocation3 + $0xb0] sm:$0xff]
        %v1307 = vld [vmem:[#allocation3 + $0xb8] sm:$0xff]
        %v1308 = vld [vmem:[#allocation3 + $0xc0] sm:$0xff]
        %v1309 = vld [vmem:[#allocation3 + $0xc8] sm:$0xff]
        %v1310 = vld [vmem:[#allocation3 + $0xd0] sm:$0xff]
        %v1311 = vld [vmem:[#allocation3 + $0xd8] sm:$0xff]
        %v1312 = vld [vmem:[#allocation3 + $0xe0] sm:$0xff]
        %v1313 = vld [vmem:[#allocation3 + $0xe8] sm:$0xff]
        %v1314 = vld [vmem:[#allocation3 + $0xf0] sm:$0xff]
        %v1315 = vld [vmem:[#allocation3 + $0xf8] sm:$0xff]
        %v1316 = vadd.f32 %v1284, %v1126
        %v1317 = vadd.f32 %v1285, %v1131
        %v1318 = vadd.f32 %v1286, %v1136
        %v1319 = vadd.f32 %v1287, %v1141
        %v1320 = vadd.f32 %v1288, %v1146
        %v1321 = vadd.f32 %v1289, %v1151
        %v1322 = vadd.f32 %v1290, %v1156
        %v1323 = vadd.f32 %v1291, %v1161
        %v1324 = vadd.f32 %v1292, %v1166
        %v1325 = vadd.f32 %v1293, %v1171
        %v1326 = vadd.f32 %v1294, %v1176
        %v1327 = vadd.f32 %v1295, %v1181
        %v1328 = vadd.f32 %v1296, %v1186
        %v1329 = vadd.f32 %v1297, %v1191
        %v1330 = vadd.f32 %v1298, %v1196
        %v1331 = vadd.f32 %v1299, %v1201
        %v1332 = vadd.f32 %v1300, %v1206
        %v1333 = vadd.f32 %v1301, %v1211
        %v1334 = vadd.f32 %v1302, %v1216
        %v1335 = vadd.f32 %v1303, %v1221
        %v1336 = vadd.f32 %v1304, %v1226
        %v1337 = vadd.f32 %v1305, %v1231
        %v1338 = vadd.f32 %v1306, %v1236
        %v1339 = vadd.f32 %v1307, %v1241
        %v1340 = vadd.f32 %v1308, %v1246
        %v1341 = vadd.f32 %v1309, %v1251
        %v1342 = vadd.f32 %v1310, %v1256
        %v1343 = vadd.f32 %v1311, %v1261
        %v1344 = vadd.f32 %v1312, %v1266
        %v1345 = vadd.f32 %v1313, %v1271
        %v1346 = vadd.f32 %v1314, %v1276
        %v1347 = vadd.f32 %v1315, %v1281
        %1348 = vst [vmem:[#allocation3] sm:$0xff] %v1316
        %1349 = vst [vmem:[#allocation3 + $0x8] sm:$0xff] %v1317
        %1350 = vst [vmem:[#allocation3 + $0x10] sm:$0xff] %v1318
        %1351 = vst [vmem:[#allocation3 + $0x18] sm:$0xff] %v1319
        %1352 = vst [vmem:[#allocation3 + $0x20] sm:$0xff] %v1320
        %1353 = vst [vmem:[#allocation3 + $0x28] sm:$0xff] %v1321
        %1354 = vst [vmem:[#allocation3 + $0x30] sm:$0xff] %v1322
        %1355 = vst [vmem:[#allocation3 + $0x38] sm:$0xff] %v1323
        %1356 = vst [vmem:[#allocation3 + $0x40] sm:$0xff] %v1324
        %1357 = vst [vmem:[#allocation3 + $0x48] sm:$0xff] %v1325
        %1358 = vst [vmem:[#allocation3 + $0x50] sm:$0xff] %v1326
        %1359 = vst [vmem:[#allocation3 + $0x58] sm:$0xff] %v1327
        %1360 = vst [vmem:[#allocation3 + $0x60] sm:$0xff] %v1328
        %1361 = vst [vmem:[#allocation3 + $0x68] sm:$0xff] %v1329
        %1362 = vst [vmem:[#allocation3 + $0x70] sm:$0xff] %v1330
        %1363 = vst [vmem:[#allocation3 + $0x78] sm:$0xff] %v1331
        %1364 = vst [vmem:[#allocation3 + $0x80] sm:$0xff] %v1332
        %1365 = vst [vmem:[#allocation3 + $0x88] sm:$0xff] %v1333
        %1366 = vst [vmem:[#allocation3 + $0x90] sm:$0xff] %v1334
        %1367 = vst [vmem:[#allocation3 + $0x98] sm:$0xff] %v1335
        %1368 = vst [vmem:[#allocation3 + $0xa0] sm:$0xff] %v1336
        %1369 = vst [vmem:[#allocation3 + $0xa8] sm:$0xff] %v1337
        %1370 = vst [vmem:[#allocation3 + $0xb0] sm:$0xff] %v1338
        %1371 = vst [vmem:[#allocation3 + $0xb8] sm:$0xff] %v1339
        %1372 = vst [vmem:[#allocation3 + $0xc0] sm:$0xff] %v1340
        %1373 = vst [vmem:[#allocation3 + $0xc8] sm:$0xff] %v1341
        %1374 = vst [vmem:[#allocation3 + $0xd0] sm:$0xff] %v1342
        %1375 = vst [vmem:[#allocation3 + $0xd8] sm:$0xff] %v1343
        %1376 = vst [vmem:[#allocation3 + $0xe0] sm:$0xff] %v1344
        %1377 = vst [vmem:[#allocation3 + $0xe8] sm:$0xff] %v1345
        %1378 = vst [vmem:[#allocation3 + $0xf0] sm:$0xff] %v1346
        %1379 = vst [vmem:[#allocation3 + $0xf8] sm:$0xff] %v1347
        %s1380 = scalar_lea.vmem %s291, 24
        %v1381 = vld [vmem:[%s1380] sm:$0xff]
        %v1382 = vld [vmem:[%s1380 + $0x8] sm:$0xff]
        %v1383 = vld [vmem:[%s1380 + $0x18] sm:$0xff]
        %v1384 = vld [vmem:[%s1380 + $0x20] sm:$0xff]
        %v1385 = vld [vmem:[%s1380 + $0x30] sm:$0xff]
        %v1386 = vld [vmem:[%s1380 + $0x38] sm:$0xff]
        %v1387 = vld [vmem:[%s1380 + $0x48] sm:$0xff]
        %v1388 = vld [vmem:[%s1380 + $0x50] sm:$0xff]
        %v1389 = vld [vmem:[%s1380 + $0x60] sm:$0xff]
        %v1390 = vld [vmem:[%s1380 + $0x68] sm:$0xff]
        %v1391 = vld [vmem:[%s1380 + $0x78] sm:$0xff]
        %v1392 = vld [vmem:[%s1380 + $0x80] sm:$0xff]
        %v1393 = vld [vmem:[%s1380 + $0x90] sm:$0xff]
        %v1394 = vld [vmem:[%s1380 + $0x98] sm:$0xff]
        %v1395 = vld [vmem:[%s1380 + $0xa8] sm:$0xff]
        %v1396 = vld [vmem:[%s1380 + $0xb0] sm:$0xff]
        %v1397 = vld [vmem:[%s1380 + $0xc0] sm:$0xff]
        %v1398 = vld [vmem:[%s1380 + $0xc8] sm:$0xff]
        %v1399 = vld [vmem:[%s1380 + $0xd8] sm:$0xff]
        %v1400 = vld [vmem:[%s1380 + $0xe0] sm:$0xff]
        %v1401 = vld [vmem:[%s1380 + $0xf0] sm:$0xff]
        %v1402 = vld [vmem:[%s1380 + $0xf8] sm:$0xff]
        %v1403 = vld [vmem:[%s1380 + $0x108] sm:$0xff]
        %v1404 = vld [vmem:[%s1380 + $0x110] sm:$0xff]
        %v1405 = vld [vmem:[%s1380 + $0x120] sm:$0xff]
        %v1406 = vld [vmem:[%s1380 + $0x128] sm:$0xff]
        %v1407 = vld [vmem:[%s1380 + $0x138] sm:$0xff]
        %v1408 = vld [vmem:[%s1380 + $0x140] sm:$0xff]
        %v1409 = vld [vmem:[%s1380 + $0x150] sm:$0xff]
        %v1410 = vld [vmem:[%s1380 + $0x158] sm:$0xff]
        %v1411 = vld [vmem:[%s1380 + $0x168] sm:$0xff]
        %v1412 = vld [vmem:[%s1380 + $0x170] sm:$0xff]
        %s1413 = scalar_lea.vmem %s1, 384
        %v1414 = vld [vmem:[%s1413] sm:$0xff]
        %v1415 = vld [vmem:[%s1413 + $0x8] sm:$0xff]
        %v1416 = vld [vmem:[%s1413 + $0x10] sm:$0xff]
        %v1417 = vld [vmem:[%s1413 + $0x18] sm:$0xff]
        %v1418 = vld [vmem:[%s1413 + $0x20] sm:$0xff]
        %v1419 = vld [vmem:[%s1413 + $0x28] sm:$0xff]
        %v1420 = vld [vmem:[%s1413 + $0x30] sm:$0xff]
        %v1421 = vld [vmem:[%s1413 + $0x38] sm:$0xff]
        %v1422 = vld [vmem:[%s1413 + $0x40] sm:$0xff]
        %v1423 = vld [vmem:[%s1413 + $0x48] sm:$0xff]
        %v1424 = vld [vmem:[%s1413 + $0x50] sm:$0xff]
        %v1425 = vld [vmem:[%s1413 + $0x58] sm:$0xff]
        %v1426 = vld [vmem:[%s1413 + $0x60] sm:$0xff]
        %v1427 = vld [vmem:[%s1413 + $0x68] sm:$0xff]
        %v1428 = vld [vmem:[%s1413 + $0x70] sm:$0xff]
        %v1429 = vld [vmem:[%s1413 + $0x78] sm:$0xff]
        %1430 = vmatprep.subr.mxu0 0.0
        %1431 = vmatpush1.msra.mxu0 %v1414
        %1432 = vmatprep.subr.mxu0 0.0
        %1433 = vmatpush1.msra.mxu0 %v1415
        %1434 = vmatprep.subr.mxu0 0.0
        %1435 = vmatpush1.msra.mxu0 %v1416
        %1436 = vmatprep.subr.mxu0 0.0
        %1437 = vmatpush1.msra.mxu0 %v1417
        %1438 = vmatprep.subr.mxu0 0.0
        %1439 = vmatpush1.msra.mxu0 %v1418
        %1440 = vmatprep.subr.mxu0 0.0
        %1441 = vmatpush1.msra.mxu0 %v1419
        %1442 = vmatprep.subr.mxu0 0.0
        %1443 = vmatpush1.msra.mxu0 %v1420
        %1444 = vmatprep.subr.mxu0 0.0
        %1445 = vmatpush1.msra.mxu0 %v1421
        %1446 = vmatprep.subr.mxu0 0.0
        %1447 = vmatpush1.msra.mxu0 %v1422
        %1448 = vmatprep.subr.mxu0 0.0
        %1449 = vmatpush1.msra.mxu0 %v1423
        %1450 = vmatprep.subr.mxu0 0.0
        %1451 = vmatpush1.msra.mxu0 %v1424
        %1452 = vmatprep.subr.mxu0 0.0
        %1453 = vmatpush1.msra.mxu0 %v1425
        %1454 = vmatprep.subr.mxu0 0.0
        %1455 = vmatpush1.msra.mxu0 %v1426
        %1456 = vmatprep.subr.mxu0 0.0
        %1457 = vmatpush1.msra.mxu0 %v1427
        %1458 = vmatprep.subr.mxu0 0.0
        %1459 = vmatpush1.msra.mxu0 %v1428
        %1460 = vmatprep.subr.mxu0 0.0
        %1461 = vmatpush1.msra.mxu0 %v1429
        %1462 = vmatprep.subr.mxu0 0.0
        %1463 = vmatpush1.msra.mxu0 0.0
        %1464 = vmatprep.subr.mxu0 0.0
        %1465 = vmatpush1.msra.mxu0 0.0
        %1466 = vmatprep.subr.mxu0 0.0
        %1467 = vmatpush1.msra.mxu0 0.0
        %1468 = vmatprep.subr.mxu0 0.0
        %1469 = vmatpush1.msra.mxu0 0.0
        %1470 = vmatprep.subr.mxu0 0.0
        %1471 = vmatpush1.msra.mxu0 0.0
        %1472 = vmatprep.subr.mxu0 0.0
        %1473 = vmatpush1.msra.mxu0 0.0
        %1474 = vmatprep.subr.mxu0 0.0
        %1475 = vmatpush1.msra.mxu0 0.0
        %1476 = vmatprep.subr.mxu0 0.0
        %1477 = vmatpush1.msra.mxu0 0.0
        %1478 = vmatprep.subr.mxu0 0.0
        %1479 = vmatpush1.msra.mxu0 0.0
        %1480 = vmatprep.subr.mxu0 0.0
        %1481 = vmatpush1.msra.mxu0 0.0
        %1482 = vmatprep.subr.mxu0 0.0
        %1483 = vmatpush1.msra.mxu0 0.0
        %1484 = vmatprep.subr.mxu0 0.0
        %1485 = vmatpush1.msra.mxu0 0.0
        %1486 = vmatprep.subr.mxu0 0.0
        %1487 = vmatpush1.msra.mxu0 0.0
        %1488 = vmatprep.subr.mxu0 0.0
        %1489 = vmatpush1.msra.mxu0 0.0
        %1490 = vmatprep.subr.mxu0 0.0
        %1491 = vmatpush1.msra.mxu0 0.0
        %1492 = vmatprep.subr.mxu0 0.0
        %1493 = vmatpush1.msra.mxu0 0.0
        %1494 = vmatprep.mubr.f32.mxu0 0.0
        %1495 = vmatmul.mubr.f32.gmra.mrb[0].mxu0 %v1381
        %v1496 = vpop.f32.mrb[0].mxu0
        %v1497 = vadd.f32 0.0, %v1496
        %v1498 = vpop.f32.mrb[0].mxu0
        %1499 = vmatprep.mubr.f32.mxu0 0.0
        %1500 = vmatmul.mubr.f32.gmra.mrb[0].mxu0 %v1382
        %v1501 = vpop.f32.mrb[0].mxu0
        %v1502 = vadd.f32 0.0, %v1501
        %v1503 = vpop.f32.mrb[0].mxu0
        %1504 = vmatprep.mubr.f32.mxu0 0.0
        %1505 = vmatmul.mubr.f32.gmra.mrb[0].mxu0 %v1383
        %v1506 = vpop.f32.mrb[0].mxu0
        %v1507 = vadd.f32 0.0, %v1506
        %v1508 = vpop.f32.mrb[0].mxu0
        %1509 = vmatprep.mubr.f32.mxu0 0.0
        %1510 = vmatmul.mubr.f32.gmra.mrb[0].mxu0 %v1384
        %v1511 = vpop.f32.mrb[0].mxu0
        %v1512 = vadd.f32 0.0, %v1511
        %v1513 = vpop.f32.mrb[0].mxu0
        %1514 = vmatprep.mubr.f32.mxu0 0.0
        %1515 = vmatmul.mubr.f32.gmra.mrb[0].mxu0 %v1385
        %v1516 = vpop.f32.mrb[0].mxu0
        %v1517 = vadd.f32 0.0, %v1516
        %v1518 = vpop.f32.mrb[0].mxu0
        %1519 = vmatprep.mubr.f32.mxu0 0.0
        %1520 = vmatmul.mubr.f32.gmra.mrb[0].mxu0 %v1386
        %v1521 = vpop.f32.mrb[0].mxu0
        %v1522 = vadd.f32 0.0, %v1521
        %v1523 = vpop.f32.mrb[0].mxu0
        %1524 = vmatprep.mubr.f32.mxu0 0.0
        %1525 = vmatmul.mubr.f32.gmra.mrb[0].mxu0 %v1387
        %v1526 = vpop.f32.mrb[0].mxu0
        %v1527 = vadd.f32 0.0, %v1526
        %v1528 = vpop.f32.mrb[0].mxu0
        %1529 = vmatprep.mubr.f32.mxu0 0.0
        %1530 = vmatmul.mubr.f32.gmra.mrb[0].mxu0 %v1388
        %v1531 = vpop.f32.mrb[0].mxu0
        %v1532 = vadd.f32 0.0, %v1531
        %v1533 = vpop.f32.mrb[0].mxu0
        %1534 = vmatprep.mubr.f32.mxu0 0.0
        %1535 = vmatmul.mubr.f32.gmra.mrb[0].mxu0 %v1389
        %v1536 = vpop.f32.mrb[0].mxu0
        %v1537 = vadd.f32 0.0, %v1536
        %v1538 = vpop.f32.mrb[0].mxu0
        %1539 = vmatprep.mubr.f32.mxu0 0.0
        %1540 = vmatmul.mubr.f32.gmra.mrb[0].mxu0 %v1390
        %v1541 = vpop.f32.mrb[0].mxu0
        %v1542 = vadd.f32 0.0, %v1541
        %v1543 = vpop.f32.mrb[0].mxu0
        %1544 = vmatprep.mubr.f32.mxu0 0.0
        %1545 = vmatmul.mubr.f32.gmra.mrb[0].mxu0 %v1391
        %v1546 = vpop.f32.mrb[0].mxu0
        %v1547 = vadd.f32 0.0, %v1546
        %v1548 = vpop.f32.mrb[0].mxu0
        %1549 = vmatprep.mubr.f32.mxu0 0.0
        %1550 = vmatmul.mubr.f32.gmra.mrb[0].mxu0 %v1392
        %v1551 = vpop.f32.mrb[0].mxu0
        %v1552 = vadd.f32 0.0, %v1551
        %v1553 = vpop.f32.mrb[0].mxu0
        %1554 = vmatprep.mubr.f32.mxu0 0.0
        %1555 = vmatmul.mubr.f32.gmra.mrb[0].mxu0 %v1393
        %v1556 = vpop.f32.mrb[0].mxu0
        %v1557 = vadd.f32 0.0, %v1556
        %v1558 = vpop.f32.mrb[0].mxu0
        %1559 = vmatprep.mubr.f32.mxu0 0.0
        %1560 = vmatmul.mubr.f32.gmra.mrb[0].mxu0 %v1394
        %v1561 = vpop.f32.mrb[0].mxu0
        %v1562 = vadd.f32 0.0, %v1561
        %v1563 = vpop.f32.mrb[0].mxu0
        %1564 = vmatprep.mubr.f32.mxu0 0.0
        %1565 = vmatmul.mubr.f32.gmra.mrb[0].mxu0 %v1395
        %v1566 = vpop.f32.mrb[0].mxu0
        %v1567 = vadd.f32 0.0, %v1566
        %v1568 = vpop.f32.mrb[0].mxu0
        %1569 = vmatprep.mubr.f32.mxu0 0.0
        %1570 = vmatmul.mubr.f32.gmra.mrb[0].mxu0 %v1396
        %v1571 = vpop.f32.mrb[0].mxu0
        %v1572 = vadd.f32 0.0, %v1571
        %v1573 = vpop.f32.mrb[0].mxu0
        %1574 = vmatprep.mubr.f32.mxu0 0.0
        %1575 = vmatmul.mubr.f32.gmra.mrb[0].mxu0 %v1397
        %v1576 = vpop.f32.mrb[0].mxu0
        %v1577 = vadd.f32 0.0, %v1576
        %v1578 = vpop.f32.mrb[0].mxu0
        %1579 = vmatprep.mubr.f32.mxu0 0.0
        %1580 = vmatmul.mubr.f32.gmra.mrb[0].mxu0 %v1398
        %v1581 = vpop.f32.mrb[0].mxu0
        %v1582 = vadd.f32 0.0, %v1581
        %v1583 = vpop.f32.mrb[0].mxu0
        %1584 = vmatprep.mubr.f32.mxu0 0.0
        %1585 = vmatmul.mubr.f32.gmra.mrb[0].mxu0 %v1399
        %v1586 = vpop.f32.mrb[0].mxu0
        %v1587 = vadd.f32 0.0, %v1586
        %v1588 = vpop.f32.mrb[0].mxu0
        %1589 = vmatprep.mubr.f32.mxu0 0.0
        %1590 = vmatmul.mubr.f32.gmra.mrb[0].mxu0 %v1400
        %v1591 = vpop.f32.mrb[0].mxu0
        %v1592 = vadd.f32 0.0, %v1591
        %v1593 = vpop.f32.mrb[0].mxu0
        %1594 = vmatprep.mubr.f32.mxu0 0.0
        %1595 = vmatmul.mubr.f32.gmra.mrb[0].mxu0 %v1401
        %v1596 = vpop.f32.mrb[0].mxu0
        %v1597 = vadd.f32 0.0, %v1596
        %v1598 = vpop.f32.mrb[0].mxu0
        %1599 = vmatprep.mubr.f32.mxu0 0.0
        %1600 = vmatmul.mubr.f32.gmra.mrb[0].mxu0 %v1402
        %v1601 = vpop.f32.mrb[0].mxu0
        %v1602 = vadd.f32 0.0, %v1601
        %v1603 = vpop.f32.mrb[0].mxu0
        %1604 = vmatprep.mubr.f32.mxu0 0.0
        %1605 = vmatmul.mubr.f32.gmra.mrb[0].mxu0 %v1403
        %v1606 = vpop.f32.mrb[0].mxu0
        %v1607 = vadd.f32 0.0, %v1606
        %v1608 = vpop.f32.mrb[0].mxu0
        %1609 = vmatprep.mubr.f32.mxu0 0.0
        %1610 = vmatmul.mubr.f32.gmra.mrb[0].mxu0 %v1404
        %v1611 = vpop.f32.mrb[0].mxu0
        %v1612 = vadd.f32 0.0, %v1611
        %v1613 = vpop.f32.mrb[0].mxu0
        %1614 = vmatprep.mubr.f32.mxu0 0.0
        %1615 = vmatmul.mubr.f32.gmra.mrb[0].mxu0 %v1405
        %v1616 = vpop.f32.mrb[0].mxu0
        %v1617 = vadd.f32 0.0, %v1616
        %v1618 = vpop.f32.mrb[0].mxu0
        %1619 = vmatprep.mubr.f32.mxu0 0.0
        %1620 = vmatmul.mubr.f32.gmra.mrb[0].mxu0 %v1406
        %v1621 = vpop.f32.mrb[0].mxu0
        %v1622 = vadd.f32 0.0, %v1621
        %v1623 = vpop.f32.mrb[0].mxu0
        %1624 = vmatprep.mubr.f32.mxu0 0.0
        %1625 = vmatmul.mubr.f32.gmra.mrb[0].mxu0 %v1407
        %v1626 = vpop.f32.mrb[0].mxu0
        %v1627 = vadd.f32 0.0, %v1626
        %v1628 = vpop.f32.mrb[0].mxu0
        %1629 = vmatprep.mubr.f32.mxu0 0.0
        %1630 = vmatmul.mubr.f32.gmra.mrb[0].mxu0 %v1408
        %v1631 = vpop.f32.mrb[0].mxu0
        %v1632 = vadd.f32 0.0, %v1631
        %v1633 = vpop.f32.mrb[0].mxu0
        %1634 = vmatprep.mubr.f32.mxu0 0.0
        %1635 = vmatmul.mubr.f32.gmra.mrb[0].mxu0 %v1409
        %v1636 = vpop.f32.mrb[0].mxu0
        %v1637 = vadd.f32 0.0, %v1636
        %v1638 = vpop.f32.mrb[0].mxu0
        %1639 = vmatprep.mubr.f32.mxu0 0.0
        %1640 = vmatmul.mubr.f32.gmra.mrb[0].mxu0 %v1410
        %v1641 = vpop.f32.mrb[0].mxu0
        %v1642 = vadd.f32 0.0, %v1641
        %v1643 = vpop.f32.mrb[0].mxu0
        %1644 = vmatprep.mubr.f32.mxu0 0.0
        %1645 = vmatmul.mubr.f32.gmra.mrb[0].mxu0 %v1411
        %v1646 = vpop.f32.mrb[0].mxu0
        %v1647 = vadd.f32 0.0, %v1646
        %v1648 = vpop.f32.mrb[0].mxu0
        %1649 = vmatprep.mubr.f32.mxu0 0.0
        %1650 = vmatmul.mubr.f32.gmra.mrb[0].mxu0 %v1412
        %v1651 = vpop.f32.mrb[0].mxu0
        %v1652 = vadd.f32 0.0, %v1651
        %v1653 = vpop.f32.mrb[0].mxu0
        %1654 = vdwg.mxu0
        %v1655 = vld [vmem:[#allocation3] sm:$0xff]
        %v1656 = vld [vmem:[#allocation3 + $0x8] sm:$0xff]
        %v1657 = vld [vmem:[#allocation3 + $0x10] sm:$0xff]
        %v1658 = vld [vmem:[#allocation3 + $0x18] sm:$0xff]
        %v1659 = vld [vmem:[#allocation3 + $0x20] sm:$0xff]
        %v1660 = vld [vmem:[#allocation3 + $0x28] sm:$0xff]
        %v1661 = vld [vmem:[#allocation3 + $0x30] sm:$0xff]
        %v1662 = vld [vmem:[#allocation3 + $0x38] sm:$0xff]
        %v1663 = vld [vmem:[#allocation3 + $0x40] sm:$0xff]
        %v1664 = vld [vmem:[#allocation3 + $0x48] sm:$0xff]
        %v1665 = vld [vmem:[#allocation3 + $0x50] sm:$0xff]
        %v1666 = vld [vmem:[#allocation3 + $0x58] sm:$0xff]
        %v1667 = vld [vmem:[#allocation3 + $0x60] sm:$0xff]
        %v1668 = vld [vmem:[#allocation3 + $0x68] sm:$0xff]
        %v1669 = vld [vmem:[#allocation3 + $0x70] sm:$0xff]
        %v1670 = vld [vmem:[#allocation3 + $0x78] sm:$0xff]
        %v1671 = vld [vmem:[#allocation3 + $0x80] sm:$0xff]
        %v1672 = vld [vmem:[#allocation3 + $0x88] sm:$0xff]
        %v1673 = vld [vmem:[#allocation3 + $0x90] sm:$0xff]
        %v1674 = vld [vmem:[#allocation3 + $0x98] sm:$0xff]
        %v1675 = vld [vmem:[#allocation3 + $0xa0] sm:$0xff]
        %v1676 = vld [vmem:[#allocation3 + $0xa8] sm:$0xff]
        %v1677 = vld [vmem:[#allocation3 + $0xb0] sm:$0xff]
        %v1678 = vld [vmem:[#allocation3 + $0xb8] sm:$0xff]
        %v1679 = vld [vmem:[#allocation3 + $0xc0] sm:$0xff]
        %v1680 = vld [vmem:[#allocation3 + $0xc8] sm:$0xff]
        %v1681 = vld [vmem:[#allocation3 + $0xd0] sm:$0xff]
        %v1682 = vld [vmem:[#allocation3 + $0xd8] sm:$0xff]
        %v1683 = vld [vmem:[#allocation3 + $0xe0] sm:$0xff]
        %v1684 = vld [vmem:[#allocation3 + $0xe8] sm:$0xff]
        %v1685 = vld [vmem:[#allocation3 + $0xf0] sm:$0xff]
        %v1686 = vld [vmem:[#allocation3 + $0xf8] sm:$0xff]
        %v1687 = vadd.f32 %v1655, %v1497
        %v1688 = vadd.f32 %v1656, %v1502
        %v1689 = vadd.f32 %v1657, %v1507
        %v1690 = vadd.f32 %v1658, %v1512
        %v1691 = vadd.f32 %v1659, %v1517
        %v1692 = vadd.f32 %v1660, %v1522
        %v1693 = vadd.f32 %v1661, %v1527
        %v1694 = vadd.f32 %v1662, %v1532
        %v1695 = vadd.f32 %v1663, %v1537
        %v1696 = vadd.f32 %v1664, %v1542
        %v1697 = vadd.f32 %v1665, %v1547
        %v1698 = vadd.f32 %v1666, %v1552
        %v1699 = vadd.f32 %v1667, %v1557
        %v1700 = vadd.f32 %v1668, %v1562
        %v1701 = vadd.f32 %v1669, %v1567
        %v1702 = vadd.f32 %v1670, %v1572
        %v1703 = vadd.f32 %v1671, %v1577
        %v1704 = vadd.f32 %v1672, %v1582
        %v1705 = vadd.f32 %v1673, %v1587
        %v1706 = vadd.f32 %v1674, %v1592
        %v1707 = vadd.f32 %v1675, %v1597
        %v1708 = vadd.f32 %v1676, %v1602
        %v1709 = vadd.f32 %v1677, %v1607
        %v1710 = vadd.f32 %v1678, %v1612
        %v1711 = vadd.f32 %v1679, %v1617
        %v1712 = vadd.f32 %v1680, %v1622
        %v1713 = vadd.f32 %v1681, %v1627
        %v1714 = vadd.f32 %v1682, %v1632
        %v1715 = vadd.f32 %v1683, %v1637
        %v1716 = vadd.f32 %v1684, %v1642
        %v1717 = vadd.f32 %v1685, %v1647
        %v1718 = vadd.f32 %v1686, %v1652
        %1719 = vst [vmem:[#allocation3] sm:$0xff] %v1687
        %1720 = vst [vmem:[#allocation3 + $0x8] sm:$0xff] %v1688
        %1721 = vst [vmem:[#allocation3 + $0x10] sm:$0xff] %v1689
        %1722 = vst [vmem:[#allocation3 + $0x18] sm:$0xff] %v1690
        %1723 = vst [vmem:[#allocation3 + $0x20] sm:$0xff] %v1691
        %1724 = vst [vmem:[#allocation3 + $0x28] sm:$0xff] %v1692
        %1725 = vst [vmem:[#allocation3 + $0x30] sm:$0xff] %v1693
        %1726 = vst [vmem:[#allocation3 + $0x38] sm:$0xff] %v1694
        %1727 = vst [vmem:[#allocation3 + $0x40] sm:$0xff] %v1695
        %1728 = vst [vmem:[#allocation3 + $0x48] sm:$0xff] %v1696
        %1729 = vst [vmem:[#allocation3 + $0x50] sm:$0xff] %v1697
        %1730 = vst [vmem:[#allocation3 + $0x58] sm:$0xff] %v1698
        %1731 = vst [vmem:[#allocation3 + $0x60] sm:$0xff] %v1699
        %1732 = vst [vmem:[#allocation3 + $0x68] sm:$0xff] %v1700
        %1733 = vst [vmem:[#allocation3 + $0x70] sm:$0xff] %v1701
        %1734 = vst [vmem:[#allocation3 + $0x78] sm:$0xff] %v1702
        %1735 = vst [vmem:[#allocation3 + $0x80] sm:$0xff] %v1703
        %1736 = vst [vmem:[#allocation3 + $0x88] sm:$0xff] %v1704
        %1737 = vst [vmem:[#allocation3 + $0x90] sm:$0xff] %v1705
        %1738 = vst [vmem:[#allocation3 + $0x98] sm:$0xff] %v1706
        %1739 = vst [vmem:[#allocation3 + $0xa0] sm:$0xff] %v1707
        %1740 = vst [vmem:[#allocation3 + $0xa8] sm:$0xff] %v1708
        %1741 = vst [vmem:[#allocation3 + $0xb0] sm:$0xff] %v1709
        %1742 = vst [vmem:[#allocation3 + $0xb8] sm:$0xff] %v1710
        %1743 = vst [vmem:[#allocation3 + $0xc0] sm:$0xff] %v1711
        %1744 = vst [vmem:[#allocation3 + $0xc8] sm:$0xff] %v1712
        %1745 = vst [vmem:[#allocation3 + $0xd0] sm:$0xff] %v1713
        %1746 = vst [vmem:[#allocation3 + $0xd8] sm:$0xff] %v1714
        %1747 = vst [vmem:[#allocation3 + $0xe0] sm:$0xff] %v1715
        %1748 = vst [vmem:[#allocation3 + $0xe8] sm:$0xff] %v1716
        %1749 = vst [vmem:[#allocation3 + $0xf0] sm:$0xff] %v1717
        %1750 = vst [vmem:[#allocation3 + $0xf8] sm:$0xff] %v1718
        %v1751 = vld [vmem:[%s1380 + $0x1] sm:$0xff]
        %v1752 = vld [vmem:[%s1380 + $0x9] sm:$0xff]
        %v1753 = vld [vmem:[%s1380 + $0x19] sm:$0xff]
        %v1754 = vld [vmem:[%s1380 + $0x21] sm:$0xff]
        %v1755 = vld [vmem:[%s1380 + $0x31] sm:$0xff]
        %v1756 = vld [vmem:[%s1380 + $0x39] sm:$0xff]
        %v1757 = vld [vmem:[%s1380 + $0x49] sm:$0xff]
        %v1758 = vld [vmem:[%s1380 + $0x51] sm:$0xff]
        %v1759 = vld [vmem:[%s1380 + $0x61] sm:$0xff]
        %v1760 = vld [vmem:[%s1380 + $0x69] sm:$0xff]
        %v1761 = vld [vmem:[%s1380 + $0x79] sm:$0xff]
        %v1762 = vld [vmem:[%s1380 + $0x81] sm:$0xff]
        %v1763 = vld [vmem:[%s1380 + $0x91] sm:$0xff]
        %v1764 = vld [vmem:[%s1380 + $0x99] sm:$0xff]
        %v1765 = vld [vmem:[%s1380 + $0xa9] sm:$0xff]
        %v1766 = vld [vmem:[%s1380 + $0xb1] sm:$0xff]
        %v1767 = vld [vmem:[%s1380 + $0xc1] sm:$0xff]
        %v1768 = vld [vmem:[%s1380 + $0xc9] sm:$0xff]
        %v1769 = vld [vmem:[%s1380 + $0xd9] sm:$0xff]
        %v1770 = vld [vmem:[%s1380 + $0xe1] sm:$0xff]
        %v1771 = vld [vmem:[%s1380 + $0xf1] sm:$0xff]
        %v1772 = vld [vmem:[%s1380 + $0xf9] sm:$0xff]
        %v1773 = vld [vmem:[%s1380 + $0x109] sm:$0xff]
        %v1774 = vld [vmem:[%s1380 + $0x111] sm:$0xff]
        %v1775 = vld [vmem:[%s1380 + $0x121] sm:$0xff]
        %v1776 = vld [vmem:[%s1380 + $0x129] sm:$0xff]
        %v1777 = vld [vmem:[%s1380 + $0x139] sm:$0xff]
        %v1778 = vld [vmem:[%s1380 + $0x141] sm:$0xff]
        %v1779 = vld [vmem:[%s1380 + $0x151] sm:$0xff]
        %v1780 = vld [vmem:[%s1380 + $0x159] sm:$0xff]
        %v1781 = vld [vmem:[%s1380 + $0x169] sm:$0xff]
        %v1782 = vld [vmem:[%s1380 + $0x171] sm:$0xff]
        %s1783 = scalar_lea.vmem %s1, 512
        %v1784 = vld [vmem:[%s1783] sm:$0xff]
        %v1785 = vld [vmem:[%s1783 + $0x8] sm:$0xff]
        %v1786 = vld [vmem:[%s1783 + $0x10] sm:$0xff]
        %v1787 = vld [vmem:[%s1783 + $0x18] sm:$0xff]
        %v1788 = vld [vmem:[%s1783 + $0x20] sm:$0xff]
        %v1789 = vld [vmem:[%s1783 + $0x28] sm:$0xff]
        %v1790 = vld [vmem:[%s1783 + $0x30] sm:$0xff]
        %v1791 = vld [vmem:[%s1783 + $0x38] sm:$0xff]
        %v1792 = vld [vmem:[%s1783 + $0x40] sm:$0xff]
        %v1793 = vld [vmem:[%s1783 + $0x48] sm:$0xff]
        %v1794 = vld [vmem:[%s1783 + $0x50] sm:$0xff]
        %v1795 = vld [vmem:[%s1783 + $0x58] sm:$0xff]
        %v1796 = vld [vmem:[%s1783 + $0x60] sm:$0xff]
        %v1797 = vld [vmem:[%s1783 + $0x68] sm:$0xff]
        %v1798 = vld [vmem:[%s1783 + $0x70] sm:$0xff]
        %v1799 = vld [vmem:[%s1783 + $0x78] sm:$0xff]
        %1800 = vmatprep.subr.mxu0 0.0
        %1801 = vmatpush1.msra.mxu0 %v1784
        %1802 = vmatprep.subr.mxu0 0.0
        %1803 = vmatpush1.msra.mxu0 %v1785
        %1804 = vmatprep.subr.mxu0 0.0
        %1805 = vmatpush1.msra.mxu0 %v1786
        %1806 = vmatprep.subr.mxu0 0.0
        %1807 = vmatpush1.msra.mxu0 %v1787
        %1808 = vmatprep.subr.mxu0 0.0
        %1809 = vmatpush1.msra.mxu0 %v1788
        %1810 = vmatprep.subr.mxu0 0.0
        %1811 = vmatpush1.msra.mxu0 %v1789
        %1812 = vmatprep.subr.mxu0 0.0
        %1813 = vmatpush1.msra.mxu0 %v1790
        %1814 = vmatprep.subr.mxu0 0.0
        %1815 = vmatpush1.msra.mxu0 %v1791
        %1816 = vmatprep.subr.mxu0 0.0
        %1817 = vmatpush1.msra.mxu0 %v1792
        %1818 = vmatprep.subr.mxu0 0.0
        %1819 = vmatpush1.msra.mxu0 %v1793
        %1820 = vmatprep.subr.mxu0 0.0
        %1821 = vmatpush1.msra.mxu0 %v1794
        %1822 = vmatprep.subr.mxu0 0.0
        %1823 = vmatpush1.msra.mxu0 %v1795
        %1824 = vmatprep.subr.mxu0 0.0
        %1825 = vmatpush1.msra.mxu0 %v1796
        %1826 = vmatprep.subr.mxu0 0.0
        %1827 = vmatpush1.msra.mxu0 %v1797
        %1828 = vmatprep.subr.mxu0 0.0
        %1829 = vmatpush1.msra.mxu0 %v1798
        %1830 = vmatprep.subr.mxu0 0.0
        %1831 = vmatpush1.msra.mxu0 %v1799
        %1832 = vmatprep.subr.mxu0 0.0
        %1833 = vmatpush1.msra.mxu0 0.0
        %1834 = vmatprep.subr.mxu0 0.0
        %1835 = vmatpush1.msra.mxu0 0.0
        %1836 = vmatprep.subr.mxu0 0.0
        %1837 = vmatpush1.msra.mxu0 0.0
        %1838 = vmatprep.subr.mxu0 0.0
        %1839 = vmatpush1.msra.mxu0 0.0
        %1840 = vmatprep.subr.mxu0 0.0
        %1841 = vmatpush1.msra.mxu0 0.0
        %1842 = vmatprep.subr.mxu0 0.0
        %1843 = vmatpush1.msra.mxu0 0.0
        %1844 = vmatprep.subr.mxu0 0.0
        %1845 = vmatpush1.msra.mxu0 0.0
        %1846 = vmatprep.subr.mxu0 0.0
        %1847 = vmatpush1.msra.mxu0 0.0
        %1848 = vmatprep.subr.mxu0 0.0
        %1849 = vmatpush1.msra.mxu0 0.0
        %1850 = vmatprep.subr.mxu0 0.0
        %1851 = vmatpush1.msra.mxu0 0.0
        %1852 = vmatprep.subr.mxu0 0.0
        %1853 = vmatpush1.msra.mxu0 0.0
        %1854 = vmatprep.subr.mxu0 0.0
        %1855 = vmatpush1.msra.mxu0 0.0
        %1856 = vmatprep.subr.mxu0 0.0
        %1857 = vmatpush1.msra.mxu0 0.0
        %1858 = vmatprep.subr.mxu0 0.0
        %1859 = vmatpush1.msra.mxu0 0.0
        %1860 = vmatprep.subr.mxu0 0.0
        %1861 = vmatpush1.msra.mxu0 0.0
        %1862 = vmatprep.subr.mxu0 0.0
        %1863 = vmatpush1.msra.mxu0 0.0
        %1864 = vmatprep.mubr.f32.mxu0 0.0
        %1865 = vmatmul.mubr.f32.gmra.mrb[0].mxu0 %v1751
        %v1866 = vpop.f32.mrb[0].mxu0
        %v1867 = vadd.f32 0.0, %v1866
        %v1868 = vpop.f32.mrb[0].mxu0
        %1869 = vmatprep.mubr.f32.mxu0 0.0
        %1870 = vmatmul.mubr.f32.gmra.mrb[0].mxu0 %v1752
        %v1871 = vpop.f32.mrb[0].mxu0
        %v1872 = vadd.f32 0.0, %v1871
        %v1873 = vpop.f32.mrb[0].mxu0
        %1874 = vmatprep.mubr.f32.mxu0 0.0
        %1875 = vmatmul.mubr.f32.gmra.mrb[0].mxu0 %v1753
        %v1876 = vpop.f32.mrb[0].mxu0
        %v1877 = vadd.f32 0.0, %v1876
        %v1878 = vpop.f32.mrb[0].mxu0
        %1879 = vmatprep.mubr.f32.mxu0 0.0
        %1880 = vmatmul.mubr.f32.gmra.mrb[0].mxu0 %v1754
        %v1881 = vpop.f32.mrb[0].mxu0
        %v1882 = vadd.f32 0.0, %v1881
        %v1883 = vpop.f32.mrb[0].mxu0
        %1884 = vmatprep.mubr.f32.mxu0 0.0
        %1885 = vmatmul.mubr.f32.gmra.mrb[0].mxu0 %v1755
        %v1886 = vpop.f32.mrb[0].mxu0
        %v1887 = vadd.f32 0.0, %v1886
        %v1888 = vpop.f32.mrb[0].mxu0
        %1889 = vmatprep.mubr.f32.mxu0 0.0
        %1890 = vmatmul.mubr.f32.gmra.mrb[0].mxu0 %v1756
        %v1891 = vpop.f32.mrb[0].mxu0
        %v1892 = vadd.f32 0.0, %v1891
        %v1893 = vpop.f32.mrb[0].mxu0
        %1894 = vmatprep.mubr.f32.mxu0 0.0
        %1895 = vmatmul.mubr.f32.gmra.mrb[0].mxu0 %v1757
        %v1896 = vpop.f32.mrb[0].mxu0
        %v1897 = vadd.f32 0.0, %v1896
        %v1898 = vpop.f32.mrb[0].mxu0
        %1899 = vmatprep.mubr.f32.mxu0 0.0
        %1900 = vmatmul.mubr.f32.gmra.mrb[0].mxu0 %v1758
        %v1901 = vpop.f32.mrb[0].mxu0
        %v1902 = vadd.f32 0.0, %v1901
        %v1903 = vpop.f32.mrb[0].mxu0
        %1904 = vmatprep.mubr.f32.mxu0 0.0
        %1905 = vmatmul.mubr.f32.gmra.mrb[0].mxu0 %v1759
        %v1906 = vpop.f32.mrb[0].mxu0
        %v1907 = vadd.f32 0.0, %v1906
        %v1908 = vpop.f32.mrb[0].mxu0
        %1909 = vmatprep.mubr.f32.mxu0 0.0
        %1910 = vmatmul.mubr.f32.gmra.mrb[0].mxu0 %v1760
        %v1911 = vpop.f32.mrb[0].mxu0
        %v1912 = vadd.f32 0.0, %v1911
        %v1913 = vpop.f32.mrb[0].mxu0
        %1914 = vmatprep.mubr.f32.mxu0 0.0
        %1915 = vmatmul.mubr.f32.gmra.mrb[0].mxu0 %v1761
        %v1916 = vpop.f32.mrb[0].mxu0
        %v1917 = vadd.f32 0.0, %v1916
        %v1918 = vpop.f32.mrb[0].mxu0
        %1919 = vmatprep.mubr.f32.mxu0 0.0
        %1920 = vmatmul.mubr.f32.gmra.mrb[0].mxu0 %v1762
        %v1921 = vpop.f32.mrb[0].mxu0
        %v1922 = vadd.f32 0.0, %v1921
        %v1923 = vpop.f32.mrb[0].mxu0
        %1924 = vmatprep.mubr.f32.mxu0 0.0
        %1925 = vmatmul.mubr.f32.gmra.mrb[0].mxu0 %v1763
        %v1926 = vpop.f32.mrb[0].mxu0
        %v1927 = vadd.f32 0.0, %v1926
        %v1928 = vpop.f32.mrb[0].mxu0
        %1929 = vmatprep.mubr.f32.mxu0 0.0
        %1930 = vmatmul.mubr.f32.gmra.mrb[0].mxu0 %v1764
        %v1931 = vpop.f32.mrb[0].mxu0
        %v1932 = vadd.f32 0.0, %v1931
        %v1933 = vpop.f32.mrb[0].mxu0
        %1934 = vmatprep.mubr.f32.mxu0 0.0
        %1935 = vmatmul.mubr.f32.gmra.mrb[0].mxu0 %v1765
        %v1936 = vpop.f32.mrb[0].mxu0
        %v1937 = vadd.f32 0.0, %v1936
        %v1938 = vpop.f32.mrb[0].mxu0
        %1939 = vmatprep.mubr.f32.mxu0 0.0
        %1940 = vmatmul.mubr.f32.gmra.mrb[0].mxu0 %v1766
        %v1941 = vpop.f32.mrb[0].mxu0
        %v1942 = vadd.f32 0.0, %v1941
        %v1943 = vpop.f32.mrb[0].mxu0
        %1944 = vmatprep.mubr.f32.mxu0 0.0
        %1945 = vmatmul.mubr.f32.gmra.mrb[0].mxu0 %v1767
        %v1946 = vpop.f32.mrb[0].mxu0
        %v1947 = vadd.f32 0.0, %v1946
        %v1948 = vpop.f32.mrb[0].mxu0
        %1949 = vmatprep.mubr.f32.mxu0 0.0
        %1950 = vmatmul.mubr.f32.gmra.mrb[0].mxu0 %v1768
        %v1951 = vpop.f32.mrb[0].mxu0
        %v1952 = vadd.f32 0.0, %v1951
        %v1953 = vpop.f32.mrb[0].mxu0
        %1954 = vmatprep.mubr.f32.mxu0 0.0
        %1955 = vmatmul.mubr.f32.gmra.mrb[0].mxu0 %v1769
        %v1956 = vpop.f32.mrb[0].mxu0
        %v1957 = vadd.f32 0.0, %v1956
        %v1958 = vpop.f32.mrb[0].mxu0
        %1959 = vmatprep.mubr.f32.mxu0 0.0
        %1960 = vmatmul.mubr.f32.gmra.mrb[0].mxu0 %v1770
        %v1961 = vpop.f32.mrb[0].mxu0
        %v1962 = vadd.f32 0.0, %v1961
        %v1963 = vpop.f32.mrb[0].mxu0
        %1964 = vmatprep.mubr.f32.mxu0 0.0
        %1965 = vmatmul.mubr.f32.gmra.mrb[0].mxu0 %v1771
        %v1966 = vpop.f32.mrb[0].mxu0
        %v1967 = vadd.f32 0.0, %v1966
        %v1968 = vpop.f32.mrb[0].mxu0
        %1969 = vmatprep.mubr.f32.mxu0 0.0
        %1970 = vmatmul.mubr.f32.gmra.mrb[0].mxu0 %v1772
        %v1971 = vpop.f32.mrb[0].mxu0
        %v1972 = vadd.f32 0.0, %v1971
        %v1973 = vpop.f32.mrb[0].mxu0
        %1974 = vmatprep.mubr.f32.mxu0 0.0
        %1975 = vmatmul.mubr.f32.gmra.mrb[0].mxu0 %v1773
        %v1976 = vpop.f32.mrb[0].mxu0
        %v1977 = vadd.f32 0.0, %v1976
        %v1978 = vpop.f32.mrb[0].mxu0
        %1979 = vmatprep.mubr.f32.mxu0 0.0
        %1980 = vmatmul.mubr.f32.gmra.mrb[0].mxu0 %v1774
        %v1981 = vpop.f32.mrb[0].mxu0
        %v1982 = vadd.f32 0.0, %v1981
        %v1983 = vpop.f32.mrb[0].mxu0
        %1984 = vmatprep.mubr.f32.mxu0 0.0
        %1985 = vmatmul.mubr.f32.gmra.mrb[0].mxu0 %v1775
        %v1986 = vpop.f32.mrb[0].mxu0
        %v1987 = vadd.f32 0.0, %v1986
        %v1988 = vpop.f32.mrb[0].mxu0
        %1989 = vmatprep.mubr.f32.mxu0 0.0
        %1990 = vmatmul.mubr.f32.gmra.mrb[0].mxu0 %v1776
        %v1991 = vpop.f32.mrb[0].mxu0
        %v1992 = vadd.f32 0.0, %v1991
        %v1993 = vpop.f32.mrb[0].mxu0
        %1994 = vmatprep.mubr.f32.mxu0 0.0
        %1995 = vmatmul.mubr.f32.gmra.mrb[0].mxu0 %v1777
        %v1996 = vpop.f32.mrb[0].mxu0
        %v1997 = vadd.f32 0.0, %v1996
        %v1998 = vpop.f32.mrb[0].mxu0
        %1999 = vmatprep.mubr.f32.mxu0 0.0
        %2000 = vmatmul.mubr.f32.gmra.mrb[0].mxu0 %v1778
        %v2001 = vpop.f32.mrb[0].mxu0
        %v2002 = vadd.f32 0.0, %v2001
        %v2003 = vpop.f32.mrb[0].mxu0
        %2004 = vmatprep.mubr.f32.mxu0 0.0
        %2005 = vmatmul.mubr.f32.gmra.mrb[0].mxu0 %v1779
        %v2006 = vpop.f32.mrb[0].mxu0
        %v2007 = vadd.f32 0.0, %v2006
        %v2008 = vpop.f32.mrb[0].mxu0
        %2009 = vmatprep.mubr.f32.mxu0 0.0
        %2010 = vmatmul.mubr.f32.gmra.mrb[0].mxu0 %v1780
        %v2011 = vpop.f32.mrb[0].mxu0
        %v2012 = vadd.f32 0.0, %v2011
        %v2013 = vpop.f32.mrb[0].mxu0
        %2014 = vmatprep.mubr.f32.mxu0 0.0
        %2015 = vmatmul.mubr.f32.gmra.mrb[0].mxu0 %v1781
        %v2016 = vpop.f32.mrb[0].mxu0
        %v2017 = vadd.f32 0.0, %v2016
        %v2018 = vpop.f32.mrb[0].mxu0
        %2019 = vmatprep.mubr.f32.mxu0 0.0
        %2020 = vmatmul.mubr.f32.gmra.mrb[0].mxu0 %v1782
        %v2021 = vpop.f32.mrb[0].mxu0
        %v2022 = vadd.f32 0.0, %v2021
        %v2023 = vpop.f32.mrb[0].mxu0
        %2024 = vdwg.mxu0
        %v2025 = vld [vmem:[#allocation3] sm:$0xff]
        %v2026 = vld [vmem:[#allocation3 + $0x8] sm:$0xff]
        %v2027 = vld [vmem:[#allocation3 + $0x10] sm:$0xff]
        %v2028 = vld [vmem:[#allocation3 + $0x18] sm:$0xff]
        %v2029 = vld [vmem:[#allocation3 + $0x20] sm:$0xff]
        %v2030 = vld [vmem:[#allocation3 + $0x28] sm:$0xff]
        %v2031 = vld [vmem:[#allocation3 + $0x30] sm:$0xff]
        %v2032 = vld [vmem:[#allocation3 + $0x38] sm:$0xff]
        %v2033 = vld [vmem:[#allocation3 + $0x40] sm:$0xff]
        %v2034 = vld [vmem:[#allocation3 + $0x48] sm:$0xff]
        %v2035 = vld [vmem:[#allocation3 + $0x50] sm:$0xff]
        %v2036 = vld [vmem:[#allocation3 + $0x58] sm:$0xff]
        %v2037 = vld [vmem:[#allocation3 + $0x60] sm:$0xff]
        %v2038 = vld [vmem:[#allocation3 + $0x68] sm:$0xff]
        %v2039 = vld [vmem:[#allocation3 + $0x70] sm:$0xff]
        %v2040 = vld [vmem:[#allocation3 + $0x78] sm:$0xff]
        %v2041 = vld [vmem:[#allocation3 + $0x80] sm:$0xff]
        %v2042 = vld [vmem:[#allocation3 + $0x88] sm:$0xff]
        %v2043 = vld [vmem:[#allocation3 + $0x90] sm:$0xff]
        %v2044 = vld [vmem:[#allocation3 + $0x98] sm:$0xff]
        %v2045 = vld [vmem:[#allocation3 + $0xa0] sm:$0xff]
        %v2046 = vld [vmem:[#allocation3 + $0xa8] sm:$0xff]
        %v2047 = vld [vmem:[#allocation3 + $0xb0] sm:$0xff]
        %v2048 = vld [vmem:[#allocation3 + $0xb8] sm:$0xff]
        %v2049 = vld [vmem:[#allocation3 + $0xc0] sm:$0xff]
        %v2050 = vld [vmem:[#allocation3 + $0xc8] sm:$0xff]
        %v2051 = vld [vmem:[#allocation3 + $0xd0] sm:$0xff]
        %v2052 = vld [vmem:[#allocation3 + $0xd8] sm:$0xff]
        %v2053 = vld [vmem:[#allocation3 + $0xe0] sm:$0xff]
        %v2054 = vld [vmem:[#allocation3 + $0xe8] sm:$0xff]
        %v2055 = vld [vmem:[#allocation3 + $0xf0] sm:$0xff]
        %v2056 = vld [vmem:[#allocation3 + $0xf8] sm:$0xff]
        %v2057 = vadd.f32 %v2025, %v1867
        %v2058 = vadd.f32 %v2026, %v1872
        %v2059 = vadd.f32 %v2027, %v1877
        %v2060 = vadd.f32 %v2028, %v1882
        %v2061 = vadd.f32 %v2029, %v1887
        %v2062 = vadd.f32 %v2030, %v1892
        %v2063 = vadd.f32 %v2031, %v1897
        %v2064 = vadd.f32 %v2032, %v1902
        %v2065 = vadd.f32 %v2033, %v1907
        %v2066 = vadd.f32 %v2034, %v1912
        %v2067 = vadd.f32 %v2035, %v1917
        %v2068 = vadd.f32 %v2036, %v1922
        %v2069 = vadd.f32 %v2037, %v1927
        %v2070 = vadd.f32 %v2038, %v1932
        %v2071 = vadd.f32 %v2039, %v1937
        %v2072 = vadd.f32 %v2040, %v1942
        %v2073 = vadd.f32 %v2041, %v1947
        %v2074 = vadd.f32 %v2042, %v1952
        %v2075 = vadd.f32 %v2043, %v1957
        %v2076 = vadd.f32 %v2044, %v1962
        %v2077 = vadd.f32 %v2045, %v1967
        %v2078 = vadd.f32 %v2046, %v1972
        %v2079 = vadd.f32 %v2047, %v1977
        %v2080 = vadd.f32 %v2048, %v1982
        %v2081 = vadd.f32 %v2049, %v1987
        %v2082 = vadd.f32 %v2050, %v1992
        %v2083 = vadd.f32 %v2051, %v1997
        %v2084 = vadd.f32 %v2052, %v2002
        %v2085 = vadd.f32 %v2053, %v2007
        %v2086 = vadd.f32 %v2054, %v2012
        %v2087 = vadd.f32 %v2055, %v2017
        %v2088 = vadd.f32 %v2056, %v2022
        %2089 = vst [vmem:[#allocation3] sm:$0xff] %v2057
        %2090 = vst [vmem:[#allocation3 + $0x8] sm:$0xff] %v2058
        %2091 = vst [vmem:[#allocation3 + $0x10] sm:$0xff] %v2059
        %2092 = vst [vmem:[#allocation3 + $0x18] sm:$0xff] %v2060
        %2093 = vst [vmem:[#allocation3 + $0x20] sm:$0xff] %v2061
        %2094 = vst [vmem:[#allocation3 + $0x28] sm:$0xff] %v2062
        %2095 = vst [vmem:[#allocation3 + $0x30] sm:$0xff] %v2063
        %2096 = vst [vmem:[#allocation3 + $0x38] sm:$0xff] %v2064
        %2097 = vst [vmem:[#allocation3 + $0x40] sm:$0xff] %v2065
        %2098 = vst [vmem:[#allocation3 + $0x48] sm:$0xff] %v2066
        %2099 = vst [vmem:[#allocation3 + $0x50] sm:$0xff] %v2067
        %2100 = vst [vmem:[#allocation3 + $0x58] sm:$0xff] %v2068
        %2101 = vst [vmem:[#allocation3 + $0x60] sm:$0xff] %v2069
        %2102 = vst [vmem:[#allocation3 + $0x68] sm:$0xff] %v2070
        %2103 = vst [vmem:[#allocation3 + $0x70] sm:$0xff] %v2071
        %2104 = vst [vmem:[#allocation3 + $0x78] sm:$0xff] %v2072
        %2105 = vst [vmem:[#allocation3 + $0x80] sm:$0xff] %v2073
        %2106 = vst [vmem:[#allocation3 + $0x88] sm:$0xff] %v2074
        %2107 = vst [vmem:[#allocation3 + $0x90] sm:$0xff] %v2075
        %2108 = vst [vmem:[#allocation3 + $0x98] sm:$0xff] %v2076
        %2109 = vst [vmem:[#allocation3 + $0xa0] sm:$0xff] %v2077
        %2110 = vst [vmem:[#allocation3 + $0xa8] sm:$0xff] %v2078
        %2111 = vst [vmem:[#allocation3 + $0xb0] sm:$0xff] %v2079
        %2112 = vst [vmem:[#allocation3 + $0xb8] sm:$0xff] %v2080
        %2113 = vst [vmem:[#allocation3 + $0xc0] sm:$0xff] %v2081
        %2114 = vst [vmem:[#allocation3 + $0xc8] sm:$0xff] %v2082
        %2115 = vst [vmem:[#allocation3 + $0xd0] sm:$0xff] %v2083
        %2116 = vst [vmem:[#allocation3 + $0xd8] sm:$0xff] %v2084
        %2117 = vst [vmem:[#allocation3 + $0xe0] sm:$0xff] %v2085
        %2118 = vst [vmem:[#allocation3 + $0xe8] sm:$0xff] %v2086
        %2119 = vst [vmem:[#allocation3 + $0xf0] sm:$0xff] %v2087
        %2120 = vst [vmem:[#allocation3 + $0xf8] sm:$0xff] %v2088
        %v2121 = vld [vmem:[%s1380 + $0x2] sm:$0xff]
        %v2122 = vld [vmem:[%s1380 + $0xa] sm:$0xff]
        %v2123 = vld [vmem:[%s1380 + $0x1a] sm:$0xff]
        %v2124 = vld [vmem:[%s1380 + $0x22] sm:$0xff]
        %v2125 = vld [vmem:[%s1380 + $0x32] sm:$0xff]
        %v2126 = vld [vmem:[%s1380 + $0x3a] sm:$0xff]
        %v2127 = vld [vmem:[%s1380 + $0x4a] sm:$0xff]
        %v2128 = vld [vmem:[%s1380 + $0x52] sm:$0xff]
        %v2129 = vld [vmem:[%s1380 + $0x62] sm:$0xff]
        %v2130 = vld [vmem:[%s1380 + $0x6a] sm:$0xff]
        %v2131 = vld [vmem:[%s1380 + $0x7a] sm:$0xff]
        %v2132 = vld [vmem:[%s1380 + $0x82] sm:$0xff]
        %v2133 = vld [vmem:[%s1380 + $0x92] sm:$0xff]
        %v2134 = vld [vmem:[%s1380 + $0x9a] sm:$0xff]
        %v2135 = vld [vmem:[%s1380 + $0xaa] sm:$0xff]
        %v2136 = vld [vmem:[%s1380 + $0xb2] sm:$0xff]
        %v2137 = vld [vmem:[%s1380 + $0xc2] sm:$0xff]
        %v2138 = vld [vmem:[%s1380 + $0xca] sm:$0xff]
        %v2139 = vld [vmem:[%s1380 + $0xda] sm:$0xff]
        %v2140 = vld [vmem:[%s1380 + $0xe2] sm:$0xff]
        %v2141 = vld [vmem:[%s1380 + $0xf2] sm:$0xff]
        %v2142 = vld [vmem:[%s1380 + $0xfa] sm:$0xff]
        %v2143 = vld [vmem:[%s1380 + $0x10a] sm:$0xff]
        %v2144 = vld [vmem:[%s1380 + $0x112] sm:$0xff]
        %v2145 = vld [vmem:[%s1380 + $0x122] sm:$0xff]
        %v2146 = vld [vmem:[%s1380 + $0x12a] sm:$0xff]
        %v2147 = vld [vmem:[%s1380 + $0x13a] sm:$0xff]
        %v2148 = vld [vmem:[%s1380 + $0x142] sm:$0xff]
        %v2149 = vld [vmem:[%s1380 + $0x152] sm:$0xff]
        %v2150 = vld [vmem:[%s1380 + $0x15a] sm:$0xff]
        %v2151 = vld [vmem:[%s1380 + $0x16a] sm:$0xff]
        %v2152 = vld [vmem:[%s1380 + $0x172] sm:$0xff]
        %s2153 = scalar_lea.vmem %s1, 640
        %v2154 = vld [vmem:[%s2153] sm:$0xff]
        %v2155 = vld [vmem:[%s2153 + $0x8] sm:$0xff]
        %v2156 = vld [vmem:[%s2153 + $0x10] sm:$0xff]
        %v2157 = vld [vmem:[%s2153 + $0x18] sm:$0xff]
        %v2158 = vld [vmem:[%s2153 + $0x20] sm:$0xff]
        %v2159 = vld [vmem:[%s2153 + $0x28] sm:$0xff]
        %v2160 = vld [vmem:[%s2153 + $0x30] sm:$0xff]
        %v2161 = vld [vmem:[%s2153 + $0x38] sm:$0xff]
        %v2162 = vld [vmem:[%s2153 + $0x40] sm:$0xff]
        %v2163 = vld [vmem:[%s2153 + $0x48] sm:$0xff]
        %v2164 = vld [vmem:[%s2153 + $0x50] sm:$0xff]
        %v2165 = vld [vmem:[%s2153 + $0x58] sm:$0xff]
        %v2166 = vld [vmem:[%s2153 + $0x60] sm:$0xff]
        %v2167 = vld [vmem:[%s2153 + $0x68] sm:$0xff]
        %v2168 = vld [vmem:[%s2153 + $0x70] sm:$0xff]
        %v2169 = vld [vmem:[%s2153 + $0x78] sm:$0xff]
        %2170 = vmatprep.subr.mxu0 0.0
        %2171 = vmatpush1.msra.mxu0 %v2154
        %2172 = vmatprep.subr.mxu0 0.0
        %2173 = vmatpush1.msra.mxu0 %v2155
        %2174 = vmatprep.subr.mxu0 0.0
        %2175 = vmatpush1.msra.mxu0 %v2156
        %2176 = vmatprep.subr.mxu0 0.0
        %2177 = vmatpush1.msra.mxu0 %v2157
        %2178 = vmatprep.subr.mxu0 0.0
        %2179 = vmatpush1.msra.mxu0 %v2158
        %2180 = vmatprep.subr.mxu0 0.0
        %2181 = vmatpush1.msra.mxu0 %v2159
        %2182 = vmatprep.subr.mxu0 0.0
        %2183 = vmatpush1.msra.mxu0 %v2160
        %2184 = vmatprep.subr.mxu0 0.0
        %2185 = vmatpush1.msra.mxu0 %v2161
        %2186 = vmatprep.subr.mxu0 0.0
        %2187 = vmatpush1.msra.mxu0 %v2162
        %2188 = vmatprep.subr.mxu0 0.0
        %2189 = vmatpush1.msra.mxu0 %v2163
        %2190 = vmatprep.subr.mxu0 0.0
        %2191 = vmatpush1.msra.mxu0 %v2164
        %2192 = vmatprep.subr.mxu0 0.0
        %2193 = vmatpush1.msra.mxu0 %v2165
        %2194 = vmatprep.subr.mxu0 0.0
        %2195 = vmatpush1.msra.mxu0 %v2166
        %2196 = vmatprep.subr.mxu0 0.0
        %2197 = vmatpush1.msra.mxu0 %v2167
        %2198 = vmatprep.subr.mxu0 0.0
        %2199 = vmatpush1.msra.mxu0 %v2168
        %2200 = vmatprep.subr.mxu0 0.0
        %2201 = vmatpush1.msra.mxu0 %v2169
        %2202 = vmatprep.subr.mxu0 0.0
        %2203 = vmatpush1.msra.mxu0 0.0
        %2204 = vmatprep.subr.mxu0 0.0
        %2205 = vmatpush1.msra.mxu0 0.0
        %2206 = vmatprep.subr.mxu0 0.0
        %2207 = vmatpush1.msra.mxu0 0.0
        %2208 = vmatprep.subr.mxu0 0.0
        %2209 = vmatpush1.msra.mxu0 0.0
        %2210 = vmatprep.subr.mxu0 0.0
        %2211 = vmatpush1.msra.mxu0 0.0
        %2212 = vmatprep.subr.mxu0 0.0
        %2213 = vmatpush1.msra.mxu0 0.0
        %2214 = vmatprep.subr.mxu0 0.0
        %2215 = vmatpush1.msra.mxu0 0.0
        %2216 = vmatprep.subr.mxu0 0.0
        %2217 = vmatpush1.msra.mxu0 0.0
        %2218 = vmatprep.subr.mxu0 0.0
        %2219 = vmatpush1.msra.mxu0 0.0
        %2220 = vmatprep.subr.mxu0 0.0
        %2221 = vmatpush1.msra.mxu0 0.0
        %2222 = vmatprep.subr.mxu0 0.0
        %2223 = vmatpush1.msra.mxu0 0.0
        %2224 = vmatprep.subr.mxu0 0.0
        %2225 = vmatpush1.msra.mxu0 0.0
        %2226 = vmatprep.subr.mxu0 0.0
        %2227 = vmatpush1.msra.mxu0 0.0
        %2228 = vmatprep.subr.mxu0 0.0
        %2229 = vmatpush1.msra.mxu0 0.0
        %2230 = vmatprep.subr.mxu0 0.0
        %2231 = vmatpush1.msra.mxu0 0.0
        %2232 = vmatprep.subr.mxu0 0.0
        %2233 = vmatpush1.msra.mxu0 0.0
        %2234 = vmatprep.mubr.f32.mxu0 0.0
        %2235 = vmatmul.mubr.f32.gmra.mrb[0].mxu0 %v2121
        %v2236 = vpop.f32.mrb[0].mxu0
        %v2237 = vadd.f32 0.0, %v2236
        %v2238 = vpop.f32.mrb[0].mxu0
        %2239 = vmatprep.mubr.f32.mxu0 0.0
        %2240 = vmatmul.mubr.f32.gmra.mrb[0].mxu0 %v2122
        %v2241 = vpop.f32.mrb[0].mxu0
        %v2242 = vadd.f32 0.0, %v2241
        %v2243 = vpop.f32.mrb[0].mxu0
        %2244 = vmatprep.mubr.f32.mxu0 0.0
        %2245 = vmatmul.mubr.f32.gmra.mrb[0].mxu0 %v2123
        %v2246 = vpop.f32.mrb[0].mxu0
        %v2247 = vadd.f32 0.0, %v2246
        %v2248 = vpop.f32.mrb[0].mxu0
        %2249 = vmatprep.mubr.f32.mxu0 0.0
        %2250 = vmatmul.mubr.f32.gmra.mrb[0].mxu0 %v2124
        %v2251 = vpop.f32.mrb[0].mxu0
        %v2252 = vadd.f32 0.0, %v2251
        %v2253 = vpop.f32.mrb[0].mxu0
        %2254 = vmatprep.mubr.f32.mxu0 0.0
        %2255 = vmatmul.mubr.f32.gmra.mrb[0].mxu0 %v2125
        %v2256 = vpop.f32.mrb[0].mxu0
        %v2257 = vadd.f32 0.0, %v2256
        %v2258 = vpop.f32.mrb[0].mxu0
        %2259 = vmatprep.mubr.f32.mxu0 0.0
        %2260 = vmatmul.mubr.f32.gmra.mrb[0].mxu0 %v2126
        %v2261 = vpop.f32.mrb[0].mxu0
        %v2262 = vadd.f32 0.0, %v2261
        %v2263 = vpop.f32.mrb[0].mxu0
        %2264 = vmatprep.mubr.f32.mxu0 0.0
        %2265 = vmatmul.mubr.f32.gmra.mrb[0].mxu0 %v2127
        %v2266 = vpop.f32.mrb[0].mxu0
        %v2267 = vadd.f32 0.0, %v2266
        %v2268 = vpop.f32.mrb[0].mxu0
        %2269 = vmatprep.mubr.f32.mxu0 0.0
        %2270 = vmatmul.mubr.f32.gmra.mrb[0].mxu0 %v2128
        %v2271 = vpop.f32.mrb[0].mxu0
        %v2272 = vadd.f32 0.0, %v2271
        %v2273 = vpop.f32.mrb[0].mxu0
        %2274 = vmatprep.mubr.f32.mxu0 0.0
        %2275 = vmatmul.mubr.f32.gmra.mrb[0].mxu0 %v2129
        %v2276 = vpop.f32.mrb[0].mxu0
        %v2277 = vadd.f32 0.0, %v2276
        %v2278 = vpop.f32.mrb[0].mxu0
        %2279 = vmatprep.mubr.f32.mxu0 0.0
        %2280 = vmatmul.mubr.f32.gmra.mrb[0].mxu0 %v2130
        %v2281 = vpop.f32.mrb[0].mxu0
        %v2282 = vadd.f32 0.0, %v2281
        %v2283 = vpop.f32.mrb[0].mxu0
        %2284 = vmatprep.mubr.f32.mxu0 0.0
        %2285 = vmatmul.mubr.f32.gmra.mrb[0].mxu0 %v2131
        %v2286 = vpop.f32.mrb[0].mxu0
        %v2287 = vadd.f32 0.0, %v2286
        %v2288 = vpop.f32.mrb[0].mxu0
        %2289 = vmatprep.mubr.f32.mxu0 0.0
        %2290 = vmatmul.mubr.f32.gmra.mrb[0].mxu0 %v2132
        %v2291 = vpop.f32.mrb[0].mxu0
        %v2292 = vadd.f32 0.0, %v2291
        %v2293 = vpop.f32.mrb[0].mxu0
        %2294 = vmatprep.mubr.f32.mxu0 0.0
        %2295 = vmatmul.mubr.f32.gmra.mrb[0].mxu0 %v2133
        %v2296 = vpop.f32.mrb[0].mxu0
        %v2297 = vadd.f32 0.0, %v2296
        %v2298 = vpop.f32.mrb[0].mxu0
        %2299 = vmatprep.mubr.f32.mxu0 0.0
        %2300 = vmatmul.mubr.f32.gmra.mrb[0].mxu0 %v2134
        %v2301 = vpop.f32.mrb[0].mxu0
        %v2302 = vadd.f32 0.0, %v2301
        %v2303 = vpop.f32.mrb[0].mxu0
        %2304 = vmatprep.mubr.f32.mxu0 0.0
        %2305 = vmatmul.mubr.f32.gmra.mrb[0].mxu0 %v2135
        %v2306 = vpop.f32.mrb[0].mxu0
        %v2307 = vadd.f32 0.0, %v2306
        %v2308 = vpop.f32.mrb[0].mxu0
        %2309 = vmatprep.mubr.f32.mxu0 0.0
        %2310 = vmatmul.mubr.f32.gmra.mrb[0].mxu0 %v2136
        %v2311 = vpop.f32.mrb[0].mxu0
        %v2312 = vadd.f32 0.0, %v2311
        %v2313 = vpop.f32.mrb[0].mxu0
        %2314 = vmatprep.mubr.f32.mxu0 0.0
        %2315 = vmatmul.mubr.f32.gmra.mrb[0].mxu0 %v2137
        %v2316 = vpop.f32.mrb[0].mxu0
        %v2317 = vadd.f32 0.0, %v2316
        %v2318 = vpop.f32.mrb[0].mxu0
        %2319 = vmatprep.mubr.f32.mxu0 0.0
        %2320 = vmatmul.mubr.f32.gmra.mrb[0].mxu0 %v2138
        %v2321 = vpop.f32.mrb[0].mxu0
        %v2322 = vadd.f32 0.0, %v2321
        %v2323 = vpop.f32.mrb[0].mxu0
        %2324 = vmatprep.mubr.f32.mxu0 0.0
        %2325 = vmatmul.mubr.f32.gmra.mrb[0].mxu0 %v2139
        %v2326 = vpop.f32.mrb[0].mxu0
        %v2327 = vadd.f32 0.0, %v2326
        %v2328 = vpop.f32.mrb[0].mxu0
        %2329 = vmatprep.mubr.f32.mxu0 0.0
        %2330 = vmatmul.mubr.f32.gmra.mrb[0].mxu0 %v2140
        %v2331 = vpop.f32.mrb[0].mxu0
        %v2332 = vadd.f32 0.0, %v2331
        %v2333 = vpop.f32.mrb[0].mxu0
        %2334 = vmatprep.mubr.f32.mxu0 0.0
        %2335 = vmatmul.mubr.f32.gmra.mrb[0].mxu0 %v2141
        %v2336 = vpop.f32.mrb[0].mxu0
        %v2337 = vadd.f32 0.0, %v2336
        %v2338 = vpop.f32.mrb[0].mxu0
        %2339 = vmatprep.mubr.f32.mxu0 0.0
        %2340 = vmatmul.mubr.f32.gmra.mrb[0].mxu0 %v2142
        %v2341 = vpop.f32.mrb[0].mxu0
        %v2342 = vadd.f32 0.0, %v2341
        %v2343 = vpop.f32.mrb[0].mxu0
        %2344 = vmatprep.mubr.f32.mxu0 0.0
        %2345 = vmatmul.mubr.f32.gmra.mrb[0].mxu0 %v2143
        %v2346 = vpop.f32.mrb[0].mxu0
        %v2347 = vadd.f32 0.0, %v2346
        %v2348 = vpop.f32.mrb[0].mxu0
        %2349 = vmatprep.mubr.f32.mxu0 0.0
        %2350 = vmatmul.mubr.f32.gmra.mrb[0].mxu0 %v2144
        %v2351 = vpop.f32.mrb[0].mxu0
        %v2352 = vadd.f32 0.0, %v2351
        %v2353 = vpop.f32.mrb[0].mxu0
        %2354 = vmatprep.mubr.f32.mxu0 0.0
        %2355 = vmatmul.mubr.f32.gmra.mrb[0].mxu0 %v2145
        %v2356 = vpop.f32.mrb[0].mxu0
        %v2357 = vadd.f32 0.0, %v2356
        %v2358 = vpop.f32.mrb[0].mxu0
        %2359 = vmatprep.mubr.f32.mxu0 0.0
        %2360 = vmatmul.mubr.f32.gmra.mrb[0].mxu0 %v2146
        %v2361 = vpop.f32.mrb[0].mxu0
        %v2362 = vadd.f32 0.0, %v2361
        %v2363 = vpop.f32.mrb[0].mxu0
        %2364 = vmatprep.mubr.f32.mxu0 0.0
        %2365 = vmatmul.mubr.f32.gmra.mrb[0].mxu0 %v2147
        %v2366 = vpop.f32.mrb[0].mxu0
        %v2367 = vadd.f32 0.0, %v2366
        %v2368 = vpop.f32.mrb[0].mxu0
        %2369 = vmatprep.mubr.f32.mxu0 0.0
        %2370 = vmatmul.mubr.f32.gmra.mrb[0].mxu0 %v2148
        %v2371 = vpop.f32.mrb[0].mxu0
        %v2372 = vadd.f32 0.0, %v2371
        %v2373 = vpop.f32.mrb[0].mxu0
        %2374 = vmatprep.mubr.f32.mxu0 0.0
        %2375 = vmatmul.mubr.f32.gmra.mrb[0].mxu0 %v2149
        %v2376 = vpop.f32.mrb[0].mxu0
        %v2377 = vadd.f32 0.0, %v2376
        %v2378 = vpop.f32.mrb[0].mxu0
        %2379 = vmatprep.mubr.f32.mxu0 0.0
        %2380 = vmatmul.mubr.f32.gmra.mrb[0].mxu0 %v2150
        %v2381 = vpop.f32.mrb[0].mxu0
        %v2382 = vadd.f32 0.0, %v2381
        %v2383 = vpop.f32.mrb[0].mxu0
        %2384 = vmatprep.mubr.f32.mxu0 0.0
        %2385 = vmatmul.mubr.f32.gmra.mrb[0].mxu0 %v2151
        %v2386 = vpop.f32.mrb[0].mxu0
        %v2387 = vadd.f32 0.0, %v2386
        %v2388 = vpop.f32.mrb[0].mxu0
        %2389 = vmatprep.mubr.f32.mxu0 0.0
        %2390 = vmatmul.mubr.f32.gmra.mrb[0].mxu0 %v2152
        %v2391 = vpop.f32.mrb[0].mxu0
        %v2392 = vadd.f32 0.0, %v2391
        %v2393 = vpop.f32.mrb[0].mxu0
        %2394 = vdwg.mxu0
        %v2395 = vld [vmem:[#allocation3] sm:$0xff]
        %v2396 = vld [vmem:[#allocation3 + $0x8] sm:$0xff]
        %v2397 = vld [vmem:[#allocation3 + $0x10] sm:$0xff]
        %v2398 = vld [vmem:[#allocation3 + $0x18] sm:$0xff]
        %v2399 = vld [vmem:[#allocation3 + $0x20] sm:$0xff]
        %v2400 = vld [vmem:[#allocation3 + $0x28] sm:$0xff]
        %v2401 = vld [vmem:[#allocation3 + $0x30] sm:$0xff]
        %v2402 = vld [vmem:[#allocation3 + $0x38] sm:$0xff]
        %v2403 = vld [vmem:[#allocation3 + $0x40] sm:$0xff]
        %v2404 = vld [vmem:[#allocation3 + $0x48] sm:$0xff]
        %v2405 = vld [vmem:[#allocation3 + $0x50] sm:$0xff]
        %v2406 = vld [vmem:[#allocation3 + $0x58] sm:$0xff]
        %v2407 = vld [vmem:[#allocation3 + $0x60] sm:$0xff]
        %v2408 = vld [vmem:[#allocation3 + $0x68] sm:$0xff]
        %v2409 = vld [vmem:[#allocation3 + $0x70] sm:$0xff]
        %v2410 = vld [vmem:[#allocation3 + $0x78] sm:$0xff]
        %v2411 = vld [vmem:[#allocation3 + $0x80] sm:$0xff]
        %v2412 = vld [vmem:[#allocation3 + $0x88] sm:$0xff]
        %v2413 = vld [vmem:[#allocation3 + $0x90] sm:$0xff]
        %v2414 = vld [vmem:[#allocation3 + $0x98] sm:$0xff]
        %v2415 = vld [vmem:[#allocation3 + $0xa0] sm:$0xff]
        %v2416 = vld [vmem:[#allocation3 + $0xa8] sm:$0xff]
        %v2417 = vld [vmem:[#allocation3 + $0xb0] sm:$0xff]
        %v2418 = vld [vmem:[#allocation3 + $0xb8] sm:$0xff]
        %v2419 = vld [vmem:[#allocation3 + $0xc0] sm:$0xff]
        %v2420 = vld [vmem:[#allocation3 + $0xc8] sm:$0xff]
        %v2421 = vld [vmem:[#allocation3 + $0xd0] sm:$0xff]
        %v2422 = vld [vmem:[#allocation3 + $0xd8] sm:$0xff]
        %v2423 = vld [vmem:[#allocation3 + $0xe0] sm:$0xff]
        %v2424 = vld [vmem:[#allocation3 + $0xe8] sm:$0xff]
        %v2425 = vld [vmem:[#allocation3 + $0xf0] sm:$0xff]
        %v2426 = vld [vmem:[#allocation3 + $0xf8] sm:$0xff]
        %v2427 = vadd.f32 %v2395, %v2237
        %v2428 = vadd.f32 %v2396, %v2242
        %v2429 = vadd.f32 %v2397, %v2247
        %v2430 = vadd.f32 %v2398, %v2252
        %v2431 = vadd.f32 %v2399, %v2257
        %v2432 = vadd.f32 %v2400, %v2262
        %v2433 = vadd.f32 %v2401, %v2267
        %v2434 = vadd.f32 %v2402, %v2272
        %v2435 = vadd.f32 %v2403, %v2277
        %v2436 = vadd.f32 %v2404, %v2282
        %v2437 = vadd.f32 %v2405, %v2287
        %v2438 = vadd.f32 %v2406, %v2292
        %v2439 = vadd.f32 %v2407, %v2297
        %v2440 = vadd.f32 %v2408, %v2302
        %v2441 = vadd.f32 %v2409, %v2307
        %v2442 = vadd.f32 %v2410, %v2312
        %v2443 = vadd.f32 %v2411, %v2317
        %v2444 = vadd.f32 %v2412, %v2322
        %v2445 = vadd.f32 %v2413, %v2327
        %v2446 = vadd.f32 %v2414, %v2332
        %v2447 = vadd.f32 %v2415, %v2337
        %v2448 = vadd.f32 %v2416, %v2342
        %v2449 = vadd.f32 %v2417, %v2347
        %v2450 = vadd.f32 %v2418, %v2352
        %v2451 = vadd.f32 %v2419, %v2357
        %v2452 = vadd.f32 %v2420, %v2362
        %v2453 = vadd.f32 %v2421, %v2367
        %v2454 = vadd.f32 %v2422, %v2372
        %v2455 = vadd.f32 %v2423, %v2377
        %v2456 = vadd.f32 %v2424, %v2382
        %v2457 = vadd.f32 %v2425, %v2387
        %v2458 = vadd.f32 %v2426, %v2392
        %2459 = vst [vmem:[#allocation3] sm:$0xff] %v2427
        %2460 = vst [vmem:[#allocation3 + $0x8] sm:$0xff] %v2428
        %2461 = vst [vmem:[#allocation3 + $0x10] sm:$0xff] %v2429
        %2462 = vst [vmem:[#allocation3 + $0x18] sm:$0xff] %v2430
        %2463 = vst [vmem:[#allocation3 + $0x20] sm:$0xff] %v2431
        %2464 = vst [vmem:[#allocation3 + $0x28] sm:$0xff] %v2432
        %2465 = vst [vmem:[#allocation3 + $0x30] sm:$0xff] %v2433
        %2466 = vst [vmem:[#allocation3 + $0x38] sm:$0xff] %v2434
        %2467 = vst [vmem:[#allocation3 + $0x40] sm:$0xff] %v2435
        %2468 = vst [vmem:[#allocation3 + $0x48] sm:$0xff] %v2436
        %2469 = vst [vmem:[#allocation3 + $0x50] sm:$0xff] %v2437
        %2470 = vst [vmem:[#allocation3 + $0x58] sm:$0xff] %v2438
        %2471 = vst [vmem:[#allocation3 + $0x60] sm:$0xff] %v2439
        %2472 = vst [vmem:[#allocation3 + $0x68] sm:$0xff] %v2440
        %2473 = vst [vmem:[#allocation3 + $0x70] sm:$0xff] %v2441
        %2474 = vst [vmem:[#allocation3 + $0x78] sm:$0xff] %v2442
        %2475 = vst [vmem:[#allocation3 + $0x80] sm:$0xff] %v2443
        %2476 = vst [vmem:[#allocation3 + $0x88] sm:$0xff] %v2444
        %2477 = vst [vmem:[#allocation3 + $0x90] sm:$0xff] %v2445
        %2478 = vst [vmem:[#allocation3 + $0x98] sm:$0xff] %v2446
        %2479 = vst [vmem:[#allocation3 + $0xa0] sm:$0xff] %v2447
        %2480 = vst [vmem:[#allocation3 + $0xa8] sm:$0xff] %v2448
        %2481 = vst [vmem:[#allocation3 + $0xb0] sm:$0xff] %v2449
        %2482 = vst [vmem:[#allocation3 + $0xb8] sm:$0xff] %v2450
        %2483 = vst [vmem:[#allocation3 + $0xc0] sm:$0xff] %v2451
        %2484 = vst [vmem:[#allocation3 + $0xc8] sm:$0xff] %v2452
        %2485 = vst [vmem:[#allocation3 + $0xd0] sm:$0xff] %v2453
        %2486 = vst [vmem:[#allocation3 + $0xd8] sm:$0xff] %v2454
        %2487 = vst [vmem:[#allocation3 + $0xe0] sm:$0xff] %v2455
        %2488 = vst [vmem:[#allocation3 + $0xe8] sm:$0xff] %v2456
        %2489 = vst [vmem:[#allocation3 + $0xf0] sm:$0xff] %v2457
        %2490 = vst [vmem:[#allocation3 + $0xf8] sm:$0xff] %v2458
        %s2491 = scalar_lea.vmem %s291, 48
        %v2492 = vld [vmem:[%s2491] sm:$0xff]
        %v2493 = vld [vmem:[%s2491 + $0x8] sm:$0xff]
        %v2494 = vld [vmem:[%s2491 + $0x18] sm:$0xff]
        %v2495 = vld [vmem:[%s2491 + $0x20] sm:$0xff]
        %v2496 = vld [vmem:[%s2491 + $0x30] sm:$0xff]
        %v2497 = vld [vmem:[%s2491 + $0x38] sm:$0xff]
        %v2498 = vld [vmem:[%s2491 + $0x48] sm:$0xff]
        %v2499 = vld [vmem:[%s2491 + $0x50] sm:$0xff]
        %v2500 = vld [vmem:[%s2491 + $0x60] sm:$0xff]
        %v2501 = vld [vmem:[%s2491 + $0x68] sm:$0xff]
        %v2502 = vld [vmem:[%s2491 + $0x78] sm:$0xff]
        %v2503 = vld [vmem:[%s2491 + $0x80] sm:$0xff]
        %v2504 = vld [vmem:[%s2491 + $0x90] sm:$0xff]
        %v2505 = vld [vmem:[%s2491 + $0x98] sm:$0xff]
        %v2506 = vld [vmem:[%s2491 + $0xa8] sm:$0xff]
        %v2507 = vld [vmem:[%s2491 + $0xb0] sm:$0xff]
        %v2508 = vld [vmem:[%s2491 + $0xc0] sm:$0xff]
        %v2509 = vld [vmem:[%s2491 + $0xc8] sm:$0xff]
        %v2510 = vld [vmem:[%s2491 + $0xd8] sm:$0xff]
        %v2511 = vld [vmem:[%s2491 + $0xe0] sm:$0xff]
        %v2512 = vld [vmem:[%s2491 + $0xf0] sm:$0xff]
        %v2513 = vld [vmem:[%s2491 + $0xf8] sm:$0xff]
        %v2514 = vld [vmem:[%s2491 + $0x108] sm:$0xff]
        %v2515 = vld [vmem:[%s2491 + $0x110] sm:$0xff]
        %v2516 = vld [vmem:[%s2491 + $0x120] sm:$0xff]
        %v2517 = vld [vmem:[%s2491 + $0x128] sm:$0xff]
        %v2518 = vld [vmem:[%s2491 + $0x138] sm:$0xff]
        %v2519 = vld [vmem:[%s2491 + $0x140] sm:$0xff]
        %v2520 = vld [vmem:[%s2491 + $0x150] sm:$0xff]
        %v2521 = vld [vmem:[%s2491 + $0x158] sm:$0xff]
        %v2522 = vld [vmem:[%s2491 + $0x168] sm:$0xff]
        %v2523 = vld [vmem:[%s2491 + $0x170] sm:$0xff]
        %s2524 = scalar_lea.vmem %s1, 768
        %v2525 = vld [vmem:[%s2524] sm:$0xff]
        %v2526 = vld [vmem:[%s2524 + $0x8] sm:$0xff]
        %v2527 = vld [vmem:[%s2524 + $0x10] sm:$0xff]
        %v2528 = vld [vmem:[%s2524 + $0x18] sm:$0xff]
        %v2529 = vld [vmem:[%s2524 + $0x20] sm:$0xff]
        %v2530 = vld [vmem:[%s2524 + $0x28] sm:$0xff]
        %v2531 = vld [vmem:[%s2524 + $0x30] sm:$0xff]
        %v2532 = vld [vmem:[%s2524 + $0x38] sm:$0xff]
        %v2533 = vld [vmem:[%s2524 + $0x40] sm:$0xff]
        %v2534 = vld [vmem:[%s2524 + $0x48] sm:$0xff]
        %v2535 = vld [vmem:[%s2524 + $0x50] sm:$0xff]
        %v2536 = vld [vmem:[%s2524 + $0x58] sm:$0xff]
        %v2537 = vld [vmem:[%s2524 + $0x60] sm:$0xff]
        %v2538 = vld [vmem:[%s2524 + $0x68] sm:$0xff]
        %v2539 = vld [vmem:[%s2524 + $0x70] sm:$0xff]
        %v2540 = vld [vmem:[%s2524 + $0x78] sm:$0xff]
        %2541 = vmatprep.subr.mxu0 0.0
        %2542 = vmatpush1.msra.mxu0 %v2525
        %2543 = vmatprep.subr.mxu0 0.0
        %2544 = vmatpush1.msra.mxu0 %v2526
        %2545 = vmatprep.subr.mxu0 0.0
        %2546 = vmatpush1.msra.mxu0 %v2527
        %2547 = vmatprep.subr.mxu0 0.0
        %2548 = vmatpush1.msra.mxu0 %v2528
        %2549 = vmatprep.subr.mxu0 0.0
        %2550 = vmatpush1.msra.mxu0 %v2529
        %2551 = vmatprep.subr.mxu0 0.0
        %2552 = vmatpush1.msra.mxu0 %v2530
        %2553 = vmatprep.subr.mxu0 0.0
        %2554 = vmatpush1.msra.mxu0 %v2531
        %2555 = vmatprep.subr.mxu0 0.0
        %2556 = vmatpush1.msra.mxu0 %v2532
        %2557 = vmatprep.subr.mxu0 0.0
        %2558 = vmatpush1.msra.mxu0 %v2533
        %2559 = vmatprep.subr.mxu0 0.0
        %2560 = vmatpush1.msra.mxu0 %v2534
        %2561 = vmatprep.subr.mxu0 0.0
        %2562 = vmatpush1.msra.mxu0 %v2535
        %2563 = vmatprep.subr.mxu0 0.0
        %2564 = vmatpush1.msra.mxu0 %v2536
        %2565 = vmatprep.subr.mxu0 0.0
        %2566 = vmatpush1.msra.mxu0 %v2537
        %2567 = vmatprep.subr.mxu0 0.0
        %2568 = vmatpush1.msra.mxu0 %v2538
        %2569 = vmatprep.subr.mxu0 0.0
        %2570 = vmatpush1.msra.mxu0 %v2539
        %2571 = vmatprep.subr.mxu0 0.0
        %2572 = vmatpush1.msra.mxu0 %v2540
        %2573 = vmatprep.subr.mxu0 0.0
        %2574 = vmatpush1.msra.mxu0 0.0
        %2575 = vmatprep.subr.mxu0 0.0
        %2576 = vmatpush1.msra.mxu0 0.0
        %2577 = vmatprep.subr.mxu0 0.0
        %2578 = vmatpush1.msra.mxu0 0.0
        %2579 = vmatprep.subr.mxu0 0.0
        %2580 = vmatpush1.msra.mxu0 0.0
        %2581 = vmatprep.subr.mxu0 0.0
        %2582 = vmatpush1.msra.mxu0 0.0
        %2583 = vmatprep.subr.mxu0 0.0
        %2584 = vmatpush1.msra.mxu0 0.0
        %2585 = vmatprep.subr.mxu0 0.0
        %2586 = vmatpush1.msra.mxu0 0.0
        %2587 = vmatprep.subr.mxu0 0.0
        %2588 = vmatpush1.msra.mxu0 0.0
        %2589 = vmatprep.subr.mxu0 0.0
        %2590 = vmatpush1.msra.mxu0 0.0
        %2591 = vmatprep.subr.mxu0 0.0
        %2592 = vmatpush1.msra.mxu0 0.0
        %2593 = vmatprep.subr.mxu0 0.0
        %2594 = vmatpush1.msra.mxu0 0.0
        %2595 = vmatprep.subr.mxu0 0.0
        %2596 = vmatpush1.msra.mxu0 0.0
        %2597 = vmatprep.subr.mxu0 0.0
        %2598 = vmatpush1.msra.mxu0 0.0
        %2599 = vmatprep.subr.mxu0 0.0
        %2600 = vmatpush1.msra.mxu0 0.0
        %2601 = vmatprep.subr.mxu0 0.0
        %2602 = vmatpush1.msra.mxu0 0.0
        %2603 = vmatprep.subr.mxu0 0.0
        %2604 = vmatpush1.msra.mxu0 0.0
        %2605 = vmatprep.mubr.f32.mxu0 0.0
        %2606 = vmatmul.mubr.f32.gmra.mrb[0].mxu0 %v2492
        %v2607 = vpop.f32.mrb[0].mxu0
        %v2608 = vadd.f32 0.0, %v2607
        %v2609 = vpop.f32.mrb[0].mxu0
        %2610 = vmatprep.mubr.f32.mxu0 0.0
        %2611 = vmatmul.mubr.f32.gmra.mrb[0].mxu0 %v2493
        %v2612 = vpop.f32.mrb[0].mxu0
        %v2613 = vadd.f32 0.0, %v2612
        %v2614 = vpop.f32.mrb[0].mxu0
        %2615 = vmatprep.mubr.f32.mxu0 0.0
        %2616 = vmatmul.mubr.f32.gmra.mrb[0].mxu0 %v2494
        %v2617 = vpop.f32.mrb[0].mxu0
        %v2618 = vadd.f32 0.0, %v2617
        %v2619 = vpop.f32.mrb[0].mxu0
        %2620 = vmatprep.mubr.f32.mxu0 0.0
        %2621 = vmatmul.mubr.f32.gmra.mrb[0].mxu0 %v2495
        %v2622 = vpop.f32.mrb[0].mxu0
        %v2623 = vadd.f32 0.0, %v2622
        %v2624 = vpop.f32.mrb[0].mxu0
        %2625 = vmatprep.mubr.f32.mxu0 0.0
        %2626 = vmatmul.mubr.f32.gmra.mrb[0].mxu0 %v2496
        %v2627 = vpop.f32.mrb[0].mxu0
        %v2628 = vadd.f32 0.0, %v2627
        %v2629 = vpop.f32.mrb[0].mxu0
        %2630 = vmatprep.mubr.f32.mxu0 0.0
        %2631 = vmatmul.mubr.f32.gmra.mrb[0].mxu0 %v2497
        %v2632 = vpop.f32.mrb[0].mxu0
        %v2633 = vadd.f32 0.0, %v2632
        %v2634 = vpop.f32.mrb[0].mxu0
        %2635 = vmatprep.mubr.f32.mxu0 0.0
        %2636 = vmatmul.mubr.f32.gmra.mrb[0].mxu0 %v2498
        %v2637 = vpop.f32.mrb[0].mxu0
        %v2638 = vadd.f32 0.0, %v2637
        %v2639 = vpop.f32.mrb[0].mxu0
        %2640 = vmatprep.mubr.f32.mxu0 0.0
        %2641 = vmatmul.mubr.f32.gmra.mrb[0].mxu0 %v2499
        %v2642 = vpop.f32.mrb[0].mxu0
        %v2643 = vadd.f32 0.0, %v2642
        %v2644 = vpop.f32.mrb[0].mxu0
        %2645 = vmatprep.mubr.f32.mxu0 0.0
        %2646 = vmatmul.mubr.f32.gmra.mrb[0].mxu0 %v2500
        %v2647 = vpop.f32.mrb[0].mxu0
        %v2648 = vadd.f32 0.0, %v2647
        %v2649 = vpop.f32.mrb[0].mxu0
        %2650 = vmatprep.mubr.f32.mxu0 0.0
        %2651 = vmatmul.mubr.f32.gmra.mrb[0].mxu0 %v2501
        %v2652 = vpop.f32.mrb[0].mxu0
        %v2653 = vadd.f32 0.0, %v2652
        %v2654 = vpop.f32.mrb[0].mxu0
        %2655 = vmatprep.mubr.f32.mxu0 0.0
        %2656 = vmatmul.mubr.f32.gmra.mrb[0].mxu0 %v2502
        %v2657 = vpop.f32.mrb[0].mxu0
        %v2658 = vadd.f32 0.0, %v2657
        %v2659 = vpop.f32.mrb[0].mxu0
        %2660 = vmatprep.mubr.f32.mxu0 0.0
        %2661 = vmatmul.mubr.f32.gmra.mrb[0].mxu0 %v2503
        %v2662 = vpop.f32.mrb[0].mxu0
        %v2663 = vadd.f32 0.0, %v2662
        %v2664 = vpop.f32.mrb[0].mxu0
        %2665 = vmatprep.mubr.f32.mxu0 0.0
        %2666 = vmatmul.mubr.f32.gmra.mrb[0].mxu0 %v2504
        %v2667 = vpop.f32.mrb[0].mxu0
        %v2668 = vadd.f32 0.0, %v2667
        %v2669 = vpop.f32.mrb[0].mxu0
        %2670 = vmatprep.mubr.f32.mxu0 0.0
        %2671 = vmatmul.mubr.f32.gmra.mrb[0].mxu0 %v2505
        %v2672 = vpop.f32.mrb[0].mxu0
        %v2673 = vadd.f32 0.0, %v2672
        %v2674 = vpop.f32.mrb[0].mxu0
        %2675 = vmatprep.mubr.f32.mxu0 0.0
        %2676 = vmatmul.mubr.f32.gmra.mrb[0].mxu0 %v2506
        %v2677 = vpop.f32.mrb[0].mxu0
        %v2678 = vadd.f32 0.0, %v2677
        %v2679 = vpop.f32.mrb[0].mxu0
        %2680 = vmatprep.mubr.f32.mxu0 0.0
        %2681 = vmatmul.mubr.f32.gmra.mrb[0].mxu0 %v2507
        %v2682 = vpop.f32.mrb[0].mxu0
        %v2683 = vadd.f32 0.0, %v2682
        %v2684 = vpop.f32.mrb[0].mxu0
        %2685 = vmatprep.mubr.f32.mxu0 0.0
        %2686 = vmatmul.mubr.f32.gmra.mrb[0].mxu0 %v2508
        %v2687 = vpop.f32.mrb[0].mxu0
        %v2688 = vadd.f32 0.0, %v2687
        %v2689 = vpop.f32.mrb[0].mxu0
        %2690 = vmatprep.mubr.f32.mxu0 0.0
        %2691 = vmatmul.mubr.f32.gmra.mrb[0].mxu0 %v2509
        %v2692 = vpop.f32.mrb[0].mxu0
        %v2693 = vadd.f32 0.0, %v2692
        %v2694 = vpop.f32.mrb[0].mxu0
        %2695 = vmatprep.mubr.f32.mxu0 0.0
        %2696 = vmatmul.mubr.f32.gmra.mrb[0].mxu0 %v2510
        %v2697 = vpop.f32.mrb[0].mxu0
        %v2698 = vadd.f32 0.0, %v2697
        %v2699 = vpop.f32.mrb[0].mxu0
        %2700 = vmatprep.mubr.f32.mxu0 0.0
        %2701 = vmatmul.mubr.f32.gmra.mrb[0].mxu0 %v2511
        %v2702 = vpop.f32.mrb[0].mxu0
        %v2703 = vadd.f32 0.0, %v2702
        %v2704 = vpop.f32.mrb[0].mxu0
        %2705 = vmatprep.mubr.f32.mxu0 0.0
        %2706 = vmatmul.mubr.f32.gmra.mrb[0].mxu0 %v2512
        %v2707 = vpop.f32.mrb[0].mxu0
        %v2708 = vadd.f32 0.0, %v2707
        %v2709 = vpop.f32.mrb[0].mxu0
        %2710 = vmatprep.mubr.f32.mxu0 0.0
        %2711 = vmatmul.mubr.f32.gmra.mrb[0].mxu0 %v2513
        %v2712 = vpop.f32.mrb[0].mxu0
        %v2713 = vadd.f32 0.0, %v2712
        %v2714 = vpop.f32.mrb[0].mxu0
        %2715 = vmatprep.mubr.f32.mxu0 0.0
        %2716 = vmatmul.mubr.f32.gmra.mrb[0].mxu0 %v2514
        %v2717 = vpop.f32.mrb[0].mxu0
        %v2718 = vadd.f32 0.0, %v2717
        %v2719 = vpop.f32.mrb[0].mxu0
        %2720 = vmatprep.mubr.f32.mxu0 0.0
        %2721 = vmatmul.mubr.f32.gmra.mrb[0].mxu0 %v2515
        %v2722 = vpop.f32.mrb[0].mxu0
        %v2723 = vadd.f32 0.0, %v2722
        %v2724 = vpop.f32.mrb[0].mxu0
        %2725 = vmatprep.mubr.f32.mxu0 0.0
        %2726 = vmatmul.mubr.f32.gmra.mrb[0].mxu0 %v2516
        %v2727 = vpop.f32.mrb[0].mxu0
        %v2728 = vadd.f32 0.0, %v2727
        %v2729 = vpop.f32.mrb[0].mxu0
        %2730 = vmatprep.mubr.f32.mxu0 0.0
        %2731 = vmatmul.mubr.f32.gmra.mrb[0].mxu0 %v2517
        %v2732 = vpop.f32.mrb[0].mxu0
        %v2733 = vadd.f32 0.0, %v2732
        %v2734 = vpop.f32.mrb[0].mxu0
        %2735 = vmatprep.mubr.f32.mxu0 0.0
        %2736 = vmatmul.mubr.f32.gmra.mrb[0].mxu0 %v2518
        %v2737 = vpop.f32.mrb[0].mxu0
        %v2738 = vadd.f32 0.0, %v2737
        %v2739 = vpop.f32.mrb[0].mxu0
        %2740 = vmatprep.mubr.f32.mxu0 0.0
        %2741 = vmatmul.mubr.f32.gmra.mrb[0].mxu0 %v2519
        %v2742 = vpop.f32.mrb[0].mxu0
        %v2743 = vadd.f32 0.0, %v2742
        %v2744 = vpop.f32.mrb[0].mxu0
        %2745 = vmatprep.mubr.f32.mxu0 0.0
        %2746 = vmatmul.mubr.f32.gmra.mrb[0].mxu0 %v2520
        %v2747 = vpop.f32.mrb[0].mxu0
        %v2748 = vadd.f32 0.0, %v2747
        %v2749 = vpop.f32.mrb[0].mxu0
        %2750 = vmatprep.mubr.f32.mxu0 0.0
        %2751 = vmatmul.mubr.f32.gmra.mrb[0].mxu0 %v2521
        %v2752 = vpop.f32.mrb[0].mxu0
        %v2753 = vadd.f32 0.0, %v2752
        %v2754 = vpop.f32.mrb[0].mxu0
        %2755 = vmatprep.mubr.f32.mxu0 0.0
        %2756 = vmatmul.mubr.f32.gmra.mrb[0].mxu0 %v2522
        %v2757 = vpop.f32.mrb[0].mxu0
        %v2758 = vadd.f32 0.0, %v2757
        %v2759 = vpop.f32.mrb[0].mxu0
        %2760 = vmatprep.mubr.f32.mxu0 0.0
        %2761 = vmatmul.mubr.f32.gmra.mrb[0].mxu0 %v2523
        %v2762 = vpop.f32.mrb[0].mxu0
        %v2763 = vadd.f32 0.0, %v2762
        %v2764 = vpop.f32.mrb[0].mxu0
        %2765 = vdwg.mxu0
        %v2766 = vld [vmem:[#allocation3] sm:$0xff]
        %v2767 = vld [vmem:[#allocation3 + $0x8] sm:$0xff]
        %v2768 = vld [vmem:[#allocation3 + $0x10] sm:$0xff]
        %v2769 = vld [vmem:[#allocation3 + $0x18] sm:$0xff]
        %v2770 = vld [vmem:[#allocation3 + $0x20] sm:$0xff]
        %v2771 = vld [vmem:[#allocation3 + $0x28] sm:$0xff]
        %v2772 = vld [vmem:[#allocation3 + $0x30] sm:$0xff]
        %v2773 = vld [vmem:[#allocation3 + $0x38] sm:$0xff]
        %v2774 = vld [vmem:[#allocation3 + $0x40] sm:$0xff]
        %v2775 = vld [vmem:[#allocation3 + $0x48] sm:$0xff]
        %v2776 = vld [vmem:[#allocation3 + $0x50] sm:$0xff]
        %v2777 = vld [vmem:[#allocation3 + $0x58] sm:$0xff]
        %v2778 = vld [vmem:[#allocation3 + $0x60] sm:$0xff]
        %v2779 = vld [vmem:[#allocation3 + $0x68] sm:$0xff]
        %v2780 = vld [vmem:[#allocation3 + $0x70] sm:$0xff]
        %v2781 = vld [vmem:[#allocation3 + $0x78] sm:$0xff]
        %v2782 = vld [vmem:[#allocation3 + $0x80] sm:$0xff]
        %v2783 = vld [vmem:[#allocation3 + $0x88] sm:$0xff]
        %v2784 = vld [vmem:[#allocation3 + $0x90] sm:$0xff]
        %v2785 = vld [vmem:[#allocation3 + $0x98] sm:$0xff]
        %v2786 = vld [vmem:[#allocation3 + $0xa0] sm:$0xff]
        %v2787 = vld [vmem:[#allocation3 + $0xa8] sm:$0xff]
        %v2788 = vld [vmem:[#allocation3 + $0xb0] sm:$0xff]
        %v2789 = vld [vmem:[#allocation3 + $0xb8] sm:$0xff]
        %v2790 = vld [vmem:[#allocation3 + $0xc0] sm:$0xff]
        %v2791 = vld [vmem:[#allocation3 + $0xc8] sm:$0xff]
        %v2792 = vld [vmem:[#allocation3 + $0xd0] sm:$0xff]
        %v2793 = vld [vmem:[#allocation3 + $0xd8] sm:$0xff]
        %v2794 = vld [vmem:[#allocation3 + $0xe0] sm:$0xff]
        %v2795 = vld [vmem:[#allocation3 + $0xe8] sm:$0xff]
        %v2796 = vld [vmem:[#allocation3 + $0xf0] sm:$0xff]
        %v2797 = vld [vmem:[#allocation3 + $0xf8] sm:$0xff]
        %v2798 = vadd.f32 %v2766, %v2608
        %v2799 = vadd.f32 %v2767, %v2613
        %v2800 = vadd.f32 %v2768, %v2618
        %v2801 = vadd.f32 %v2769, %v2623
        %v2802 = vadd.f32 %v2770, %v2628
        %v2803 = vadd.f32 %v2771, %v2633
        %v2804 = vadd.f32 %v2772, %v2638
        %v2805 = vadd.f32 %v2773, %v2643
        %v2806 = vadd.f32 %v2774, %v2648
        %v2807 = vadd.f32 %v2775, %v2653
        %v2808 = vadd.f32 %v2776, %v2658
        %v2809 = vadd.f32 %v2777, %v2663
        %v2810 = vadd.f32 %v2778, %v2668
        %v2811 = vadd.f32 %v2779, %v2673
        %v2812 = vadd.f32 %v2780, %v2678
        %v2813 = vadd.f32 %v2781, %v2683
        %v2814 = vadd.f32 %v2782, %v2688
        %v2815 = vadd.f32 %v2783, %v2693
        %v2816 = vadd.f32 %v2784, %v2698
        %v2817 = vadd.f32 %v2785, %v2703
        %v2818 = vadd.f32 %v2786, %v2708
        %v2819 = vadd.f32 %v2787, %v2713
        %v2820 = vadd.f32 %v2788, %v2718
        %v2821 = vadd.f32 %v2789, %v2723
        %v2822 = vadd.f32 %v2790, %v2728
        %v2823 = vadd.f32 %v2791, %v2733
        %v2824 = vadd.f32 %v2792, %v2738
        %v2825 = vadd.f32 %v2793, %v2743
        %v2826 = vadd.f32 %v2794, %v2748
        %v2827 = vadd.f32 %v2795, %v2753
        %v2828 = vadd.f32 %v2796, %v2758
        %v2829 = vadd.f32 %v2797, %v2763
        %2830 = vst [vmem:[#allocation3] sm:$0xff] %v2798
        %2831 = vst [vmem:[#allocation3 + $0x8] sm:$0xff] %v2799
        %2832 = vst [vmem:[#allocation3 + $0x10] sm:$0xff] %v2800
        %2833 = vst [vmem:[#allocation3 + $0x18] sm:$0xff] %v2801
        %2834 = vst [vmem:[#allocation3 + $0x20] sm:$0xff] %v2802
        %2835 = vst [vmem:[#allocation3 + $0x28] sm:$0xff] %v2803
        %2836 = vst [vmem:[#allocation3 + $0x30] sm:$0xff] %v2804
        %2837 = vst [vmem:[#allocation3 + $0x38] sm:$0xff] %v2805
        %2838 = vst [vmem:[#allocation3 + $0x40] sm:$0xff] %v2806
        %2839 = vst [vmem:[#allocation3 + $0x48] sm:$0xff] %v2807
        %2840 = vst [vmem:[#allocation3 + $0x50] sm:$0xff] %v2808
        %2841 = vst [vmem:[#allocation3 + $0x58] sm:$0xff] %v2809
        %2842 = vst [vmem:[#allocation3 + $0x60] sm:$0xff] %v2810
        %2843 = vst [vmem:[#allocation3 + $0x68] sm:$0xff] %v2811
        %2844 = vst [vmem:[#allocation3 + $0x70] sm:$0xff] %v2812
        %2845 = vst [vmem:[#allocation3 + $0x78] sm:$0xff] %v2813
        %2846 = vst [vmem:[#allocation3 + $0x80] sm:$0xff] %v2814
        %2847 = vst [vmem:[#allocation3 + $0x88] sm:$0xff] %v2815
        %2848 = vst [vmem:[#allocation3 + $0x90] sm:$0xff] %v2816
        %2849 = vst [vmem:[#allocation3 + $0x98] sm:$0xff] %v2817
        %2850 = vst [vmem:[#allocation3 + $0xa0] sm:$0xff] %v2818
        %2851 = vst [vmem:[#allocation3 + $0xa8] sm:$0xff] %v2819
        %2852 = vst [vmem:[#allocation3 + $0xb0] sm:$0xff] %v2820
        %2853 = vst [vmem:[#allocation3 + $0xb8] sm:$0xff] %v2821
        %2854 = vst [vmem:[#allocation3 + $0xc0] sm:$0xff] %v2822
        %2855 = vst [vmem:[#allocation3 + $0xc8] sm:$0xff] %v2823
        %2856 = vst [vmem:[#allocation3 + $0xd0] sm:$0xff] %v2824
        %2857 = vst [vmem:[#allocation3 + $0xd8] sm:$0xff] %v2825
        %2858 = vst [vmem:[#allocation3 + $0xe0] sm:$0xff] %v2826
        %2859 = vst [vmem:[#allocation3 + $0xe8] sm:$0xff] %v2827
        %2860 = vst [vmem:[#allocation3 + $0xf0] sm:$0xff] %v2828
        %2861 = vst [vmem:[#allocation3 + $0xf8] sm:$0xff] %v2829
        %v2862 = vld [vmem:[%s2491 + $0x1] sm:$0xff]
        %v2863 = vld [vmem:[%s2491 + $0x9] sm:$0xff]
        %v2864 = vld [vmem:[%s2491 + $0x19] sm:$0xff]
        %v2865 = vld [vmem:[%s2491 + $0x21] sm:$0xff]
        %v2866 = vld [vmem:[%s2491 + $0x31] sm:$0xff]
        %v2867 = vld [vmem:[%s2491 + $0x39] sm:$0xff]
        %v2868 = vld [vmem:[%s2491 + $0x49] sm:$0xff]
        %v2869 = vld [vmem:[%s2491 + $0x51] sm:$0xff]
        %v2870 = vld [vmem:[%s2491 + $0x61] sm:$0xff]
        %v2871 = vld [vmem:[%s2491 + $0x69] sm:$0xff]
        %v2872 = vld [vmem:[%s2491 + $0x79] sm:$0xff]
        %v2873 = vld [vmem:[%s2491 + $0x81] sm:$0xff]
        %v2874 = vld [vmem:[%s2491 + $0x91] sm:$0xff]
        %v2875 = vld [vmem:[%s2491 + $0x99] sm:$0xff]
        %v2876 = vld [vmem:[%s2491 + $0xa9] sm:$0xff]
        %v2877 = vld [vmem:[%s2491 + $0xb1] sm:$0xff]
        %v2878 = vld [vmem:[%s2491 + $0xc1] sm:$0xff]
        %v2879 = vld [vmem:[%s2491 + $0xc9] sm:$0xff]
        %v2880 = vld [vmem:[%s2491 + $0xd9] sm:$0xff]
        %v2881 = vld [vmem:[%s2491 + $0xe1] sm:$0xff]
        %v2882 = vld [vmem:[%s2491 + $0xf1] sm:$0xff]
        %v2883 = vld [vmem:[%s2491 + $0xf9] sm:$0xff]
        %v2884 = vld [vmem:[%s2491 + $0x109] sm:$0xff]
        %v2885 = vld [vmem:[%s2491 + $0x111] sm:$0xff]
        %v2886 = vld [vmem:[%s2491 + $0x121] sm:$0xff]
        %v2887 = vld [vmem:[%s2491 + $0x129] sm:$0xff]
        %v2888 = vld [vmem:[%s2491 + $0x139] sm:$0xff]
        %v2889 = vld [vmem:[%s2491 + $0x141] sm:$0xff]
        %v2890 = vld [vmem:[%s2491 + $0x151] sm:$0xff]
        %v2891 = vld [vmem:[%s2491 + $0x159] sm:$0xff]
        %v2892 = vld [vmem:[%s2491 + $0x169] sm:$0xff]
        %v2893 = vld [vmem:[%s2491 + $0x171] sm:$0xff]
        %s2894 = scalar_lea.vmem %s1, 896
        %v2895 = vld [vmem:[%s2894] sm:$0xff]
        %v2896 = vld [vmem:[%s2894 + $0x8] sm:$0xff]
        %v2897 = vld [vmem:[%s2894 + $0x10] sm:$0xff]
        %v2898 = vld [vmem:[%s2894 + $0x18] sm:$0xff]
        %v2899 = vld [vmem:[%s2894 + $0x20] sm:$0xff]
        %v2900 = vld [vmem:[%s2894 + $0x28] sm:$0xff]
        %v2901 = vld [vmem:[%s2894 + $0x30] sm:$0xff]
        %v2902 = vld [vmem:[%s2894 + $0x38] sm:$0xff]
        %v2903 = vld [vmem:[%s2894 + $0x40] sm:$0xff]
        %v2904 = vld [vmem:[%s2894 + $0x48] sm:$0xff]
        %v2905 = vld [vmem:[%s2894 + $0x50] sm:$0xff]
        %v2906 = vld [vmem:[%s2894 + $0x58] sm:$0xff]
        %v2907 = vld [vmem:[%s2894 + $0x60] sm:$0xff]
        %v2908 = vld [vmem:[%s2894 + $0x68] sm:$0xff]
        %v2909 = vld [vmem:[%s2894 + $0x70] sm:$0xff]
        %v2910 = vld [vmem:[%s2894 + $0x78] sm:$0xff]
        %2911 = vmatprep.subr.mxu0 0.0
        %2912 = vmatpush1.msra.mxu0 %v2895
        %2913 = vmatprep.subr.mxu0 0.0
        %2914 = vmatpush1.msra.mxu0 %v2896
        %2915 = vmatprep.subr.mxu0 0.0
        %2916 = vmatpush1.msra.mxu0 %v2897
        %2917 = vmatprep.subr.mxu0 0.0
        %2918 = vmatpush1.msra.mxu0 %v2898
        %2919 = vmatprep.subr.mxu0 0.0
        %2920 = vmatpush1.msra.mxu0 %v2899
        %2921 = vmatprep.subr.mxu0 0.0
        %2922 = vmatpush1.msra.mxu0 %v2900
        %2923 = vmatprep.subr.mxu0 0.0
        %2924 = vmatpush1.msra.mxu0 %v2901
        %2925 = vmatprep.subr.mxu0 0.0
        %2926 = vmatpush1.msra.mxu0 %v2902
        %2927 = vmatprep.subr.mxu0 0.0
        %2928 = vmatpush1.msra.mxu0 %v2903
        %2929 = vmatprep.subr.mxu0 0.0
        %2930 = vmatpush1.msra.mxu0 %v2904
        %2931 = vmatprep.subr.mxu0 0.0
        %2932 = vmatpush1.msra.mxu0 %v2905
        %2933 = vmatprep.subr.mxu0 0.0
        %2934 = vmatpush1.msra.mxu0 %v2906
        %2935 = vmatprep.subr.mxu0 0.0
        %2936 = vmatpush1.msra.mxu0 %v2907
        %2937 = vmatprep.subr.mxu0 0.0
        %2938 = vmatpush1.msra.mxu0 %v2908
        %2939 = vmatprep.subr.mxu0 0.0
        %2940 = vmatpush1.msra.mxu0 %v2909
        %2941 = vmatprep.subr.mxu0 0.0
        %2942 = vmatpush1.msra.mxu0 %v2910
        %2943 = vmatprep.subr.mxu0 0.0
        %2944 = vmatpush1.msra.mxu0 0.0
        %2945 = vmatprep.subr.mxu0 0.0
        %2946 = vmatpush1.msra.mxu0 0.0
        %2947 = vmatprep.subr.mxu0 0.0
        %2948 = vmatpush1.msra.mxu0 0.0
        %2949 = vmatprep.subr.mxu0 0.0
        %2950 = vmatpush1.msra.mxu0 0.0
        %2951 = vmatprep.subr.mxu0 0.0
        %2952 = vmatpush1.msra.mxu0 0.0
        %2953 = vmatprep.subr.mxu0 0.0
        %2954 = vmatpush1.msra.mxu0 0.0
        %2955 = vmatprep.subr.mxu0 0.0
        %2956 = vmatpush1.msra.mxu0 0.0
        %2957 = vmatprep.subr.mxu0 0.0
        %2958 = vmatpush1.msra.mxu0 0.0
        %2959 = vmatprep.subr.mxu0 0.0
        %2960 = vmatpush1.msra.mxu0 0.0
        %2961 = vmatprep.subr.mxu0 0.0
        %2962 = vmatpush1.msra.mxu0 0.0
        %2963 = vmatprep.subr.mxu0 0.0
        %2964 = vmatpush1.msra.mxu0 0.0
        %2965 = vmatprep.subr.mxu0 0.0
        %2966 = vmatpush1.msra.mxu0 0.0
        %2967 = vmatprep.subr.mxu0 0.0
        %2968 = vmatpush1.msra.mxu0 0.0
        %2969 = vmatprep.subr.mxu0 0.0
        %2970 = vmatpush1.msra.mxu0 0.0
        %2971 = vmatprep.subr.mxu0 0.0
        %2972 = vmatpush1.msra.mxu0 0.0
        %2973 = vmatprep.subr.mxu0 0.0
        %2974 = vmatpush1.msra.mxu0 0.0
        %2975 = vmatprep.mubr.f32.mxu0 0.0
        %2976 = vmatmul.mubr.f32.gmra.mrb[0].mxu0 %v2862
        %v2977 = vpop.f32.mrb[0].mxu0
        %v2978 = vadd.f32 0.0, %v2977
        %v2979 = vpop.f32.mrb[0].mxu0
        %2980 = vmatprep.mubr.f32.mxu0 0.0
        %2981 = vmatmul.mubr.f32.gmra.mrb[0].mxu0 %v2863
        %v2982 = vpop.f32.mrb[0].mxu0
        %v2983 = vadd.f32 0.0, %v2982
        %v2984 = vpop.f32.mrb[0].mxu0
        %2985 = vmatprep.mubr.f32.mxu0 0.0
        %2986 = vmatmul.mubr.f32.gmra.mrb[0].mxu0 %v2864
        %v2987 = vpop.f32.mrb[0].mxu0
        %v2988 = vadd.f32 0.0, %v2987
        %v2989 = vpop.f32.mrb[0].mxu0
        %2990 = vmatprep.mubr.f32.mxu0 0.0
        %2991 = vmatmul.mubr.f32.gmra.mrb[0].mxu0 %v2865
        %v2992 = vpop.f32.mrb[0].mxu0
        %v2993 = vadd.f32 0.0, %v2992
        %v2994 = vpop.f32.mrb[0].mxu0
        %2995 = vmatprep.mubr.f32.mxu0 0.0
        %2996 = vmatmul.mubr.f32.gmra.mrb[0].mxu0 %v2866
        %v2997 = vpop.f32.mrb[0].mxu0
        %v2998 = vadd.f32 0.0, %v2997
        %v2999 = vpop.f32.mrb[0].mxu0
        %3000 = vmatprep.mubr.f32.mxu0 0.0
        %3001 = vmatmul.mubr.f32.gmra.mrb[0].mxu0 %v2867
        %v3002 = vpop.f32.mrb[0].mxu0
        %v3003 = vadd.f32 0.0, %v3002
        %v3004 = vpop.f32.mrb[0].mxu0
        %3005 = vmatprep.mubr.f32.mxu0 0.0
        %3006 = vmatmul.mubr.f32.gmra.mrb[0].mxu0 %v2868
        %v3007 = vpop.f32.mrb[0].mxu0
        %v3008 = vadd.f32 0.0, %v3007
        %v3009 = vpop.f32.mrb[0].mxu0
        %3010 = vmatprep.mubr.f32.mxu0 0.0
        %3011 = vmatmul.mubr.f32.gmra.mrb[0].mxu0 %v2869
        %v3012 = vpop.f32.mrb[0].mxu0
        %v3013 = vadd.f32 0.0, %v3012
        %v3014 = vpop.f32.mrb[0].mxu0
        %3015 = vmatprep.mubr.f32.mxu0 0.0
        %3016 = vmatmul.mubr.f32.gmra.mrb[0].mxu0 %v2870
        %v3017 = vpop.f32.mrb[0].mxu0
        %v3018 = vadd.f32 0.0, %v3017
        %v3019 = vpop.f32.mrb[0].mxu0
        %3020 = vmatprep.mubr.f32.mxu0 0.0
        %3021 = vmatmul.mubr.f32.gmra.mrb[0].mxu0 %v2871
        %v3022 = vpop.f32.mrb[0].mxu0
        %v3023 = vadd.f32 0.0, %v3022
        %v3024 = vpop.f32.mrb[0].mxu0
        %3025 = vmatprep.mubr.f32.mxu0 0.0
        %3026 = vmatmul.mubr.f32.gmra.mrb[0].mxu0 %v2872
        %v3027 = vpop.f32.mrb[0].mxu0
        %v3028 = vadd.f32 0.0, %v3027
        %v3029 = vpop.f32.mrb[0].mxu0
        %3030 = vmatprep.mubr.f32.mxu0 0.0
        %3031 = vmatmul.mubr.f32.gmra.mrb[0].mxu0 %v2873
        %v3032 = vpop.f32.mrb[0].mxu0
        %v3033 = vadd.f32 0.0, %v3032
        %v3034 = vpop.f32.mrb[0].mxu0
        %3035 = vmatprep.mubr.f32.mxu0 0.0
        %3036 = vmatmul.mubr.f32.gmra.mrb[0].mxu0 %v2874
        %v3037 = vpop.f32.mrb[0].mxu0
        %v3038 = vadd.f32 0.0, %v3037
        %v3039 = vpop.f32.mrb[0].mxu0
        %3040 = vmatprep.mubr.f32.mxu0 0.0
        %3041 = vmatmul.mubr.f32.gmra.mrb[0].mxu0 %v2875
        %v3042 = vpop.f32.mrb[0].mxu0
        %v3043 = vadd.f32 0.0, %v3042
        %v3044 = vpop.f32.mrb[0].mxu0
        %3045 = vmatprep.mubr.f32.mxu0 0.0
        %3046 = vmatmul.mubr.f32.gmra.mrb[0].mxu0 %v2876
        %v3047 = vpop.f32.mrb[0].mxu0
        %v3048 = vadd.f32 0.0, %v3047
        %v3049 = vpop.f32.mrb[0].mxu0
        %3050 = vmatprep.mubr.f32.mxu0 0.0
        %3051 = vmatmul.mubr.f32.gmra.mrb[0].mxu0 %v2877
        %v3052 = vpop.f32.mrb[0].mxu0
        %v3053 = vadd.f32 0.0, %v3052
        %v3054 = vpop.f32.mrb[0].mxu0
        %3055 = vmatprep.mubr.f32.mxu0 0.0
        %3056 = vmatmul.mubr.f32.gmra.mrb[0].mxu0 %v2878
        %v3057 = vpop.f32.mrb[0].mxu0
        %v3058 = vadd.f32 0.0, %v3057
        %v3059 = vpop.f32.mrb[0].mxu0
        %3060 = vmatprep.mubr.f32.mxu0 0.0
        %3061 = vmatmul.mubr.f32.gmra.mrb[0].mxu0 %v2879
        %v3062 = vpop.f32.mrb[0].mxu0
        %v3063 = vadd.f32 0.0, %v3062
        %v3064 = vpop.f32.mrb[0].mxu0
        %3065 = vmatprep.mubr.f32.mxu0 0.0
        %3066 = vmatmul.mubr.f32.gmra.mrb[0].mxu0 %v2880
        %v3067 = vpop.f32.mrb[0].mxu0
        %v3068 = vadd.f32 0.0, %v3067
        %v3069 = vpop.f32.mrb[0].mxu0
        %3070 = vmatprep.mubr.f32.mxu0 0.0
        %3071 = vmatmul.mubr.f32.gmra.mrb[0].mxu0 %v2881
        %v3072 = vpop.f32.mrb[0].mxu0
        %v3073 = vadd.f32 0.0, %v3072
        %v3074 = vpop.f32.mrb[0].mxu0
        %3075 = vmatprep.mubr.f32.mxu0 0.0
        %3076 = vmatmul.mubr.f32.gmra.mrb[0].mxu0 %v2882
        %v3077 = vpop.f32.mrb[0].mxu0
        %v3078 = vadd.f32 0.0, %v3077
        %v3079 = vpop.f32.mrb[0].mxu0
        %3080 = vmatprep.mubr.f32.mxu0 0.0
        %3081 = vmatmul.mubr.f32.gmra.mrb[0].mxu0 %v2883
        %v3082 = vpop.f32.mrb[0].mxu0
        %v3083 = vadd.f32 0.0, %v3082
        %v3084 = vpop.f32.mrb[0].mxu0
        %3085 = vmatprep.mubr.f32.mxu0 0.0
        %3086 = vmatmul.mubr.f32.gmra.mrb[0].mxu0 %v2884
        %v3087 = vpop.f32.mrb[0].mxu0
        %v3088 = vadd.f32 0.0, %v3087
        %v3089 = vpop.f32.mrb[0].mxu0
        %3090 = vmatprep.mubr.f32.mxu0 0.0
        %3091 = vmatmul.mubr.f32.gmra.mrb[0].mxu0 %v2885
        %v3092 = vpop.f32.mrb[0].mxu0
        %v3093 = vadd.f32 0.0, %v3092
        %v3094 = vpop.f32.mrb[0].mxu0
        %3095 = vmatprep.mubr.f32.mxu0 0.0
        %3096 = vmatmul.mubr.f32.gmra.mrb[0].mxu0 %v2886
        %v3097 = vpop.f32.mrb[0].mxu0
        %v3098 = vadd.f32 0.0, %v3097
        %v3099 = vpop.f32.mrb[0].mxu0
        %3100 = vmatprep.mubr.f32.mxu0 0.0
        %3101 = vmatmul.mubr.f32.gmra.mrb[0].mxu0 %v2887
        %v3102 = vpop.f32.mrb[0].mxu0
        %v3103 = vadd.f32 0.0, %v3102
        %v3104 = vpop.f32.mrb[0].mxu0
        %3105 = vmatprep.mubr.f32.mxu0 0.0
        %3106 = vmatmul.mubr.f32.gmra.mrb[0].mxu0 %v2888
        %v3107 = vpop.f32.mrb[0].mxu0
        %v3108 = vadd.f32 0.0, %v3107
        %v3109 = vpop.f32.mrb[0].mxu0
        %3110 = vmatprep.mubr.f32.mxu0 0.0
        %3111 = vmatmul.mubr.f32.gmra.mrb[0].mxu0 %v2889
        %v3112 = vpop.f32.mrb[0].mxu0
        %v3113 = vadd.f32 0.0, %v3112
        %v3114 = vpop.f32.mrb[0].mxu0
        %3115 = vmatprep.mubr.f32.mxu0 0.0
        %3116 = vmatmul.mubr.f32.gmra.mrb[0].mxu0 %v2890
        %v3117 = vpop.f32.mrb[0].mxu0
        %v3118 = vadd.f32 0.0, %v3117
        %v3119 = vpop.f32.mrb[0].mxu0
        %3120 = vmatprep.mubr.f32.mxu0 0.0
        %3121 = vmatmul.mubr.f32.gmra.mrb[0].mxu0 %v2891
        %v3122 = vpop.f32.mrb[0].mxu0
        %v3123 = vadd.f32 0.0, %v3122
        %v3124 = vpop.f32.mrb[0].mxu0
        %3125 = vmatprep.mubr.f32.mxu0 0.0
        %3126 = vmatmul.mubr.f32.gmra.mrb[0].mxu0 %v2892
        %v3127 = vpop.f32.mrb[0].mxu0
        %v3128 = vadd.f32 0.0, %v3127
        %v3129 = vpop.f32.mrb[0].mxu0
        %3130 = vmatprep.mubr.f32.mxu0 0.0
        %3131 = vmatmul.mubr.f32.gmra.mrb[0].mxu0 %v2893
        %v3132 = vpop.f32.mrb[0].mxu0
        %v3133 = vadd.f32 0.0, %v3132
        %v3134 = vpop.f32.mrb[0].mxu0
        %3135 = vdwg.mxu0
        %v3136 = vld [vmem:[#allocation3] sm:$0xff]
        %v3137 = vld [vmem:[#allocation3 + $0x8] sm:$0xff]
        %v3138 = vld [vmem:[#allocation3 + $0x10] sm:$0xff]
        %v3139 = vld [vmem:[#allocation3 + $0x18] sm:$0xff]
        %v3140 = vld [vmem:[#allocation3 + $0x20] sm:$0xff]
        %v3141 = vld [vmem:[#allocation3 + $0x28] sm:$0xff]
        %v3142 = vld [vmem:[#allocation3 + $0x30] sm:$0xff]
        %v3143 = vld [vmem:[#allocation3 + $0x38] sm:$0xff]
        %v3144 = vld [vmem:[#allocation3 + $0x40] sm:$0xff]
        %v3145 = vld [vmem:[#allocation3 + $0x48] sm:$0xff]
        %v3146 = vld [vmem:[#allocation3 + $0x50] sm:$0xff]
        %v3147 = vld [vmem:[#allocation3 + $0x58] sm:$0xff]
        %v3148 = vld [vmem:[#allocation3 + $0x60] sm:$0xff]
        %v3149 = vld [vmem:[#allocation3 + $0x68] sm:$0xff]
        %v3150 = vld [vmem:[#allocation3 + $0x70] sm:$0xff]
        %v3151 = vld [vmem:[#allocation3 + $0x78] sm:$0xff]
        %v3152 = vld [vmem:[#allocation3 + $0x80] sm:$0xff]
        %v3153 = vld [vmem:[#allocation3 + $0x88] sm:$0xff]
        %v3154 = vld [vmem:[#allocation3 + $0x90] sm:$0xff]
        %v3155 = vld [vmem:[#allocation3 + $0x98] sm:$0xff]
        %v3156 = vld [vmem:[#allocation3 + $0xa0] sm:$0xff]
        %v3157 = vld [vmem:[#allocation3 + $0xa8] sm:$0xff]
        %v3158 = vld [vmem:[#allocation3 + $0xb0] sm:$0xff]
        %v3159 = vld [vmem:[#allocation3 + $0xb8] sm:$0xff]
        %v3160 = vld [vmem:[#allocation3 + $0xc0] sm:$0xff]
        %v3161 = vld [vmem:[#allocation3 + $0xc8] sm:$0xff]
        %v3162 = vld [vmem:[#allocation3 + $0xd0] sm:$0xff]
        %v3163 = vld [vmem:[#allocation3 + $0xd8] sm:$0xff]
        %v3164 = vld [vmem:[#allocation3 + $0xe0] sm:$0xff]
        %v3165 = vld [vmem:[#allocation3 + $0xe8] sm:$0xff]
        %v3166 = vld [vmem:[#allocation3 + $0xf0] sm:$0xff]
        %v3167 = vld [vmem:[#allocation3 + $0xf8] sm:$0xff]
        %v3168 = vadd.f32 %v3136, %v2978
        %v3169 = vadd.f32 %v3137, %v2983
        %v3170 = vadd.f32 %v3138, %v2988
        %v3171 = vadd.f32 %v3139, %v2993
        %v3172 = vadd.f32 %v3140, %v2998
        %v3173 = vadd.f32 %v3141, %v3003
        %v3174 = vadd.f32 %v3142, %v3008
        %v3175 = vadd.f32 %v3143, %v3013
        %v3176 = vadd.f32 %v3144, %v3018
        %v3177 = vadd.f32 %v3145, %v3023
        %v3178 = vadd.f32 %v3146, %v3028
        %v3179 = vadd.f32 %v3147, %v3033
        %v3180 = vadd.f32 %v3148, %v3038
        %v3181 = vadd.f32 %v3149, %v3043
        %v3182 = vadd.f32 %v3150, %v3048
        %v3183 = vadd.f32 %v3151, %v3053
        %v3184 = vadd.f32 %v3152, %v3058
        %v3185 = vadd.f32 %v3153, %v3063
        %v3186 = vadd.f32 %v3154, %v3068
        %v3187 = vadd.f32 %v3155, %v3073
        %v3188 = vadd.f32 %v3156, %v3078
        %v3189 = vadd.f32 %v3157, %v3083
        %v3190 = vadd.f32 %v3158, %v3088
        %v3191 = vadd.f32 %v3159, %v3093
        %v3192 = vadd.f32 %v3160, %v3098
        %v3193 = vadd.f32 %v3161, %v3103
        %v3194 = vadd.f32 %v3162, %v3108
        %v3195 = vadd.f32 %v3163, %v3113
        %v3196 = vadd.f32 %v3164, %v3118
        %v3197 = vadd.f32 %v3165, %v3123
        %v3198 = vadd.f32 %v3166, %v3128
        %v3199 = vadd.f32 %v3167, %v3133
        %3200 = vst [vmem:[#allocation3] sm:$0xff] %v3168
        %3201 = vst [vmem:[#allocation3 + $0x8] sm:$0xff] %v3169
        %3202 = vst [vmem:[#allocation3 + $0x10] sm:$0xff] %v3170
        %3203 = vst [vmem:[#allocation3 + $0x18] sm:$0xff] %v3171
        %3204 = vst [vmem:[#allocation3 + $0x20] sm:$0xff] %v3172
        %3205 = vst [vmem:[#allocation3 + $0x28] sm:$0xff] %v3173
        %3206 = vst [vmem:[#allocation3 + $0x30] sm:$0xff] %v3174
        %3207 = vst [vmem:[#allocation3 + $0x38] sm:$0xff] %v3175
        %3208 = vst [vmem:[#allocation3 + $0x40] sm:$0xff] %v3176
        %3209 = vst [vmem:[#allocation3 + $0x48] sm:$0xff] %v3177
        %3210 = vst [vmem:[#allocation3 + $0x50] sm:$0xff] %v3178
        %3211 = vst [vmem:[#allocation3 + $0x58] sm:$0xff] %v3179
        %3212 = vst [vmem:[#allocation3 + $0x60] sm:$0xff] %v3180
        %3213 = vst [vmem:[#allocation3 + $0x68] sm:$0xff] %v3181
        %3214 = vst [vmem:[#allocation3 + $0x70] sm:$0xff] %v3182
        %3215 = vst [vmem:[#allocation3 + $0x78] sm:$0xff] %v3183
        %3216 = vst [vmem:[#allocation3 + $0x80] sm:$0xff] %v3184
        %3217 = vst [vmem:[#allocation3 + $0x88] sm:$0xff] %v3185
        %3218 = vst [vmem:[#allocation3 + $0x90] sm:$0xff] %v3186
        %3219 = vst [vmem:[#allocation3 + $0x98] sm:$0xff] %v3187
        %3220 = vst [vmem:[#allocation3 + $0xa0] sm:$0xff] %v3188
        %3221 = vst [vmem:[#allocation3 + $0xa8] sm:$0xff] %v3189
        %3222 = vst [vmem:[#allocation3 + $0xb0] sm:$0xff] %v3190
        %3223 = vst [vmem:[#allocation3 + $0xb8] sm:$0xff] %v3191
        %3224 = vst [vmem:[#allocation3 + $0xc0] sm:$0xff] %v3192
        %3225 = vst [vmem:[#allocation3 + $0xc8] sm:$0xff] %v3193
        %3226 = vst [vmem:[#allocation3 + $0xd0] sm:$0xff] %v3194
        %3227 = vst [vmem:[#allocation3 + $0xd8] sm:$0xff] %v3195
        %3228 = vst [vmem:[#allocation3 + $0xe0] sm:$0xff] %v3196
        %3229 = vst [vmem:[#allocation3 + $0xe8] sm:$0xff] %v3197
        %3230 = vst [vmem:[#allocation3 + $0xf0] sm:$0xff] %v3198
        %3231 = vst [vmem:[#allocation3 + $0xf8] sm:$0xff] %v3199
        %v3232 = vld [vmem:[%s2491 + $0x2] sm:$0xff]
        %v3233 = vld [vmem:[%s2491 + $0xa] sm:$0xff]
        %v3234 = vld [vmem:[%s2491 + $0x1a] sm:$0xff]
        %v3235 = vld [vmem:[%s2491 + $0x22] sm:$0xff]
        %v3236 = vld [vmem:[%s2491 + $0x32] sm:$0xff]
        %v3237 = vld [vmem:[%s2491 + $0x3a] sm:$0xff]
        %v3238 = vld [vmem:[%s2491 + $0x4a] sm:$0xff]
        %v3239 = vld [vmem:[%s2491 + $0x52] sm:$0xff]
        %v3240 = vld [vmem:[%s2491 + $0x62] sm:$0xff]
        %v3241 = vld [vmem:[%s2491 + $0x6a] sm:$0xff]
        %v3242 = vld [vmem:[%s2491 + $0x7a] sm:$0xff]
        %v3243 = vld [vmem:[%s2491 + $0x82] sm:$0xff]
        %v3244 = vld [vmem:[%s2491 + $0x92] sm:$0xff]
        %v3245 = vld [vmem:[%s2491 + $0x9a] sm:$0xff]
        %v3246 = vld [vmem:[%s2491 + $0xaa] sm:$0xff]
        %v3247 = vld [vmem:[%s2491 + $0xb2] sm:$0xff]
        %v3248 = vld [vmem:[%s2491 + $0xc2] sm:$0xff]
        %v3249 = vld [vmem:[%s2491 + $0xca] sm:$0xff]
        %v3250 = vld [vmem:[%s2491 + $0xda] sm:$0xff]
        %v3251 = vld [vmem:[%s2491 + $0xe2] sm:$0xff]
        %v3252 = vld [vmem:[%s2491 + $0xf2] sm:$0xff]
        %v3253 = vld [vmem:[%s2491 + $0xfa] sm:$0xff]
        %v3254 = vld [vmem:[%s2491 + $0x10a] sm:$0xff]
        %v3255 = vld [vmem:[%s2491 + $0x112] sm:$0xff]
        %v3256 = vld [vmem:[%s2491 + $0x122] sm:$0xff]
        %v3257 = vld [vmem:[%s2491 + $0x12a] sm:$0xff]
        %v3258 = vld [vmem:[%s2491 + $0x13a] sm:$0xff]
        %v3259 = vld [vmem:[%s2491 + $0x142] sm:$0xff]
        %v3260 = vld [vmem:[%s2491 + $0x152] sm:$0xff]
        %v3261 = vld [vmem:[%s2491 + $0x15a] sm:$0xff]
        %v3262 = vld [vmem:[%s2491 + $0x16a] sm:$0xff]
        %v3263 = vld [vmem:[%s2491 + $0x172] sm:$0xff]
        %s3264 = scalar_lea.vmem %s1, 1024
        %v3265 = vld [vmem:[%s3264] sm:$0xff]
        %v3266 = vld [vmem:[%s3264 + $0x8] sm:$0xff]
        %v3267 = vld [vmem:[%s3264 + $0x10] sm:$0xff]
        %v3268 = vld [vmem:[%s3264 + $0x18] sm:$0xff]
        %v3269 = vld [vmem:[%s3264 + $0x20] sm:$0xff]
        %v3270 = vld [vmem:[%s3264 + $0x28] sm:$0xff]
        %v3271 = vld [vmem:[%s3264 + $0x30] sm:$0xff]
        %v3272 = vld [vmem:[%s3264 + $0x38] sm:$0xff]
        %v3273 = vld [vmem:[%s3264 + $0x40] sm:$0xff]
        %v3274 = vld [vmem:[%s3264 + $0x48] sm:$0xff]
        %v3275 = vld [vmem:[%s3264 + $0x50] sm:$0xff]
        %v3276 = vld [vmem:[%s3264 + $0x58] sm:$0xff]
        %v3277 = vld [vmem:[%s3264 + $0x60] sm:$0xff]
        %v3278 = vld [vmem:[%s3264 + $0x68] sm:$0xff]
        %v3279 = vld [vmem:[%s3264 + $0x70] sm:$0xff]
        %v3280 = vld [vmem:[%s3264 + $0x78] sm:$0xff]
        %3281 = vmatprep.subr.mxu0 0.0
        %3282 = vmatpush1.msra.mxu0 %v3265
        %3283 = vmatprep.subr.mxu0 0.0
        %3284 = vmatpush1.msra.mxu0 %v3266
        %3285 = vmatprep.subr.mxu0 0.0
        %3286 = vmatpush1.msra.mxu0 %v3267
        %3287 = vmatprep.subr.mxu0 0.0
        %3288 = vmatpush1.msra.mxu0 %v3268
        %3289 = vmatprep.subr.mxu0 0.0
        %3290 = vmatpush1.msra.mxu0 %v3269
        %3291 = vmatprep.subr.mxu0 0.0
        %3292 = vmatpush1.msra.mxu0 %v3270
        %3293 = vmatprep.subr.mxu0 0.0
        %3294 = vmatpush1.msra.mxu0 %v3271
        %3295 = vmatprep.subr.mxu0 0.0
        %3296 = vmatpush1.msra.mxu0 %v3272
        %3297 = vmatprep.subr.mxu0 0.0
        %3298 = vmatpush1.msra.mxu0 %v3273
        %3299 = vmatprep.subr.mxu0 0.0
        %3300 = vmatpush1.msra.mxu0 %v3274
        %3301 = vmatprep.subr.mxu0 0.0
        %3302 = vmatpush1.msra.mxu0 %v3275
        %3303 = vmatprep.subr.mxu0 0.0
        %3304 = vmatpush1.msra.mxu0 %v3276
        %3305 = vmatprep.subr.mxu0 0.0
        %3306 = vmatpush1.msra.mxu0 %v3277
        %3307 = vmatprep.subr.mxu0 0.0
        %3308 = vmatpush1.msra.mxu0 %v3278
        %3309 = vmatprep.subr.mxu0 0.0
        %3310 = vmatpush1.msra.mxu0 %v3279
        %3311 = vmatprep.subr.mxu0 0.0
        %3312 = vmatpush1.msra.mxu0 %v3280
        %3313 = vmatprep.subr.mxu0 0.0
        %3314 = vmatpush1.msra.mxu0 0.0
        %3315 = vmatprep.subr.mxu0 0.0
        %3316 = vmatpush1.msra.mxu0 0.0
        %3317 = vmatprep.subr.mxu0 0.0
        %3318 = vmatpush1.msra.mxu0 0.0
        %3319 = vmatprep.subr.mxu0 0.0
        %3320 = vmatpush1.msra.mxu0 0.0
        %3321 = vmatprep.subr.mxu0 0.0
        %3322 = vmatpush1.msra.mxu0 0.0
        %3323 = vmatprep.subr.mxu0 0.0
        %3324 = vmatpush1.msra.mxu0 0.0
        %3325 = vmatprep.subr.mxu0 0.0
        %3326 = vmatpush1.msra.mxu0 0.0
        %3327 = vmatprep.subr.mxu0 0.0
        %3328 = vmatpush1.msra.mxu0 0.0
        %3329 = vmatprep.subr.mxu0 0.0
        %3330 = vmatpush1.msra.mxu0 0.0
        %3331 = vmatprep.subr.mxu0 0.0
        %3332 = vmatpush1.msra.mxu0 0.0
        %3333 = vmatprep.subr.mxu0 0.0
        %3334 = vmatpush1.msra.mxu0 0.0
        %3335 = vmatprep.subr.mxu0 0.0
        %3336 = vmatpush1.msra.mxu0 0.0
        %3337 = vmatprep.subr.mxu0 0.0
        %3338 = vmatpush1.msra.mxu0 0.0
        %3339 = vmatprep.subr.mxu0 0.0
        %3340 = vmatpush1.msra.mxu0 0.0
        %3341 = vmatprep.subr.mxu0 0.0
        %3342 = vmatpush1.msra.mxu0 0.0
        %3343 = vmatprep.subr.mxu0 0.0
        %3344 = vmatpush1.msra.mxu0 0.0
        %3345 = vmatprep.mubr.f32.mxu0 0.0
        %3346 = vmatmul.mubr.f32.gmra.mrb[0].mxu0 %v3232
        %v3347 = vpop.f32.mrb[0].mxu0
        %v3348 = vadd.f32 0.0, %v3347
        %v3349 = vpop.f32.mrb[0].mxu0
        %3350 = vmatprep.mubr.f32.mxu0 0.0
        %3351 = vmatmul.mubr.f32.gmra.mrb[0].mxu0 %v3233
        %v3352 = vpop.f32.mrb[0].mxu0
        %v3353 = vadd.f32 0.0, %v3352
        %v3354 = vpop.f32.mrb[0].mxu0
        %3355 = vmatprep.mubr.f32.mxu0 0.0
        %3356 = vmatmul.mubr.f32.gmra.mrb[0].mxu0 %v3234
        %v3357 = vpop.f32.mrb[0].mxu0
        %v3358 = vadd.f32 0.0, %v3357
        %v3359 = vpop.f32.mrb[0].mxu0
        %3360 = vmatprep.mubr.f32.mxu0 0.0
        %3361 = vmatmul.mubr.f32.gmra.mrb[0].mxu0 %v3235
        %v3362 = vpop.f32.mrb[0].mxu0
        %v3363 = vadd.f32 0.0, %v3362
        %v3364 = vpop.f32.mrb[0].mxu0
        %3365 = vmatprep.mubr.f32.mxu0 0.0
        %3366 = vmatmul.mubr.f32.gmra.mrb[0].mxu0 %v3236
        %v3367 = vpop.f32.mrb[0].mxu0
        %v3368 = vadd.f32 0.0, %v3367
        %v3369 = vpop.f32.mrb[0].mxu0
        %3370 = vmatprep.mubr.f32.mxu0 0.0
        %3371 = vmatmul.mubr.f32.gmra.mrb[0].mxu0 %v3237
        %v3372 = vpop.f32.mrb[0].mxu0
        %v3373 = vadd.f32 0.0, %v3372
        %v3374 = vpop.f32.mrb[0].mxu0
        %3375 = vmatprep.mubr.f32.mxu0 0.0
        %3376 = vmatmul.mubr.f32.gmra.mrb[0].mxu0 %v3238
        %v3377 = vpop.f32.mrb[0].mxu0
        %v3378 = vadd.f32 0.0, %v3377
        %v3379 = vpop.f32.mrb[0].mxu0
        %3380 = vmatprep.mubr.f32.mxu0 0.0
        %3381 = vmatmul.mubr.f32.gmra.mrb[0].mxu0 %v3239
        %v3382 = vpop.f32.mrb[0].mxu0
        %v3383 = vadd.f32 0.0, %v3382
        %v3384 = vpop.f32.mrb[0].mxu0
        %3385 = vmatprep.mubr.f32.mxu0 0.0
        %3386 = vmatmul.mubr.f32.gmra.mrb[0].mxu0 %v3240
        %v3387 = vpop.f32.mrb[0].mxu0
        %v3388 = vadd.f32 0.0, %v3387
        %v3389 = vpop.f32.mrb[0].mxu0
        %3390 = vmatprep.mubr.f32.mxu0 0.0
        %3391 = vmatmul.mubr.f32.gmra.mrb[0].mxu0 %v3241
        %v3392 = vpop.f32.mrb[0].mxu0
        %v3393 = vadd.f32 0.0, %v3392
        %v3394 = vpop.f32.mrb[0].mxu0
        %3395 = vmatprep.mubr.f32.mxu0 0.0
        %3396 = vmatmul.mubr.f32.gmra.mrb[0].mxu0 %v3242
        %v3397 = vpop.f32.mrb[0].mxu0
        %v3398 = vadd.f32 0.0, %v3397
        %v3399 = vpop.f32.mrb[0].mxu0
        %3400 = vmatprep.mubr.f32.mxu0 0.0
        %3401 = vmatmul.mubr.f32.gmra.mrb[0].mxu0 %v3243
        %v3402 = vpop.f32.mrb[0].mxu0
        %v3403 = vadd.f32 0.0, %v3402
        %v3404 = vpop.f32.mrb[0].mxu0
        %3405 = vmatprep.mubr.f32.mxu0 0.0
        %3406 = vmatmul.mubr.f32.gmra.mrb[0].mxu0 %v3244
        %v3407 = vpop.f32.mrb[0].mxu0
        %v3408 = vadd.f32 0.0, %v3407
        %v3409 = vpop.f32.mrb[0].mxu0
        %3410 = vmatprep.mubr.f32.mxu0 0.0
        %3411 = vmatmul.mubr.f32.gmra.mrb[0].mxu0 %v3245
        %v3412 = vpop.f32.mrb[0].mxu0
        %v3413 = vadd.f32 0.0, %v3412
        %v3414 = vpop.f32.mrb[0].mxu0
        %3415 = vmatprep.mubr.f32.mxu0 0.0
        %3416 = vmatmul.mubr.f32.gmra.mrb[0].mxu0 %v3246
        %v3417 = vpop.f32.mrb[0].mxu0
        %v3418 = vadd.f32 0.0, %v3417
        %v3419 = vpop.f32.mrb[0].mxu0
        %3420 = vmatprep.mubr.f32.mxu0 0.0
        %3421 = vmatmul.mubr.f32.gmra.mrb[0].mxu0 %v3247
        %v3422 = vpop.f32.mrb[0].mxu0
        %v3423 = vadd.f32 0.0, %v3422
        %v3424 = vpop.f32.mrb[0].mxu0
        %3425 = vmatprep.mubr.f32.mxu0 0.0
        %3426 = vmatmul.mubr.f32.gmra.mrb[0].mxu0 %v3248
        %v3427 = vpop.f32.mrb[0].mxu0
        %v3428 = vadd.f32 0.0, %v3427
        %v3429 = vpop.f32.mrb[0].mxu0
        %3430 = vmatprep.mubr.f32.mxu0 0.0
        %3431 = vmatmul.mubr.f32.gmra.mrb[0].mxu0 %v3249
        %v3432 = vpop.f32.mrb[0].mxu0
        %v3433 = vadd.f32 0.0, %v3432
        %v3434 = vpop.f32.mrb[0].mxu0
        %3435 = vmatprep.mubr.f32.mxu0 0.0
        %3436 = vmatmul.mubr.f32.gmra.mrb[0].mxu0 %v3250
        %v3437 = vpop.f32.mrb[0].mxu0
        %v3438 = vadd.f32 0.0, %v3437
        %v3439 = vpop.f32.mrb[0].mxu0
        %3440 = vmatprep.mubr.f32.mxu0 0.0
        %3441 = vmatmul.mubr.f32.gmra.mrb[0].mxu0 %v3251
        %v3442 = vpop.f32.mrb[0].mxu0
        %v3443 = vadd.f32 0.0, %v3442
        %v3444 = vpop.f32.mrb[0].mxu0
        %3445 = vmatprep.mubr.f32.mxu0 0.0
        %3446 = vmatmul.mubr.f32.gmra.mrb[0].mxu0 %v3252
        %v3447 = vpop.f32.mrb[0].mxu0
        %v3448 = vadd.f32 0.0, %v3447
        %v3449 = vpop.f32.mrb[0].mxu0
        %3450 = vmatprep.mubr.f32.mxu0 0.0
        %3451 = vmatmul.mubr.f32.gmra.mrb[0].mxu0 %v3253
        %v3452 = vpop.f32.mrb[0].mxu0
        %v3453 = vadd.f32 0.0, %v3452
        %v3454 = vpop.f32.mrb[0].mxu0
        %3455 = vmatprep.mubr.f32.mxu0 0.0
        %3456 = vmatmul.mubr.f32.gmra.mrb[0].mxu0 %v3254
        %v3457 = vpop.f32.mrb[0].mxu0
        %v3458 = vadd.f32 0.0, %v3457
        %v3459 = vpop.f32.mrb[0].mxu0
        %3460 = vmatprep.mubr.f32.mxu0 0.0
        %3461 = vmatmul.mubr.f32.gmra.mrb[0].mxu0 %v3255
        %v3462 = vpop.f32.mrb[0].mxu0
        %v3463 = vadd.f32 0.0, %v3462
        %v3464 = vpop.f32.mrb[0].mxu0
        %3465 = vmatprep.mubr.f32.mxu0 0.0
        %3466 = vmatmul.mubr.f32.gmra.mrb[0].mxu0 %v3256
        %v3467 = vpop.f32.mrb[0].mxu0
        %v3468 = vadd.f32 0.0, %v3467
        %v3469 = vpop.f32.mrb[0].mxu0
        %3470 = vmatprep.mubr.f32.mxu0 0.0
        %3471 = vmatmul.mubr.f32.gmra.mrb[0].mxu0 %v3257
        %v3472 = vpop.f32.mrb[0].mxu0
        %v3473 = vadd.f32 0.0, %v3472
        %v3474 = vpop.f32.mrb[0].mxu0
        %3475 = vmatprep.mubr.f32.mxu0 0.0
        %3476 = vmatmul.mubr.f32.gmra.mrb[0].mxu0 %v3258
        %v3477 = vpop.f32.mrb[0].mxu0
        %v3478 = vadd.f32 0.0, %v3477
        %v3479 = vpop.f32.mrb[0].mxu0
        %3480 = vmatprep.mubr.f32.mxu0 0.0
        %3481 = vmatmul.mubr.f32.gmra.mrb[0].mxu0 %v3259
        %v3482 = vpop.f32.mrb[0].mxu0
        %v3483 = vadd.f32 0.0, %v3482
        %v3484 = vpop.f32.mrb[0].mxu0
        %3485 = vmatprep.mubr.f32.mxu0 0.0
        %3486 = vmatmul.mubr.f32.gmra.mrb[0].mxu0 %v3260
        %v3487 = vpop.f32.mrb[0].mxu0
        %v3488 = vadd.f32 0.0, %v3487
        %v3489 = vpop.f32.mrb[0].mxu0
        %3490 = vmatprep.mubr.f32.mxu0 0.0
        %3491 = vmatmul.mubr.f32.gmra.mrb[0].mxu0 %v3261
        %v3492 = vpop.f32.mrb[0].mxu0
        %v3493 = vadd.f32 0.0, %v3492
        %v3494 = vpop.f32.mrb[0].mxu0
        %3495 = vmatprep.mubr.f32.mxu0 0.0
        %3496 = vmatmul.mubr.f32.gmra.mrb[0].mxu0 %v3262
        %v3497 = vpop.f32.mrb[0].mxu0
        %v3498 = vadd.f32 0.0, %v3497
        %v3499 = vpop.f32.mrb[0].mxu0
        %3500 = vmatprep.mubr.f32.mxu0 0.0
        %3501 = vmatmul.mubr.f32.gmra.mrb[0].mxu0 %v3263
        %v3502 = vpop.f32.mrb[0].mxu0
        %v3503 = vadd.f32 0.0, %v3502
        %v3504 = vpop.f32.mrb[0].mxu0
        %3505 = vdwg.mxu0
        %v3506 = vld [vmem:[#allocation3] sm:$0xff]
        %v3507 = vld [vmem:[#allocation3 + $0x8] sm:$0xff]
        %v3508 = vld [vmem:[#allocation3 + $0x10] sm:$0xff]
        %v3509 = vld [vmem:[#allocation3 + $0x18] sm:$0xff]
        %v3510 = vld [vmem:[#allocation3 + $0x20] sm:$0xff]
        %v3511 = vld [vmem:[#allocation3 + $0x28] sm:$0xff]
        %v3512 = vld [vmem:[#allocation3 + $0x30] sm:$0xff]
        %v3513 = vld [vmem:[#allocation3 + $0x38] sm:$0xff]
        %v3514 = vld [vmem:[#allocation3 + $0x40] sm:$0xff]
        %v3515 = vld [vmem:[#allocation3 + $0x48] sm:$0xff]
        %v3516 = vld [vmem:[#allocation3 + $0x50] sm:$0xff]
        %v3517 = vld [vmem:[#allocation3 + $0x58] sm:$0xff]
        %v3518 = vld [vmem:[#allocation3 + $0x60] sm:$0xff]
        %v3519 = vld [vmem:[#allocation3 + $0x68] sm:$0xff]
        %v3520 = vld [vmem:[#allocation3 + $0x70] sm:$0xff]
        %v3521 = vld [vmem:[#allocation3 + $0x78] sm:$0xff]
        %v3522 = vld [vmem:[#allocation3 + $0x80] sm:$0xff]
        %v3523 = vld [vmem:[#allocation3 + $0x88] sm:$0xff]
        %v3524 = vld [vmem:[#allocation3 + $0x90] sm:$0xff]
        %v3525 = vld [vmem:[#allocation3 + $0x98] sm:$0xff]
        %v3526 = vld [vmem:[#allocation3 + $0xa0] sm:$0xff]
        %v3527 = vld [vmem:[#allocation3 + $0xa8] sm:$0xff]
        %v3528 = vld [vmem:[#allocation3 + $0xb0] sm:$0xff]
        %v3529 = vld [vmem:[#allocation3 + $0xb8] sm:$0xff]
        %v3530 = vld [vmem:[#allocation3 + $0xc0] sm:$0xff]
        %v3531 = vld [vmem:[#allocation3 + $0xc8] sm:$0xff]
        %v3532 = vld [vmem:[#allocation3 + $0xd0] sm:$0xff]
        %v3533 = vld [vmem:[#allocation3 + $0xd8] sm:$0xff]
        %v3534 = vld [vmem:[#allocation3 + $0xe0] sm:$0xff]
        %v3535 = vld [vmem:[#allocation3 + $0xe8] sm:$0xff]
        %v3536 = vld [vmem:[#allocation3 + $0xf0] sm:$0xff]
        %v3537 = vld [vmem:[#allocation3 + $0xf8] sm:$0xff]
        %v3538 = vadd.f32 %v3506, %v3348
        %v3539 = vadd.f32 %v3507, %v3353
        %v3540 = vadd.f32 %v3508, %v3358
        %v3541 = vadd.f32 %v3509, %v3363
        %v3542 = vadd.f32 %v3510, %v3368
        %v3543 = vadd.f32 %v3511, %v3373
        %v3544 = vadd.f32 %v3512, %v3378
        %v3545 = vadd.f32 %v3513, %v3383
        %v3546 = vadd.f32 %v3514, %v3388
        %v3547 = vadd.f32 %v3515, %v3393
        %v3548 = vadd.f32 %v3516, %v3398
        %v3549 = vadd.f32 %v3517, %v3403
        %v3550 = vadd.f32 %v3518, %v3408
        %v3551 = vadd.f32 %v3519, %v3413
        %v3552 = vadd.f32 %v3520, %v3418
        %v3553 = vadd.f32 %v3521, %v3423
        %v3554 = vadd.f32 %v3522, %v3428
        %v3555 = vadd.f32 %v3523, %v3433
        %v3556 = vadd.f32 %v3524, %v3438
        %v3557 = vadd.f32 %v3525, %v3443
        %v3558 = vadd.f32 %v3526, %v3448
        %v3559 = vadd.f32 %v3527, %v3453
        %v3560 = vadd.f32 %v3528, %v3458
        %v3561 = vadd.f32 %v3529, %v3463
        %v3562 = vadd.f32 %v3530, %v3468
        %v3563 = vadd.f32 %v3531, %v3473
        %v3564 = vadd.f32 %v3532, %v3478
        %v3565 = vadd.f32 %v3533, %v3483
        %v3566 = vadd.f32 %v3534, %v3488
        %v3567 = vadd.f32 %v3535, %v3493
        %v3568 = vadd.f32 %v3536, %v3498
        %v3569 = vadd.f32 %v3537, %v3503
        %3570 = vst [vmem:[#allocation3] sm:$0xff] %v3538
        %3571 = vst [vmem:[#allocation3 + $0x8] sm:$0xff] %v3539
        %3572 = vst [vmem:[#allocation3 + $0x10] sm:$0xff] %v3540
        %3573 = vst [vmem:[#allocation3 + $0x18] sm:$0xff] %v3541
        %3574 = vst [vmem:[#allocation3 + $0x20] sm:$0xff] %v3542
        %3575 = vst [vmem:[#allocation3 + $0x28] sm:$0xff] %v3543
        %3576 = vst [vmem:[#allocation3 + $0x30] sm:$0xff] %v3544
        %3577 = vst [vmem:[#allocation3 + $0x38] sm:$0xff] %v3545
        %3578 = vst [vmem:[#allocation3 + $0x40] sm:$0xff] %v3546
        %3579 = vst [vmem:[#allocation3 + $0x48] sm:$0xff] %v3547
        %3580 = vst [vmem:[#allocation3 + $0x50] sm:$0xff] %v3548
        %3581 = vst [vmem:[#allocation3 + $0x58] sm:$0xff] %v3549
        %3582 = vst [vmem:[#allocation3 + $0x60] sm:$0xff] %v3550
        %3583 = vst [vmem:[#allocation3 + $0x68] sm:$0xff] %v3551
        %3584 = vst [vmem:[#allocation3 + $0x70] sm:$0xff] %v3552
        %3585 = vst [vmem:[#allocation3 + $0x78] sm:$0xff] %v3553
        %3586 = vst [vmem:[#allocation3 + $0x80] sm:$0xff] %v3554
        %3587 = vst [vmem:[#allocation3 + $0x88] sm:$0xff] %v3555
        %3588 = vst [vmem:[#allocation3 + $0x90] sm:$0xff] %v3556
        %3589 = vst [vmem:[#allocation3 + $0x98] sm:$0xff] %v3557
        %3590 = vst [vmem:[#allocation3 + $0xa0] sm:$0xff] %v3558
        %3591 = vst [vmem:[#allocation3 + $0xa8] sm:$0xff] %v3559
        %3592 = vst [vmem:[#allocation3 + $0xb0] sm:$0xff] %v3560
        %3593 = vst [vmem:[#allocation3 + $0xb8] sm:$0xff] %v3561
        %3594 = vst [vmem:[#allocation3 + $0xc0] sm:$0xff] %v3562
        %3595 = vst [vmem:[#allocation3 + $0xc8] sm:$0xff] %v3563
        %3596 = vst [vmem:[#allocation3 + $0xd0] sm:$0xff] %v3564
        %3597 = vst [vmem:[#allocation3 + $0xd8] sm:$0xff] %v3565
        %3598 = vst [vmem:[#allocation3 + $0xe0] sm:$0xff] %v3566
        %3599 = vst [vmem:[#allocation3 + $0xe8] sm:$0xff] %v3567
        %3600 = vst [vmem:[#allocation3 + $0xf0] sm:$0xff] %v3568
        %3601 = vst [vmem:[#allocation3 + $0xf8] sm:$0xff] %v3569
        %v3602 = vld [vmem:[#allocation3] sm:$0xff]
        %v3603 = vld [vmem:[#allocation3 + $0x8] sm:$0xff]
        %v3604 = vld [vmem:[#allocation3 + $0x10] sm:$0xff]
        %v3605 = vld [vmem:[#allocation3 + $0x18] sm:$0xff]
        %v3606 = vld [vmem:[#allocation3 + $0x20] sm:$0xff]
        %v3607 = vld [vmem:[#allocation3 + $0x28] sm:$0xff]
        %v3608 = vld [vmem:[#allocation3 + $0x30] sm:$0xff]
        %v3609 = vld [vmem:[#allocation3 + $0x38] sm:$0xff]
        %v3610 = vld [vmem:[#allocation3 + $0x40] sm:$0xff]
        %v3611 = vld [vmem:[#allocation3 + $0x48] sm:$0xff]
        %v3612 = vld [vmem:[#allocation3 + $0x50] sm:$0xff]
        %v3613 = vld [vmem:[#allocation3 + $0x58] sm:$0xff]
        %v3614 = vld [vmem:[#allocation3 + $0x60] sm:$0xff]
        %v3615 = vld [vmem:[#allocation3 + $0x68] sm:$0xff]
        %v3616 = vld [vmem:[#allocation3 + $0x70] sm:$0xff]
        %v3617 = vld [vmem:[#allocation3 + $0x78] sm:$0xff]
        %v3618 = vld [vmem:[#allocation3 + $0x80] sm:$0xff]
        %v3619 = vld [vmem:[#allocation3 + $0x88] sm:$0xff]
        %v3620 = vld [vmem:[#allocation3 + $0x90] sm:$0xff]
        %v3621 = vld [vmem:[#allocation3 + $0x98] sm:$0xff]
        %v3622 = vld [vmem:[#allocation3 + $0xa0] sm:$0xff]
        %v3623 = vld [vmem:[#allocation3 + $0xa8] sm:$0xff]
        %v3624 = vld [vmem:[#allocation3 + $0xb0] sm:$0xff]
        %v3625 = vld [vmem:[#allocation3 + $0xb8] sm:$0xff]
        %v3626 = vld [vmem:[#allocation3 + $0xc0] sm:$0xff]
        %v3627 = vld [vmem:[#allocation3 + $0xc8] sm:$0xff]
        %v3628 = vld [vmem:[#allocation3 + $0xd0] sm:$0xff]
        %v3629 = vld [vmem:[#allocation3 + $0xd8] sm:$0xff]
        %v3630 = vld [vmem:[#allocation3 + $0xe0] sm:$0xff]
        %v3631 = vld [vmem:[#allocation3 + $0xe8] sm:$0xff]
        %v3632 = vld [vmem:[#allocation3 + $0xf0] sm:$0xff]
        %v3633 = vld [vmem:[#allocation3 + $0xf8] sm:$0xff]
        %v3634 = vld [vmem:[%s2] sm:$0x1]
        %v3636 = vlaneseq
        %v3637 = vshrl.u32 %v3636, 7
        %v3638 = vsub.s32 0, %v3637
        %v3639 = vrot.slane %v3634, %v3638
        %v3641 = vmul.f32 %v3602, %v3639
        %v3642 = vmul.f32 %v3603, %v3639
        %v3643 = vmul.f32 %v3604, %v3639
        %v3644 = vmul.f32 %v3605, %v3639
        %v3645 = vmul.f32 %v3606, %v3639
        %v3646 = vmul.f32 %v3607, %v3639
        %v3647 = vmul.f32 %v3608, %v3639
        %v3648 = vmul.f32 %v3609, %v3639
        %v3649 = vmul.f32 %v3610, %v3639
        %v3650 = vmul.f32 %v3611, %v3639
        %v3651 = vmul.f32 %v3612, %v3639
        %v3652 = vmul.f32 %v3613, %v3639
        %v3653 = vmul.f32 %v3614, %v3639
        %v3654 = vmul.f32 %v3615, %v3639
        %v3655 = vmul.f32 %v3616, %v3639
        %v3656 = vmul.f32 %v3617, %v3639
        %v3657 = vmul.f32 %v3618, %v3639
        %v3658 = vmul.f32 %v3619, %v3639
        %v3659 = vmul.f32 %v3620, %v3639
        %v3660 = vmul.f32 %v3621, %v3639
        %v3661 = vmul.f32 %v3622, %v3639
        %v3662 = vmul.f32 %v3623, %v3639
        %v3663 = vmul.f32 %v3624, %v3639
        %v3664 = vmul.f32 %v3625, %v3639
        %v3665 = vmul.f32 %v3626, %v3639
        %v3666 = vmul.f32 %v3627, %v3639
        %v3667 = vmul.f32 %v3628, %v3639
        %v3668 = vmul.f32 %v3629, %v3639
        %v3669 = vmul.f32 %v3630, %v3639
        %v3670 = vmul.f32 %v3631, %v3639
        %v3671 = vmul.f32 %v3632, %v3639
        %v3672 = vmul.f32 %v3633, %v3639
        %v3673 = vld [vmem:[%s3] sm:$0x1]
        %v3675 = vlaneseq
        %v3676 = vshrl.u32 %v3675, 7
        %v3677 = vsub.s32 0, %v3676
        %v3678 = vrot.slane %v3673, %v3677
        %v3680 = vadd.f32 %v3641, %v3678
        %v3681 = vadd.f32 %v3642, %v3678
        %v3682 = vadd.f32 %v3643, %v3678
        %v3683 = vadd.f32 %v3644, %v3678
        %v3684 = vadd.f32 %v3645, %v3678
        %v3685 = vadd.f32 %v3646, %v3678
        %v3686 = vadd.f32 %v3647, %v3678
        %v3687 = vadd.f32 %v3648, %v3678
        %v3688 = vadd.f32 %v3649, %v3678
        %v3689 = vadd.f32 %v3650, %v3678
        %v3690 = vadd.f32 %v3651, %v3678
        %v3691 = vadd.f32 %v3652, %v3678
        %v3692 = vadd.f32 %v3653, %v3678
        %v3693 = vadd.f32 %v3654, %v3678
        %v3694 = vadd.f32 %v3655, %v3678
        %v3695 = vadd.f32 %v3656, %v3678
        %v3696 = vadd.f32 %v3657, %v3678
        %v3697 = vadd.f32 %v3658, %v3678
        %v3698 = vadd.f32 %v3659, %v3678
        %v3699 = vadd.f32 %v3660, %v3678
        %v3700 = vadd.f32 %v3661, %v3678
        %v3701 = vadd.f32 %v3662, %v3678
        %v3702 = vadd.f32 %v3663, %v3678
        %v3703 = vadd.f32 %v3664, %v3678
        %v3704 = vadd.f32 %v3665, %v3678
        %v3705 = vadd.f32 %v3666, %v3678
        %v3706 = vadd.f32 %v3667, %v3678
        %v3707 = vadd.f32 %v3668, %v3678
        %v3708 = vadd.f32 %v3669, %v3678
        %v3709 = vadd.f32 %v3670, %v3678
        %v3710 = vadd.f32 %v3671, %v3678
        %v3711 = vadd.f32 %v3672, %v3678
        %v3712 = vmax.f32 %v3680, 0.0
        %v3713 = vmax.f32 %v3681, 0.0
        %v3714 = vmax.f32 %v3682, 0.0
        %v3715 = vmax.f32 %v3683, 0.0
        %v3716 = vmax.f32 %v3684, 0.0
        %v3717 = vmax.f32 %v3685, 0.0
        %v3718 = vmax.f32 %v3686, 0.0
        %v3719 = vmax.f32 %v3687, 0.0
        %v3720 = vmax.f32 %v3688, 0.0
        %v3721 = vmax.f32 %v3689, 0.0
        %v3722 = vmax.f32 %v3690, 0.0
        %v3723 = vmax.f32 %v3691, 0.0
        %v3724 = vmax.f32 %v3692, 0.0
        %v3725 = vmax.f32 %v3693, 0.0
        %v3726 = vmax.f32 %v3694, 0.0
        %v3727 = vmax.f32 %v3695, 0.0
        %v3728 = vmax.f32 %v3696, 0.0
        %v3729 = vmax.f32 %v3697, 0.0
        %v3730 = vmax.f32 %v3698, 0.0
        %v3731 = vmax.f32 %v3699, 0.0
        %v3732 = vmax.f32 %v3700, 0.0
        %v3733 = vmax.f32 %v3701, 0.0
        %v3734 = vmax.f32 %v3702, 0.0
        %v3735 = vmax.f32 %v3703, 0.0
        %v3736 = vmax.f32 %v3704, 0.0
        %v3737 = vmax.f32 %v3705, 0.0
        %v3738 = vmax.f32 %v3706, 0.0
        %v3739 = vmax.f32 %v3707, 0.0
        %v3740 = vmax.f32 %v3708, 0.0
        %v3741 = vmax.f32 %v3709, 0.0
        %v3742 = vmax.f32 %v3710, 0.0
        %v3743 = vmax.f32 %v3711, 0.0
        %s3744 = scalar_lea.vmem [#allocation2], 24
        %3745 = vst [vmem:[%s3744 + $0x1] sm:$0xff] %v3712
        %3746 = vst [vmem:[%s3744 + $0x9] sm:$0xff] %v3713
        %3747 = vst [vmem:[%s3744 + $0x19] sm:$0xff] %v3714
        %3748 = vst [vmem:[%s3744 + $0x21] sm:$0xff] %v3715
        %3749 = vst [vmem:[%s3744 + $0x31] sm:$0xff] %v3716
        %3750 = vst [vmem:[%s3744 + $0x39] sm:$0xff] %v3717
        %3751 = vst [vmem:[%s3744 + $0x49] sm:$0xff] %v3718
        %3752 = vst [vmem:[%s3744 + $0x51] sm:$0xff] %v3719
        %3753 = vst [vmem:[%s3744 + $0x61] sm:$0xff] %v3720
        %3754 = vst [vmem:[%s3744 + $0x69] sm:$0xff] %v3721
        %3755 = vst [vmem:[%s3744 + $0x79] sm:$0xff] %v3722
        %3756 = vst [vmem:[%s3744 + $0x81] sm:$0xff] %v3723
        %3757 = vst [vmem:[%s3744 + $0x91] sm:$0xff] %v3724
        %3758 = vst [vmem:[%s3744 + $0x99] sm:$0xff] %v3725
        %3759 = vst [vmem:[%s3744 + $0xa9] sm:$0xff] %v3726
        %3760 = vst [vmem:[%s3744 + $0xb1] sm:$0xff] %v3727
        %3761 = vst [vmem:[%s3744 + $0xc1] sm:$0xff] %v3728
        %3762 = vst [vmem:[%s3744 + $0xc9] sm:$0xff] %v3729
        %3763 = vst [vmem:[%s3744 + $0xd9] sm:$0xff] %v3730
        %3764 = vst [vmem:[%s3744 + $0xe1] sm:$0xff] %v3731
        %3765 = vst [vmem:[%s3744 + $0xf1] sm:$0xff] %v3732
        %3766 = vst [vmem:[%s3744 + $0xf9] sm:$0xff] %v3733
        %3767 = vst [vmem:[%s3744 + $0x109] sm:$0xff] %v3734
        %3768 = vst [vmem:[%s3744 + $0x111] sm:$0xff] %v3735
        %3769 = vst [vmem:[%s3744 + $0x121] sm:$0xff] %v3736
        %3770 = vst [vmem:[%s3744 + $0x129] sm:$0xff] %v3737
        %3771 = vst [vmem:[%s3744 + $0x139] sm:$0xff] %v3738
        %3772 = vst [vmem:[%s3744 + $0x141] sm:$0xff] %v3739
        %3773 = vst [vmem:[%s3744 + $0x151] sm:$0xff] %v3740
        %3774 = vst [vmem:[%s3744 + $0x159] sm:$0xff] %v3741
        %3775 = vst [vmem:[%s3744 + $0x169] sm:$0xff] %v3742
        %3776 = vst [vmem:[%s3744 + $0x171] sm:$0xff] %v3743
        %v3777 = vld [vmem:[#allocation2] sm:$0xff]
        %v3778 = vld [vmem:[#allocation2 + $0x8] sm:$0xff]
        %v3779 = vld [vmem:[#allocation2 + $0x18] sm:$0xff]
        %v3780 = vld [vmem:[#allocation2 + $0x20] sm:$0xff]
        %v3781 = vld [vmem:[#allocation2 + $0x30] sm:$0xff]
        %v3782 = vld [vmem:[#allocation2 + $0x38] sm:$0xff]
        %v3783 = vld [vmem:[#allocation2 + $0x48] sm:$0xff]
        %v3784 = vld [vmem:[#allocation2 + $0x50] sm:$0xff]
        %v3785 = vld [vmem:[#allocation2 + $0x60] sm:$0xff]
        %v3786 = vld [vmem:[#allocation2 + $0x68] sm:$0xff]
        %v3787 = vld [vmem:[#allocation2 + $0x78] sm:$0xff]
        %v3788 = vld [vmem:[#allocation2 + $0x80] sm:$0xff]
        %v3789 = vld [vmem:[#allocation2 + $0x90] sm:$0xff]
        %v3790 = vld [vmem:[#allocation2 + $0x98] sm:$0xff]
        %v3791 = vld [vmem:[#allocation2 + $0xa8] sm:$0xff]
        %v3792 = vld [vmem:[#allocation2 + $0xb0] sm:$0xff]
        %v3793 = vld [vmem:[#allocation2 + $0xc0] sm:$0xff]
        %v3794 = vld [vmem:[#allocation2 + $0xc8] sm:$0xff]
        %v3795 = vld [vmem:[#allocation2 + $0xd8] sm:$0xff]
        %v3796 = vld [vmem:[#allocation2 + $0xe0] sm:$0xff]
        %v3797 = vld [vmem:[#allocation2 + $0xf0] sm:$0xff]
        %v3798 = vld [vmem:[#allocation2 + $0xf8] sm:$0xff]
        %v3799 = vld [vmem:[#allocation2 + $0x108] sm:$0xff]
        %v3800 = vld [vmem:[#allocation2 + $0x110] sm:$0xff]
        %v3801 = vld [vmem:[#allocation2 + $0x120] sm:$0xff]
        %v3802 = vld [vmem:[#allocation2 + $0x128] sm:$0xff]
        %v3803 = vld [vmem:[#allocation2 + $0x138] sm:$0xff]
        %v3804 = vld [vmem:[#allocation2 + $0x140] sm:$0xff]
        %v3805 = vld [vmem:[#allocation2 + $0x150] sm:$0xff]
        %v3806 = vld [vmem:[#allocation2 + $0x158] sm:$0xff]
        %v3807 = vld [vmem:[#allocation2 + $0x168] sm:$0xff]
        %v3808 = vld [vmem:[#allocation2 + $0x170] sm:$0xff]
        %v3809 = vld [vmem:[#allocation4] sm:$0xff]
        %v3810 = vld [vmem:[#allocation4 + $0x8] sm:$0xff]
        %v3811 = vld [vmem:[#allocation4 + $0x10] sm:$0xff]
        %v3812 = vld [vmem:[#allocation4 + $0x18] sm:$0xff]
        %v3813 = vld [vmem:[#allocation4 + $0x20] sm:$0xff]
        %v3814 = vld [vmem:[#allocation4 + $0x28] sm:$0xff]
        %v3815 = vld [vmem:[#allocation4 + $0x30] sm:$0xff]
        %v3816 = vld [vmem:[#allocation4 + $0x38] sm:$0xff]
        %v3817 = vld [vmem:[#allocation4 + $0x40] sm:$0xff]
        %v3818 = vld [vmem:[#allocation4 + $0x48] sm:$0xff]
        %v3819 = vld [vmem:[#allocation4 + $0x50] sm:$0xff]
        %v3820 = vld [vmem:[#allocation4 + $0x58] sm:$0xff]
        %v3821 = vld [vmem:[#allocation4 + $0x60] sm:$0xff]
        %v3822 = vld [vmem:[#allocation4 + $0x68] sm:$0xff]
        %v3823 = vld [vmem:[#allocation4 + $0x70] sm:$0xff]
        %v3824 = vld [vmem:[#allocation4 + $0x78] sm:$0xff]
        %3825 = vmatprep.subr.mxu0 0.0
        %3826 = vmatpush1.msra.mxu0 %v3809
        %3827 = vmatprep.subr.mxu0 0.0
        %3828 = vmatpush1.msra.mxu0 %v3810
        %3829 = vmatprep.subr.mxu0 0.0
        %3830 = vmatpush1.msra.mxu0 %v3811
        %3831 = vmatprep.subr.mxu0 0.0
        %3832 = vmatpush1.msra.mxu0 %v3812
        %3833 = vmatprep.subr.mxu0 0.0
        %3834 = vmatpush1.msra.mxu0 %v3813
        %3835 = vmatprep.subr.mxu0 0.0
        %3836 = vmatpush1.msra.mxu0 %v3814
        %3837 = vmatprep.subr.mxu0 0.0
        %3838 = vmatpush1.msra.mxu0 %v3815
        %3839 = vmatprep.subr.mxu0 0.0
        %3840 = vmatpush1.msra.mxu0 %v3816
        %3841 = vmatprep.subr.mxu0 0.0
        %3842 = vmatpush1.msra.mxu0 %v3817
        %3843 = vmatprep.subr.mxu0 0.0
        %3844 = vmatpush1.msra.mxu0 %v3818
        %3845 = vmatprep.subr.mxu0 0.0
        %3846 = vmatpush1.msra.mxu0 %v3819
        %3847 = vmatprep.subr.mxu0 0.0
        %3848 = vmatpush1.msra.mxu0 %v3820
        %3849 = vmatprep.subr.mxu0 0.0
        %3850 = vmatpush1.msra.mxu0 %v3821
        %3851 = vmatprep.subr.mxu0 0.0
        %3852 = vmatpush1.msra.mxu0 %v3822
        %3853 = vmatprep.subr.mxu0 0.0
        %3854 = vmatpush1.msra.mxu0 %v3823
        %3855 = vmatprep.subr.mxu0 0.0
        %3856 = vmatpush1.msra.mxu0 %v3824
        %3857 = vmatprep.subr.mxu0 0.0
        %3858 = vmatpush1.msra.mxu0 0.0
        %3859 = vmatprep.subr.mxu0 0.0
        %3860 = vmatpush1.msra.mxu0 0.0
        %3861 = vmatprep.subr.mxu0 0.0
        %3862 = vmatpush1.msra.mxu0 0.0
        %3863 = vmatprep.subr.mxu0 0.0
        %3864 = vmatpush1.msra.mxu0 0.0
        %3865 = vmatprep.subr.mxu0 0.0
        %3866 = vmatpush1.msra.mxu0 0.0
        %3867 = vmatprep.subr.mxu0 0.0
        %3868 = vmatpush1.msra.mxu0 0.0
        %3869 = vmatprep.subr.mxu0 0.0
        %3870 = vmatpush1.msra.mxu0 0.0
        %3871 = vmatprep.subr.mxu0 0.0
        %3872 = vmatpush1.msra.mxu0 0.0
        %3873 = vmatprep.subr.mxu0 0.0
        %3874 = vmatpush1.msra.mxu0 0.0
        %3875 = vmatprep.subr.mxu0 0.0
        %3876 = vmatpush1.msra.mxu0 0.0
        %3877 = vmatprep.subr.mxu0 0.0
        %3878 = vmatpush1.msra.mxu0 0.0
        %3879 = vmatprep.subr.mxu0 0.0
        %3880 = vmatpush1.msra.mxu0 0.0
        %3881 = vmatprep.subr.mxu0 0.0
        %3882 = vmatpush1.msra.mxu0 0.0
        %3883 = vmatprep.subr.mxu0 0.0
        %3884 = vmatpush1.msra.mxu0 0.0
        %3885 = vmatprep.subr.mxu0 0.0
        %3886 = vmatpush1.msra.mxu0 0.0
        %3887 = vmatprep.subr.mxu0 0.0
        %3888 = vmatpush1.msra.mxu0 0.0
        %3889 = vmatprep.mubr.f32.mxu0 0.0
        %3890 = vmatmul.mubr.f32.gmra.mrb[0].mxu0 %v3777
        %v3891 = vpop.f32.mrb[0].mxu0
        %v3892 = vadd.f32 0.0, %v3891
        %v3893 = vpop.f32.mrb[0].mxu0
        %3894 = vmatprep.mubr.f32.mxu0 0.0
        %3895 = vmatmul.mubr.f32.gmra.mrb[0].mxu0 %v3778
        %v3896 = vpop.f32.mrb[0].mxu0
        %v3897 = vadd.f32 0.0, %v3896
        %v3898 = vpop.f32.mrb[0].mxu0
        %3899 = vmatprep.mubr.f32.mxu0 0.0
        %3900 = vmatmul.mubr.f32.gmra.mrb[0].mxu0 %v3779
        %v3901 = vpop.f32.mrb[0].mxu0
        %v3902 = vadd.f32 0.0, %v3901
        %v3903 = vpop.f32.mrb[0].mxu0
        %3904 = vmatprep.mubr.f32.mxu0 0.0
        %3905 = vmatmul.mubr.f32.gmra.mrb[0].mxu0 %v3780
        %v3906 = vpop.f32.mrb[0].mxu0
        %v3907 = vadd.f32 0.0, %v3906
        %v3908 = vpop.f32.mrb[0].mxu0
        %3909 = vmatprep.mubr.f32.mxu0 0.0
        %3910 = vmatmul.mubr.f32.gmra.mrb[0].mxu0 %v3781
        %v3911 = vpop.f32.mrb[0].mxu0
        %v3912 = vadd.f32 0.0, %v3911
        %v3913 = vpop.f32.mrb[0].mxu0
        %3914 = vmatprep.mubr.f32.mxu0 0.0
        %3915 = vmatmul.mubr.f32.gmra.mrb[0].mxu0 %v3782
        %v3916 = vpop.f32.mrb[0].mxu0
        %v3917 = vadd.f32 0.0, %v3916
        %v3918 = vpop.f32.mrb[0].mxu0
        %3919 = vmatprep.mubr.f32.mxu0 0.0
        %3920 = vmatmul.mubr.f32.gmra.mrb[0].mxu0 %v3783
        %v3921 = vpop.f32.mrb[0].mxu0
        %v3922 = vadd.f32 0.0, %v3921
        %v3923 = vpop.f32.mrb[0].mxu0
        %3924 = vmatprep.mubr.f32.mxu0 0.0
        %3925 = vmatmul.mubr.f32.gmra.mrb[0].mxu0 %v3784
        %v3926 = vpop.f32.mrb[0].mxu0
        %v3927 = vadd.f32 0.0, %v3926
        %v3928 = vpop.f32.mrb[0].mxu0
        %3929 = vmatprep.mubr.f32.mxu0 0.0
        %3930 = vmatmul.mubr.f32.gmra.mrb[0].mxu0 %v3785
        %v3931 = vpop.f32.mrb[0].mxu0
        %v3932 = vadd.f32 0.0, %v3931
        %v3933 = vpop.f32.mrb[0].mxu0
        %3934 = vmatprep.mubr.f32.mxu0 0.0
        %3935 = vmatmul.mubr.f32.gmra.mrb[0].mxu0 %v3786
        %v3936 = vpop.f32.mrb[0].mxu0
        %v3937 = vadd.f32 0.0, %v3936
        %v3938 = vpop.f32.mrb[0].mxu0
        %3939 = vmatprep.mubr.f32.mxu0 0.0
        %3940 = vmatmul.mubr.f32.gmra.mrb[0].mxu0 %v3787
        %v3941 = vpop.f32.mrb[0].mxu0
        %v3942 = vadd.f32 0.0, %v3941
        %v3943 = vpop.f32.mrb[0].mxu0
        %3944 = vmatprep.mubr.f32.mxu0 0.0
        %3945 = vmatmul.mubr.f32.gmra.mrb[0].mxu0 %v3788
        %v3946 = vpop.f32.mrb[0].mxu0
        %v3947 = vadd.f32 0.0, %v3946
        %v3948 = vpop.f32.mrb[0].mxu0
        %3949 = vmatprep.mubr.f32.mxu0 0.0
        %3950 = vmatmul.mubr.f32.gmra.mrb[0].mxu0 %v3789
        %v3951 = vpop.f32.mrb[0].mxu0
        %v3952 = vadd.f32 0.0, %v3951
        %v3953 = vpop.f32.mrb[0].mxu0
        %3954 = vmatprep.mubr.f32.mxu0 0.0
        %3955 = vmatmul.mubr.f32.gmra.mrb[0].mxu0 %v3790
        %v3956 = vpop.f32.mrb[0].mxu0
        %v3957 = vadd.f32 0.0, %v3956
        %v3958 = vpop.f32.mrb[0].mxu0
        %3959 = vmatprep.mubr.f32.mxu0 0.0
        %3960 = vmatmul.mubr.f32.gmra.mrb[0].mxu0 %v3791
        %v3961 = vpop.f32.mrb[0].mxu0
        %v3962 = vadd.f32 0.0, %v3961
        %v3963 = vpop.f32.mrb[0].mxu0
        %3964 = vmatprep.mubr.f32.mxu0 0.0
        %3965 = vmatmul.mubr.f32.gmra.mrb[0].mxu0 %v3792
        %v3966 = vpop.f32.mrb[0].mxu0
        %v3967 = vadd.f32 0.0, %v3966
        %v3968 = vpop.f32.mrb[0].mxu0
        %3969 = vmatprep.mubr.f32.mxu0 0.0
        %3970 = vmatmul.mubr.f32.gmra.mrb[0].mxu0 %v3793
        %v3971 = vpop.f32.mrb[0].mxu0
        %v3972 = vadd.f32 0.0, %v3971
        %v3973 = vpop.f32.mrb[0].mxu0
        %3974 = vmatprep.mubr.f32.mxu0 0.0
        %3975 = vmatmul.mubr.f32.gmra.mrb[0].mxu0 %v3794
        %v3976 = vpop.f32.mrb[0].mxu0
        %v3977 = vadd.f32 0.0, %v3976
        %v3978 = vpop.f32.mrb[0].mxu0
        %3979 = vmatprep.mubr.f32.mxu0 0.0
        %3980 = vmatmul.mubr.f32.gmra.mrb[0].mxu0 %v3795
        %v3981 = vpop.f32.mrb[0].mxu0
        %v3982 = vadd.f32 0.0, %v3981
        %v3983 = vpop.f32.mrb[0].mxu0
        %3984 = vmatprep.mubr.f32.mxu0 0.0
        %3985 = vmatmul.mubr.f32.gmra.mrb[0].mxu0 %v3796
        %v3986 = vpop.f32.mrb[0].mxu0
        %v3987 = vadd.f32 0.0, %v3986
        %v3988 = vpop.f32.mrb[0].mxu0
        %3989 = vmatprep.mubr.f32.mxu0 0.0
        %3990 = vmatmul.mubr.f32.gmra.mrb[0].mxu0 %v3797
        %v3991 = vpop.f32.mrb[0].mxu0
        %v3992 = vadd.f32 0.0, %v3991
        %v3993 = vpop.f32.mrb[0].mxu0
        %3994 = vmatprep.mubr.f32.mxu0 0.0
        %3995 = vmatmul.mubr.f32.gmra.mrb[0].mxu0 %v3798
        %v3996 = vpop.f32.mrb[0].mxu0
        %v3997 = vadd.f32 0.0, %v3996
        %v3998 = vpop.f32.mrb[0].mxu0
        %3999 = vmatprep.mubr.f32.mxu0 0.0
        %4000 = vmatmul.mubr.f32.gmra.mrb[0].mxu0 %v3799
        %v4001 = vpop.f32.mrb[0].mxu0
        %v4002 = vadd.f32 0.0, %v4001
        %v4003 = vpop.f32.mrb[0].mxu0
        %4004 = vmatprep.mubr.f32.mxu0 0.0
        %4005 = vmatmul.mubr.f32.gmra.mrb[0].mxu0 %v3800
        %v4006 = vpop.f32.mrb[0].mxu0
        %v4007 = vadd.f32 0.0, %v4006
        %v4008 = vpop.f32.mrb[0].mxu0
        %4009 = vmatprep.mubr.f32.mxu0 0.0
        %4010 = vmatmul.mubr.f32.gmra.mrb[0].mxu0 %v3801
        %v4011 = vpop.f32.mrb[0].mxu0
        %v4012 = vadd.f32 0.0, %v4011
        %v4013 = vpop.f32.mrb[0].mxu0
        %4014 = vmatprep.mubr.f32.mxu0 0.0
        %4015 = vmatmul.mubr.f32.gmra.mrb[0].mxu0 %v3802
        %v4016 = vpop.f32.mrb[0].mxu0
        %v4017 = vadd.f32 0.0, %v4016
        %v4018 = vpop.f32.mrb[0].mxu0
        %4019 = vmatprep.mubr.f32.mxu0 0.0
        %4020 = vmatmul.mubr.f32.gmra.mrb[0].mxu0 %v3803
        %v4021 = vpop.f32.mrb[0].mxu0
        %v4022 = vadd.f32 0.0, %v4021
        %v4023 = vpop.f32.mrb[0].mxu0
        %4024 = vmatprep.mubr.f32.mxu0 0.0
        %4025 = vmatmul.mubr.f32.gmra.mrb[0].mxu0 %v3804
        %v4026 = vpop.f32.mrb[0].mxu0
        %v4027 = vadd.f32 0.0, %v4026
        %v4028 = vpop.f32.mrb[0].mxu0
        %4029 = vmatprep.mubr.f32.mxu0 0.0
        %4030 = vmatmul.mubr.f32.gmra.mrb[0].mxu0 %v3805
        %v4031 = vpop.f32.mrb[0].mxu0
        %v4032 = vadd.f32 0.0, %v4031
        %v4033 = vpop.f32.mrb[0].mxu0
        %4034 = vmatprep.mubr.f32.mxu0 0.0
        %4035 = vmatmul.mubr.f32.gmra.mrb[0].mxu0 %v3806
        %v4036 = vpop.f32.mrb[0].mxu0
        %v4037 = vadd.f32 0.0, %v4036
        %v4038 = vpop.f32.mrb[0].mxu0
        %4039 = vmatprep.mubr.f32.mxu0 0.0
        %4040 = vmatmul.mubr.f32.gmra.mrb[0].mxu0 %v3807
        %v4041 = vpop.f32.mrb[0].mxu0
        %v4042 = vadd.f32 0.0, %v4041
        %v4043 = vpop.f32.mrb[0].mxu0
        %4044 = vmatprep.mubr.f32.mxu0 0.0
        %4045 = vmatmul.mubr.f32.gmra.mrb[0].mxu0 %v3808
        %v4046 = vpop.f32.mrb[0].mxu0
        %v4047 = vadd.f32 0.0, %v4046
        %v4048 = vpop.f32.mrb[0].mxu0
        %4049 = vdwg.mxu0
        %4050 = vst [vmem:[#allocation3] sm:$0xff] %v3892
        %4051 = vst [vmem:[#allocation3 + $0x8] sm:$0xff] %v3897
        %4052 = vst [vmem:[#allocation3 + $0x10] sm:$0xff] %v3902
        %4053 = vst [vmem:[#allocation3 + $0x18] sm:$0xff] %v3907
        %4054 = vst [vmem:[#allocation3 + $0x20] sm:$0xff] %v3912
        %4055 = vst [vmem:[#allocation3 + $0x28] sm:$0xff] %v3917
        %4056 = vst [vmem:[#allocation3 + $0x30] sm:$0xff] %v3922
        %4057 = vst [vmem:[#allocation3 + $0x38] sm:$0xff] %v3927
        %4058 = vst [vmem:[#allocation3 + $0x40] sm:$0xff] %v3932
        %4059 = vst [vmem:[#allocation3 + $0x48] sm:$0xff] %v3937
        %4060 = vst [vmem:[#allocation3 + $0x50] sm:$0xff] %v3942
        %4061 = vst [vmem:[#allocation3 + $0x58] sm:$0xff] %v3947
        %4062 = vst [vmem:[#allocation3 + $0x60] sm:$0xff] %v3952
        %4063 = vst [vmem:[#allocation3 + $0x68] sm:$0xff] %v3957
        %4064 = vst [vmem:[#allocation3 + $0x70] sm:$0xff] %v3962
        %4065 = vst [vmem:[#allocation3 + $0x78] sm:$0xff] %v3967
        %4066 = vst [vmem:[#allocation3 + $0x80] sm:$0xff] %v3972
        %4067 = vst [vmem:[#allocation3 + $0x88] sm:$0xff] %v3977
        %4068 = vst [vmem:[#allocation3 + $0x90] sm:$0xff] %v3982
        %4069 = vst [vmem:[#allocation3 + $0x98] sm:$0xff] %v3987
        %4070 = vst [vmem:[#allocation3 + $0xa0] sm:$0xff] %v3992
        %4071 = vst [vmem:[#allocation3 + $0xa8] sm:$0xff] %v3997
        %4072 = vst [vmem:[#allocation3 + $0xb0] sm:$0xff] %v4002
        %4073 = vst [vmem:[#allocation3 + $0xb8] sm:$0xff] %v4007
        %4074 = vst [vmem:[#allocation3 + $0xc0] sm:$0xff] %v4012
        %4075 = vst [vmem:[#allocation3 + $0xc8] sm:$0xff] %v4017
        %4076 = vst [vmem:[#allocation3 + $0xd0] sm:$0xff] %v4022
        %4077 = vst [vmem:[#allocation3 + $0xd8] sm:$0xff] %v4027
        %4078 = vst [vmem:[#allocation3 + $0xe0] sm:$0xff] %v4032
        %4079 = vst [vmem:[#allocation3 + $0xe8] sm:$0xff] %v4037
        %4080 = vst [vmem:[#allocation3 + $0xf0] sm:$0xff] %v4042
        %4081 = vst [vmem:[#allocation3 + $0xf8] sm:$0xff] %v4047
        %v4082 = vld [vmem:[#allocation2 + $0x1] sm:$0xff]
        %v4083 = vld [vmem:[#allocation2 + $0x9] sm:$0xff]
        %v4084 = vld [vmem:[#allocation2 + $0x19] sm:$0xff]
        %v4085 = vld [vmem:[#allocation2 + $0x21] sm:$0xff]
        %v4086 = vld [vmem:[#allocation2 + $0x31] sm:$0xff]
        %v4087 = vld [vmem:[#allocation2 + $0x39] sm:$0xff]
        %v4088 = vld [vmem:[#allocation2 + $0x49] sm:$0xff]
        %v4089 = vld [vmem:[#allocation2 + $0x51] sm:$0xff]
        %v4090 = vld [vmem:[#allocation2 + $0x61] sm:$0xff]
        %v4091 = vld [vmem:[#allocation2 + $0x69] sm:$0xff]
        %v4092 = vld [vmem:[#allocation2 + $0x79] sm:$0xff]
        %v4093 = vld [vmem:[#allocation2 + $0x81] sm:$0xff]
        %v4094 = vld [vmem:[#allocation2 + $0x91] sm:$0xff]
        %v4095 = vld [vmem:[#allocation2 + $0x99] sm:$0xff]
        %v4096 = vld [vmem:[#allocation2 + $0xa9] sm:$0xff]
        %v4097 = vld [vmem:[#allocation2 + $0xb1] sm:$0xff]
        %v4098 = vld [vmem:[#allocation2 + $0xc1] sm:$0xff]
        %v4099 = vld [vmem:[#allocation2 + $0xc9] sm:$0xff]
        %v4100 = vld [vmem:[#allocation2 + $0xd9] sm:$0xff]
        %v4101 = vld [vmem:[#allocation2 + $0xe1] sm:$0xff]
        %v4102 = vld [vmem:[#allocation2 + $0xf1] sm:$0xff]
        %v4103 = vld [vmem:[#allocation2 + $0xf9] sm:$0xff]
        %v4104 = vld [vmem:[#allocation2 + $0x109] sm:$0xff]
        %v4105 = vld [vmem:[#allocation2 + $0x111] sm:$0xff]
        %v4106 = vld [vmem:[#allocation2 + $0x121] sm:$0xff]
        %v4107 = vld [vmem:[#allocation2 + $0x129] sm:$0xff]
        %v4108 = vld [vmem:[#allocation2 + $0x139] sm:$0xff]
        %v4109 = vld [vmem:[#allocation2 + $0x141] sm:$0xff]
        %v4110 = vld [vmem:[#allocation2 + $0x151] sm:$0xff]
        %v4111 = vld [vmem:[#allocation2 + $0x159] sm:$0xff]
        %v4112 = vld [vmem:[#allocation2 + $0x169] sm:$0xff]
        %v4113 = vld [vmem:[#allocation2 + $0x171] sm:$0xff]
        %s4114 = scalar_lea.vmem [#allocation4], 128
        %v4115 = vld [vmem:[%s4114] sm:$0xff]
        %v4116 = vld [vmem:[%s4114 + $0x8] sm:$0xff]
        %v4117 = vld [vmem:[%s4114 + $0x10] sm:$0xff]
        %v4118 = vld [vmem:[%s4114 + $0x18] sm:$0xff]
        %v4119 = vld [vmem:[%s4114 + $0x20] sm:$0xff]
        %v4120 = vld [vmem:[%s4114 + $0x28] sm:$0xff]
        %v4121 = vld [vmem:[%s4114 + $0x30] sm:$0xff]
        %v4122 = vld [vmem:[%s4114 + $0x38] sm:$0xff]
        %v4123 = vld [vmem:[%s4114 + $0x40] sm:$0xff]
        %v4124 = vld [vmem:[%s4114 + $0x48] sm:$0xff]
        %v4125 = vld [vmem:[%s4114 + $0x50] sm:$0xff]
        %v4126 = vld [vmem:[%s4114 + $0x58] sm:$0xff]
        %v4127 = vld [vmem:[%s4114 + $0x60] sm:$0xff]
        %v4128 = vld [vmem:[%s4114 + $0x68] sm:$0xff]
        %v4129 = vld [vmem:[%s4114 + $0x70] sm:$0xff]
        %v4130 = vld [vmem:[%s4114 + $0x78] sm:$0xff]
        %4131 = vmatprep.subr.mxu0 0.0
        %4132 = vmatpush1.msra.mxu0 %v4115
        %4133 = vmatprep.subr.mxu0 0.0
        %4134 = vmatpush1.msra.mxu0 %v4116
        %4135 = vmatprep.subr.mxu0 0.0
        %4136 = vmatpush1.msra.mxu0 %v4117
        %4137 = vmatprep.subr.mxu0 0.0
        %4138 = vmatpush1.msra.mxu0 %v4118
        %4139 = vmatprep.subr.mxu0 0.0
        %4140 = vmatpush1.msra.mxu0 %v4119
        %4141 = vmatprep.subr.mxu0 0.0
        %4142 = vmatpush1.msra.mxu0 %v4120
        %4143 = vmatprep.subr.mxu0 0.0
        %4144 = vmatpush1.msra.mxu0 %v4121
        %4145 = vmatprep.subr.mxu0 0.0
        %4146 = vmatpush1.msra.mxu0 %v4122
        %4147 = vmatprep.subr.mxu0 0.0
        %4148 = vmatpush1.msra.mxu0 %v4123
        %4149 = vmatprep.subr.mxu0 0.0
        %4150 = vmatpush1.msra.mxu0 %v4124
        %4151 = vmatprep.subr.mxu0 0.0
        %4152 = vmatpush1.msra.mxu0 %v4125
        %4153 = vmatprep.subr.mxu0 0.0
        %4154 = vmatpush1.msra.mxu0 %v4126
        %4155 = vmatprep.subr.mxu0 0.0
        %4156 = vmatpush1.msra.mxu0 %v4127
        %4157 = vmatprep.subr.mxu0 0.0
        %4158 = vmatpush1.msra.mxu0 %v4128
        %4159 = vmatprep.subr.mxu0 0.0
        %4160 = vmatpush1.msra.mxu0 %v4129
        %4161 = vmatprep.subr.mxu0 0.0
        %4162 = vmatpush1.msra.mxu0 %v4130
        %4163 = vmatprep.subr.mxu0 0.0
        %4164 = vmatpush1.msra.mxu0 0.0
        %4165 = vmatprep.subr.mxu0 0.0
        %4166 = vmatpush1.msra.mxu0 0.0
        %4167 = vmatprep.subr.mxu0 0.0
        %4168 = vmatpush1.msra.mxu0 0.0
        %4169 = vmatprep.subr.mxu0 0.0
        %4170 = vmatpush1.msra.mxu0 0.0
        %4171 = vmatprep.subr.mxu0 0.0
        %4172 = vmatpush1.msra.mxu0 0.0
        %4173 = vmatprep.subr.mxu0 0.0
        %4174 = vmatpush1.msra.mxu0 0.0
        %4175 = vmatprep.subr.mxu0 0.0
        %4176 = vmatpush1.msra.mxu0 0.0
        %4177 = vmatprep.subr.mxu0 0.0
        %4178 = vmatpush1.msra.mxu0 0.0
        %4179 = vmatprep.subr.mxu0 0.0
        %4180 = vmatpush1.msra.mxu0 0.0
        %4181 = vmatprep.subr.mxu0 0.0
        %4182 = vmatpush1.msra.mxu0 0.0
        %4183 = vmatprep.subr.mxu0 0.0
        %4184 = vmatpush1.msra.mxu0 0.0
        %4185 = vmatprep.subr.mxu0 0.0
        %4186 = vmatpush1.msra.mxu0 0.0
        %4187 = vmatprep.subr.mxu0 0.0
        %4188 = vmatpush1.msra.mxu0 0.0
        %4189 = vmatprep.subr.mxu0 0.0
        %4190 = vmatpush1.msra.mxu0 0.0
        %4191 = vmatprep.subr.mxu0 0.0
        %4192 = vmatpush1.msra.mxu0 0.0
        %4193 = vmatprep.subr.mxu0 0.0
        %4194 = vmatpush1.msra.mxu0 0.0
        %4195 = vmatprep.mubr.f32.mxu0 0.0
        %4196 = vmatmul.mubr.f32.gmra.mrb[0].mxu0 %v4082
        %v4197 = vpop.f32.mrb[0].mxu0
        %v4198 = vadd.f32 0.0, %v4197
        %v4199 = vpop.f32.mrb[0].mxu0
        %4200 = vmatprep.mubr.f32.mxu0 0.0
        %4201 = vmatmul.mubr.f32.gmra.mrb[0].mxu0 %v4083
        %v4202 = vpop.f32.mrb[0].mxu0
        %v4203 = vadd.f32 0.0, %v4202
        %v4204 = vpop.f32.mrb[0].mxu0
        %4205 = vmatprep.mubr.f32.mxu0 0.0
        %4206 = vmatmul.mubr.f32.gmra.mrb[0].mxu0 %v4084
        %v4207 = vpop.f32.mrb[0].mxu0
        %v4208 = vadd.f32 0.0, %v4207
        %v4209 = vpop.f32.mrb[0].mxu0
        %4210 = vmatprep.mubr.f32.mxu0 0.0
        %4211 = vmatmul.mubr.f32.gmra.mrb[0].mxu0 %v4085
        %v4212 = vpop.f32.mrb[0].mxu0
        %v4213 = vadd.f32 0.0, %v4212
        %v4214 = vpop.f32.mrb[0].mxu0
        %4215 = vmatprep.mubr.f32.mxu0 0.0
        %4216 = vmatmul.mubr.f32.gmra.mrb[0].mxu0 %v4086
        %v4217 = vpop.f32.mrb[0].mxu0
        %v4218 = vadd.f32 0.0, %v4217
        %v4219 = vpop.f32.mrb[0].mxu0
        %4220 = vmatprep.mubr.f32.mxu0 0.0
        %4221 = vmatmul.mubr.f32.gmra.mrb[0].mxu0 %v4087
        %v4222 = vpop.f32.mrb[0].mxu0
        %v4223 = vadd.f32 0.0, %v4222
        %v4224 = vpop.f32.mrb[0].mxu0
        %4225 = vmatprep.mubr.f32.mxu0 0.0
        %4226 = vmatmul.mubr.f32.gmra.mrb[0].mxu0 %v4088
        %v4227 = vpop.f32.mrb[0].mxu0
        %v4228 = vadd.f32 0.0, %v4227
        %v4229 = vpop.f32.mrb[0].mxu0
        %4230 = vmatprep.mubr.f32.mxu0 0.0
        %4231 = vmatmul.mubr.f32.gmra.mrb[0].mxu0 %v4089
        %v4232 = vpop.f32.mrb[0].mxu0
        %v4233 = vadd.f32 0.0, %v4232
        %v4234 = vpop.f32.mrb[0].mxu0
        %4235 = vmatprep.mubr.f32.mxu0 0.0
        %4236 = vmatmul.mubr.f32.gmra.mrb[0].mxu0 %v4090
        %v4237 = vpop.f32.mrb[0].mxu0
        %v4238 = vadd.f32 0.0, %v4237
        %v4239 = vpop.f32.mrb[0].mxu0
        %4240 = vmatprep.mubr.f32.mxu0 0.0
        %4241 = vmatmul.mubr.f32.gmra.mrb[0].mxu0 %v4091
        %v4242 = vpop.f32.mrb[0].mxu0
        %v4243 = vadd.f32 0.0, %v4242
        %v4244 = vpop.f32.mrb[0].mxu0
        %4245 = vmatprep.mubr.f32.mxu0 0.0
        %4246 = vmatmul.mubr.f32.gmra.mrb[0].mxu0 %v4092
        %v4247 = vpop.f32.mrb[0].mxu0
        %v4248 = vadd.f32 0.0, %v4247
        %v4249 = vpop.f32.mrb[0].mxu0
        %4250 = vmatprep.mubr.f32.mxu0 0.0
        %4251 = vmatmul.mubr.f32.gmra.mrb[0].mxu0 %v4093
        %v4252 = vpop.f32.mrb[0].mxu0
        %v4253 = vadd.f32 0.0, %v4252
        %v4254 = vpop.f32.mrb[0].mxu0
        %4255 = vmatprep.mubr.f32.mxu0 0.0
        %4256 = vmatmul.mubr.f32.gmra.mrb[0].mxu0 %v4094
        %v4257 = vpop.f32.mrb[0].mxu0
        %v4258 = vadd.f32 0.0, %v4257
        %v4259 = vpop.f32.mrb[0].mxu0
        %4260 = vmatprep.mubr.f32.mxu0 0.0
        %4261 = vmatmul.mubr.f32.gmra.mrb[0].mxu0 %v4095
        %v4262 = vpop.f32.mrb[0].mxu0
        %v4263 = vadd.f32 0.0, %v4262
        %v4264 = vpop.f32.mrb[0].mxu0
        %4265 = vmatprep.mubr.f32.mxu0 0.0
        %4266 = vmatmul.mubr.f32.gmra.mrb[0].mxu0 %v4096
        %v4267 = vpop.f32.mrb[0].mxu0
        %v4268 = vadd.f32 0.0, %v4267
        %v4269 = vpop.f32.mrb[0].mxu0
        %4270 = vmatprep.mubr.f32.mxu0 0.0
        %4271 = vmatmul.mubr.f32.gmra.mrb[0].mxu0 %v4097
        %v4272 = vpop.f32.mrb[0].mxu0
        %v4273 = vadd.f32 0.0, %v4272
        %v4274 = vpop.f32.mrb[0].mxu0
        %4275 = vmatprep.mubr.f32.mxu0 0.0
        %4276 = vmatmul.mubr.f32.gmra.mrb[0].mxu0 %v4098
        %v4277 = vpop.f32.mrb[0].mxu0
        %v4278 = vadd.f32 0.0, %v4277
        %v4279 = vpop.f32.mrb[0].mxu0
        %4280 = vmatprep.mubr.f32.mxu0 0.0
        %4281 = vmatmul.mubr.f32.gmra.mrb[0].mxu0 %v4099
        %v4282 = vpop.f32.mrb[0].mxu0
        %v4283 = vadd.f32 0.0, %v4282
        %v4284 = vpop.f32.mrb[0].mxu0
        %4285 = vmatprep.mubr.f32.mxu0 0.0
        %4286 = vmatmul.mubr.f32.gmra.mrb[0].mxu0 %v4100
        %v4287 = vpop.f32.mrb[0].mxu0
        %v4288 = vadd.f32 0.0, %v4287
        %v4289 = vpop.f32.mrb[0].mxu0
        %4290 = vmatprep.mubr.f32.mxu0 0.0
        %4291 = vmatmul.mubr.f32.gmra.mrb[0].mxu0 %v4101
        %v4292 = vpop.f32.mrb[0].mxu0
        %v4293 = vadd.f32 0.0, %v4292
        %v4294 = vpop.f32.mrb[0].mxu0
        %4295 = vmatprep.mubr.f32.mxu0 0.0
        %4296 = vmatmul.mubr.f32.gmra.mrb[0].mxu0 %v4102
        %v4297 = vpop.f32.mrb[0].mxu0
        %v4298 = vadd.f32 0.0, %v4297
        %v4299 = vpop.f32.mrb[0].mxu0
        %4300 = vmatprep.mubr.f32.mxu0 0.0
        %4301 = vmatmul.mubr.f32.gmra.mrb[0].mxu0 %v4103
        %v4302 = vpop.f32.mrb[0].mxu0
        %v4303 = vadd.f32 0.0, %v4302
        %v4304 = vpop.f32.mrb[0].mxu0
        %4305 = vmatprep.mubr.f32.mxu0 0.0
        %4306 = vmatmul.mubr.f32.gmra.mrb[0].mxu0 %v4104
        %v4307 = vpop.f32.mrb[0].mxu0
        %v4308 = vadd.f32 0.0, %v4307
        %v4309 = vpop.f32.mrb[0].mxu0
        %4310 = vmatprep.mubr.f32.mxu0 0.0
        %4311 = vmatmul.mubr.f32.gmra.mrb[0].mxu0 %v4105
        %v4312 = vpop.f32.mrb[0].mxu0
        %v4313 = vadd.f32 0.0, %v4312
        %v4314 = vpop.f32.mrb[0].mxu0
        %4315 = vmatprep.mubr.f32.mxu0 0.0
        %4316 = vmatmul.mubr.f32.gmra.mrb[0].mxu0 %v4106
        %v4317 = vpop.f32.mrb[0].mxu0
        %v4318 = vadd.f32 0.0, %v4317
        %v4319 = vpop.f32.mrb[0].mxu0
        %4320 = vmatprep.mubr.f32.mxu0 0.0
        %4321 = vmatmul.mubr.f32.gmra.mrb[0].mxu0 %v4107
        %v4322 = vpop.f32.mrb[0].mxu0
        %v4323 = vadd.f32 0.0, %v4322
        %v4324 = vpop.f32.mrb[0].mxu0
        %4325 = vmatprep.mubr.f32.mxu0 0.0
        %4326 = vmatmul.mubr.f32.gmra.mrb[0].mxu0 %v4108
        %v4327 = vpop.f32.mrb[0].mxu0
        %v4328 = vadd.f32 0.0, %v4327
        %v4329 = vpop.f32.mrb[0].mxu0
        %4330 = vmatprep.mubr.f32.mxu0 0.0
        %4331 = vmatmul.mubr.f32.gmra.mrb[0].mxu0 %v4109
        %v4332 = vpop.f32.mrb[0].mxu0
        %v4333 = vadd.f32 0.0, %v4332
        %v4334 = vpop.f32.mrb[0].mxu0
        %4335 = vmatprep.mubr.f32.mxu0 0.0
        %4336 = vmatmul.mubr.f32.gmra.mrb[0].mxu0 %v4110
        %v4337 = vpop.f32.mrb[0].mxu0
        %v4338 = vadd.f32 0.0, %v4337
        %v4339 = vpop.f32.mrb[0].mxu0
        %4340 = vmatprep.mubr.f32.mxu0 0.0
        %4341 = vmatmul.mubr.f32.gmra.mrb[0].mxu0 %v4111
        %v4342 = vpop.f32.mrb[0].mxu0
        %v4343 = vadd.f32 0.0, %v4342
        %v4344 = vpop.f32.mrb[0].mxu0
        %4345 = vmatprep.mubr.f32.mxu0 0.0
        %4346 = vmatmul.mubr.f32.gmra.mrb[0].mxu0 %v4112
        %v4347 = vpop.f32.mrb[0].mxu0
        %v4348 = vadd.f32 0.0, %v4347
        %v4349 = vpop.f32.mrb[0].mxu0
        %4350 = vmatprep.mubr.f32.mxu0 0.0
        %4351 = vmatmul.mubr.f32.gmra.mrb[0].mxu0 %v4113
        %v4352 = vpop.f32.mrb[0].mxu0
        %v4353 = vadd.f32 0.0, %v4352
        %v4354 = vpop.f32.mrb[0].mxu0
        %4355 = vdwg.mxu0
        %v4356 = vld [vmem:[#allocation3] sm:$0xff]
        %v4357 = vld [vmem:[#allocation3 + $0x8] sm:$0xff]
        %v4358 = vld [vmem:[#allocation3 + $0x10] sm:$0xff]
        %v4359 = vld [vmem:[#allocation3 + $0x18] sm:$0xff]
        %v4360 = vld [vmem:[#allocation3 + $0x20] sm:$0xff]
        %v4361 = vld [vmem:[#allocation3 + $0x28] sm:$0xff]
        %v4362 = vld [vmem:[#allocation3 + $0x30] sm:$0xff]
        %v4363 = vld [vmem:[#allocation3 + $0x38] sm:$0xff]
        %v4364 = vld [vmem:[#allocation3 + $0x40] sm:$0xff]
        %v4365 = vld [vmem:[#allocation3 + $0x48] sm:$0xff]
        %v4366 = vld [vmem:[#allocation3 + $0x50] sm:$0xff]
        %v4367 = vld [vmem:[#allocation3 + $0x58] sm:$0xff]
        %v4368 = vld [vmem:[#allocation3 + $0x60] sm:$0xff]
        %v4369 = vld [vmem:[#allocation3 + $0x68] sm:$0xff]
        %v4370 = vld [vmem:[#allocation3 + $0x70] sm:$0xff]
        %v4371 = vld [vmem:[#allocation3 + $0x78] sm:$0xff]
        %v4372 = vld [vmem:[#allocation3 + $0x80] sm:$0xff]
        %v4373 = vld [vmem:[#allocation3 + $0x88] sm:$0xff]
        %v4374 = vld [vmem:[#allocation3 + $0x90] sm:$0xff]
        %v4375 = vld [vmem:[#allocation3 + $0x98] sm:$0xff]
        %v4376 = vld [vmem:[#allocation3 + $0xa0] sm:$0xff]
        %v4377 = vld [vmem:[#allocation3 + $0xa8] sm:$0xff]
        %v4378 = vld [vmem:[#allocation3 + $0xb0] sm:$0xff]
        %v4379 = vld [vmem:[#allocation3 + $0xb8] sm:$0xff]
        %v4380 = vld [vmem:[#allocation3 + $0xc0] sm:$0xff]
        %v4381 = vld [vmem:[#allocation3 + $0xc8] sm:$0xff]
        %v4382 = vld [vmem:[#allocation3 + $0xd0] sm:$0xff]
        %v4383 = vld [vmem:[#allocation3 + $0xd8] sm:$0xff]
        %v4384 = vld [vmem:[#allocation3 + $0xe0] sm:$0xff]
        %v4385 = vld [vmem:[#allocation3 + $0xe8] sm:$0xff]
        %v4386 = vld [vmem:[#allocation3 + $0xf0] sm:$0xff]
        %v4387 = vld [vmem:[#allocation3 + $0xf8] sm:$0xff]
        %v4388 = vadd.f32 %v4356, %v4198
        %v4389 = vadd.f32 %v4357, %v4203
        %v4390 = vadd.f32 %v4358, %v4208
        %v4391 = vadd.f32 %v4359, %v4213
        %v4392 = vadd.f32 %v4360, %v4218
        %v4393 = vadd.f32 %v4361, %v4223
        %v4394 = vadd.f32 %v4362, %v4228
        %v4395 = vadd.f32 %v4363, %v4233
        %v4396 = vadd.f32 %v4364, %v4238
        %v4397 = vadd.f32 %v4365, %v4243
        %v4398 = vadd.f32 %v4366, %v4248
        %v4399 = vadd.f32 %v4367, %v4253
        %v4400 = vadd.f32 %v4368, %v4258
        %v4401 = vadd.f32 %v4369, %v4263
        %v4402 = vadd.f32 %v4370, %v4268
        %v4403 = vadd.f32 %v4371, %v4273
        %v4404 = vadd.f32 %v4372, %v4278
        %v4405 = vadd.f32 %v4373, %v4283
        %v4406 = vadd.f32 %v4374, %v4288
        %v4407 = vadd.f32 %v4375, %v4293
        %v4408 = vadd.f32 %v4376, %v4298
        %v4409 = vadd.f32 %v4377, %v4303
        %v4410 = vadd.f32 %v4378, %v4308
        %v4411 = vadd.f32 %v4379, %v4313
        %v4412 = vadd.f32 %v4380, %v4318
        %v4413 = vadd.f32 %v4381, %v4323
        %v4414 = vadd.f32 %v4382, %v4328
        %v4415 = vadd.f32 %v4383, %v4333
        %v4416 = vadd.f32 %v4384, %v4338
        %v4417 = vadd.f32 %v4385, %v4343
        %v4418 = vadd.f32 %v4386, %v4348
        %v4419 = vadd.f32 %v4387, %v4353
        %4420 = vst [vmem:[#allocation3] sm:$0xff] %v4388
        %4421 = vst [vmem:[#allocation3 + $0x8] sm:$0xff] %v4389
        %4422 = vst [vmem:[#allocation3 + $0x10] sm:$0xff] %v4390
        %4423 = vst [vmem:[#allocation3 + $0x18] sm:$0xff] %v4391
        %4424 = vst [vmem:[#allocation3 + $0x20] sm:$0xff] %v4392
        %4425 = vst [vmem:[#allocation3 + $0x28] sm:$0xff] %v4393
        %4426 = vst [vmem:[#allocation3 + $0x30] sm:$0xff] %v4394
        %4427 = vst [vmem:[#allocation3 + $0x38] sm:$0xff] %v4395
        %4428 = vst [vmem:[#allocation3 + $0x40] sm:$0xff] %v4396
        %4429 = vst [vmem:[#allocation3 + $0x48] sm:$0xff] %v4397
        %4430 = vst [vmem:[#allocation3 + $0x50] sm:$0xff] %v4398
        %4431 = vst [vmem:[#allocation3 + $0x58] sm:$0xff] %v4399
        %4432 = vst [vmem:[#allocation3 + $0x60] sm:$0xff] %v4400
        %4433 = vst [vmem:[#allocation3 + $0x68] sm:$0xff] %v4401
        %4434 = vst [vmem:[#allocation3 + $0x70] sm:$0xff] %v4402
        %4435 = vst [vmem:[#allocation3 + $0x78] sm:$0xff] %v4403
        %4436 = vst [vmem:[#allocation3 + $0x80] sm:$0xff] %v4404
        %4437 = vst [vmem:[#allocation3 + $0x88] sm:$0xff] %v4405
        %4438 = vst [vmem:[#allocation3 + $0x90] sm:$0xff] %v4406
        %4439 = vst [vmem:[#allocation3 + $0x98] sm:$0xff] %v4407
        %4440 = vst [vmem:[#allocation3 + $0xa0] sm:$0xff] %v4408
        %4441 = vst [vmem:[#allocation3 + $0xa8] sm:$0xff] %v4409
        %4442 = vst [vmem:[#allocation3 + $0xb0] sm:$0xff] %v4410
        %4443 = vst [vmem:[#allocation3 + $0xb8] sm:$0xff] %v4411
        %4444 = vst [vmem:[#allocation3 + $0xc0] sm:$0xff] %v4412
        %4445 = vst [vmem:[#allocation3 + $0xc8] sm:$0xff] %v4413
        %4446 = vst [vmem:[#allocation3 + $0xd0] sm:$0xff] %v4414
        %4447 = vst [vmem:[#allocation3 + $0xd8] sm:$0xff] %v4415
        %4448 = vst [vmem:[#allocation3 + $0xe0] sm:$0xff] %v4416
        %4449 = vst [vmem:[#allocation3 + $0xe8] sm:$0xff] %v4417
        %4450 = vst [vmem:[#allocation3 + $0xf0] sm:$0xff] %v4418
        %4451 = vst [vmem:[#allocation3 + $0xf8] sm:$0xff] %v4419
        %v4452 = vld [vmem:[#allocation2 + $0x2] sm:$0xff]
        %v4453 = vld [vmem:[#allocation2 + $0xa] sm:$0xff]
        %v4454 = vld [vmem:[#allocation2 + $0x1a] sm:$0xff]
        %v4455 = vld [vmem:[#allocation2 + $0x22] sm:$0xff]
        %v4456 = vld [vmem:[#allocation2 + $0x32] sm:$0xff]
        %v4457 = vld [vmem:[#allocation2 + $0x3a] sm:$0xff]
        %v4458 = vld [vmem:[#allocation2 + $0x4a] sm:$0xff]
        %v4459 = vld [vmem:[#allocation2 + $0x52] sm:$0xff]
        %v4460 = vld [vmem:[#allocation2 + $0x62] sm:$0xff]
        %v4461 = vld [vmem:[#allocation2 + $0x6a] sm:$0xff]
        %v4462 = vld [vmem:[#allocation2 + $0x7a] sm:$0xff]
        %v4463 = vld [vmem:[#allocation2 + $0x82] sm:$0xff]
        %v4464 = vld [vmem:[#allocation2 + $0x92] sm:$0xff]
        %v4465 = vld [vmem:[#allocation2 + $0x9a] sm:$0xff]
        %v4466 = vld [vmem:[#allocation2 + $0xaa] sm:$0xff]
        %v4467 = vld [vmem:[#allocation2 + $0xb2] sm:$0xff]
        %v4468 = vld [vmem:[#allocation2 + $0xc2] sm:$0xff]
        %v4469 = vld [vmem:[#allocation2 + $0xca] sm:$0xff]
        %v4470 = vld [vmem:[#allocation2 + $0xda] sm:$0xff]
        %v4471 = vld [vmem:[#allocation2 + $0xe2] sm:$0xff]
        %v4472 = vld [vmem:[#allocation2 + $0xf2] sm:$0xff]
        %v4473 = vld [vmem:[#allocation2 + $0xfa] sm:$0xff]
        %v4474 = vld [vmem:[#allocation2 + $0x10a] sm:$0xff]
        %v4475 = vld [vmem:[#allocation2 + $0x112] sm:$0xff]
        %v4476 = vld [vmem:[#allocation2 + $0x122] sm:$0xff]
        %v4477 = vld [vmem:[#allocation2 + $0x12a] sm:$0xff]
        %v4478 = vld [vmem:[#allocation2 + $0x13a] sm:$0xff]
        %v4479 = vld [vmem:[#allocation2 + $0x142] sm:$0xff]
        %v4480 = vld [vmem:[#allocation2 + $0x152] sm:$0xff]
        %v4481 = vld [vmem:[#allocation2 + $0x15a] sm:$0xff]
        %v4482 = vld [vmem:[#allocation2 + $0x16a] sm:$0xff]
        %v4483 = vld [vmem:[#allocation2 + $0x172] sm:$0xff]
        %s4484 = scalar_lea.vmem [#allocation4], 256
        %v4485 = vld [vmem:[%s4484] sm:$0xff]
        %v4486 = vld [vmem:[%s4484 + $0x8] sm:$0xff]
        %v4487 = vld [vmem:[%s4484 + $0x10] sm:$0xff]
        %v4488 = vld [vmem:[%s4484 + $0x18] sm:$0xff]
        %v4489 = vld [vmem:[%s4484 + $0x20] sm:$0xff]
        %v4490 = vld [vmem:[%s4484 + $0x28] sm:$0xff]
        %v4491 = vld [vmem:[%s4484 + $0x30] sm:$0xff]
        %v4492 = vld [vmem:[%s4484 + $0x38] sm:$0xff]
        %v4493 = vld [vmem:[%s4484 + $0x40] sm:$0xff]
        %v4494 = vld [vmem:[%s4484 + $0x48] sm:$0xff]
        %v4495 = vld [vmem:[%s4484 + $0x50] sm:$0xff]
        %v4496 = vld [vmem:[%s4484 + $0x58] sm:$0xff]
        %v4497 = vld [vmem:[%s4484 + $0x60] sm:$0xff]
        %v4498 = vld [vmem:[%s4484 + $0x68] sm:$0xff]
        %v4499 = vld [vmem:[%s4484 + $0x70] sm:$0xff]
        %v4500 = vld [vmem:[%s4484 + $0x78] sm:$0xff]
        %4501 = vmatprep.subr.mxu0 0.0
        %4502 = vmatpush1.msra.mxu0 %v4485
        %4503 = vmatprep.subr.mxu0 0.0
        %4504 = vmatpush1.msra.mxu0 %v4486
        %4505 = vmatprep.subr.mxu0 0.0
        %4506 = vmatpush1.msra.mxu0 %v4487
        %4507 = vmatprep.subr.mxu0 0.0
        %4508 = vmatpush1.msra.mxu0 %v4488
        %4509 = vmatprep.subr.mxu0 0.0
        %4510 = vmatpush1.msra.mxu0 %v4489
        %4511 = vmatprep.subr.mxu0 0.0
        %4512 = vmatpush1.msra.mxu0 %v4490
        %4513 = vmatprep.subr.mxu0 0.0
        %4514 = vmatpush1.msra.mxu0 %v4491
        %4515 = vmatprep.subr.mxu0 0.0
        %4516 = vmatpush1.msra.mxu0 %v4492
        %4517 = vmatprep.subr.mxu0 0.0
        %4518 = vmatpush1.msra.mxu0 %v4493
        %4519 = vmatprep.subr.mxu0 0.0
        %4520 = vmatpush1.msra.mxu0 %v4494
        %4521 = vmatprep.subr.mxu0 0.0
        %4522 = vmatpush1.msra.mxu0 %v4495
        %4523 = vmatprep.subr.mxu0 0.0
        %4524 = vmatpush1.msra.mxu0 %v4496
        %4525 = vmatprep.subr.mxu0 0.0
        %4526 = vmatpush1.msra.mxu0 %v4497
        %4527 = vmatprep.subr.mxu0 0.0
        %4528 = vmatpush1.msra.mxu0 %v4498
        %4529 = vmatprep.subr.mxu0 0.0
        %4530 = vmatpush1.msra.mxu0 %v4499
        %4531 = vmatprep.subr.mxu0 0.0
        %4532 = vmatpush1.msra.mxu0 %v4500
        %4533 = vmatprep.subr.mxu0 0.0
        %4534 = vmatpush1.msra.mxu0 0.0
        %4535 = vmatprep.subr.mxu0 0.0
        %4536 = vmatpush1.msra.mxu0 0.0
        %4537 = vmatprep.subr.mxu0 0.0
        %4538 = vmatpush1.msra.mxu0 0.0
        %4539 = vmatprep.subr.mxu0 0.0
        %4540 = vmatpush1.msra.mxu0 0.0
        %4541 = vmatprep.subr.mxu0 0.0
        %4542 = vmatpush1.msra.mxu0 0.0
        %4543 = vmatprep.subr.mxu0 0.0
        %4544 = vmatpush1.msra.mxu0 0.0
        %4545 = vmatprep.subr.mxu0 0.0
        %4546 = vmatpush1.msra.mxu0 0.0
        %4547 = vmatprep.subr.mxu0 0.0
        %4548 = vmatpush1.msra.mxu0 0.0
        %4549 = vmatprep.subr.mxu0 0.0
        %4550 = vmatpush1.msra.mxu0 0.0
        %4551 = vmatprep.subr.mxu0 0.0
        %4552 = vmatpush1.msra.mxu0 0.0
        %4553 = vmatprep.subr.mxu0 0.0
        %4554 = vmatpush1.msra.mxu0 0.0
        %4555 = vmatprep.subr.mxu0 0.0
        %4556 = vmatpush1.msra.mxu0 0.0
        %4557 = vmatprep.subr.mxu0 0.0
        %4558 = vmatpush1.msra.mxu0 0.0
        %4559 = vmatprep.subr.mxu0 0.0
        %4560 = vmatpush1.msra.mxu0 0.0
        %4561 = vmatprep.subr.mxu0 0.0
        %4562 = vmatpush1.msra.mxu0 0.0
        %4563 = vmatprep.subr.mxu0 0.0
        %4564 = vmatpush1.msra.mxu0 0.0
        %4565 = vmatprep.mubr.f32.mxu0 0.0
        %4566 = vmatmul.mubr.f32.gmra.mrb[0].mxu0 %v4452
        %v4567 = vpop.f32.mrb[0].mxu0
        %v4568 = vadd.f32 0.0, %v4567
        %v4569 = vpop.f32.mrb[0].mxu0
        %4570 = vmatprep.mubr.f32.mxu0 0.0
        %4571 = vmatmul.mubr.f32.gmra.mrb[0].mxu0 %v4453
        %v4572 = vpop.f32.mrb[0].mxu0
        %v4573 = vadd.f32 0.0, %v4572
        %v4574 = vpop.f32.mrb[0].mxu0
        %4575 = vmatprep.mubr.f32.mxu0 0.0
        %4576 = vmatmul.mubr.f32.gmra.mrb[0].mxu0 %v4454
        %v4577 = vpop.f32.mrb[0].mxu0
        %v4578 = vadd.f32 0.0, %v4577
        %v4579 = vpop.f32.mrb[0].mxu0
        %4580 = vmatprep.mubr.f32.mxu0 0.0
        %4581 = vmatmul.mubr.f32.gmra.mrb[0].mxu0 %v4455
        %v4582 = vpop.f32.mrb[0].mxu0
        %v4583 = vadd.f32 0.0, %v4582
        %v4584 = vpop.f32.mrb[0].mxu0
        %4585 = vmatprep.mubr.f32.mxu0 0.0
        %4586 = vmatmul.mubr.f32.gmra.mrb[0].mxu0 %v4456
        %v4587 = vpop.f32.mrb[0].mxu0
        %v4588 = vadd.f32 0.0, %v4587
        %v4589 = vpop.f32.mrb[0].mxu0
        %4590 = vmatprep.mubr.f32.mxu0 0.0
        %4591 = vmatmul.mubr.f32.gmra.mrb[0].mxu0 %v4457
        %v4592 = vpop.f32.mrb[0].mxu0
        %v4593 = vadd.f32 0.0, %v4592
        %v4594 = vpop.f32.mrb[0].mxu0
        %4595 = vmatprep.mubr.f32.mxu0 0.0
        %4596 = vmatmul.mubr.f32.gmra.mrb[0].mxu0 %v4458
        %v4597 = vpop.f32.mrb[0].mxu0
        %v4598 = vadd.f32 0.0, %v4597
        %v4599 = vpop.f32.mrb[0].mxu0
        %4600 = vmatprep.mubr.f32.mxu0 0.0
        %4601 = vmatmul.mubr.f32.gmra.mrb[0].mxu0 %v4459
        %v4602 = vpop.f32.mrb[0].mxu0
        %v4603 = vadd.f32 0.0, %v4602
        %v4604 = vpop.f32.mrb[0].mxu0
        %4605 = vmatprep.mubr.f32.mxu0 0.0
        %4606 = vmatmul.mubr.f32.gmra.mrb[0].mxu0 %v4460
        %v4607 = vpop.f32.mrb[0].mxu0
        %v4608 = vadd.f32 0.0, %v4607
        %v4609 = vpop.f32.mrb[0].mxu0
        %4610 = vmatprep.mubr.f32.mxu0 0.0
        %4611 = vmatmul.mubr.f32.gmra.mrb[0].mxu0 %v4461
        %v4612 = vpop.f32.mrb[0].mxu0
        %v4613 = vadd.f32 0.0, %v4612
        %v4614 = vpop.f32.mrb[0].mxu0
        %4615 = vmatprep.mubr.f32.mxu0 0.0
        %4616 = vmatmul.mubr.f32.gmra.mrb[0].mxu0 %v4462
        %v4617 = vpop.f32.mrb[0].mxu0
        %v4618 = vadd.f32 0.0, %v4617
        %v4619 = vpop.f32.mrb[0].mxu0
        %4620 = vmatprep.mubr.f32.mxu0 0.0
        %4621 = vmatmul.mubr.f32.gmra.mrb[0].mxu0 %v4463
        %v4622 = vpop.f32.mrb[0].mxu0
        %v4623 = vadd.f32 0.0, %v4622
        %v4624 = vpop.f32.mrb[0].mxu0
        %4625 = vmatprep.mubr.f32.mxu0 0.0
        %4626 = vmatmul.mubr.f32.gmra.mrb[0].mxu0 %v4464
        %v4627 = vpop.f32.mrb[0].mxu0
        %v4628 = vadd.f32 0.0, %v4627
        %v4629 = vpop.f32.mrb[0].mxu0
        %4630 = vmatprep.mubr.f32.mxu0 0.0
        %4631 = vmatmul.mubr.f32.gmra.mrb[0].mxu0 %v4465
        %v4632 = vpop.f32.mrb[0].mxu0
        %v4633 = vadd.f32 0.0, %v4632
        %v4634 = vpop.f32.mrb[0].mxu0
        %4635 = vmatprep.mubr.f32.mxu0 0.0
        %4636 = vmatmul.mubr.f32.gmra.mrb[0].mxu0 %v4466
        %v4637 = vpop.f32.mrb[0].mxu0
        %v4638 = vadd.f32 0.0, %v4637
        %v4639 = vpop.f32.mrb[0].mxu0
        %4640 = vmatprep.mubr.f32.mxu0 0.0
        %4641 = vmatmul.mubr.f32.gmra.mrb[0].mxu0 %v4467
        %v4642 = vpop.f32.mrb[0].mxu0
        %v4643 = vadd.f32 0.0, %v4642
        %v4644 = vpop.f32.mrb[0].mxu0
        %4645 = vmatprep.mubr.f32.mxu0 0.0
        %4646 = vmatmul.mubr.f32.gmra.mrb[0].mxu0 %v4468
        %v4647 = vpop.f32.mrb[0].mxu0
        %v4648 = vadd.f32 0.0, %v4647
        %v4649 = vpop.f32.mrb[0].mxu0
        %4650 = vmatprep.mubr.f32.mxu0 0.0
        %4651 = vmatmul.mubr.f32.gmra.mrb[0].mxu0 %v4469
        %v4652 = vpop.f32.mrb[0].mxu0
        %v4653 = vadd.f32 0.0, %v4652
        %v4654 = vpop.f32.mrb[0].mxu0
        %4655 = vmatprep.mubr.f32.mxu0 0.0
        %4656 = vmatmul.mubr.f32.gmra.mrb[0].mxu0 %v4470
        %v4657 = vpop.f32.mrb[0].mxu0
        %v4658 = vadd.f32 0.0, %v4657
        %v4659 = vpop.f32.mrb[0].mxu0
        %4660 = vmatprep.mubr.f32.mxu0 0.0
        %4661 = vmatmul.mubr.f32.gmra.mrb[0].mxu0 %v4471
        %v4662 = vpop.f32.mrb[0].mxu0
        %v4663 = vadd.f32 0.0, %v4662
        %v4664 = vpop.f32.mrb[0].mxu0
        %4665 = vmatprep.mubr.f32.mxu0 0.0
        %4666 = vmatmul.mubr.f32.gmra.mrb[0].mxu0 %v4472
        %v4667 = vpop.f32.mrb[0].mxu0
        %v4668 = vadd.f32 0.0, %v4667
        %v4669 = vpop.f32.mrb[0].mxu0
        %4670 = vmatprep.mubr.f32.mxu0 0.0
        %4671 = vmatmul.mubr.f32.gmra.mrb[0].mxu0 %v4473
        %v4672 = vpop.f32.mrb[0].mxu0
        %v4673 = vadd.f32 0.0, %v4672
        %v4674 = vpop.f32.mrb[0].mxu0
        %4675 = vmatprep.mubr.f32.mxu0 0.0
        %4676 = vmatmul.mubr.f32.gmra.mrb[0].mxu0 %v4474
        %v4677 = vpop.f32.mrb[0].mxu0
        %v4678 = vadd.f32 0.0, %v4677
        %v4679 = vpop.f32.mrb[0].mxu0
        %4680 = vmatprep.mubr.f32.mxu0 0.0
        %4681 = vmatmul.mubr.f32.gmra.mrb[0].mxu0 %v4475
        %v4682 = vpop.f32.mrb[0].mxu0
        %v4683 = vadd.f32 0.0, %v4682
        %v4684 = vpop.f32.mrb[0].mxu0
        %4685 = vmatprep.mubr.f32.mxu0 0.0
        %4686 = vmatmul.mubr.f32.gmra.mrb[0].mxu0 %v4476
        %v4687 = vpop.f32.mrb[0].mxu0
        %v4688 = vadd.f32 0.0, %v4687
        %v4689 = vpop.f32.mrb[0].mxu0
        %4690 = vmatprep.mubr.f32.mxu0 0.0
        %4691 = vmatmul.mubr.f32.gmra.mrb[0].mxu0 %v4477
        %v4692 = vpop.f32.mrb[0].mxu0
        %v4693 = vadd.f32 0.0, %v4692
        %v4694 = vpop.f32.mrb[0].mxu0
        %4695 = vmatprep.mubr.f32.mxu0 0.0
        %4696 = vmatmul.mubr.f32.gmra.mrb[0].mxu0 %v4478
        %v4697 = vpop.f32.mrb[0].mxu0
        %v4698 = vadd.f32 0.0, %v4697
        %v4699 = vpop.f32.mrb[0].mxu0
        %4700 = vmatprep.mubr.f32.mxu0 0.0
        %4701 = vmatmul.mubr.f32.gmra.mrb[0].mxu0 %v4479
        %v4702 = vpop.f32.mrb[0].mxu0
        %v4703 = vadd.f32 0.0, %v4702
        %v4704 = vpop.f32.mrb[0].mxu0
        %4705 = vmatprep.mubr.f32.mxu0 0.0
        %4706 = vmatmul.mubr.f32.gmra.mrb[0].mxu0 %v4480
        %v4707 = vpop.f32.mrb[0].mxu0
        %v4708 = vadd.f32 0.0, %v4707
        %v4709 = vpop.f32.mrb[0].mxu0
        %4710 = vmatprep.mubr.f32.mxu0 0.0
        %4711 = vmatmul.mubr.f32.gmra.mrb[0].mxu0 %v4481
        %v4712 = vpop.f32.mrb[0].mxu0
        %v4713 = vadd.f32 0.0, %v4712
        %v4714 = vpop.f32.mrb[0].mxu0
        %4715 = vmatprep.mubr.f32.mxu0 0.0
        %4716 = vmatmul.mubr.f32.gmra.mrb[0].mxu0 %v4482
        %v4717 = vpop.f32.mrb[0].mxu0
        %v4718 = vadd.f32 0.0, %v4717
        %v4719 = vpop.f32.mrb[0].mxu0
        %4720 = vmatprep.mubr.f32.mxu0 0.0
        %4721 = vmatmul.mubr.f32.gmra.mrb[0].mxu0 %v4483
        %v4722 = vpop.f32.mrb[0].mxu0
        %v4723 = vadd.f32 0.0, %v4722
        %v4724 = vpop.f32.mrb[0].mxu0
        %4725 = vdwg.mxu0
        %v4726 = vld [vmem:[#allocation3] sm:$0xff]
        %v4727 = vld [vmem:[#allocation3 + $0x8] sm:$0xff]
        %v4728 = vld [vmem:[#allocation3 + $0x10] sm:$0xff]
        %v4729 = vld [vmem:[#allocation3 + $0x18] sm:$0xff]
        %v4730 = vld [vmem:[#allocation3 + $0x20] sm:$0xff]
        %v4731 = vld [vmem:[#allocation3 + $0x28] sm:$0xff]
        %v4732 = vld [vmem:[#allocation3 + $0x30] sm:$0xff]
        %v4733 = vld [vmem:[#allocation3 + $0x38] sm:$0xff]
        %v4734 = vld [vmem:[#allocation3 + $0x40] sm:$0xff]
        %v4735 = vld [vmem:[#allocation3 + $0x48] sm:$0xff]
        %v4736 = vld [vmem:[#allocation3 + $0x50] sm:$0xff]
        %v4737 = vld [vmem:[#allocation3 + $0x58] sm:$0xff]
        %v4738 = vld [vmem:[#allocation3 + $0x60] sm:$0xff]
        %v4739 = vld [vmem:[#allocation3 + $0x68] sm:$0xff]
        %v4740 = vld [vmem:[#allocation3 + $0x70] sm:$0xff]
        %v4741 = vld [vmem:[#allocation3 + $0x78] sm:$0xff]
        %v4742 = vld [vmem:[#allocation3 + $0x80] sm:$0xff]
        %v4743 = vld [vmem:[#allocation3 + $0x88] sm:$0xff]
        %v4744 = vld [vmem:[#allocation3 + $0x90] sm:$0xff]
        %v4745 = vld [vmem:[#allocation3 + $0x98] sm:$0xff]
        %v4746 = vld [vmem:[#allocation3 + $0xa0] sm:$0xff]
        %v4747 = vld [vmem:[#allocation3 + $0xa8] sm:$0xff]
        %v4748 = vld [vmem:[#allocation3 + $0xb0] sm:$0xff]
        %v4749 = vld [vmem:[#allocation3 + $0xb8] sm:$0xff]
        %v4750 = vld [vmem:[#allocation3 + $0xc0] sm:$0xff]
        %v4751 = vld [vmem:[#allocation3 + $0xc8] sm:$0xff]
        %v4752 = vld [vmem:[#allocation3 + $0xd0] sm:$0xff]
        %v4753 = vld [vmem:[#allocation3 + $0xd8] sm:$0xff]
        %v4754 = vld [vmem:[#allocation3 + $0xe0] sm:$0xff]
        %v4755 = vld [vmem:[#allocation3 + $0xe8] sm:$0xff]
        %v4756 = vld [vmem:[#allocation3 + $0xf0] sm:$0xff]
        %v4757 = vld [vmem:[#allocation3 + $0xf8] sm:$0xff]
        %v4758 = vadd.f32 %v4726, %v4568
        %v4759 = vadd.f32 %v4727, %v4573
        %v4760 = vadd.f32 %v4728, %v4578
        %v4761 = vadd.f32 %v4729, %v4583
        %v4762 = vadd.f32 %v4730, %v4588
        %v4763 = vadd.f32 %v4731, %v4593
        %v4764 = vadd.f32 %v4732, %v4598
        %v4765 = vadd.f32 %v4733, %v4603
        %v4766 = vadd.f32 %v4734, %v4608
        %v4767 = vadd.f32 %v4735, %v4613
        %v4768 = vadd.f32 %v4736, %v4618
        %v4769 = vadd.f32 %v4737, %v4623
        %v4770 = vadd.f32 %v4738, %v4628
        %v4771 = vadd.f32 %v4739, %v4633
        %v4772 = vadd.f32 %v4740, %v4638
        %v4773 = vadd.f32 %v4741, %v4643
        %v4774 = vadd.f32 %v4742, %v4648
        %v4775 = vadd.f32 %v4743, %v4653
        %v4776 = vadd.f32 %v4744, %v4658
        %v4777 = vadd.f32 %v4745, %v4663
        %v4778 = vadd.f32 %v4746, %v4668
        %v4779 = vadd.f32 %v4747, %v4673
        %v4780 = vadd.f32 %v4748, %v4678
        %v4781 = vadd.f32 %v4749, %v4683
        %v4782 = vadd.f32 %v4750, %v4688
        %v4783 = vadd.f32 %v4751, %v4693
        %v4784 = vadd.f32 %v4752, %v4698
        %v4785 = vadd.f32 %v4753, %v4703
        %v4786 = vadd.f32 %v4754, %v4708
        %v4787 = vadd.f32 %v4755, %v4713
        %v4788 = vadd.f32 %v4756, %v4718
        %v4789 = vadd.f32 %v4757, %v4723
        %4790 = vst [vmem:[#allocation3] sm:$0xff] %v4758
        %4791 = vst [vmem:[#allocation3 + $0x8] sm:$0xff] %v4759
        %4792 = vst [vmem:[#allocation3 + $0x10] sm:$0xff] %v4760
        %4793 = vst [vmem:[#allocation3 + $0x18] sm:$0xff] %v4761
        %4794 = vst [vmem:[#allocation3 + $0x20] sm:$0xff] %v4762
        %4795 = vst [vmem:[#allocation3 + $0x28] sm:$0xff] %v4763
        %4796 = vst [vmem:[#allocation3 + $0x30] sm:$0xff] %v4764
        %4797 = vst [vmem:[#allocation3 + $0x38] sm:$0xff] %v4765
        %4798 = vst [vmem:[#allocation3 + $0x40] sm:$0xff] %v4766
        %4799 = vst [vmem:[#allocation3 + $0x48] sm:$0xff] %v4767
        %4800 = vst [vmem:[#allocation3 + $0x50] sm:$0xff] %v4768
        %4801 = vst [vmem:[#allocation3 + $0x58] sm:$0xff] %v4769
        %4802 = vst [vmem:[#allocation3 + $0x60] sm:$0xff] %v4770
        %4803 = vst [vmem:[#allocation3 + $0x68] sm:$0xff] %v4771
        %4804 = vst [vmem:[#allocation3 + $0x70] sm:$0xff] %v4772
        %4805 = vst [vmem:[#allocation3 + $0x78] sm:$0xff] %v4773
        %4806 = vst [vmem:[#allocation3 + $0x80] sm:$0xff] %v4774
        %4807 = vst [vmem:[#allocation3 + $0x88] sm:$0xff] %v4775
        %4808 = vst [vmem:[#allocation3 + $0x90] sm:$0xff] %v4776
        %4809 = vst [vmem:[#allocation3 + $0x98] sm:$0xff] %v4777
        %4810 = vst [vmem:[#allocation3 + $0xa0] sm:$0xff] %v4778
        %4811 = vst [vmem:[#allocation3 + $0xa8] sm:$0xff] %v4779
        %4812 = vst [vmem:[#allocation3 + $0xb0] sm:$0xff] %v4780
        %4813 = vst [vmem:[#allocation3 + $0xb8] sm:$0xff] %v4781
        %4814 = vst [vmem:[#allocation3 + $0xc0] sm:$0xff] %v4782
        %4815 = vst [vmem:[#allocation3 + $0xc8] sm:$0xff] %v4783
        %4816 = vst [vmem:[#allocation3 + $0xd0] sm:$0xff] %v4784
        %4817 = vst [vmem:[#allocation3 + $0xd8] sm:$0xff] %v4785
        %4818 = vst [vmem:[#allocation3 + $0xe0] sm:$0xff] %v4786
        %4819 = vst [vmem:[#allocation3 + $0xe8] sm:$0xff] %v4787
        %4820 = vst [vmem:[#allocation3 + $0xf0] sm:$0xff] %v4788
        %4821 = vst [vmem:[#allocation3 + $0xf8] sm:$0xff] %v4789
        %v4822 = vld [vmem:[%s3744] sm:$0xff]
        %v4823 = vld [vmem:[%s3744 + $0x8] sm:$0xff]
        %v4824 = vld [vmem:[%s3744 + $0x18] sm:$0xff]
        %v4825 = vld [vmem:[%s3744 + $0x20] sm:$0xff]
        %v4826 = vld [vmem:[%s3744 + $0x30] sm:$0xff]
        %v4827 = vld [vmem:[%s3744 + $0x38] sm:$0xff]
        %v4828 = vld [vmem:[%s3744 + $0x48] sm:$0xff]
        %v4829 = vld [vmem:[%s3744 + $0x50] sm:$0xff]
        %v4830 = vld [vmem:[%s3744 + $0x60] sm:$0xff]
        %v4831 = vld [vmem:[%s3744 + $0x68] sm:$0xff]
        %v4832 = vld [vmem:[%s3744 + $0x78] sm:$0xff]
        %v4833 = vld [vmem:[%s3744 + $0x80] sm:$0xff]
        %v4834 = vld [vmem:[%s3744 + $0x90] sm:$0xff]
        %v4835 = vld [vmem:[%s3744 + $0x98] sm:$0xff]
        %v4836 = vld [vmem:[%s3744 + $0xa8] sm:$0xff]
        %v4837 = vld [vmem:[%s3744 + $0xb0] sm:$0xff]
        %v4838 = vld [vmem:[%s3744 + $0xc0] sm:$0xff]
        %v4839 = vld [vmem:[%s3744 + $0xc8] sm:$0xff]
        %v4840 = vld [vmem:[%s3744 + $0xd8] sm:$0xff]
        %v4841 = vld [vmem:[%s3744 + $0xe0] sm:$0xff]
        %v4842 = vld [vmem:[%s3744 + $0xf0] sm:$0xff]
        %v4843 = vld [vmem:[%s3744 + $0xf8] sm:$0xff]
        %v4844 = vld [vmem:[%s3744 + $0x108] sm:$0xff]
        %v4845 = vld [vmem:[%s3744 + $0x110] sm:$0xff]
        %v4846 = vld [vmem:[%s3744 + $0x120] sm:$0xff]
        %v4847 = vld [vmem:[%s3744 + $0x128] sm:$0xff]
        %v4848 = vld [vmem:[%s3744 + $0x138] sm:$0xff]
        %v4849 = vld [vmem:[%s3744 + $0x140] sm:$0xff]
        %v4850 = vld [vmem:[%s3744 + $0x150] sm:$0xff]
        %v4851 = vld [vmem:[%s3744 + $0x158] sm:$0xff]
        %v4852 = vld [vmem:[%s3744 + $0x168] sm:$0xff]
        %v4853 = vld [vmem:[%s3744 + $0x170] sm:$0xff]
        %s4854 = scalar_lea.vmem [#allocation4], 384
        %v4855 = vld [vmem:[%s4854] sm:$0xff]
        %v4856 = vld [vmem:[%s4854 + $0x8] sm:$0xff]
        %v4857 = vld [vmem:[%s4854 + $0x10] sm:$0xff]
        %v4858 = vld [vmem:[%s4854 + $0x18] sm:$0xff]
        %v4859 = vld [vmem:[%s4854 + $0x20] sm:$0xff]
        %v4860 = vld [vmem:[%s4854 + $0x28] sm:$0xff]
        %v4861 = vld [vmem:[%s4854 + $0x30] sm:$0xff]
        %v4862 = vld [vmem:[%s4854 + $0x38] sm:$0xff]
        %v4863 = vld [vmem:[%s4854 + $0x40] sm:$0xff]
        %v4864 = vld [vmem:[%s4854 + $0x48] sm:$0xff]
        %v4865 = vld [vmem:[%s4854 + $0x50] sm:$0xff]
        %v4866 = vld [vmem:[%s4854 + $0x58] sm:$0xff]
        %v4867 = vld [vmem:[%s4854 + $0x60] sm:$0xff]
        %v4868 = vld [vmem:[%s4854 + $0x68] sm:$0xff]
        %v4869 = vld [vmem:[%s4854 + $0x70] sm:$0xff]
        %v4870 = vld [vmem:[%s4854 + $0x78] sm:$0xff]
        %4871 = vmatprep.subr.mxu0 0.0
        %4872 = vmatpush1.msra.mxu0 %v4855
        %4873 = vmatprep.subr.mxu0 0.0
        %4874 = vmatpush1.msra.mxu0 %v4856
        %4875 = vmatprep.subr.mxu0 0.0
        %4876 = vmatpush1.msra.mxu0 %v4857
        %4877 = vmatprep.subr.mxu0 0.0
        %4878 = vmatpush1.msra.mxu0 %v4858
        %4879 = vmatprep.subr.mxu0 0.0
        %4880 = vmatpush1.msra.mxu0 %v4859
        %4881 = vmatprep.subr.mxu0 0.0
        %4882 = vmatpush1.msra.mxu0 %v4860
        %4883 = vmatprep.subr.mxu0 0.0
        %4884 = vmatpush1.msra.mxu0 %v4861
        %4885 = vmatprep.subr.mxu0 0.0
        %4886 = vmatpush1.msra.mxu0 %v4862
        %4887 = vmatprep.subr.mxu0 0.0
        %4888 = vmatpush1.msra.mxu0 %v4863
        %4889 = vmatprep.subr.mxu0 0.0
        %4890 = vmatpush1.msra.mxu0 %v4864
        %4891 = vmatprep.subr.mxu0 0.0
        %4892 = vmatpush1.msra.mxu0 %v4865
        %4893 = vmatprep.subr.mxu0 0.0
        %4894 = vmatpush1.msra.mxu0 %v4866
        %4895 = vmatprep.subr.mxu0 0.0
        %4896 = vmatpush1.msra.mxu0 %v4867
        %4897 = vmatprep.subr.mxu0 0.0
        %4898 = vmatpush1.msra.mxu0 %v4868
        %4899 = vmatprep.subr.mxu0 0.0
        %4900 = vmatpush1.msra.mxu0 %v4869
        %4901 = vmatprep.subr.mxu0 0.0
        %4902 = vmatpush1.msra.mxu0 %v4870
        %4903 = vmatprep.subr.mxu0 0.0
        %4904 = vmatpush1.msra.mxu0 0.0
        %4905 = vmatprep.subr.mxu0 0.0
        %4906 = vmatpush1.msra.mxu0 0.0
        %4907 = vmatprep.subr.mxu0 0.0
        %4908 = vmatpush1.msra.mxu0 0.0
        %4909 = vmatprep.subr.mxu0 0.0
        %4910 = vmatpush1.msra.mxu0 0.0
        %4911 = vmatprep.subr.mxu0 0.0
        %4912 = vmatpush1.msra.mxu0 0.0
        %4913 = vmatprep.subr.mxu0 0.0
        %4914 = vmatpush1.msra.mxu0 0.0
        %4915 = vmatprep.subr.mxu0 0.0
        %4916 = vmatpush1.msra.mxu0 0.0
        %4917 = vmatprep.subr.mxu0 0.0
        %4918 = vmatpush1.msra.mxu0 0.0
        %4919 = vmatprep.subr.mxu0 0.0
        %4920 = vmatpush1.msra.mxu0 0.0
        %4921 = vmatprep.subr.mxu0 0.0
        %4922 = vmatpush1.msra.mxu0 0.0
        %4923 = vmatprep.subr.mxu0 0.0
        %4924 = vmatpush1.msra.mxu0 0.0
        %4925 = vmatprep.subr.mxu0 0.0
        %4926 = vmatpush1.msra.mxu0 0.0
        %4927 = vmatprep.subr.mxu0 0.0
        %4928 = vmatpush1.msra.mxu0 0.0
        %4929 = vmatprep.subr.mxu0 0.0
        %4930 = vmatpush1.msra.mxu0 0.0
        %4931 = vmatprep.subr.mxu0 0.0
        %4932 = vmatpush1.msra.mxu0 0.0
        %4933 = vmatprep.subr.mxu0 0.0
        %4934 = vmatpush1.msra.mxu0 0.0
        %4935 = vmatprep.mubr.f32.mxu0 0.0
        %4936 = vmatmul.mubr.f32.gmra.mrb[0].mxu0 %v4822
        %v4937 = vpop.f32.mrb[0].mxu0
        %v4938 = vadd.f32 0.0, %v4937
        %v4939 = vpop.f32.mrb[0].mxu0
        %4940 = vmatprep.mubr.f32.mxu0 0.0
        %4941 = vmatmul.mubr.f32.gmra.mrb[0].mxu0 %v4823
        %v4942 = vpop.f32.mrb[0].mxu0
        %v4943 = vadd.f32 0.0, %v4942
        %v4944 = vpop.f32.mrb[0].mxu0
        %4945 = vmatprep.mubr.f32.mxu0 0.0
        %4946 = vmatmul.mubr.f32.gmra.mrb[0].mxu0 %v4824
        %v4947 = vpop.f32.mrb[0].mxu0
        %v4948 = vadd.f32 0.0, %v4947
        %v4949 = vpop.f32.mrb[0].mxu0
        %4950 = vmatprep.mubr.f32.mxu0 0.0
        %4951 = vmatmul.mubr.f32.gmra.mrb[0].mxu0 %v4825
        %v4952 = vpop.f32.mrb[0].mxu0
        %v4953 = vadd.f32 0.0, %v4952
        %v4954 = vpop.f32.mrb[0].mxu0
        %4955 = vmatprep.mubr.f32.mxu0 0.0
        %4956 = vmatmul.mubr.f32.gmra.mrb[0].mxu0 %v4826
        %v4957 = vpop.f32.mrb[0].mxu0
        %v4958 = vadd.f32 0.0, %v4957
        %v4959 = vpop.f32.mrb[0].mxu0
        %4960 = vmatprep.mubr.f32.mxu0 0.0
        %4961 = vmatmul.mubr.f32.gmra.mrb[0].mxu0 %v4827
        %v4962 = vpop.f32.mrb[0].mxu0
        %v4963 = vadd.f32 0.0, %v4962
        %v4964 = vpop.f32.mrb[0].mxu0
        %4965 = vmatprep.mubr.f32.mxu0 0.0
        %4966 = vmatmul.mubr.f32.gmra.mrb[0].mxu0 %v4828
        %v4967 = vpop.f32.mrb[0].mxu0
        %v4968 = vadd.f32 0.0, %v4967
        %v4969 = vpop.f32.mrb[0].mxu0
        %4970 = vmatprep.mubr.f32.mxu0 0.0
        %4971 = vmatmul.mubr.f32.gmra.mrb[0].mxu0 %v4829
        %v4972 = vpop.f32.mrb[0].mxu0
        %v4973 = vadd.f32 0.0, %v4972
        %v4974 = vpop.f32.mrb[0].mxu0
        %4975 = vmatprep.mubr.f32.mxu0 0.0
        %4976 = vmatmul.mubr.f32.gmra.mrb[0].mxu0 %v4830
        %v4977 = vpop.f32.mrb[0].mxu0
        %v4978 = vadd.f32 0.0, %v4977
        %v4979 = vpop.f32.mrb[0].mxu0
        %4980 = vmatprep.mubr.f32.mxu0 0.0
        %4981 = vmatmul.mubr.f32.gmra.mrb[0].mxu0 %v4831
        %v4982 = vpop.f32.mrb[0].mxu0
        %v4983 = vadd.f32 0.0, %v4982
        %v4984 = vpop.f32.mrb[0].mxu0
        %4985 = vmatprep.mubr.f32.mxu0 0.0
        %4986 = vmatmul.mubr.f32.gmra.mrb[0].mxu0 %v4832
        %v4987 = vpop.f32.mrb[0].mxu0
        %v4988 = vadd.f32 0.0, %v4987
        %v4989 = vpop.f32.mrb[0].mxu0
        %4990 = vmatprep.mubr.f32.mxu0 0.0
        %4991 = vmatmul.mubr.f32.gmra.mrb[0].mxu0 %v4833
        %v4992 = vpop.f32.mrb[0].mxu0
        %v4993 = vadd.f32 0.0, %v4992
        %v4994 = vpop.f32.mrb[0].mxu0
        %4995 = vmatprep.mubr.f32.mxu0 0.0
        %4996 = vmatmul.mubr.f32.gmra.mrb[0].mxu0 %v4834
        %v4997 = vpop.f32.mrb[0].mxu0
        %v4998 = vadd.f32 0.0, %v4997
        %v4999 = vpop.f32.mrb[0].mxu0
        %5000 = vmatprep.mubr.f32.mxu0 0.0
        %5001 = vmatmul.mubr.f32.gmra.mrb[0].mxu0 %v4835
        %v5002 = vpop.f32.mrb[0].mxu0
        %v5003 = vadd.f32 0.0, %v5002
        %v5004 = vpop.f32.mrb[0].mxu0
        %5005 = vmatprep.mubr.f32.mxu0 0.0
        %5006 = vmatmul.mubr.f32.gmra.mrb[0].mxu0 %v4836
        %v5007 = vpop.f32.mrb[0].mxu0
        %v5008 = vadd.f32 0.0, %v5007
        %v5009 = vpop.f32.mrb[0].mxu0
        %5010 = vmatprep.mubr.f32.mxu0 0.0
        %5011 = vmatmul.mubr.f32.gmra.mrb[0].mxu0 %v4837
        %v5012 = vpop.f32.mrb[0].mxu0
        %v5013 = vadd.f32 0.0, %v5012
        %v5014 = vpop.f32.mrb[0].mxu0
        %5015 = vmatprep.mubr.f32.mxu0 0.0
        %5016 = vmatmul.mubr.f32.gmra.mrb[0].mxu0 %v4838
        %v5017 = vpop.f32.mrb[0].mxu0
        %v5018 = vadd.f32 0.0, %v5017
        %v5019 = vpop.f32.mrb[0].mxu0
        %5020 = vmatprep.mubr.f32.mxu0 0.0
        %5021 = vmatmul.mubr.f32.gmra.mrb[0].mxu0 %v4839
        %v5022 = vpop.f32.mrb[0].mxu0
        %v5023 = vadd.f32 0.0, %v5022
        %v5024 = vpop.f32.mrb[0].mxu0
        %5025 = vmatprep.mubr.f32.mxu0 0.0
        %5026 = vmatmul.mubr.f32.gmra.mrb[0].mxu0 %v4840
        %v5027 = vpop.f32.mrb[0].mxu0
        %v5028 = vadd.f32 0.0, %v5027
        %v5029 = vpop.f32.mrb[0].mxu0
        %5030 = vmatprep.mubr.f32.mxu0 0.0
        %5031 = vmatmul.mubr.f32.gmra.mrb[0].mxu0 %v4841
        %v5032 = vpop.f32.mrb[0].mxu0
        %v5033 = vadd.f32 0.0, %v5032
        %v5034 = vpop.f32.mrb[0].mxu0
        %5035 = vmatprep.mubr.f32.mxu0 0.0
        %5036 = vmatmul.mubr.f32.gmra.mrb[0].mxu0 %v4842
        %v5037 = vpop.f32.mrb[0].mxu0
        %v5038 = vadd.f32 0.0, %v5037
        %v5039 = vpop.f32.mrb[0].mxu0
        %5040 = vmatprep.mubr.f32.mxu0 0.0
        %5041 = vmatmul.mubr.f32.gmra.mrb[0].mxu0 %v4843
        %v5042 = vpop.f32.mrb[0].mxu0
        %v5043 = vadd.f32 0.0, %v5042
        %v5044 = vpop.f32.mrb[0].mxu0
        %5045 = vmatprep.mubr.f32.mxu0 0.0
        %5046 = vmatmul.mubr.f32.gmra.mrb[0].mxu0 %v4844
        %v5047 = vpop.f32.mrb[0].mxu0
        %v5048 = vadd.f32 0.0, %v5047
        %v5049 = vpop.f32.mrb[0].mxu0
        %5050 = vmatprep.mubr.f32.mxu0 0.0
        %5051 = vmatmul.mubr.f32.gmra.mrb[0].mxu0 %v4845
        %v5052 = vpop.f32.mrb[0].mxu0
        %v5053 = vadd.f32 0.0, %v5052
        %v5054 = vpop.f32.mrb[0].mxu0
        %5055 = vmatprep.mubr.f32.mxu0 0.0
        %5056 = vmatmul.mubr.f32.gmra.mrb[0].mxu0 %v4846
        %v5057 = vpop.f32.mrb[0].mxu0
        %v5058 = vadd.f32 0.0, %v5057
        %v5059 = vpop.f32.mrb[0].mxu0
        %5060 = vmatprep.mubr.f32.mxu0 0.0
        %5061 = vmatmul.mubr.f32.gmra.mrb[0].mxu0 %v4847
        %v5062 = vpop.f32.mrb[0].mxu0
        %v5063 = vadd.f32 0.0, %v5062
        %v5064 = vpop.f32.mrb[0].mxu0
        %5065 = vmatprep.mubr.f32.mxu0 0.0
        %5066 = vmatmul.mubr.f32.gmra.mrb[0].mxu0 %v4848
        %v5067 = vpop.f32.mrb[0].mxu0
        %v5068 = vadd.f32 0.0, %v5067
        %v5069 = vpop.f32.mrb[0].mxu0
        %5070 = vmatprep.mubr.f32.mxu0 0.0
        %5071 = vmatmul.mubr.f32.gmra.mrb[0].mxu0 %v4849
        %v5072 = vpop.f32.mrb[0].mxu0
        %v5073 = vadd.f32 0.0, %v5072
        %v5074 = vpop.f32.mrb[0].mxu0
        %5075 = vmatprep.mubr.f32.mxu0 0.0
        %5076 = vmatmul.mubr.f32.gmra.mrb[0].mxu0 %v4850
        %v5077 = vpop.f32.mrb[0].mxu0
        %v5078 = vadd.f32 0.0, %v5077
        %v5079 = vpop.f32.mrb[0].mxu0
        %5080 = vmatprep.mubr.f32.mxu0 0.0
        %5081 = vmatmul.mubr.f32.gmra.mrb[0].mxu0 %v4851
        %v5082 = vpop.f32.mrb[0].mxu0
        %v5083 = vadd.f32 0.0, %v5082
        %v5084 = vpop.f32.mrb[0].mxu0
        %5085 = vmatprep.mubr.f32.mxu0 0.0
        %5086 = vmatmul.mubr.f32.gmra.mrb[0].mxu0 %v4852
        %v5087 = vpop.f32.mrb[0].mxu0
        %v5088 = vadd.f32 0.0, %v5087
        %v5089 = vpop.f32.mrb[0].mxu0
        %5090 = vmatprep.mubr.f32.mxu0 0.0
        %5091 = vmatmul.mubr.f32.gmra.mrb[0].mxu0 %v4853
        %v5092 = vpop.f32.mrb[0].mxu0
        %v5093 = vadd.f32 0.0, %v5092
        %v5094 = vpop.f32.mrb[0].mxu0
        %5095 = vdwg.mxu0
        %v5096 = vld [vmem:[#allocation3] sm:$0xff]
        %v5097 = vld [vmem:[#allocation3 + $0x8] sm:$0xff]
        %v5098 = vld [vmem:[#allocation3 + $0x10] sm:$0xff]
        %v5099 = vld [vmem:[#allocation3 + $0x18] sm:$0xff]
        %v5100 = vld [vmem:[#allocation3 + $0x20] sm:$0xff]
        %v5101 = vld [vmem:[#allocation3 + $0x28] sm:$0xff]
        %v5102 = vld [vmem:[#allocation3 + $0x30] sm:$0xff]
        %v5103 = vld [vmem:[#allocation3 + $0x38] sm:$0xff]
        %v5104 = vld [vmem:[#allocation3 + $0x40] sm:$0xff]
        %v5105 = vld [vmem:[#allocation3 + $0x48] sm:$0xff]
        %v5106 = vld [vmem:[#allocation3 + $0x50] sm:$0xff]
        %v5107 = vld [vmem:[#allocation3 + $0x58] sm:$0xff]
        %v5108 = vld [vmem:[#allocation3 + $0x60] sm:$0xff]
        %v5109 = vld [vmem:[#allocation3 + $0x68] sm:$0xff]
        %v5110 = vld [vmem:[#allocation3 + $0x70] sm:$0xff]
        %v5111 = vld [vmem:[#allocation3 + $0x78] sm:$0xff]
        %v5112 = vld [vmem:[#allocation3 + $0x80] sm:$0xff]
        %v5113 = vld [vmem:[#allocation3 + $0x88] sm:$0xff]
        %v5114 = vld [vmem:[#allocation3 + $0x90] sm:$0xff]
        %v5115 = vld [vmem:[#allocation3 + $0x98] sm:$0xff]
        %v5116 = vld [vmem:[#allocation3 + $0xa0] sm:$0xff]
        %v5117 = vld [vmem:[#allocation3 + $0xa8] sm:$0xff]
        %v5118 = vld [vmem:[#allocation3 + $0xb0] sm:$0xff]
        %v5119 = vld [vmem:[#allocation3 + $0xb8] sm:$0xff]
        %v5120 = vld [vmem:[#allocation3 + $0xc0] sm:$0xff]
        %v5121 = vld [vmem:[#allocation3 + $0xc8] sm:$0xff]
        %v5122 = vld [vmem:[#allocation3 + $0xd0] sm:$0xff]
        %v5123 = vld [vmem:[#allocation3 + $0xd8] sm:$0xff]
        %v5124 = vld [vmem:[#allocation3 + $0xe0] sm:$0xff]
        %v5125 = vld [vmem:[#allocation3 + $0xe8] sm:$0xff]
        %v5126 = vld [vmem:[#allocation3 + $0xf0] sm:$0xff]
        %v5127 = vld [vmem:[#allocation3 + $0xf8] sm:$0xff]
        %v5128 = vadd.f32 %v5096, %v4938
        %v5129 = vadd.f32 %v5097, %v4943
        %v5130 = vadd.f32 %v5098, %v4948
        %v5131 = vadd.f32 %v5099, %v4953
        %v5132 = vadd.f32 %v5100, %v4958
        %v5133 = vadd.f32 %v5101, %v4963
        %v5134 = vadd.f32 %v5102, %v4968
        %v5135 = vadd.f32 %v5103, %v4973
        %v5136 = vadd.f32 %v5104, %v4978
        %v5137 = vadd.f32 %v5105, %v4983
        %v5138 = vadd.f32 %v5106, %v4988
        %v5139 = vadd.f32 %v5107, %v4993
        %v5140 = vadd.f32 %v5108, %v4998
        %v5141 = vadd.f32 %v5109, %v5003
        %v5142 = vadd.f32 %v5110, %v5008
        %v5143 = vadd.f32 %v5111, %v5013
        %v5144 = vadd.f32 %v5112, %v5018
        %v5145 = vadd.f32 %v5113, %v5023
        %v5146 = vadd.f32 %v5114, %v5028
        %v5147 = vadd.f32 %v5115, %v5033
        %v5148 = vadd.f32 %v5116, %v5038
        %v5149 = vadd.f32 %v5117, %v5043
        %v5150 = vadd.f32 %v5118, %v5048
        %v5151 = vadd.f32 %v5119, %v5053
        %v5152 = vadd.f32 %v5120, %v5058
        %v5153 = vadd.f32 %v5121, %v5063
        %v5154 = vadd.f32 %v5122, %v5068
        %v5155 = vadd.f32 %v5123, %v5073
        %v5156 = vadd.f32 %v5124, %v5078
        %v5157 = vadd.f32 %v5125, %v5083
        %v5158 = vadd.f32 %v5126, %v5088
        %v5159 = vadd.f32 %v5127, %v5093
        %5160 = vst [vmem:[#allocation3] sm:$0xff] %v5128
        %5161 = vst [vmem:[#allocation3 + $0x8] sm:$0xff] %v5129
        %5162 = vst [vmem:[#allocation3 + $0x10] sm:$0xff] %v5130
        %5163 = vst [vmem:[#allocation3 + $0x18] sm:$0xff] %v5131
        %5164 = vst [vmem:[#allocation3 + $0x20] sm:$0xff] %v5132
        %5165 = vst [vmem:[#allocation3 + $0x28] sm:$0xff] %v5133
        %5166 = vst [vmem:[#allocation3 + $0x30] sm:$0xff] %v5134
        %5167 = vst [vmem:[#allocation3 + $0x38] sm:$0xff] %v5135
        %5168 = vst [vmem:[#allocation3 + $0x40] sm:$0xff] %v5136
        %5169 = vst [vmem:[#allocation3 + $0x48] sm:$0xff] %v5137
        %5170 = vst [vmem:[#allocation3 + $0x50] sm:$0xff] %v5138
        %5171 = vst [vmem:[#allocation3 + $0x58] sm:$0xff] %v5139
        %5172 = vst [vmem:[#allocation3 + $0x60] sm:$0xff] %v5140
        %5173 = vst [vmem:[#allocation3 + $0x68] sm:$0xff] %v5141
        %5174 = vst [vmem:[#allocation3 + $0x70] sm:$0xff] %v5142
        %5175 = vst [vmem:[#allocation3 + $0x78] sm:$0xff] %v5143
        %5176 = vst [vmem:[#allocation3 + $0x80] sm:$0xff] %v5144
        %5177 = vst [vmem:[#allocation3 + $0x88] sm:$0xff] %v5145
        %5178 = vst [vmem:[#allocation3 + $0x90] sm:$0xff] %v5146
        %5179 = vst [vmem:[#allocation3 + $0x98] sm:$0xff] %v5147
        %5180 = vst [vmem:[#allocation3 + $0xa0] sm:$0xff] %v5148
        %5181 = vst [vmem:[#allocation3 + $0xa8] sm:$0xff] %v5149
        %5182 = vst [vmem:[#allocation3 + $0xb0] sm:$0xff] %v5150
        %5183 = vst [vmem:[#allocation3 + $0xb8] sm:$0xff] %v5151
        %5184 = vst [vmem:[#allocation3 + $0xc0] sm:$0xff] %v5152
        %5185 = vst [vmem:[#allocation3 + $0xc8] sm:$0xff] %v5153
        %5186 = vst [vmem:[#allocation3 + $0xd0] sm:$0xff] %v5154
        %5187 = vst [vmem:[#allocation3 + $0xd8] sm:$0xff] %v5155
        %5188 = vst [vmem:[#allocation3 + $0xe0] sm:$0xff] %v5156
        %5189 = vst [vmem:[#allocation3 + $0xe8] sm:$0xff] %v5157
        %5190 = vst [vmem:[#allocation3 + $0xf0] sm:$0xff] %v5158
        %5191 = vst [vmem:[#allocation3 + $0xf8] sm:$0xff] %v5159
        %v5192 = vld [vmem:[%s3744 + $0x1] sm:$0xff]
        %v5193 = vld [vmem:[%s3744 + $0x9] sm:$0xff]
        %v5194 = vld [vmem:[%s3744 + $0x19] sm:$0xff]
        %v5195 = vld [vmem:[%s3744 + $0x21] sm:$0xff]
        %v5196 = vld [vmem:[%s3744 + $0x31] sm:$0xff]
        %v5197 = vld [vmem:[%s3744 + $0x39] sm:$0xff]
        %v5198 = vld [vmem:[%s3744 + $0x49] sm:$0xff]
        %v5199 = vld [vmem:[%s3744 + $0x51] sm:$0xff]
        %v5200 = vld [vmem:[%s3744 + $0x61] sm:$0xff]
        %v5201 = vld [vmem:[%s3744 + $0x69] sm:$0xff]
        %v5202 = vld [vmem:[%s3744 + $0x79] sm:$0xff]
        %v5203 = vld [vmem:[%s3744 + $0x81] sm:$0xff]
        %v5204 = vld [vmem:[%s3744 + $0x91] sm:$0xff]
        %v5205 = vld [vmem:[%s3744 + $0x99] sm:$0xff]
        %v5206 = vld [vmem:[%s3744 + $0xa9] sm:$0xff]
        %v5207 = vld [vmem:[%s3744 + $0xb1] sm:$0xff]
        %v5208 = vld [vmem:[%s3744 + $0xc1] sm:$0xff]
        %v5209 = vld [vmem:[%s3744 + $0xc9] sm:$0xff]
        %v5210 = vld [vmem:[%s3744 + $0xd9] sm:$0xff]
        %v5211 = vld [vmem:[%s3744 + $0xe1] sm:$0xff]
        %v5212 = vld [vmem:[%s3744 + $0xf1] sm:$0xff]
        %v5213 = vld [vmem:[%s3744 + $0xf9] sm:$0xff]
        %v5214 = vld [vmem:[%s3744 + $0x109] sm:$0xff]
        %v5215 = vld [vmem:[%s3744 + $0x111] sm:$0xff]
        %v5216 = vld [vmem:[%s3744 + $0x121] sm:$0xff]
        %v5217 = vld [vmem:[%s3744 + $0x129] sm:$0xff]
        %v5218 = vld [vmem:[%s3744 + $0x139] sm:$0xff]
        %v5219 = vld [vmem:[%s3744 + $0x141] sm:$0xff]
        %v5220 = vld [vmem:[%s3744 + $0x151] sm:$0xff]
        %v5221 = vld [vmem:[%s3744 + $0x159] sm:$0xff]
        %v5222 = vld [vmem:[%s3744 + $0x169] sm:$0xff]
        %v5223 = vld [vmem:[%s3744 + $0x171] sm:$0xff]
        %s5224 = scalar_lea.vmem [#allocation4], 512
        %v5225 = vld [vmem:[%s5224] sm:$0xff]
        %v5226 = vld [vmem:[%s5224 + $0x8] sm:$0xff]
        %v5227 = vld [vmem:[%s5224 + $0x10] sm:$0xff]
        %v5228 = vld [vmem:[%s5224 + $0x18] sm:$0xff]
        %v5229 = vld [vmem:[%s5224 + $0x20] sm:$0xff]
        %v5230 = vld [vmem:[%s5224 + $0x28] sm:$0xff]
        %v5231 = vld [vmem:[%s5224 + $0x30] sm:$0xff]
        %v5232 = vld [vmem:[%s5224 + $0x38] sm:$0xff]
        %v5233 = vld [vmem:[%s5224 + $0x40] sm:$0xff]
        %v5234 = vld [vmem:[%s5224 + $0x48] sm:$0xff]
        %v5235 = vld [vmem:[%s5224 + $0x50] sm:$0xff]
        %v5236 = vld [vmem:[%s5224 + $0x58] sm:$0xff]
        %v5237 = vld [vmem:[%s5224 + $0x60] sm:$0xff]
        %v5238 = vld [vmem:[%s5224 + $0x68] sm:$0xff]
        %v5239 = vld [vmem:[%s5224 + $0x70] sm:$0xff]
        %v5240 = vld [vmem:[%s5224 + $0x78] sm:$0xff]
        %5241 = vmatprep.subr.mxu0 0.0
        %5242 = vmatpush1.msra.mxu0 %v5225
        %5243 = vmatprep.subr.mxu0 0.0
        %5244 = vmatpush1.msra.mxu0 %v5226
        %5245 = vmatprep.subr.mxu0 0.0
        %5246 = vmatpush1.msra.mxu0 %v5227
        %5247 = vmatprep.subr.mxu0 0.0
        %5248 = vmatpush1.msra.mxu0 %v5228
        %5249 = vmatprep.subr.mxu0 0.0
        %5250 = vmatpush1.msra.mxu0 %v5229
        %5251 = vmatprep.subr.mxu0 0.0
        %5252 = vmatpush1.msra.mxu0 %v5230
        %5253 = vmatprep.subr.mxu0 0.0
        %5254 = vmatpush1.msra.mxu0 %v5231
        %5255 = vmatprep.subr.mxu0 0.0
        %5256 = vmatpush1.msra.mxu0 %v5232
        %5257 = vmatprep.subr.mxu0 0.0
        %5258 = vmatpush1.msra.mxu0 %v5233
        %5259 = vmatprep.subr.mxu0 0.0
        %5260 = vmatpush1.msra.mxu0 %v5234
        %5261 = vmatprep.subr.mxu0 0.0
        %5262 = vmatpush1.msra.mxu0 %v5235
        %5263 = vmatprep.subr.mxu0 0.0
        %5264 = vmatpush1.msra.mxu0 %v5236
        %5265 = vmatprep.subr.mxu0 0.0
        %5266 = vmatpush1.msra.mxu0 %v5237
        %5267 = vmatprep.subr.mxu0 0.0
        %5268 = vmatpush1.msra.mxu0 %v5238
        %5269 = vmatprep.subr.mxu0 0.0
        %5270 = vmatpush1.msra.mxu0 %v5239
        %5271 = vmatprep.subr.mxu0 0.0
        %5272 = vmatpush1.msra.mxu0 %v5240
        %5273 = vmatprep.subr.mxu0 0.0
        %5274 = vmatpush1.msra.mxu0 0.0
        %5275 = vmatprep.subr.mxu0 0.0
        %5276 = vmatpush1.msra.mxu0 0.0
        %5277 = vmatprep.subr.mxu0 0.0
        %5278 = vmatpush1.msra.mxu0 0.0
        %5279 = vmatprep.subr.mxu0 0.0
        %5280 = vmatpush1.msra.mxu0 0.0
        %5281 = vmatprep.subr.mxu0 0.0
        %5282 = vmatpush1.msra.mxu0 0.0
        %5283 = vmatprep.subr.mxu0 0.0
        %5284 = vmatpush1.msra.mxu0 0.0
        %5285 = vmatprep.subr.mxu0 0.0
        %5286 = vmatpush1.msra.mxu0 0.0
        %5287 = vmatprep.subr.mxu0 0.0
        %5288 = vmatpush1.msra.mxu0 0.0
        %5289 = vmatprep.subr.mxu0 0.0
        %5290 = vmatpush1.msra.mxu0 0.0
        %5291 = vmatprep.subr.mxu0 0.0
        %5292 = vmatpush1.msra.mxu0 0.0
        %5293 = vmatprep.subr.mxu0 0.0
        %5294 = vmatpush1.msra.mxu0 0.0
        %5295 = vmatprep.subr.mxu0 0.0
        %5296 = vmatpush1.msra.mxu0 0.0
        %5297 = vmatprep.subr.mxu0 0.0
        %5298 = vmatpush1.msra.mxu0 0.0
        %5299 = vmatprep.subr.mxu0 0.0
        %5300 = vmatpush1.msra.mxu0 0.0
        %5301 = vmatprep.subr.mxu0 0.0
        %5302 = vmatpush1.msra.mxu0 0.0
        %5303 = vmatprep.subr.mxu0 0.0
        %5304 = vmatpush1.msra.mxu0 0.0
        %5305 = vmatprep.mubr.f32.mxu0 0.0
        %5306 = vmatmul.mubr.f32.gmra.mrb[0].mxu0 %v5192
        %v5307 = vpop.f32.mrb[0].mxu0
        %v5308 = vadd.f32 0.0, %v5307
        %v5309 = vpop.f32.mrb[0].mxu0
        %5310 = vmatprep.mubr.f32.mxu0 0.0
        %5311 = vmatmul.mubr.f32.gmra.mrb[0].mxu0 %v5193
        %v5312 = vpop.f32.mrb[0].mxu0
        %v5313 = vadd.f32 0.0, %v5312
        %v5314 = vpop.f32.mrb[0].mxu0
        %5315 = vmatprep.mubr.f32.mxu0 0.0
        %5316 = vmatmul.mubr.f32.gmra.mrb[0].mxu0 %v5194
        %v5317 = vpop.f32.mrb[0].mxu0
        %v5318 = vadd.f32 0.0, %v5317
        %v5319 = vpop.f32.mrb[0].mxu0
        %5320 = vmatprep.mubr.f32.mxu0 0.0
        %5321 = vmatmul.mubr.f32.gmra.mrb[0].mxu0 %v5195
        %v5322 = vpop.f32.mrb[0].mxu0
        %v5323 = vadd.f32 0.0, %v5322
        %v5324 = vpop.f32.mrb[0].mxu0
        %5325 = vmatprep.mubr.f32.mxu0 0.0
        %5326 = vmatmul.mubr.f32.gmra.mrb[0].mxu0 %v5196
        %v5327 = vpop.f32.mrb[0].mxu0
        %v5328 = vadd.f32 0.0, %v5327
        %v5329 = vpop.f32.mrb[0].mxu0
        %5330 = vmatprep.mubr.f32.mxu0 0.0
        %5331 = vmatmul.mubr.f32.gmra.mrb[0].mxu0 %v5197
        %v5332 = vpop.f32.mrb[0].mxu0
        %v5333 = vadd.f32 0.0, %v5332
        %v5334 = vpop.f32.mrb[0].mxu0
        %5335 = vmatprep.mubr.f32.mxu0 0.0
        %5336 = vmatmul.mubr.f32.gmra.mrb[0].mxu0 %v5198
        %v5337 = vpop.f32.mrb[0].mxu0
        %v5338 = vadd.f32 0.0, %v5337
        %v5339 = vpop.f32.mrb[0].mxu0
        %5340 = vmatprep.mubr.f32.mxu0 0.0
        %5341 = vmatmul.mubr.f32.gmra.mrb[0].mxu0 %v5199
        %v5342 = vpop.f32.mrb[0].mxu0
        %v5343 = vadd.f32 0.0, %v5342
        %v5344 = vpop.f32.mrb[0].mxu0
        %5345 = vmatprep.mubr.f32.mxu0 0.0
        %5346 = vmatmul.mubr.f32.gmra.mrb[0].mxu0 %v5200
        %v5347 = vpop.f32.mrb[0].mxu0
        %v5348 = vadd.f32 0.0, %v5347
        %v5349 = vpop.f32.mrb[0].mxu0
        %5350 = vmatprep.mubr.f32.mxu0 0.0
        %5351 = vmatmul.mubr.f32.gmra.mrb[0].mxu0 %v5201
        %v5352 = vpop.f32.mrb[0].mxu0
        %v5353 = vadd.f32 0.0, %v5352
        %v5354 = vpop.f32.mrb[0].mxu0
        %5355 = vmatprep.mubr.f32.mxu0 0.0
        %5356 = vmatmul.mubr.f32.gmra.mrb[0].mxu0 %v5202
        %v5357 = vpop.f32.mrb[0].mxu0
        %v5358 = vadd.f32 0.0, %v5357
        %v5359 = vpop.f32.mrb[0].mxu0
        %5360 = vmatprep.mubr.f32.mxu0 0.0
        %5361 = vmatmul.mubr.f32.gmra.mrb[0].mxu0 %v5203
        %v5362 = vpop.f32.mrb[0].mxu0
        %v5363 = vadd.f32 0.0, %v5362
        %v5364 = vpop.f32.mrb[0].mxu0
        %5365 = vmatprep.mubr.f32.mxu0 0.0
        %5366 = vmatmul.mubr.f32.gmra.mrb[0].mxu0 %v5204
        %v5367 = vpop.f32.mrb[0].mxu0
        %v5368 = vadd.f32 0.0, %v5367
        %v5369 = vpop.f32.mrb[0].mxu0
        %5370 = vmatprep.mubr.f32.mxu0 0.0
        %5371 = vmatmul.mubr.f32.gmra.mrb[0].mxu0 %v5205
        %v5372 = vpop.f32.mrb[0].mxu0
        %v5373 = vadd.f32 0.0, %v5372
        %v5374 = vpop.f32.mrb[0].mxu0
        %5375 = vmatprep.mubr.f32.mxu0 0.0
        %5376 = vmatmul.mubr.f32.gmra.mrb[0].mxu0 %v5206
        %v5377 = vpop.f32.mrb[0].mxu0
        %v5378 = vadd.f32 0.0, %v5377
        %v5379 = vpop.f32.mrb[0].mxu0
        %5380 = vmatprep.mubr.f32.mxu0 0.0
        %5381 = vmatmul.mubr.f32.gmra.mrb[0].mxu0 %v5207
        %v5382 = vpop.f32.mrb[0].mxu0
        %v5383 = vadd.f32 0.0, %v5382
        %v5384 = vpop.f32.mrb[0].mxu0
        %5385 = vmatprep.mubr.f32.mxu0 0.0
        %5386 = vmatmul.mubr.f32.gmra.mrb[0].mxu0 %v5208
        %v5387 = vpop.f32.mrb[0].mxu0
        %v5388 = vadd.f32 0.0, %v5387
        %v5389 = vpop.f32.mrb[0].mxu0
        %5390 = vmatprep.mubr.f32.mxu0 0.0
        %5391 = vmatmul.mubr.f32.gmra.mrb[0].mxu0 %v5209
        %v5392 = vpop.f32.mrb[0].mxu0
        %v5393 = vadd.f32 0.0, %v5392
        %v5394 = vpop.f32.mrb[0].mxu0
        %5395 = vmatprep.mubr.f32.mxu0 0.0
        %5396 = vmatmul.mubr.f32.gmra.mrb[0].mxu0 %v5210
        %v5397 = vpop.f32.mrb[0].mxu0
        %v5398 = vadd.f32 0.0, %v5397
        %v5399 = vpop.f32.mrb[0].mxu0
        %5400 = vmatprep.mubr.f32.mxu0 0.0
        %5401 = vmatmul.mubr.f32.gmra.mrb[0].mxu0 %v5211
        %v5402 = vpop.f32.mrb[0].mxu0
        %v5403 = vadd.f32 0.0, %v5402
        %v5404 = vpop.f32.mrb[0].mxu0
        %5405 = vmatprep.mubr.f32.mxu0 0.0
        %5406 = vmatmul.mubr.f32.gmra.mrb[0].mxu0 %v5212
        %v5407 = vpop.f32.mrb[0].mxu0
        %v5408 = vadd.f32 0.0, %v5407
        %v5409 = vpop.f32.mrb[0].mxu0
        %5410 = vmatprep.mubr.f32.mxu0 0.0
        %5411 = vmatmul.mubr.f32.gmra.mrb[0].mxu0 %v5213
        %v5412 = vpop.f32.mrb[0].mxu0
        %v5413 = vadd.f32 0.0, %v5412
        %v5414 = vpop.f32.mrb[0].mxu0
        %5415 = vmatprep.mubr.f32.mxu0 0.0
        %5416 = vmatmul.mubr.f32.gmra.mrb[0].mxu0 %v5214
        %v5417 = vpop.f32.mrb[0].mxu0
        %v5418 = vadd.f32 0.0, %v5417
        %v5419 = vpop.f32.mrb[0].mxu0
        %5420 = vmatprep.mubr.f32.mxu0 0.0
        %5421 = vmatmul.mubr.f32.gmra.mrb[0].mxu0 %v5215
        %v5422 = vpop.f32.mrb[0].mxu0
        %v5423 = vadd.f32 0.0, %v5422
        %v5424 = vpop.f32.mrb[0].mxu0
        %5425 = vmatprep.mubr.f32.mxu0 0.0
        %5426 = vmatmul.mubr.f32.gmra.mrb[0].mxu0 %v5216
        %v5427 = vpop.f32.mrb[0].mxu0
        %v5428 = vadd.f32 0.0, %v5427
        %v5429 = vpop.f32.mrb[0].mxu0
        %5430 = vmatprep.mubr.f32.mxu0 0.0
        %5431 = vmatmul.mubr.f32.gmra.mrb[0].mxu0 %v5217
        %v5432 = vpop.f32.mrb[0].mxu0
        %v5433 = vadd.f32 0.0, %v5432
        %v5434 = vpop.f32.mrb[0].mxu0
        %5435 = vmatprep.mubr.f32.mxu0 0.0
        %5436 = vmatmul.mubr.f32.gmra.mrb[0].mxu0 %v5218
        %v5437 = vpop.f32.mrb[0].mxu0
        %v5438 = vadd.f32 0.0, %v5437
        %v5439 = vpop.f32.mrb[0].mxu0
        %5440 = vmatprep.mubr.f32.mxu0 0.0
        %5441 = vmatmul.mubr.f32.gmra.mrb[0].mxu0 %v5219
        %v5442 = vpop.f32.mrb[0].mxu0
        %v5443 = vadd.f32 0.0, %v5442
        %v5444 = vpop.f32.mrb[0].mxu0
        %5445 = vmatprep.mubr.f32.mxu0 0.0
        %5446 = vmatmul.mubr.f32.gmra.mrb[0].mxu0 %v5220
        %v5447 = vpop.f32.mrb[0].mxu0
        %v5448 = vadd.f32 0.0, %v5447
        %v5449 = vpop.f32.mrb[0].mxu0
        %5450 = vmatprep.mubr.f32.mxu0 0.0
        %5451 = vmatmul.mubr.f32.gmra.mrb[0].mxu0 %v5221
        %v5452 = vpop.f32.mrb[0].mxu0
        %v5453 = vadd.f32 0.0, %v5452
        %v5454 = vpop.f32.mrb[0].mxu0
        %5455 = vmatprep.mubr.f32.mxu0 0.0
        %5456 = vmatmul.mubr.f32.gmra.mrb[0].mxu0 %v5222
        %v5457 = vpop.f32.mrb[0].mxu0
        %v5458 = vadd.f32 0.0, %v5457
        %v5459 = vpop.f32.mrb[0].mxu0
        %5460 = vmatprep.mubr.f32.mxu0 0.0
        %5461 = vmatmul.mubr.f32.gmra.mrb[0].mxu0 %v5223
        %v5462 = vpop.f32.mrb[0].mxu0
        %v5463 = vadd.f32 0.0, %v5462
        %v5464 = vpop.f32.mrb[0].mxu0
        %5465 = vdwg.mxu0
        %v5466 = vld [vmem:[#allocation3] sm:$0xff]
        %v5467 = vld [vmem:[#allocation3 + $0x8] sm:$0xff]
        %v5468 = vld [vmem:[#allocation3 + $0x10] sm:$0xff]
        %v5469 = vld [vmem:[#allocation3 + $0x18] sm:$0xff]
        %v5470 = vld [vmem:[#allocation3 + $0x20] sm:$0xff]
        %v5471 = vld [vmem:[#allocation3 + $0x28] sm:$0xff]
        %v5472 = vld [vmem:[#allocation3 + $0x30] sm:$0xff]
        %v5473 = vld [vmem:[#allocation3 + $0x38] sm:$0xff]
        %v5474 = vld [vmem:[#allocation3 + $0x40] sm:$0xff]
        %v5475 = vld [vmem:[#allocation3 + $0x48] sm:$0xff]
        %v5476 = vld [vmem:[#allocation3 + $0x50] sm:$0xff]
        %v5477 = vld [vmem:[#allocation3 + $0x58] sm:$0xff]
        %v5478 = vld [vmem:[#allocation3 + $0x60] sm:$0xff]
        %v5479 = vld [vmem:[#allocation3 + $0x68] sm:$0xff]
        %v5480 = vld [vmem:[#allocation3 + $0x70] sm:$0xff]
        %v5481 = vld [vmem:[#allocation3 + $0x78] sm:$0xff]
        %v5482 = vld [vmem:[#allocation3 + $0x80] sm:$0xff]
        %v5483 = vld [vmem:[#allocation3 + $0x88] sm:$0xff]
        %v5484 = vld [vmem:[#allocation3 + $0x90] sm:$0xff]
        %v5485 = vld [vmem:[#allocation3 + $0x98] sm:$0xff]
        %v5486 = vld [vmem:[#allocation3 + $0xa0] sm:$0xff]
        %v5487 = vld [vmem:[#allocation3 + $0xa8] sm:$0xff]
        %v5488 = vld [vmem:[#allocation3 + $0xb0] sm:$0xff]
        %v5489 = vld [vmem:[#allocation3 + $0xb8] sm:$0xff]
        %v5490 = vld [vmem:[#allocation3 + $0xc0] sm:$0xff]
        %v5491 = vld [vmem:[#allocation3 + $0xc8] sm:$0xff]
        %v5492 = vld [vmem:[#allocation3 + $0xd0] sm:$0xff]
        %v5493 = vld [vmem:[#allocation3 + $0xd8] sm:$0xff]
        %v5494 = vld [vmem:[#allocation3 + $0xe0] sm:$0xff]
        %v5495 = vld [vmem:[#allocation3 + $0xe8] sm:$0xff]
        %v5496 = vld [vmem:[#allocation3 + $0xf0] sm:$0xff]
        %v5497 = vld [vmem:[#allocation3 + $0xf8] sm:$0xff]
        %v5498 = vadd.f32 %v5466, %v5308
        %v5499 = vadd.f32 %v5467, %v5313
        %v5500 = vadd.f32 %v5468, %v5318
        %v5501 = vadd.f32 %v5469, %v5323
        %v5502 = vadd.f32 %v5470, %v5328
        %v5503 = vadd.f32 %v5471, %v5333
        %v5504 = vadd.f32 %v5472, %v5338
        %v5505 = vadd.f32 %v5473, %v5343
        %v5506 = vadd.f32 %v5474, %v5348
        %v5507 = vadd.f32 %v5475, %v5353
        %v5508 = vadd.f32 %v5476, %v5358
        %v5509 = vadd.f32 %v5477, %v5363
        %v5510 = vadd.f32 %v5478, %v5368
        %v5511 = vadd.f32 %v5479, %v5373
        %v5512 = vadd.f32 %v5480, %v5378
        %v5513 = vadd.f32 %v5481, %v5383
        %v5514 = vadd.f32 %v5482, %v5388
        %v5515 = vadd.f32 %v5483, %v5393
        %v5516 = vadd.f32 %v5484, %v5398
        %v5517 = vadd.f32 %v5485, %v5403
        %v5518 = vadd.f32 %v5486, %v5408
        %v5519 = vadd.f32 %v5487, %v5413
        %v5520 = vadd.f32 %v5488, %v5418
        %v5521 = vadd.f32 %v5489, %v5423
        %v5522 = vadd.f32 %v5490, %v5428
        %v5523 = vadd.f32 %v5491, %v5433
        %v5524 = vadd.f32 %v5492, %v5438
        %v5525 = vadd.f32 %v5493, %v5443
        %v5526 = vadd.f32 %v5494, %v5448
        %v5527 = vadd.f32 %v5495, %v5453
        %v5528 = vadd.f32 %v5496, %v5458
        %v5529 = vadd.f32 %v5497, %v5463
        %5530 = vst [vmem:[#allocation3] sm:$0xff] %v5498
        %5531 = vst [vmem:[#allocation3 + $0x8] sm:$0xff] %v5499
        %5532 = vst [vmem:[#allocation3 + $0x10] sm:$0xff] %v5500
        %5533 = vst [vmem:[#allocation3 + $0x18] sm:$0xff] %v5501
        %5534 = vst [vmem:[#allocation3 + $0x20] sm:$0xff] %v5502
        %5535 = vst [vmem:[#allocation3 + $0x28] sm:$0xff] %v5503
        %5536 = vst [vmem:[#allocation3 + $0x30] sm:$0xff] %v5504
        %5537 = vst [vmem:[#allocation3 + $0x38] sm:$0xff] %v5505
        %5538 = vst [vmem:[#allocation3 + $0x40] sm:$0xff] %v5506
        %5539 = vst [vmem:[#allocation3 + $0x48] sm:$0xff] %v5507
        %5540 = vst [vmem:[#allocation3 + $0x50] sm:$0xff] %v5508
        %5541 = vst [vmem:[#allocation3 + $0x58] sm:$0xff] %v5509
        %5542 = vst [vmem:[#allocation3 + $0x60] sm:$0xff] %v5510
        %5543 = vst [vmem:[#allocation3 + $0x68] sm:$0xff] %v5511
        %5544 = vst [vmem:[#allocation3 + $0x70] sm:$0xff] %v5512
        %5545 = vst [vmem:[#allocation3 + $0x78] sm:$0xff] %v5513
        %5546 = vst [vmem:[#allocation3 + $0x80] sm:$0xff] %v5514
        %5547 = vst [vmem:[#allocation3 + $0x88] sm:$0xff] %v5515
        %5548 = vst [vmem:[#allocation3 + $0x90] sm:$0xff] %v5516
        %5549 = vst [vmem:[#allocation3 + $0x98] sm:$0xff] %v5517
        %5550 = vst [vmem:[#allocation3 + $0xa0] sm:$0xff] %v5518
        %5551 = vst [vmem:[#allocation3 + $0xa8] sm:$0xff] %v5519
        %5552 = vst [vmem:[#allocation3 + $0xb0] sm:$0xff] %v5520
        %5553 = vst [vmem:[#allocation3 + $0xb8] sm:$0xff] %v5521
        %5554 = vst [vmem:[#allocation3 + $0xc0] sm:$0xff] %v5522
        %5555 = vst [vmem:[#allocation3 + $0xc8] sm:$0xff] %v5523
        %5556 = vst [vmem:[#allocation3 + $0xd0] sm:$0xff] %v5524
        %5557 = vst [vmem:[#allocation3 + $0xd8] sm:$0xff] %v5525
        %5558 = vst [vmem:[#allocation3 + $0xe0] sm:$0xff] %v5526
        %5559 = vst [vmem:[#allocation3 + $0xe8] sm:$0xff] %v5527
        %5560 = vst [vmem:[#allocation3 + $0xf0] sm:$0xff] %v5528
        %5561 = vst [vmem:[#allocation3 + $0xf8] sm:$0xff] %v5529
        %v5562 = vld [vmem:[%s3744 + $0x2] sm:$0xff]
        %v5563 = vld [vmem:[%s3744 + $0xa] sm:$0xff]
        %v5564 = vld [vmem:[%s3744 + $0x1a] sm:$0xff]
        %v5565 = vld [vmem:[%s3744 + $0x22] sm:$0xff]
        %v5566 = vld [vmem:[%s3744 + $0x32] sm:$0xff]
        %v5567 = vld [vmem:[%s3744 + $0x3a] sm:$0xff]
        %v5568 = vld [vmem:[%s3744 + $0x4a] sm:$0xff]
        %v5569 = vld [vmem:[%s3744 + $0x52] sm:$0xff]
        %v5570 = vld [vmem:[%s3744 + $0x62] sm:$0xff]
        %v5571 = vld [vmem:[%s3744 + $0x6a] sm:$0xff]
        %v5572 = vld [vmem:[%s3744 + $0x7a] sm:$0xff]
        %v5573 = vld [vmem:[%s3744 + $0x82] sm:$0xff]
        %v5574 = vld [vmem:[%s3744 + $0x92] sm:$0xff]
        %v5575 = vld [vmem:[%s3744 + $0x9a] sm:$0xff]
        %v5576 = vld [vmem:[%s3744 + $0xaa] sm:$0xff]
        %v5577 = vld [vmem:[%s3744 + $0xb2] sm:$0xff]
        %v5578 = vld [vmem:[%s3744 + $0xc2] sm:$0xff]
        %v5579 = vld [vmem:[%s3744 + $0xca] sm:$0xff]
        %v5580 = vld [vmem:[%s3744 + $0xda] sm:$0xff]
        %v5581 = vld [vmem:[%s3744 + $0xe2] sm:$0xff]
        %v5582 = vld [vmem:[%s3744 + $0xf2] sm:$0xff]
        %v5583 = vld [vmem:[%s3744 + $0xfa] sm:$0xff]
        %v5584 = vld [vmem:[%s3744 + $0x10a] sm:$0xff]
        %v5585 = vld [vmem:[%s3744 + $0x112] sm:$0xff]
        %v5586 = vld [vmem:[%s3744 + $0x122] sm:$0xff]
        %v5587 = vld [vmem:[%s3744 + $0x12a] sm:$0xff]
        %v5588 = vld [vmem:[%s3744 + $0x13a] sm:$0xff]
        %v5589 = vld [vmem:[%s3744 + $0x142] sm:$0xff]
        %v5590 = vld [vmem:[%s3744 + $0x152] sm:$0xff]
        %v5591 = vld [vmem:[%s3744 + $0x15a] sm:$0xff]
        %v5592 = vld [vmem:[%s3744 + $0x16a] sm:$0xff]
        %v5593 = vld [vmem:[%s3744 + $0x172] sm:$0xff]
        %s5594 = scalar_lea.vmem [#allocation4], 640
        %v5595 = vld [vmem:[%s5594] sm:$0xff]
        %v5596 = vld [vmem:[%s5594 + $0x8] sm:$0xff]
        %v5597 = vld [vmem:[%s5594 + $0x10] sm:$0xff]
        %v5598 = vld [vmem:[%s5594 + $0x18] sm:$0xff]
        %v5599 = vld [vmem:[%s5594 + $0x20] sm:$0xff]
        %v5600 = vld [vmem:[%s5594 + $0x28] sm:$0xff]
        %v5601 = vld [vmem:[%s5594 + $0x30] sm:$0xff]
        %v5602 = vld [vmem:[%s5594 + $0x38] sm:$0xff]
        %v5603 = vld [vmem:[%s5594 + $0x40] sm:$0xff]
        %v5604 = vld [vmem:[%s5594 + $0x48] sm:$0xff]
        %v5605 = vld [vmem:[%s5594 + $0x50] sm:$0xff]
        %v5606 = vld [vmem:[%s5594 + $0x58] sm:$0xff]
        %v5607 = vld [vmem:[%s5594 + $0x60] sm:$0xff]
        %v5608 = vld [vmem:[%s5594 + $0x68] sm:$0xff]
        %v5609 = vld [vmem:[%s5594 + $0x70] sm:$0xff]
        %v5610 = vld [vmem:[%s5594 + $0x78] sm:$0xff]
        %5611 = vmatprep.subr.mxu0 0.0
        %5612 = vmatpush1.msra.mxu0 %v5595
        %5613 = vmatprep.subr.mxu0 0.0
        %5614 = vmatpush1.msra.mxu0 %v5596
        %5615 = vmatprep.subr.mxu0 0.0
        %5616 = vmatpush1.msra.mxu0 %v5597
        %5617 = vmatprep.subr.mxu0 0.0
        %5618 = vmatpush1.msra.mxu0 %v5598
        %5619 = vmatprep.subr.mxu0 0.0
        %5620 = vmatpush1.msra.mxu0 %v5599
        %5621 = vmatprep.subr.mxu0 0.0
        %5622 = vmatpush1.msra.mxu0 %v5600
        %5623 = vmatprep.subr.mxu0 0.0
        %5624 = vmatpush1.msra.mxu0 %v5601
        %5625 = vmatprep.subr.mxu0 0.0
        %5626 = vmatpush1.msra.mxu0 %v5602
        %5627 = vmatprep.subr.mxu0 0.0
        %5628 = vmatpush1.msra.mxu0 %v5603
        %5629 = vmatprep.subr.mxu0 0.0
        %5630 = vmatpush1.msra.mxu0 %v5604
        %5631 = vmatprep.subr.mxu0 0.0
        %5632 = vmatpush1.msra.mxu0 %v5605
        %5633 = vmatprep.subr.mxu0 0.0
        %5634 = vmatpush1.msra.mxu0 %v5606
        %5635 = vmatprep.subr.mxu0 0.0
        %5636 = vmatpush1.msra.mxu0 %v5607
        %5637 = vmatprep.subr.mxu0 0.0
        %5638 = vmatpush1.msra.mxu0 %v5608
        %5639 = vmatprep.subr.mxu0 0.0
        %5640 = vmatpush1.msra.mxu0 %v5609
        %5641 = vmatprep.subr.mxu0 0.0
        %5642 = vmatpush1.msra.mxu0 %v5610
        %5643 = vmatprep.subr.mxu0 0.0
        %5644 = vmatpush1.msra.mxu0 0.0
        %5645 = vmatprep.subr.mxu0 0.0
        %5646 = vmatpush1.msra.mxu0 0.0
        %5647 = vmatprep.subr.mxu0 0.0
        %5648 = vmatpush1.msra.mxu0 0.0
        %5649 = vmatprep.subr.mxu0 0.0
        %5650 = vmatpush1.msra.mxu0 0.0
        %5651 = vmatprep.subr.mxu0 0.0
        %5652 = vmatpush1.msra.mxu0 0.0
        %5653 = vmatprep.subr.mxu0 0.0
        %5654 = vmatpush1.msra.mxu0 0.0
        %5655 = vmatprep.subr.mxu0 0.0
        %5656 = vmatpush1.msra.mxu0 0.0
        %5657 = vmatprep.subr.mxu0 0.0
        %5658 = vmatpush1.msra.mxu0 0.0
        %5659 = vmatprep.subr.mxu0 0.0
        %5660 = vmatpush1.msra.mxu0 0.0
        %5661 = vmatprep.subr.mxu0 0.0
        %5662 = vmatpush1.msra.mxu0 0.0
        %5663 = vmatprep.subr.mxu0 0.0
        %5664 = vmatpush1.msra.mxu0 0.0
        %5665 = vmatprep.subr.mxu0 0.0
        %5666 = vmatpush1.msra.mxu0 0.0
        %5667 = vmatprep.subr.mxu0 0.0
        %5668 = vmatpush1.msra.mxu0 0.0
        %5669 = vmatprep.subr.mxu0 0.0
        %5670 = vmatpush1.msra.mxu0 0.0
        %5671 = vmatprep.subr.mxu0 0.0
        %5672 = vmatpush1.msra.mxu0 0.0
        %5673 = vmatprep.subr.mxu0 0.0
        %5674 = vmatpush1.msra.mxu0 0.0
        %5675 = vmatprep.mubr.f32.mxu0 0.0
        %5676 = vmatmul.mubr.f32.gmra.mrb[0].mxu0 %v5562
        %v5677 = vpop.f32.mrb[0].mxu0
        %v5678 = vadd.f32 0.0, %v5677
        %v5679 = vpop.f32.mrb[0].mxu0
        %5680 = vmatprep.mubr.f32.mxu0 0.0
        %5681 = vmatmul.mubr.f32.gmra.mrb[0].mxu0 %v5563
        %v5682 = vpop.f32.mrb[0].mxu0
        %v5683 = vadd.f32 0.0, %v5682
        %v5684 = vpop.f32.mrb[0].mxu0
        %5685 = vmatprep.mubr.f32.mxu0 0.0
        %5686 = vmatmul.mubr.f32.gmra.mrb[0].mxu0 %v5564
        %v5687 = vpop.f32.mrb[0].mxu0
        %v5688 = vadd.f32 0.0, %v5687
        %v5689 = vpop.f32.mrb[0].mxu0
        %5690 = vmatprep.mubr.f32.mxu0 0.0
        %5691 = vmatmul.mubr.f32.gmra.mrb[0].mxu0 %v5565
        %v5692 = vpop.f32.mrb[0].mxu0
        %v5693 = vadd.f32 0.0, %v5692
        %v5694 = vpop.f32.mrb[0].mxu0
        %5695 = vmatprep.mubr.f32.mxu0 0.0
        %5696 = vmatmul.mubr.f32.gmra.mrb[0].mxu0 %v5566
        %v5697 = vpop.f32.mrb[0].mxu0
        %v5698 = vadd.f32 0.0, %v5697
        %v5699 = vpop.f32.mrb[0].mxu0
        %5700 = vmatprep.mubr.f32.mxu0 0.0
        %5701 = vmatmul.mubr.f32.gmra.mrb[0].mxu0 %v5567
        %v5702 = vpop.f32.mrb[0].mxu0
        %v5703 = vadd.f32 0.0, %v5702
        %v5704 = vpop.f32.mrb[0].mxu0
        %5705 = vmatprep.mubr.f32.mxu0 0.0
        %5706 = vmatmul.mubr.f32.gmra.mrb[0].mxu0 %v5568
        %v5707 = vpop.f32.mrb[0].mxu0
        %v5708 = vadd.f32 0.0, %v5707
        %v5709 = vpop.f32.mrb[0].mxu0
        %5710 = vmatprep.mubr.f32.mxu0 0.0
        %5711 = vmatmul.mubr.f32.gmra.mrb[0].mxu0 %v5569
        %v5712 = vpop.f32.mrb[0].mxu0
        %v5713 = vadd.f32 0.0, %v5712
        %v5714 = vpop.f32.mrb[0].mxu0
        %5715 = vmatprep.mubr.f32.mxu0 0.0
        %5716 = vmatmul.mubr.f32.gmra.mrb[0].mxu0 %v5570
        %v5717 = vpop.f32.mrb[0].mxu0
        %v5718 = vadd.f32 0.0, %v5717
        %v5719 = vpop.f32.mrb[0].mxu0
        %5720 = vmatprep.mubr.f32.mxu0 0.0
        %5721 = vmatmul.mubr.f32.gmra.mrb[0].mxu0 %v5571
        %v5722 = vpop.f32.mrb[0].mxu0
        %v5723 = vadd.f32 0.0, %v5722
        %v5724 = vpop.f32.mrb[0].mxu0
        %5725 = vmatprep.mubr.f32.mxu0 0.0
        %5726 = vmatmul.mubr.f32.gmra.mrb[0].mxu0 %v5572
        %v5727 = vpop.f32.mrb[0].mxu0
        %v5728 = vadd.f32 0.0, %v5727
        %v5729 = vpop.f32.mrb[0].mxu0
        %5730 = vmatprep.mubr.f32.mxu0 0.0
        %5731 = vmatmul.mubr.f32.gmra.mrb[0].mxu0 %v5573
        %v5732 = vpop.f32.mrb[0].mxu0
        %v5733 = vadd.f32 0.0, %v5732
        %v5734 = vpop.f32.mrb[0].mxu0
        %5735 = vmatprep.mubr.f32.mxu0 0.0
        %5736 = vmatmul.mubr.f32.gmra.mrb[0].mxu0 %v5574
        %v5737 = vpop.f32.mrb[0].mxu0
        %v5738 = vadd.f32 0.0, %v5737
        %v5739 = vpop.f32.mrb[0].mxu0
        %5740 = vmatprep.mubr.f32.mxu0 0.0
        %5741 = vmatmul.mubr.f32.gmra.mrb[0].mxu0 %v5575
        %v5742 = vpop.f32.mrb[0].mxu0
        %v5743 = vadd.f32 0.0, %v5742
        %v5744 = vpop.f32.mrb[0].mxu0
        %5745 = vmatprep.mubr.f32.mxu0 0.0
        %5746 = vmatmul.mubr.f32.gmra.mrb[0].mxu0 %v5576
        %v5747 = vpop.f32.mrb[0].mxu0
        %v5748 = vadd.f32 0.0, %v5747
        %v5749 = vpop.f32.mrb[0].mxu0
        %5750 = vmatprep.mubr.f32.mxu0 0.0
        %5751 = vmatmul.mubr.f32.gmra.mrb[0].mxu0 %v5577
        %v5752 = vpop.f32.mrb[0].mxu0
        %v5753 = vadd.f32 0.0, %v5752
        %v5754 = vpop.f32.mrb[0].mxu0
        %5755 = vmatprep.mubr.f32.mxu0 0.0
        %5756 = vmatmul.mubr.f32.gmra.mrb[0].mxu0 %v5578
        %v5757 = vpop.f32.mrb[0].mxu0
        %v5758 = vadd.f32 0.0, %v5757
        %v5759 = vpop.f32.mrb[0].mxu0
        %5760 = vmatprep.mubr.f32.mxu0 0.0
        %5761 = vmatmul.mubr.f32.gmra.mrb[0].mxu0 %v5579
        %v5762 = vpop.f32.mrb[0].mxu0
        %v5763 = vadd.f32 0.0, %v5762
        %v5764 = vpop.f32.mrb[0].mxu0
        %5765 = vmatprep.mubr.f32.mxu0 0.0
        %5766 = vmatmul.mubr.f32.gmra.mrb[0].mxu0 %v5580
        %v5767 = vpop.f32.mrb[0].mxu0
        %v5768 = vadd.f32 0.0, %v5767
        %v5769 = vpop.f32.mrb[0].mxu0
        %5770 = vmatprep.mubr.f32.mxu0 0.0
        %5771 = vmatmul.mubr.f32.gmra.mrb[0].mxu0 %v5581
        %v5772 = vpop.f32.mrb[0].mxu0
        %v5773 = vadd.f32 0.0, %v5772
        %v5774 = vpop.f32.mrb[0].mxu0
        %5775 = vmatprep.mubr.f32.mxu0 0.0
        %5776 = vmatmul.mubr.f32.gmra.mrb[0].mxu0 %v5582
        %v5777 = vpop.f32.mrb[0].mxu0
        %v5778 = vadd.f32 0.0, %v5777
        %v5779 = vpop.f32.mrb[0].mxu0
        %5780 = vmatprep.mubr.f32.mxu0 0.0
        %5781 = vmatmul.mubr.f32.gmra.mrb[0].mxu0 %v5583
        %v5782 = vpop.f32.mrb[0].mxu0
        %v5783 = vadd.f32 0.0, %v5782
        %v5784 = vpop.f32.mrb[0].mxu0
        %5785 = vmatprep.mubr.f32.mxu0 0.0
        %5786 = vmatmul.mubr.f32.gmra.mrb[0].mxu0 %v5584
        %v5787 = vpop.f32.mrb[0].mxu0
        %v5788 = vadd.f32 0.0, %v5787
        %v5789 = vpop.f32.mrb[0].mxu0
        %5790 = vmatprep.mubr.f32.mxu0 0.0
        %5791 = vmatmul.mubr.f32.gmra.mrb[0].mxu0 %v5585
        %v5792 = vpop.f32.mrb[0].mxu0
        %v5793 = vadd.f32 0.0, %v5792
        %v5794 = vpop.f32.mrb[0].mxu0
        %5795 = vmatprep.mubr.f32.mxu0 0.0
        %5796 = vmatmul.mubr.f32.gmra.mrb[0].mxu0 %v5586
        %v5797 = vpop.f32.mrb[0].mxu0
        %v5798 = vadd.f32 0.0, %v5797
        %v5799 = vpop.f32.mrb[0].mxu0
        %5800 = vmatprep.mubr.f32.mxu0 0.0
        %5801 = vmatmul.mubr.f32.gmra.mrb[0].mxu0 %v5587
        %v5802 = vpop.f32.mrb[0].mxu0
        %v5803 = vadd.f32 0.0, %v5802
        %v5804 = vpop.f32.mrb[0].mxu0
        %5805 = vmatprep.mubr.f32.mxu0 0.0
        %5806 = vmatmul.mubr.f32.gmra.mrb[0].mxu0 %v5588
        %v5807 = vpop.f32.mrb[0].mxu0
        %v5808 = vadd.f32 0.0, %v5807
        %v5809 = vpop.f32.mrb[0].mxu0
        %5810 = vmatprep.mubr.f32.mxu0 0.0
        %5811 = vmatmul.mubr.f32.gmra.mrb[0].mxu0 %v5589
        %v5812 = vpop.f32.mrb[0].mxu0
        %v5813 = vadd.f32 0.0, %v5812
        %v5814 = vpop.f32.mrb[0].mxu0
        %5815 = vmatprep.mubr.f32.mxu0 0.0
        %5816 = vmatmul.mubr.f32.gmra.mrb[0].mxu0 %v5590
        %v5817 = vpop.f32.mrb[0].mxu0
        %v5818 = vadd.f32 0.0, %v5817
        %v5819 = vpop.f32.mrb[0].mxu0
        %5820 = vmatprep.mubr.f32.mxu0 0.0
        %5821 = vmatmul.mubr.f32.gmra.mrb[0].mxu0 %v5591
        %v5822 = vpop.f32.mrb[0].mxu0
        %v5823 = vadd.f32 0.0, %v5822
        %v5824 = vpop.f32.mrb[0].mxu0
        %5825 = vmatprep.mubr.f32.mxu0 0.0
        %5826 = vmatmul.mubr.f32.gmra.mrb[0].mxu0 %v5592
        %v5827 = vpop.f32.mrb[0].mxu0
        %v5828 = vadd.f32 0.0, %v5827
        %v5829 = vpop.f32.mrb[0].mxu0
        %5830 = vmatprep.mubr.f32.mxu0 0.0
        %5831 = vmatmul.mubr.f32.gmra.mrb[0].mxu0 %v5593
        %v5832 = vpop.f32.mrb[0].mxu0
        %v5833 = vadd.f32 0.0, %v5832
        %v5834 = vpop.f32.mrb[0].mxu0
        %5835 = vdwg.mxu0
        %v5836 = vld [vmem:[#allocation3] sm:$0xff]
        %v5837 = vld [vmem:[#allocation3 + $0x8] sm:$0xff]
        %v5838 = vld [vmem:[#allocation3 + $0x10] sm:$0xff]
        %v5839 = vld [vmem:[#allocation3 + $0x18] sm:$0xff]
        %v5840 = vld [vmem:[#allocation3 + $0x20] sm:$0xff]
        %v5841 = vld [vmem:[#allocation3 + $0x28] sm:$0xff]
        %v5842 = vld [vmem:[#allocation3 + $0x30] sm:$0xff]
        %v5843 = vld [vmem:[#allocation3 + $0x38] sm:$0xff]
        %v5844 = vld [vmem:[#allocation3 + $0x40] sm:$0xff]
        %v5845 = vld [vmem:[#allocation3 + $0x48] sm:$0xff]
        %v5846 = vld [vmem:[#allocation3 + $0x50] sm:$0xff]
        %v5847 = vld [vmem:[#allocation3 + $0x58] sm:$0xff]
        %v5848 = vld [vmem:[#allocation3 + $0x60] sm:$0xff]
        %v5849 = vld [vmem:[#allocation3 + $0x68] sm:$0xff]
        %v5850 = vld [vmem:[#allocation3 + $0x70] sm:$0xff]
        %v5851 = vld [vmem:[#allocation3 + $0x78] sm:$0xff]
        %v5852 = vld [vmem:[#allocation3 + $0x80] sm:$0xff]
        %v5853 = vld [vmem:[#allocation3 + $0x88] sm:$0xff]
        %v5854 = vld [vmem:[#allocation3 + $0x90] sm:$0xff]
        %v5855 = vld [vmem:[#allocation3 + $0x98] sm:$0xff]
        %v5856 = vld [vmem:[#allocation3 + $0xa0] sm:$0xff]
        %v5857 = vld [vmem:[#allocation3 + $0xa8] sm:$0xff]
        %v5858 = vld [vmem:[#allocation3 + $0xb0] sm:$0xff]
        %v5859 = vld [vmem:[#allocation3 + $0xb8] sm:$0xff]
        %v5860 = vld [vmem:[#allocation3 + $0xc0] sm:$0xff]
        %v5861 = vld [vmem:[#allocation3 + $0xc8] sm:$0xff]
        %v5862 = vld [vmem:[#allocation3 + $0xd0] sm:$0xff]
        %v5863 = vld [vmem:[#allocation3 + $0xd8] sm:$0xff]
        %v5864 = vld [vmem:[#allocation3 + $0xe0] sm:$0xff]
        %v5865 = vld [vmem:[#allocation3 + $0xe8] sm:$0xff]
        %v5866 = vld [vmem:[#allocation3 + $0xf0] sm:$0xff]
        %v5867 = vld [vmem:[#allocation3 + $0xf8] sm:$0xff]
        %v5868 = vadd.f32 %v5836, %v5678
        %v5869 = vadd.f32 %v5837, %v5683
        %v5870 = vadd.f32 %v5838, %v5688
        %v5871 = vadd.f32 %v5839, %v5693
        %v5872 = vadd.f32 %v5840, %v5698
        %v5873 = vadd.f32 %v5841, %v5703
        %v5874 = vadd.f32 %v5842, %v5708
        %v5875 = vadd.f32 %v5843, %v5713
        %v5876 = vadd.f32 %v5844, %v5718
        %v5877 = vadd.f32 %v5845, %v5723
        %v5878 = vadd.f32 %v5846, %v5728
        %v5879 = vadd.f32 %v5847, %v5733
        %v5880 = vadd.f32 %v5848, %v5738
        %v5881 = vadd.f32 %v5849, %v5743
        %v5882 = vadd.f32 %v5850, %v5748
        %v5883 = vadd.f32 %v5851, %v5753
        %v5884 = vadd.f32 %v5852, %v5758
        %v5885 = vadd.f32 %v5853, %v5763
        %v5886 = vadd.f32 %v5854, %v5768
        %v5887 = vadd.f32 %v5855, %v5773
        %v5888 = vadd.f32 %v5856, %v5778
        %v5889 = vadd.f32 %v5857, %v5783
        %v5890 = vadd.f32 %v5858, %v5788
        %v5891 = vadd.f32 %v5859, %v5793
        %v5892 = vadd.f32 %v5860, %v5798
        %v5893 = vadd.f32 %v5861, %v5803
        %v5894 = vadd.f32 %v5862, %v5808
        %v5895 = vadd.f32 %v5863, %v5813
        %v5896 = vadd.f32 %v5864, %v5818
        %v5897 = vadd.f32 %v5865, %v5823
        %v5898 = vadd.f32 %v5866, %v5828
        %v5899 = vadd.f32 %v5867, %v5833
        %5900 = vst [vmem:[#allocation3] sm:$0xff] %v5868
        %5901 = vst [vmem:[#allocation3 + $0x8] sm:$0xff] %v5869
        %5902 = vst [vmem:[#allocation3 + $0x10] sm:$0xff] %v5870
        %5903 = vst [vmem:[#allocation3 + $0x18] sm:$0xff] %v5871
        %5904 = vst [vmem:[#allocation3 + $0x20] sm:$0xff] %v5872
        %5905 = vst [vmem:[#allocation3 + $0x28] sm:$0xff] %v5873
        %5906 = vst [vmem:[#allocation3 + $0x30] sm:$0xff] %v5874
        %5907 = vst [vmem:[#allocation3 + $0x38] sm:$0xff] %v5875
        %5908 = vst [vmem:[#allocation3 + $0x40] sm:$0xff] %v5876
        %5909 = vst [vmem:[#allocation3 + $0x48] sm:$0xff] %v5877
        %5910 = vst [vmem:[#allocation3 + $0x50] sm:$0xff] %v5878
        %5911 = vst [vmem:[#allocation3 + $0x58] sm:$0xff] %v5879
        %5912 = vst [vmem:[#allocation3 + $0x60] sm:$0xff] %v5880
        %5913 = vst [vmem:[#allocation3 + $0x68] sm:$0xff] %v5881
        %5914 = vst [vmem:[#allocation3 + $0x70] sm:$0xff] %v5882
        %5915 = vst [vmem:[#allocation3 + $0x78] sm:$0xff] %v5883
        %5916 = vst [vmem:[#allocation3 + $0x80] sm:$0xff] %v5884
        %5917 = vst [vmem:[#allocation3 + $0x88] sm:$0xff] %v5885
        %5918 = vst [vmem:[#allocation3 + $0x90] sm:$0xff] %v5886
        %5919 = vst [vmem:[#allocation3 + $0x98] sm:$0xff] %v5887
        %5920 = vst [vmem:[#allocation3 + $0xa0] sm:$0xff] %v5888
        %5921 = vst [vmem:[#allocation3 + $0xa8] sm:$0xff] %v5889
        %5922 = vst [vmem:[#allocation3 + $0xb0] sm:$0xff] %v5890
        %5923 = vst [vmem:[#allocation3 + $0xb8] sm:$0xff] %v5891
        %5924 = vst [vmem:[#allocation3 + $0xc0] sm:$0xff] %v5892
        %5925 = vst [vmem:[#allocation3 + $0xc8] sm:$0xff] %v5893
        %5926 = vst [vmem:[#allocation3 + $0xd0] sm:$0xff] %v5894
        %5927 = vst [vmem:[#allocation3 + $0xd8] sm:$0xff] %v5895
        %5928 = vst [vmem:[#allocation3 + $0xe0] sm:$0xff] %v5896
        %5929 = vst [vmem:[#allocation3 + $0xe8] sm:$0xff] %v5897
        %5930 = vst [vmem:[#allocation3 + $0xf0] sm:$0xff] %v5898
        %5931 = vst [vmem:[#allocation3 + $0xf8] sm:$0xff] %v5899
        %s5932 = scalar_lea.vmem [#allocation2], 48
        %v5933 = vld [vmem:[%s5932] sm:$0xff]
        %v5934 = vld [vmem:[%s5932 + $0x8] sm:$0xff]
        %v5935 = vld [vmem:[%s5932 + $0x18] sm:$0xff]
        %v5936 = vld [vmem:[%s5932 + $0x20] sm:$0xff]
        %v5937 = vld [vmem:[%s5932 + $0x30] sm:$0xff]
        %v5938 = vld [vmem:[%s5932 + $0x38] sm:$0xff]
        %v5939 = vld [vmem:[%s5932 + $0x48] sm:$0xff]
        %v5940 = vld [vmem:[%s5932 + $0x50] sm:$0xff]
        %v5941 = vld [vmem:[%s5932 + $0x60] sm:$0xff]
        %v5942 = vld [vmem:[%s5932 + $0x68] sm:$0xff]
        %v5943 = vld [vmem:[%s5932 + $0x78] sm:$0xff]
        %v5944 = vld [vmem:[%s5932 + $0x80] sm:$0xff]
        %v5945 = vld [vmem:[%s5932 + $0x90] sm:$0xff]
        %v5946 = vld [vmem:[%s5932 + $0x98] sm:$0xff]
        %v5947 = vld [vmem:[%s5932 + $0xa8] sm:$0xff]
        %v5948 = vld [vmem:[%s5932 + $0xb0] sm:$0xff]
        %v5949 = vld [vmem:[%s5932 + $0xc0] sm:$0xff]
        %v5950 = vld [vmem:[%s5932 + $0xc8] sm:$0xff]
        %v5951 = vld [vmem:[%s5932 + $0xd8] sm:$0xff]
        %v5952 = vld [vmem:[%s5932 + $0xe0] sm:$0xff]
        %v5953 = vld [vmem:[%s5932 + $0xf0] sm:$0xff]
        %v5954 = vld [vmem:[%s5932 + $0xf8] sm:$0xff]
        %v5955 = vld [vmem:[%s5932 + $0x108] sm:$0xff]
        %v5956 = vld [vmem:[%s5932 + $0x110] sm:$0xff]
        %v5957 = vld [vmem:[%s5932 + $0x120] sm:$0xff]
        %v5958 = vld [vmem:[%s5932 + $0x128] sm:$0xff]
        %v5959 = vld [vmem:[%s5932 + $0x138] sm:$0xff]
        %v5960 = vld [vmem:[%s5932 + $0x140] sm:$0xff]
        %v5961 = vld [vmem:[%s5932 + $0x150] sm:$0xff]
        %v5962 = vld [vmem:[%s5932 + $0x158] sm:$0xff]
        %v5963 = vld [vmem:[%s5932 + $0x168] sm:$0xff]
        %v5964 = vld [vmem:[%s5932 + $0x170] sm:$0xff]
        %s5965 = scalar_lea.vmem [#allocation4], 768
        %v5966 = vld [vmem:[%s5965] sm:$0xff]
        %v5967 = vld [vmem:[%s5965 + $0x8] sm:$0xff]
        %v5968 = vld [vmem:[%s5965 + $0x10] sm:$0xff]
        %v5969 = vld [vmem:[%s5965 + $0x18] sm:$0xff]
        %v5970 = vld [vmem:[%s5965 + $0x20] sm:$0xff]
        %v5971 = vld [vmem:[%s5965 + $0x28] sm:$0xff]
        %v5972 = vld [vmem:[%s5965 + $0x30] sm:$0xff]
        %v5973 = vld [vmem:[%s5965 + $0x38] sm:$0xff]
        %v5974 = vld [vmem:[%s5965 + $0x40] sm:$0xff]
        %v5975 = vld [vmem:[%s5965 + $0x48] sm:$0xff]
        %v5976 = vld [vmem:[%s5965 + $0x50] sm:$0xff]
        %v5977 = vld [vmem:[%s5965 + $0x58] sm:$0xff]
        %v5978 = vld [vmem:[%s5965 + $0x60] sm:$0xff]
        %v5979 = vld [vmem:[%s5965 + $0x68] sm:$0xff]
        %v5980 = vld [vmem:[%s5965 + $0x70] sm:$0xff]
        %v5981 = vld [vmem:[%s5965 + $0x78] sm:$0xff]
        %5982 = vmatprep.subr.mxu0 0.0
        %5983 = vmatpush1.msra.mxu0 %v5966
        %5984 = vmatprep.subr.mxu0 0.0
        %5985 = vmatpush1.msra.mxu0 %v5967
        %5986 = vmatprep.subr.mxu0 0.0
        %5987 = vmatpush1.msra.mxu0 %v5968
        %5988 = vmatprep.subr.mxu0 0.0
        %5989 = vmatpush1.msra.mxu0 %v5969
        %5990 = vmatprep.subr.mxu0 0.0
        %5991 = vmatpush1.msra.mxu0 %v5970
        %5992 = vmatprep.subr.mxu0 0.0
        %5993 = vmatpush1.msra.mxu0 %v5971
        %5994 = vmatprep.subr.mxu0 0.0
        %5995 = vmatpush1.msra.mxu0 %v5972
        %5996 = vmatprep.subr.mxu0 0.0
        %5997 = vmatpush1.msra.mxu0 %v5973
        %5998 = vmatprep.subr.mxu0 0.0
        %5999 = vmatpush1.msra.mxu0 %v5974
        %6000 = vmatprep.subr.mxu0 0.0
        %6001 = vmatpush1.msra.mxu0 %v5975
        %6002 = vmatprep.subr.mxu0 0.0
        %6003 = vmatpush1.msra.mxu0 %v5976
        %6004 = vmatprep.subr.mxu0 0.0
        %6005 = vmatpush1.msra.mxu0 %v5977
        %6006 = vmatprep.subr.mxu0 0.0
        %6007 = vmatpush1.msra.mxu0 %v5978
        %6008 = vmatprep.subr.mxu0 0.0
        %6009 = vmatpush1.msra.mxu0 %v5979
        %6010 = vmatprep.subr.mxu0 0.0
        %6011 = vmatpush1.msra.mxu0 %v5980
        %6012 = vmatprep.subr.mxu0 0.0
        %6013 = vmatpush1.msra.mxu0 %v5981
        %6014 = vmatprep.subr.mxu0 0.0
        %6015 = vmatpush1.msra.mxu0 0.0
        %6016 = vmatprep.subr.mxu0 0.0
        %6017 = vmatpush1.msra.mxu0 0.0
        %6018 = vmatprep.subr.mxu0 0.0
        %6019 = vmatpush1.msra.mxu0 0.0
        %6020 = vmatprep.subr.mxu0 0.0
        %6021 = vmatpush1.msra.mxu0 0.0
        %6022 = vmatprep.subr.mxu0 0.0
        %6023 = vmatpush1.msra.mxu0 0.0
        %6024 = vmatprep.subr.mxu0 0.0
        %6025 = vmatpush1.msra.mxu0 0.0
        %6026 = vmatprep.subr.mxu0 0.0
        %6027 = vmatpush1.msra.mxu0 0.0
        %6028 = vmatprep.subr.mxu0 0.0
        %6029 = vmatpush1.msra.mxu0 0.0
        %6030 = vmatprep.subr.mxu0 0.0
        %6031 = vmatpush1.msra.mxu0 0.0
        %6032 = vmatprep.subr.mxu0 0.0
        %6033 = vmatpush1.msra.mxu0 0.0
        %6034 = vmatprep.subr.mxu0 0.0
        %6035 = vmatpush1.msra.mxu0 0.0
        %6036 = vmatprep.subr.mxu0 0.0
        %6037 = vmatpush1.msra.mxu0 0.0
        %6038 = vmatprep.subr.mxu0 0.0
        %6039 = vmatpush1.msra.mxu0 0.0
        %6040 = vmatprep.subr.mxu0 0.0
        %6041 = vmatpush1.msra.mxu0 0.0
        %6042 = vmatprep.subr.mxu0 0.0
        %6043 = vmatpush1.msra.mxu0 0.0
        %6044 = vmatprep.subr.mxu0 0.0
        %6045 = vmatpush1.msra.mxu0 0.0
        %6046 = vmatprep.mubr.f32.mxu0 0.0
        %6047 = vmatmul.mubr.f32.gmra.mrb[0].mxu0 %v5933
        %v6048 = vpop.f32.mrb[0].mxu0
        %v6049 = vadd.f32 0.0, %v6048
        %v6050 = vpop.f32.mrb[0].mxu0
        %6051 = vmatprep.mubr.f32.mxu0 0.0
        %6052 = vmatmul.mubr.f32.gmra.mrb[0].mxu0 %v5934
        %v6053 = vpop.f32.mrb[0].mxu0
        %v6054 = vadd.f32 0.0, %v6053
        %v6055 = vpop.f32.mrb[0].mxu0
        %6056 = vmatprep.mubr.f32.mxu0 0.0
        %6057 = vmatmul.mubr.f32.gmra.mrb[0].mxu0 %v5935
        %v6058 = vpop.f32.mrb[0].mxu0
        %v6059 = vadd.f32 0.0, %v6058
        %v6060 = vpop.f32.mrb[0].mxu0
        %6061 = vmatprep.mubr.f32.mxu0 0.0
        %6062 = vmatmul.mubr.f32.gmra.mrb[0].mxu0 %v5936
        %v6063 = vpop.f32.mrb[0].mxu0
        %v6064 = vadd.f32 0.0, %v6063
        %v6065 = vpop.f32.mrb[0].mxu0
        %6066 = vmatprep.mubr.f32.mxu0 0.0
        %6067 = vmatmul.mubr.f32.gmra.mrb[0].mxu0 %v5937
        %v6068 = vpop.f32.mrb[0].mxu0
        %v6069 = vadd.f32 0.0, %v6068
        %v6070 = vpop.f32.mrb[0].mxu0
        %6071 = vmatprep.mubr.f32.mxu0 0.0
        %6072 = vmatmul.mubr.f32.gmra.mrb[0].mxu0 %v5938
        %v6073 = vpop.f32.mrb[0].mxu0
        %v6074 = vadd.f32 0.0, %v6073
        %v6075 = vpop.f32.mrb[0].mxu0
        %6076 = vmatprep.mubr.f32.mxu0 0.0
        %6077 = vmatmul.mubr.f32.gmra.mrb[0].mxu0 %v5939
        %v6078 = vpop.f32.mrb[0].mxu0
        %v6079 = vadd.f32 0.0, %v6078
        %v6080 = vpop.f32.mrb[0].mxu0
        %6081 = vmatprep.mubr.f32.mxu0 0.0
        %6082 = vmatmul.mubr.f32.gmra.mrb[0].mxu0 %v5940
        %v6083 = vpop.f32.mrb[0].mxu0
        %v6084 = vadd.f32 0.0, %v6083
        %v6085 = vpop.f32.mrb[0].mxu0
        %6086 = vmatprep.mubr.f32.mxu0 0.0
        %6087 = vmatmul.mubr.f32.gmra.mrb[0].mxu0 %v5941
        %v6088 = vpop.f32.mrb[0].mxu0
        %v6089 = vadd.f32 0.0, %v6088
        %v6090 = vpop.f32.mrb[0].mxu0
        %6091 = vmatprep.mubr.f32.mxu0 0.0
        %6092 = vmatmul.mubr.f32.gmra.mrb[0].mxu0 %v5942
        %v6093 = vpop.f32.mrb[0].mxu0
        %v6094 = vadd.f32 0.0, %v6093
        %v6095 = vpop.f32.mrb[0].mxu0
        %6096 = vmatprep.mubr.f32.mxu0 0.0
        %6097 = vmatmul.mubr.f32.gmra.mrb[0].mxu0 %v5943
        %v6098 = vpop.f32.mrb[0].mxu0
        %v6099 = vadd.f32 0.0, %v6098
        %v6100 = vpop.f32.mrb[0].mxu0
        %6101 = vmatprep.mubr.f32.mxu0 0.0
        %6102 = vmatmul.mubr.f32.gmra.mrb[0].mxu0 %v5944
        %v6103 = vpop.f32.mrb[0].mxu0
        %v6104 = vadd.f32 0.0, %v6103
        %v6105 = vpop.f32.mrb[0].mxu0
        %6106 = vmatprep.mubr.f32.mxu0 0.0
        %6107 = vmatmul.mubr.f32.gmra.mrb[0].mxu0 %v5945
        %v6108 = vpop.f32.mrb[0].mxu0
        %v6109 = vadd.f32 0.0, %v6108
        %v6110 = vpop.f32.mrb[0].mxu0
        %6111 = vmatprep.mubr.f32.mxu0 0.0
        %6112 = vmatmul.mubr.f32.gmra.mrb[0].mxu0 %v5946
        %v6113 = vpop.f32.mrb[0].mxu0
        %v6114 = vadd.f32 0.0, %v6113
        %v6115 = vpop.f32.mrb[0].mxu0
        %6116 = vmatprep.mubr.f32.mxu0 0.0
        %6117 = vmatmul.mubr.f32.gmra.mrb[0].mxu0 %v5947
        %v6118 = vpop.f32.mrb[0].mxu0
        %v6119 = vadd.f32 0.0, %v6118
        %v6120 = vpop.f32.mrb[0].mxu0
        %6121 = vmatprep.mubr.f32.mxu0 0.0
        %6122 = vmatmul.mubr.f32.gmra.mrb[0].mxu0 %v5948
        %v6123 = vpop.f32.mrb[0].mxu0
        %v6124 = vadd.f32 0.0, %v6123
        %v6125 = vpop.f32.mrb[0].mxu0
        %6126 = vmatprep.mubr.f32.mxu0 0.0
        %6127 = vmatmul.mubr.f32.gmra.mrb[0].mxu0 %v5949
        %v6128 = vpop.f32.mrb[0].mxu0
        %v6129 = vadd.f32 0.0, %v6128
        %v6130 = vpop.f32.mrb[0].mxu0
        %6131 = vmatprep.mubr.f32.mxu0 0.0
        %6132 = vmatmul.mubr.f32.gmra.mrb[0].mxu0 %v5950
        %v6133 = vpop.f32.mrb[0].mxu0
        %v6134 = vadd.f32 0.0, %v6133
        %v6135 = vpop.f32.mrb[0].mxu0
        %6136 = vmatprep.mubr.f32.mxu0 0.0
        %6137 = vmatmul.mubr.f32.gmra.mrb[0].mxu0 %v5951
        %v6138 = vpop.f32.mrb[0].mxu0
        %v6139 = vadd.f32 0.0, %v6138
        %v6140 = vpop.f32.mrb[0].mxu0
        %6141 = vmatprep.mubr.f32.mxu0 0.0
        %6142 = vmatmul.mubr.f32.gmra.mrb[0].mxu0 %v5952
        %v6143 = vpop.f32.mrb[0].mxu0
        %v6144 = vadd.f32 0.0, %v6143
        %v6145 = vpop.f32.mrb[0].mxu0
        %6146 = vmatprep.mubr.f32.mxu0 0.0
        %6147 = vmatmul.mubr.f32.gmra.mrb[0].mxu0 %v5953
        %v6148 = vpop.f32.mrb[0].mxu0
        %v6149 = vadd.f32 0.0, %v6148
        %v6150 = vpop.f32.mrb[0].mxu0
        %6151 = vmatprep.mubr.f32.mxu0 0.0
        %6152 = vmatmul.mubr.f32.gmra.mrb[0].mxu0 %v5954
        %v6153 = vpop.f32.mrb[0].mxu0
        %v6154 = vadd.f32 0.0, %v6153
        %v6155 = vpop.f32.mrb[0].mxu0
        %6156 = vmatprep.mubr.f32.mxu0 0.0
        %6157 = vmatmul.mubr.f32.gmra.mrb[0].mxu0 %v5955
        %v6158 = vpop.f32.mrb[0].mxu0
        %v6159 = vadd.f32 0.0, %v6158
        %v6160 = vpop.f32.mrb[0].mxu0
        %6161 = vmatprep.mubr.f32.mxu0 0.0
        %6162 = vmatmul.mubr.f32.gmra.mrb[0].mxu0 %v5956
        %v6163 = vpop.f32.mrb[0].mxu0
        %v6164 = vadd.f32 0.0, %v6163
        %v6165 = vpop.f32.mrb[0].mxu0
        %6166 = vmatprep.mubr.f32.mxu0 0.0
        %6167 = vmatmul.mubr.f32.gmra.mrb[0].mxu0 %v5957
        %v6168 = vpop.f32.mrb[0].mxu0
        %v6169 = vadd.f32 0.0, %v6168
        %v6170 = vpop.f32.mrb[0].mxu0
        %6171 = vmatprep.mubr.f32.mxu0 0.0
        %6172 = vmatmul.mubr.f32.gmra.mrb[0].mxu0 %v5958
        %v6173 = vpop.f32.mrb[0].mxu0
        %v6174 = vadd.f32 0.0, %v6173
        %v6175 = vpop.f32.mrb[0].mxu0
        %6176 = vmatprep.mubr.f32.mxu0 0.0
        %6177 = vmatmul.mubr.f32.gmra.mrb[0].mxu0 %v5959
        %v6178 = vpop.f32.mrb[0].mxu0
        %v6179 = vadd.f32 0.0, %v6178
        %v6180 = vpop.f32.mrb[0].mxu0
        %6181 = vmatprep.mubr.f32.mxu0 0.0
        %6182 = vmatmul.mubr.f32.gmra.mrb[0].mxu0 %v5960
        %v6183 = vpop.f32.mrb[0].mxu0
        %v6184 = vadd.f32 0.0, %v6183
        %v6185 = vpop.f32.mrb[0].mxu0
        %6186 = vmatprep.mubr.f32.mxu0 0.0
        %6187 = vmatmul.mubr.f32.gmra.mrb[0].mxu0 %v5961
        %v6188 = vpop.f32.mrb[0].mxu0
        %v6189 = vadd.f32 0.0, %v6188
        %v6190 = vpop.f32.mrb[0].mxu0
        %6191 = vmatprep.mubr.f32.mxu0 0.0
        %6192 = vmatmul.mubr.f32.gmra.mrb[0].mxu0 %v5962
        %v6193 = vpop.f32.mrb[0].mxu0
        %v6194 = vadd.f32 0.0, %v6193
        %v6195 = vpop.f32.mrb[0].mxu0
        %6196 = vmatprep.mubr.f32.mxu0 0.0
        %6197 = vmatmul.mubr.f32.gmra.mrb[0].mxu0 %v5963
        %v6198 = vpop.f32.mrb[0].mxu0
        %v6199 = vadd.f32 0.0, %v6198
        %v6200 = vpop.f32.mrb[0].mxu0
        %6201 = vmatprep.mubr.f32.mxu0 0.0
        %6202 = vmatmul.mubr.f32.gmra.mrb[0].mxu0 %v5964
        %v6203 = vpop.f32.mrb[0].mxu0
        %v6204 = vadd.f32 0.0, %v6203
        %v6205 = vpop.f32.mrb[0].mxu0
        %6206 = vdwg.mxu0
        %v6207 = vld [vmem:[#allocation3] sm:$0xff]
        %v6208 = vld [vmem:[#allocation3 + $0x8] sm:$0xff]
        %v6209 = vld [vmem:[#allocation3 + $0x10] sm:$0xff]
        %v6210 = vld [vmem:[#allocation3 + $0x18] sm:$0xff]
        %v6211 = vld [vmem:[#allocation3 + $0x20] sm:$0xff]
        %v6212 = vld [vmem:[#allocation3 + $0x28] sm:$0xff]
        %v6213 = vld [vmem:[#allocation3 + $0x30] sm:$0xff]
        %v6214 = vld [vmem:[#allocation3 + $0x38] sm:$0xff]
        %v6215 = vld [vmem:[#allocation3 + $0x40] sm:$0xff]
        %v6216 = vld [vmem:[#allocation3 + $0x48] sm:$0xff]
        %v6217 = vld [vmem:[#allocation3 + $0x50] sm:$0xff]
        %v6218 = vld [vmem:[#allocation3 + $0x58] sm:$0xff]
        %v6219 = vld [vmem:[#allocation3 + $0x60] sm:$0xff]
        %v6220 = vld [vmem:[#allocation3 + $0x68] sm:$0xff]
        %v6221 = vld [vmem:[#allocation3 + $0x70] sm:$0xff]
        %v6222 = vld [vmem:[#allocation3 + $0x78] sm:$0xff]
        %v6223 = vld [vmem:[#allocation3 + $0x80] sm:$0xff]
        %v6224 = vld [vmem:[#allocation3 + $0x88] sm:$0xff]
        %v6225 = vld [vmem:[#allocation3 + $0x90] sm:$0xff]
        %v6226 = vld [vmem:[#allocation3 + $0x98] sm:$0xff]
        %v6227 = vld [vmem:[#allocation3 + $0xa0] sm:$0xff]
        %v6228 = vld [vmem:[#allocation3 + $0xa8] sm:$0xff]
        %v6229 = vld [vmem:[#allocation3 + $0xb0] sm:$0xff]
        %v6230 = vld [vmem:[#allocation3 + $0xb8] sm:$0xff]
        %v6231 = vld [vmem:[#allocation3 + $0xc0] sm:$0xff]
        %v6232 = vld [vmem:[#allocation3 + $0xc8] sm:$0xff]
        %v6233 = vld [vmem:[#allocation3 + $0xd0] sm:$0xff]
        %v6234 = vld [vmem:[#allocation3 + $0xd8] sm:$0xff]
        %v6235 = vld [vmem:[#allocation3 + $0xe0] sm:$0xff]
        %v6236 = vld [vmem:[#allocation3 + $0xe8] sm:$0xff]
        %v6237 = vld [vmem:[#allocation3 + $0xf0] sm:$0xff]
        %v6238 = vld [vmem:[#allocation3 + $0xf8] sm:$0xff]
        %v6239 = vadd.f32 %v6207, %v6049
        %v6240 = vadd.f32 %v6208, %v6054
        %v6241 = vadd.f32 %v6209, %v6059
        %v6242 = vadd.f32 %v6210, %v6064
        %v6243 = vadd.f32 %v6211, %v6069
        %v6244 = vadd.f32 %v6212, %v6074
        %v6245 = vadd.f32 %v6213, %v6079
        %v6246 = vadd.f32 %v6214, %v6084
        %v6247 = vadd.f32 %v6215, %v6089
        %v6248 = vadd.f32 %v6216, %v6094
        %v6249 = vadd.f32 %v6217, %v6099
        %v6250 = vadd.f32 %v6218, %v6104
        %v6251 = vadd.f32 %v6219, %v6109
        %v6252 = vadd.f32 %v6220, %v6114
        %v6253 = vadd.f32 %v6221, %v6119
        %v6254 = vadd.f32 %v6222, %v6124
        %v6255 = vadd.f32 %v6223, %v6129
        %v6256 = vadd.f32 %v6224, %v6134
        %v6257 = vadd.f32 %v6225, %v6139
        %v6258 = vadd.f32 %v6226, %v6144
        %v6259 = vadd.f32 %v6227, %v6149
        %v6260 = vadd.f32 %v6228, %v6154
        %v6261 = vadd.f32 %v6229, %v6159
        %v6262 = vadd.f32 %v6230, %v6164
        %v6263 = vadd.f32 %v6231, %v6169
        %v6264 = vadd.f32 %v6232, %v6174
        %v6265 = vadd.f32 %v6233, %v6179
        %v6266 = vadd.f32 %v6234, %v6184
        %v6267 = vadd.f32 %v6235, %v6189
        %v6268 = vadd.f32 %v6236, %v6194
        %v6269 = vadd.f32 %v6237, %v6199
        %v6270 = vadd.f32 %v6238, %v6204
        %6271 = vst [vmem:[#allocation3] sm:$0xff] %v6239
        %6272 = vst [vmem:[#allocation3 + $0x8] sm:$0xff] %v6240
        %6273 = vst [vmem:[#allocation3 + $0x10] sm:$0xff] %v6241
        %6274 = vst [vmem:[#allocation3 + $0x18] sm:$0xff] %v6242
        %6275 = vst [vmem:[#allocation3 + $0x20] sm:$0xff] %v6243
        %6276 = vst [vmem:[#allocation3 + $0x28] sm:$0xff] %v6244
        %6277 = vst [vmem:[#allocation3 + $0x30] sm:$0xff] %v6245
        %6278 = vst [vmem:[#allocation3 + $0x38] sm:$0xff] %v6246
        %6279 = vst [vmem:[#allocation3 + $0x40] sm:$0xff] %v6247
        %6280 = vst [vmem:[#allocation3 + $0x48] sm:$0xff] %v6248
        %6281 = vst [vmem:[#allocation3 + $0x50] sm:$0xff] %v6249
        %6282 = vst [vmem:[#allocation3 + $0x58] sm:$0xff] %v6250
        %6283 = vst [vmem:[#allocation3 + $0x60] sm:$0xff] %v6251
        %6284 = vst [vmem:[#allocation3 + $0x68] sm:$0xff] %v6252
        %6285 = vst [vmem:[#allocation3 + $0x70] sm:$0xff] %v6253
        %6286 = vst [vmem:[#allocation3 + $0x78] sm:$0xff] %v6254
        %6287 = vst [vmem:[#allocation3 + $0x80] sm:$0xff] %v6255
        %6288 = vst [vmem:[#allocation3 + $0x88] sm:$0xff] %v6256
        %6289 = vst [vmem:[#allocation3 + $0x90] sm:$0xff] %v6257
        %6290 = vst [vmem:[#allocation3 + $0x98] sm:$0xff] %v6258
        %6291 = vst [vmem:[#allocation3 + $0xa0] sm:$0xff] %v6259
        %6292 = vst [vmem:[#allocation3 + $0xa8] sm:$0xff] %v6260
        %6293 = vst [vmem:[#allocation3 + $0xb0] sm:$0xff] %v6261
        %6294 = vst [vmem:[#allocation3 + $0xb8] sm:$0xff] %v6262
        %6295 = vst [vmem:[#allocation3 + $0xc0] sm:$0xff] %v6263
        %6296 = vst [vmem:[#allocation3 + $0xc8] sm:$0xff] %v6264
        %6297 = vst [vmem:[#allocation3 + $0xd0] sm:$0xff] %v6265
        %6298 = vst [vmem:[#allocation3 + $0xd8] sm:$0xff] %v6266
        %6299 = vst [vmem:[#allocation3 + $0xe0] sm:$0xff] %v6267
        %6300 = vst [vmem:[#allocation3 + $0xe8] sm:$0xff] %v6268
        %6301 = vst [vmem:[#allocation3 + $0xf0] sm:$0xff] %v6269
        %6302 = vst [vmem:[#allocation3 + $0xf8] sm:$0xff] %v6270
        %v6303 = vld [vmem:[%s5932 + $0x1] sm:$0xff]
        %v6304 = vld [vmem:[%s5932 + $0x9] sm:$0xff]
        %v6305 = vld [vmem:[%s5932 + $0x19] sm:$0xff]
        %v6306 = vld [vmem:[%s5932 + $0x21] sm:$0xff]
        %v6307 = vld [vmem:[%s5932 + $0x31] sm:$0xff]
        %v6308 = vld [vmem:[%s5932 + $0x39] sm:$0xff]
        %v6309 = vld [vmem:[%s5932 + $0x49] sm:$0xff]
        %v6310 = vld [vmem:[%s5932 + $0x51] sm:$0xff]
        %v6311 = vld [vmem:[%s5932 + $0x61] sm:$0xff]
        %v6312 = vld [vmem:[%s5932 + $0x69] sm:$0xff]
        %v6313 = vld [vmem:[%s5932 + $0x79] sm:$0xff]
        %v6314 = vld [vmem:[%s5932 + $0x81] sm:$0xff]
        %v6315 = vld [vmem:[%s5932 + $0x91] sm:$0xff]
        %v6316 = vld [vmem:[%s5932 + $0x99] sm:$0xff]
        %v6317 = vld [vmem:[%s5932 + $0xa9] sm:$0xff]
        %v6318 = vld [vmem:[%s5932 + $0xb1] sm:$0xff]
        %v6319 = vld [vmem:[%s5932 + $0xc1] sm:$0xff]
        %v6320 = vld [vmem:[%s5932 + $0xc9] sm:$0xff]
        %v6321 = vld [vmem:[%s5932 + $0xd9] sm:$0xff]
        %v6322 = vld [vmem:[%s5932 + $0xe1] sm:$0xff]
        %v6323 = vld [vmem:[%s5932 + $0xf1] sm:$0xff]
        %v6324 = vld [vmem:[%s5932 + $0xf9] sm:$0xff]
        %v6325 = vld [vmem:[%s5932 + $0x109] sm:$0xff]
        %v6326 = vld [vmem:[%s5932 + $0x111] sm:$0xff]
        %v6327 = vld [vmem:[%s5932 + $0x121] sm:$0xff]
        %v6328 = vld [vmem:[%s5932 + $0x129] sm:$0xff]
        %v6329 = vld [vmem:[%s5932 + $0x139] sm:$0xff]
        %v6330 = vld [vmem:[%s5932 + $0x141] sm:$0xff]
        %v6331 = vld [vmem:[%s5932 + $0x151] sm:$0xff]
        %v6332 = vld [vmem:[%s5932 + $0x159] sm:$0xff]
        %v6333 = vld [vmem:[%s5932 + $0x169] sm:$0xff]
        %v6334 = vld [vmem:[%s5932 + $0x171] sm:$0xff]
        %s6335 = scalar_lea.vmem [#allocation4], 896
        %v6336 = vld [vmem:[%s6335] sm:$0xff]
        %v6337 = vld [vmem:[%s6335 + $0x8] sm:$0xff]
        %v6338 = vld [vmem:[%s6335 + $0x10] sm:$0xff]
        %v6339 = vld [vmem:[%s6335 + $0x18] sm:$0xff]
        %v6340 = vld [vmem:[%s6335 + $0x20] sm:$0xff]
        %v6341 = vld [vmem:[%s6335 + $0x28] sm:$0xff]
        %v6342 = vld [vmem:[%s6335 + $0x30] sm:$0xff]
        %v6343 = vld [vmem:[%s6335 + $0x38] sm:$0xff]
        %v6344 = vld [vmem:[%s6335 + $0x40] sm:$0xff]
        %v6345 = vld [vmem:[%s6335 + $0x48] sm:$0xff]
        %v6346 = vld [vmem:[%s6335 + $0x50] sm:$0xff]
        %v6347 = vld [vmem:[%s6335 + $0x58] sm:$0xff]
        %v6348 = vld [vmem:[%s6335 + $0x60] sm:$0xff]
        %v6349 = vld [vmem:[%s6335 + $0x68] sm:$0xff]
        %v6350 = vld [vmem:[%s6335 + $0x70] sm:$0xff]
        %v6351 = vld [vmem:[%s6335 + $0x78] sm:$0xff]
        %6352 = vmatprep.subr.mxu0 0.0
        %6353 = vmatpush1.msra.mxu0 %v6336
        %6354 = vmatprep.subr.mxu0 0.0
        %6355 = vmatpush1.msra.mxu0 %v6337
        %6356 = vmatprep.subr.mxu0 0.0
        %6357 = vmatpush1.msra.mxu0 %v6338
        %6358 = vmatprep.subr.mxu0 0.0
        %6359 = vmatpush1.msra.mxu0 %v6339
        %6360 = vmatprep.subr.mxu0 0.0
        %6361 = vmatpush1.msra.mxu0 %v6340
        %6362 = vmatprep.subr.mxu0 0.0
        %6363 = vmatpush1.msra.mxu0 %v6341
        %6364 = vmatprep.subr.mxu0 0.0
        %6365 = vmatpush1.msra.mxu0 %v6342
        %6366 = vmatprep.subr.mxu0 0.0
        %6367 = vmatpush1.msra.mxu0 %v6343
        %6368 = vmatprep.subr.mxu0 0.0
        %6369 = vmatpush1.msra.mxu0 %v6344
        %6370 = vmatprep.subr.mxu0 0.0
        %6371 = vmatpush1.msra.mxu0 %v6345
        %6372 = vmatprep.subr.mxu0 0.0
        %6373 = vmatpush1.msra.mxu0 %v6346
        %6374 = vmatprep.subr.mxu0 0.0
        %6375 = vmatpush1.msra.mxu0 %v6347
        %6376 = vmatprep.subr.mxu0 0.0
        %6377 = vmatpush1.msra.mxu0 %v6348
        %6378 = vmatprep.subr.mxu0 0.0
        %6379 = vmatpush1.msra.mxu0 %v6349
        %6380 = vmatprep.subr.mxu0 0.0
        %6381 = vmatpush1.msra.mxu0 %v6350
        %6382 = vmatprep.subr.mxu0 0.0
        %6383 = vmatpush1.msra.mxu0 %v6351
        %6384 = vmatprep.subr.mxu0 0.0
        %6385 = vmatpush1.msra.mxu0 0.0
        %6386 = vmatprep.subr.mxu0 0.0
        %6387 = vmatpush1.msra.mxu0 0.0
        %6388 = vmatprep.subr.mxu0 0.0
        %6389 = vmatpush1.msra.mxu0 0.0
        %6390 = vmatprep.subr.mxu0 0.0
        %6391 = vmatpush1.msra.mxu0 0.0
        %6392 = vmatprep.subr.mxu0 0.0
        %6393 = vmatpush1.msra.mxu0 0.0
        %6394 = vmatprep.subr.mxu0 0.0
        %6395 = vmatpush1.msra.mxu0 0.0
        %6396 = vmatprep.subr.mxu0 0.0
        %6397 = vmatpush1.msra.mxu0 0.0
        %6398 = vmatprep.subr.mxu0 0.0
        %6399 = vmatpush1.msra.mxu0 0.0
        %6400 = vmatprep.subr.mxu0 0.0
        %6401 = vmatpush1.msra.mxu0 0.0
        %6402 = vmatprep.subr.mxu0 0.0
        %6403 = vmatpush1.msra.mxu0 0.0
        %6404 = vmatprep.subr.mxu0 0.0
        %6405 = vmatpush1.msra.mxu0 0.0
        %6406 = vmatprep.subr.mxu0 0.0
        %6407 = vmatpush1.msra.mxu0 0.0
        %6408 = vmatprep.subr.mxu0 0.0
        %6409 = vmatpush1.msra.mxu0 0.0
        %6410 = vmatprep.subr.mxu0 0.0
        %6411 = vmatpush1.msra.mxu0 0.0
        %6412 = vmatprep.subr.mxu0 0.0
        %6413 = vmatpush1.msra.mxu0 0.0
        %6414 = vmatprep.subr.mxu0 0.0
        %6415 = vmatpush1.msra.mxu0 0.0
        %6416 = vmatprep.mubr.f32.mxu0 0.0
        %6417 = vmatmul.mubr.f32.gmra.mrb[0].mxu0 %v6303
        %v6418 = vpop.f32.mrb[0].mxu0
        %v6419 = vadd.f32 0.0, %v6418
        %v6420 = vpop.f32.mrb[0].mxu0
        %6421 = vmatprep.mubr.f32.mxu0 0.0
        %6422 = vmatmul.mubr.f32.gmra.mrb[0].mxu0 %v6304
        %v6423 = vpop.f32.mrb[0].mxu0
        %v6424 = vadd.f32 0.0, %v6423
        %v6425 = vpop.f32.mrb[0].mxu0
        %6426 = vmatprep.mubr.f32.mxu0 0.0
        %6427 = vmatmul.mubr.f32.gmra.mrb[0].mxu0 %v6305
        %v6428 = vpop.f32.mrb[0].mxu0
        %v6429 = vadd.f32 0.0, %v6428
        %v6430 = vpop.f32.mrb[0].mxu0
        %6431 = vmatprep.mubr.f32.mxu0 0.0
        %6432 = vmatmul.mubr.f32.gmra.mrb[0].mxu0 %v6306
        %v6433 = vpop.f32.mrb[0].mxu0
        %v6434 = vadd.f32 0.0, %v6433
        %v6435 = vpop.f32.mrb[0].mxu0
        %6436 = vmatprep.mubr.f32.mxu0 0.0
        %6437 = vmatmul.mubr.f32.gmra.mrb[0].mxu0 %v6307
        %v6438 = vpop.f32.mrb[0].mxu0
        %v6439 = vadd.f32 0.0, %v6438
        %v6440 = vpop.f32.mrb[0].mxu0
        %6441 = vmatprep.mubr.f32.mxu0 0.0
        %6442 = vmatmul.mubr.f32.gmra.mrb[0].mxu0 %v6308
        %v6443 = vpop.f32.mrb[0].mxu0
        %v6444 = vadd.f32 0.0, %v6443
        %v6445 = vpop.f32.mrb[0].mxu0
        %6446 = vmatprep.mubr.f32.mxu0 0.0
        %6447 = vmatmul.mubr.f32.gmra.mrb[0].mxu0 %v6309
        %v6448 = vpop.f32.mrb[0].mxu0
        %v6449 = vadd.f32 0.0, %v6448
        %v6450 = vpop.f32.mrb[0].mxu0
        %6451 = vmatprep.mubr.f32.mxu0 0.0
        %6452 = vmatmul.mubr.f32.gmra.mrb[0].mxu0 %v6310
        %v6453 = vpop.f32.mrb[0].mxu0
        %v6454 = vadd.f32 0.0, %v6453
        %v6455 = vpop.f32.mrb[0].mxu0
        %6456 = vmatprep.mubr.f32.mxu0 0.0
        %6457 = vmatmul.mubr.f32.gmra.mrb[0].mxu0 %v6311
        %v6458 = vpop.f32.mrb[0].mxu0
        %v6459 = vadd.f32 0.0, %v6458
        %v6460 = vpop.f32.mrb[0].mxu0
        %6461 = vmatprep.mubr.f32.mxu0 0.0
        %6462 = vmatmul.mubr.f32.gmra.mrb[0].mxu0 %v6312
        %v6463 = vpop.f32.mrb[0].mxu0
        %v6464 = vadd.f32 0.0, %v6463
        %v6465 = vpop.f32.mrb[0].mxu0
        %6466 = vmatprep.mubr.f32.mxu0 0.0
        %6467 = vmatmul.mubr.f32.gmra.mrb[0].mxu0 %v6313
        %v6468 = vpop.f32.mrb[0].mxu0
        %v6469 = vadd.f32 0.0, %v6468
        %v6470 = vpop.f32.mrb[0].mxu0
        %6471 = vmatprep.mubr.f32.mxu0 0.0
        %6472 = vmatmul.mubr.f32.gmra.mrb[0].mxu0 %v6314
        %v6473 = vpop.f32.mrb[0].mxu0
        %v6474 = vadd.f32 0.0, %v6473
        %v6475 = vpop.f32.mrb[0].mxu0
        %6476 = vmatprep.mubr.f32.mxu0 0.0
        %6477 = vmatmul.mubr.f32.gmra.mrb[0].mxu0 %v6315
        %v6478 = vpop.f32.mrb[0].mxu0
        %v6479 = vadd.f32 0.0, %v6478
        %v6480 = vpop.f32.mrb[0].mxu0
        %6481 = vmatprep.mubr.f32.mxu0 0.0
        %6482 = vmatmul.mubr.f32.gmra.mrb[0].mxu0 %v6316
        %v6483 = vpop.f32.mrb[0].mxu0
        %v6484 = vadd.f32 0.0, %v6483
        %v6485 = vpop.f32.mrb[0].mxu0
        %6486 = vmatprep.mubr.f32.mxu0 0.0
        %6487 = vmatmul.mubr.f32.gmra.mrb[0].mxu0 %v6317
        %v6488 = vpop.f32.mrb[0].mxu0
        %v6489 = vadd.f32 0.0, %v6488
        %v6490 = vpop.f32.mrb[0].mxu0
        %6491 = vmatprep.mubr.f32.mxu0 0.0
        %6492 = vmatmul.mubr.f32.gmra.mrb[0].mxu0 %v6318
        %v6493 = vpop.f32.mrb[0].mxu0
        %v6494 = vadd.f32 0.0, %v6493
        %v6495 = vpop.f32.mrb[0].mxu0
        %6496 = vmatprep.mubr.f32.mxu0 0.0
        %6497 = vmatmul.mubr.f32.gmra.mrb[0].mxu0 %v6319
        %v6498 = vpop.f32.mrb[0].mxu0
        %v6499 = vadd.f32 0.0, %v6498
        %v6500 = vpop.f32.mrb[0].mxu0
        %6501 = vmatprep.mubr.f32.mxu0 0.0
        %6502 = vmatmul.mubr.f32.gmra.mrb[0].mxu0 %v6320
        %v6503 = vpop.f32.mrb[0].mxu0
        %v6504 = vadd.f32 0.0, %v6503
        %v6505 = vpop.f32.mrb[0].mxu0
        %6506 = vmatprep.mubr.f32.mxu0 0.0
        %6507 = vmatmul.mubr.f32.gmra.mrb[0].mxu0 %v6321
        %v6508 = vpop.f32.mrb[0].mxu0
        %v6509 = vadd.f32 0.0, %v6508
        %v6510 = vpop.f32.mrb[0].mxu0
        %6511 = vmatprep.mubr.f32.mxu0 0.0
        %6512 = vmatmul.mubr.f32.gmra.mrb[0].mxu0 %v6322
        %v6513 = vpop.f32.mrb[0].mxu0
        %v6514 = vadd.f32 0.0, %v6513
        %v6515 = vpop.f32.mrb[0].mxu0
        %6516 = vmatprep.mubr.f32.mxu0 0.0
        %6517 = vmatmul.mubr.f32.gmra.mrb[0].mxu0 %v6323
        %v6518 = vpop.f32.mrb[0].mxu0
        %v6519 = vadd.f32 0.0, %v6518
        %v6520 = vpop.f32.mrb[0].mxu0
        %6521 = vmatprep.mubr.f32.mxu0 0.0
        %6522 = vmatmul.mubr.f32.gmra.mrb[0].mxu0 %v6324
        %v6523 = vpop.f32.mrb[0].mxu0
        %v6524 = vadd.f32 0.0, %v6523
        %v6525 = vpop.f32.mrb[0].mxu0
        %6526 = vmatprep.mubr.f32.mxu0 0.0
        %6527 = vmatmul.mubr.f32.gmra.mrb[0].mxu0 %v6325
        %v6528 = vpop.f32.mrb[0].mxu0
        %v6529 = vadd.f32 0.0, %v6528
        %v6530 = vpop.f32.mrb[0].mxu0
        %6531 = vmatprep.mubr.f32.mxu0 0.0
        %6532 = vmatmul.mubr.f32.gmra.mrb[0].mxu0 %v6326
        %v6533 = vpop.f32.mrb[0].mxu0
        %v6534 = vadd.f32 0.0, %v6533
        %v6535 = vpop.f32.mrb[0].mxu0
        %6536 = vmatprep.mubr.f32.mxu0 0.0
        %6537 = vmatmul.mubr.f32.gmra.mrb[0].mxu0 %v6327
        %v6538 = vpop.f32.mrb[0].mxu0
        %v6539 = vadd.f32 0.0, %v6538
        %v6540 = vpop.f32.mrb[0].mxu0
        %6541 = vmatprep.mubr.f32.mxu0 0.0
        %6542 = vmatmul.mubr.f32.gmra.mrb[0].mxu0 %v6328
        %v6543 = vpop.f32.mrb[0].mxu0
        %v6544 = vadd.f32 0.0, %v6543
        %v6545 = vpop.f32.mrb[0].mxu0
        %6546 = vmatprep.mubr.f32.mxu0 0.0
        %6547 = vmatmul.mubr.f32.gmra.mrb[0].mxu0 %v6329
        %v6548 = vpop.f32.mrb[0].mxu0
        %v6549 = vadd.f32 0.0, %v6548
        %v6550 = vpop.f32.mrb[0].mxu0
        %6551 = vmatprep.mubr.f32.mxu0 0.0
        %6552 = vmatmul.mubr.f32.gmra.mrb[0].mxu0 %v6330
        %v6553 = vpop.f32.mrb[0].mxu0
        %v6554 = vadd.f32 0.0, %v6553
        %v6555 = vpop.f32.mrb[0].mxu0
        %6556 = vmatprep.mubr.f32.mxu0 0.0
        %6557 = vmatmul.mubr.f32.gmra.mrb[0].mxu0 %v6331
        %v6558 = vpop.f32.mrb[0].mxu0
        %v6559 = vadd.f32 0.0, %v6558
        %v6560 = vpop.f32.mrb[0].mxu0
        %6561 = vmatprep.mubr.f32.mxu0 0.0
        %6562 = vmatmul.mubr.f32.gmra.mrb[0].mxu0 %v6332
        %v6563 = vpop.f32.mrb[0].mxu0
        %v6564 = vadd.f32 0.0, %v6563
        %v6565 = vpop.f32.mrb[0].mxu0
        %6566 = vmatprep.mubr.f32.mxu0 0.0
        %6567 = vmatmul.mubr.f32.gmra.mrb[0].mxu0 %v6333
        %v6568 = vpop.f32.mrb[0].mxu0
        %v6569 = vadd.f32 0.0, %v6568
        %v6570 = vpop.f32.mrb[0].mxu0
        %6571 = vmatprep.mubr.f32.mxu0 0.0
        %6572 = vmatmul.mubr.f32.gmra.mrb[0].mxu0 %v6334
        %v6573 = vpop.f32.mrb[0].mxu0
        %v6574 = vadd.f32 0.0, %v6573
        %v6575 = vpop.f32.mrb[0].mxu0
        %6576 = vdwg.mxu0
        %v6577 = vld [vmem:[#allocation3] sm:$0xff]
        %v6578 = vld [vmem:[#allocation3 + $0x8] sm:$0xff]
        %v6579 = vld [vmem:[#allocation3 + $0x10] sm:$0xff]
        %v6580 = vld [vmem:[#allocation3 + $0x18] sm:$0xff]
        %v6581 = vld [vmem:[#allocation3 + $0x20] sm:$0xff]
        %v6582 = vld [vmem:[#allocation3 + $0x28] sm:$0xff]
        %v6583 = vld [vmem:[#allocation3 + $0x30] sm:$0xff]
        %v6584 = vld [vmem:[#allocation3 + $0x38] sm:$0xff]
        %v6585 = vld [vmem:[#allocation3 + $0x40] sm:$0xff]
        %v6586 = vld [vmem:[#allocation3 + $0x48] sm:$0xff]
        %v6587 = vld [vmem:[#allocation3 + $0x50] sm:$0xff]
        %v6588 = vld [vmem:[#allocation3 + $0x58] sm:$0xff]
        %v6589 = vld [vmem:[#allocation3 + $0x60] sm:$0xff]
        %v6590 = vld [vmem:[#allocation3 + $0x68] sm:$0xff]
        %v6591 = vld [vmem:[#allocation3 + $0x70] sm:$0xff]
        %v6592 = vld [vmem:[#allocation3 + $0x78] sm:$0xff]
        %v6593 = vld [vmem:[#allocation3 + $0x80] sm:$0xff]
        %v6594 = vld [vmem:[#allocation3 + $0x88] sm:$0xff]
        %v6595 = vld [vmem:[#allocation3 + $0x90] sm:$0xff]
        %v6596 = vld [vmem:[#allocation3 + $0x98] sm:$0xff]
        %v6597 = vld [vmem:[#allocation3 + $0xa0] sm:$0xff]
        %v6598 = vld [vmem:[#allocation3 + $0xa8] sm:$0xff]
        %v6599 = vld [vmem:[#allocation3 + $0xb0] sm:$0xff]
        %v6600 = vld [vmem:[#allocation3 + $0xb8] sm:$0xff]
        %v6601 = vld [vmem:[#allocation3 + $0xc0] sm:$0xff]
        %v6602 = vld [vmem:[#allocation3 + $0xc8] sm:$0xff]
        %v6603 = vld [vmem:[#allocation3 + $0xd0] sm:$0xff]
        %v6604 = vld [vmem:[#allocation3 + $0xd8] sm:$0xff]
        %v6605 = vld [vmem:[#allocation3 + $0xe0] sm:$0xff]
        %v6606 = vld [vmem:[#allocation3 + $0xe8] sm:$0xff]
        %v6607 = vld [vmem:[#allocation3 + $0xf0] sm:$0xff]
        %v6608 = vld [vmem:[#allocation3 + $0xf8] sm:$0xff]
        %v6609 = vadd.f32 %v6577, %v6419
        %v6610 = vadd.f32 %v6578, %v6424
        %v6611 = vadd.f32 %v6579, %v6429
        %v6612 = vadd.f32 %v6580, %v6434
        %v6613 = vadd.f32 %v6581, %v6439
        %v6614 = vadd.f32 %v6582, %v6444
        %v6615 = vadd.f32 %v6583, %v6449
        %v6616 = vadd.f32 %v6584, %v6454
        %v6617 = vadd.f32 %v6585, %v6459
        %v6618 = vadd.f32 %v6586, %v6464
        %v6619 = vadd.f32 %v6587, %v6469
        %v6620 = vadd.f32 %v6588, %v6474
        %v6621 = vadd.f32 %v6589, %v6479
        %v6622 = vadd.f32 %v6590, %v6484
        %v6623 = vadd.f32 %v6591, %v6489
        %v6624 = vadd.f32 %v6592, %v6494
        %v6625 = vadd.f32 %v6593, %v6499
        %v6626 = vadd.f32 %v6594, %v6504
        %v6627 = vadd.f32 %v6595, %v6509
        %v6628 = vadd.f32 %v6596, %v6514
        %v6629 = vadd.f32 %v6597, %v6519
        %v6630 = vadd.f32 %v6598, %v6524
        %v6631 = vadd.f32 %v6599, %v6529
        %v6632 = vadd.f32 %v6600, %v6534
        %v6633 = vadd.f32 %v6601, %v6539
        %v6634 = vadd.f32 %v6602, %v6544
        %v6635 = vadd.f32 %v6603, %v6549
        %v6636 = vadd.f32 %v6604, %v6554
        %v6637 = vadd.f32 %v6605, %v6559
        %v6638 = vadd.f32 %v6606, %v6564
        %v6639 = vadd.f32 %v6607, %v6569
        %v6640 = vadd.f32 %v6608, %v6574
        %6641 = vst [vmem:[#allocation3] sm:$0xff] %v6609
        %6642 = vst [vmem:[#allocation3 + $0x8] sm:$0xff] %v6610
        %6643 = vst [vmem:[#allocation3 + $0x10] sm:$0xff] %v6611
        %6644 = vst [vmem:[#allocation3 + $0x18] sm:$0xff] %v6612
        %6645 = vst [vmem:[#allocation3 + $0x20] sm:$0xff] %v6613
        %6646 = vst [vmem:[#allocation3 + $0x28] sm:$0xff] %v6614
        %6647 = vst [vmem:[#allocation3 + $0x30] sm:$0xff] %v6615
        %6648 = vst [vmem:[#allocation3 + $0x38] sm:$0xff] %v6616
        %6649 = vst [vmem:[#allocation3 + $0x40] sm:$0xff] %v6617
        %6650 = vst [vmem:[#allocation3 + $0x48] sm:$0xff] %v6618
        %6651 = vst [vmem:[#allocation3 + $0x50] sm:$0xff] %v6619
        %6652 = vst [vmem:[#allocation3 + $0x58] sm:$0xff] %v6620
        %6653 = vst [vmem:[#allocation3 + $0x60] sm:$0xff] %v6621
        %6654 = vst [vmem:[#allocation3 + $0x68] sm:$0xff] %v6622
        %6655 = vst [vmem:[#allocation3 + $0x70] sm:$0xff] %v6623
        %6656 = vst [vmem:[#allocation3 + $0x78] sm:$0xff] %v6624
        %6657 = vst [vmem:[#allocation3 + $0x80] sm:$0xff] %v6625
        %6658 = vst [vmem:[#allocation3 + $0x88] sm:$0xff] %v6626
        %6659 = vst [vmem:[#allocation3 + $0x90] sm:$0xff] %v6627
        %6660 = vst [vmem:[#allocation3 + $0x98] sm:$0xff] %v6628
        %6661 = vst [vmem:[#allocation3 + $0xa0] sm:$0xff] %v6629
        %6662 = vst [vmem:[#allocation3 + $0xa8] sm:$0xff] %v6630
        %6663 = vst [vmem:[#allocation3 + $0xb0] sm:$0xff] %v6631
        %6664 = vst [vmem:[#allocation3 + $0xb8] sm:$0xff] %v6632
        %6665 = vst [vmem:[#allocation3 + $0xc0] sm:$0xff] %v6633
        %6666 = vst [vmem:[#allocation3 + $0xc8] sm:$0xff] %v6634
        %6667 = vst [vmem:[#allocation3 + $0xd0] sm:$0xff] %v6635
        %6668 = vst [vmem:[#allocation3 + $0xd8] sm:$0xff] %v6636
        %6669 = vst [vmem:[#allocation3 + $0xe0] sm:$0xff] %v6637
        %6670 = vst [vmem:[#allocation3 + $0xe8] sm:$0xff] %v6638
        %6671 = vst [vmem:[#allocation3 + $0xf0] sm:$0xff] %v6639
        %6672 = vst [vmem:[#allocation3 + $0xf8] sm:$0xff] %v6640
        %v6673 = vld [vmem:[%s5932 + $0x2] sm:$0xff]
        %v6674 = vld [vmem:[%s5932 + $0xa] sm:$0xff]
        %v6675 = vld [vmem:[%s5932 + $0x1a] sm:$0xff]
        %v6676 = vld [vmem:[%s5932 + $0x22] sm:$0xff]
        %v6677 = vld [vmem:[%s5932 + $0x32] sm:$0xff]
        %v6678 = vld [vmem:[%s5932 + $0x3a] sm:$0xff]
        %v6679 = vld [vmem:[%s5932 + $0x4a] sm:$0xff]
        %v6680 = vld [vmem:[%s5932 + $0x52] sm:$0xff]
        %v6681 = vld [vmem:[%s5932 + $0x62] sm:$0xff]
        %v6682 = vld [vmem:[%s5932 + $0x6a] sm:$0xff]
        %v6683 = vld [vmem:[%s5932 + $0x7a] sm:$0xff]
        %v6684 = vld [vmem:[%s5932 + $0x82] sm:$0xff]
        %v6685 = vld [vmem:[%s5932 + $0x92] sm:$0xff]
        %v6686 = vld [vmem:[%s5932 + $0x9a] sm:$0xff]
        %v6687 = vld [vmem:[%s5932 + $0xaa] sm:$0xff]
        %v6688 = vld [vmem:[%s5932 + $0xb2] sm:$0xff]
        %v6689 = vld [vmem:[%s5932 + $0xc2] sm:$0xff]
        %v6690 = vld [vmem:[%s5932 + $0xca] sm:$0xff]
        %v6691 = vld [vmem:[%s5932 + $0xda] sm:$0xff]
        %v6692 = vld [vmem:[%s5932 + $0xe2] sm:$0xff]
        %v6693 = vld [vmem:[%s5932 + $0xf2] sm:$0xff]
        %v6694 = vld [vmem:[%s5932 + $0xfa] sm:$0xff]
        %v6695 = vld [vmem:[%s5932 + $0x10a] sm:$0xff]
        %v6696 = vld [vmem:[%s5932 + $0x112] sm:$0xff]
        %v6697 = vld [vmem:[%s5932 + $0x122] sm:$0xff]
        %v6698 = vld [vmem:[%s5932 + $0x12a] sm:$0xff]
        %v6699 = vld [vmem:[%s5932 + $0x13a] sm:$0xff]
        %v6700 = vld [vmem:[%s5932 + $0x142] sm:$0xff]
        %v6701 = vld [vmem:[%s5932 + $0x152] sm:$0xff]
        %v6702 = vld [vmem:[%s5932 + $0x15a] sm:$0xff]
        %v6703 = vld [vmem:[%s5932 + $0x16a] sm:$0xff]
        %v6704 = vld [vmem:[%s5932 + $0x172] sm:$0xff]
        %s6705 = scalar_lea.vmem [#allocation4], 1024
        %v6706 = vld [vmem:[%s6705] sm:$0xff]
        %v6707 = vld [vmem:[%s6705 + $0x8] sm:$0xff]
        %v6708 = vld [vmem:[%s6705 + $0x10] sm:$0xff]
        %v6709 = vld [vmem:[%s6705 + $0x18] sm:$0xff]
        %v6710 = vld [vmem:[%s6705 + $0x20] sm:$0xff]
        %v6711 = vld [vmem:[%s6705 + $0x28] sm:$0xff]
        %v6712 = vld [vmem:[%s6705 + $0x30] sm:$0xff]
        %v6713 = vld [vmem:[%s6705 + $0x38] sm:$0xff]
        %v6714 = vld [vmem:[%s6705 + $0x40] sm:$0xff]
        %v6715 = vld [vmem:[%s6705 + $0x48] sm:$0xff]
        %v6716 = vld [vmem:[%s6705 + $0x50] sm:$0xff]
        %v6717 = vld [vmem:[%s6705 + $0x58] sm:$0xff]
        %v6718 = vld [vmem:[%s6705 + $0x60] sm:$0xff]
        %v6719 = vld [vmem:[%s6705 + $0x68] sm:$0xff]
        %v6720 = vld [vmem:[%s6705 + $0x70] sm:$0xff]
        %v6721 = vld [vmem:[%s6705 + $0x78] sm:$0xff]
        %6722 = vmatprep.subr.mxu0 0.0
        %6723 = vmatpush1.msra.mxu0 %v6706
        %6724 = vmatprep.subr.mxu0 0.0
        %6725 = vmatpush1.msra.mxu0 %v6707
        %6726 = vmatprep.subr.mxu0 0.0
        %6727 = vmatpush1.msra.mxu0 %v6708
        %6728 = vmatprep.subr.mxu0 0.0
        %6729 = vmatpush1.msra.mxu0 %v6709
        %6730 = vmatprep.subr.mxu0 0.0
        %6731 = vmatpush1.msra.mxu0 %v6710
        %6732 = vmatprep.subr.mxu0 0.0
        %6733 = vmatpush1.msra.mxu0 %v6711
        %6734 = vmatprep.subr.mxu0 0.0
        %6735 = vmatpush1.msra.mxu0 %v6712
        %6736 = vmatprep.subr.mxu0 0.0
        %6737 = vmatpush1.msra.mxu0 %v6713
        %6738 = vmatprep.subr.mxu0 0.0
        %6739 = vmatpush1.msra.mxu0 %v6714
        %6740 = vmatprep.subr.mxu0 0.0
        %6741 = vmatpush1.msra.mxu0 %v6715
        %6742 = vmatprep.subr.mxu0 0.0
        %6743 = vmatpush1.msra.mxu0 %v6716
        %6744 = vmatprep.subr.mxu0 0.0
        %6745 = vmatpush1.msra.mxu0 %v6717
        %6746 = vmatprep.subr.mxu0 0.0
        %6747 = vmatpush1.msra.mxu0 %v6718
        %6748 = vmatprep.subr.mxu0 0.0
        %6749 = vmatpush1.msra.mxu0 %v6719
        %6750 = vmatprep.subr.mxu0 0.0
        %6751 = vmatpush1.msra.mxu0 %v6720
        %6752 = vmatprep.subr.mxu0 0.0
        %6753 = vmatpush1.msra.mxu0 %v6721
        %6754 = vmatprep.subr.mxu0 0.0
        %6755 = vmatpush1.msra.mxu0 0.0
        %6756 = vmatprep.subr.mxu0 0.0
        %6757 = vmatpush1.msra.mxu0 0.0
        %6758 = vmatprep.subr.mxu0 0.0
        %6759 = vmatpush1.msra.mxu0 0.0
        %6760 = vmatprep.subr.mxu0 0.0
        %6761 = vmatpush1.msra.mxu0 0.0
        %6762 = vmatprep.subr.mxu0 0.0
        %6763 = vmatpush1.msra.mxu0 0.0
        %6764 = vmatprep.subr.mxu0 0.0
        %6765 = vmatpush1.msra.mxu0 0.0
        %6766 = vmatprep.subr.mxu0 0.0
        %6767 = vmatpush1.msra.mxu0 0.0
        %6768 = vmatprep.subr.mxu0 0.0
        %6769 = vmatpush1.msra.mxu0 0.0
        %6770 = vmatprep.subr.mxu0 0.0
        %6771 = vmatpush1.msra.mxu0 0.0
        %6772 = vmatprep.subr.mxu0 0.0
        %6773 = vmatpush1.msra.mxu0 0.0
        %6774 = vmatprep.subr.mxu0 0.0
        %6775 = vmatpush1.msra.mxu0 0.0
        %6776 = vmatprep.subr.mxu0 0.0
        %6777 = vmatpush1.msra.mxu0 0.0
        %6778 = vmatprep.subr.mxu0 0.0
        %6779 = vmatpush1.msra.mxu0 0.0
        %6780 = vmatprep.subr.mxu0 0.0
        %6781 = vmatpush1.msra.mxu0 0.0
        %6782 = vmatprep.subr.mxu0 0.0
        %6783 = vmatpush1.msra.mxu0 0.0
        %6784 = vmatprep.subr.mxu0 0.0
        %6785 = vmatpush1.msra.mxu0 0.0
        %6786 = vmatprep.mubr.f32.mxu0 0.0
        %6787 = vmatmul.mubr.f32.gmra.mrb[0].mxu0 %v6673
        %v6788 = vpop.f32.mrb[0].mxu0
        %v6789 = vadd.f32 0.0, %v6788
        %v6790 = vpop.f32.mrb[0].mxu0
        %6791 = vmatprep.mubr.f32.mxu0 0.0
        %6792 = vmatmul.mubr.f32.gmra.mrb[0].mxu0 %v6674
        %v6793 = vpop.f32.mrb[0].mxu0
        %v6794 = vadd.f32 0.0, %v6793
        %v6795 = vpop.f32.mrb[0].mxu0
        %6796 = vmatprep.mubr.f32.mxu0 0.0
        %6797 = vmatmul.mubr.f32.gmra.mrb[0].mxu0 %v6675
        %v6798 = vpop.f32.mrb[0].mxu0
        %v6799 = vadd.f32 0.0, %v6798
        %v6800 = vpop.f32.mrb[0].mxu0
        %6801 = vmatprep.mubr.f32.mxu0 0.0
        %6802 = vmatmul.mubr.f32.gmra.mrb[0].mxu0 %v6676
        %v6803 = vpop.f32.mrb[0].mxu0
        %v6804 = vadd.f32 0.0, %v6803
        %v6805 = vpop.f32.mrb[0].mxu0
        %6806 = vmatprep.mubr.f32.mxu0 0.0
        %6807 = vmatmul.mubr.f32.gmra.mrb[0].mxu0 %v6677
        %v6808 = vpop.f32.mrb[0].mxu0
        %v6809 = vadd.f32 0.0, %v6808
        %v6810 = vpop.f32.mrb[0].mxu0
        %6811 = vmatprep.mubr.f32.mxu0 0.0
        %6812 = vmatmul.mubr.f32.gmra.mrb[0].mxu0 %v6678
        %v6813 = vpop.f32.mrb[0].mxu0
        %v6814 = vadd.f32 0.0, %v6813
        %v6815 = vpop.f32.mrb[0].mxu0
        %6816 = vmatprep.mubr.f32.mxu0 0.0
        %6817 = vmatmul.mubr.f32.gmra.mrb[0].mxu0 %v6679
        %v6818 = vpop.f32.mrb[0].mxu0
        %v6819 = vadd.f32 0.0, %v6818
        %v6820 = vpop.f32.mrb[0].mxu0
        %6821 = vmatprep.mubr.f32.mxu0 0.0
        %6822 = vmatmul.mubr.f32.gmra.mrb[0].mxu0 %v6680
        %v6823 = vpop.f32.mrb[0].mxu0
        %v6824 = vadd.f32 0.0, %v6823
        %v6825 = vpop.f32.mrb[0].mxu0
        %6826 = vmatprep.mubr.f32.mxu0 0.0
        %6827 = vmatmul.mubr.f32.gmra.mrb[0].mxu0 %v6681
        %v6828 = vpop.f32.mrb[0].mxu0
        %v6829 = vadd.f32 0.0, %v6828
        %v6830 = vpop.f32.mrb[0].mxu0
        %6831 = vmatprep.mubr.f32.mxu0 0.0
        %6832 = vmatmul.mubr.f32.gmra.mrb[0].mxu0 %v6682
        %v6833 = vpop.f32.mrb[0].mxu0
        %v6834 = vadd.f32 0.0, %v6833
        %v6835 = vpop.f32.mrb[0].mxu0
        %6836 = vmatprep.mubr.f32.mxu0 0.0
        %6837 = vmatmul.mubr.f32.gmra.mrb[0].mxu0 %v6683
        %v6838 = vpop.f32.mrb[0].mxu0
        %v6839 = vadd.f32 0.0, %v6838
        %v6840 = vpop.f32.mrb[0].mxu0
        %6841 = vmatprep.mubr.f32.mxu0 0.0
        %6842 = vmatmul.mubr.f32.gmra.mrb[0].mxu0 %v6684
        %v6843 = vpop.f32.mrb[0].mxu0
        %v6844 = vadd.f32 0.0, %v6843
        %v6845 = vpop.f32.mrb[0].mxu0
        %6846 = vmatprep.mubr.f32.mxu0 0.0
        %6847 = vmatmul.mubr.f32.gmra.mrb[0].mxu0 %v6685
        %v6848 = vpop.f32.mrb[0].mxu0
        %v6849 = vadd.f32 0.0, %v6848
        %v6850 = vpop.f32.mrb[0].mxu0
        %6851 = vmatprep.mubr.f32.mxu0 0.0
        %6852 = vmatmul.mubr.f32.gmra.mrb[0].mxu0 %v6686
        %v6853 = vpop.f32.mrb[0].mxu0
        %v6854 = vadd.f32 0.0, %v6853
        %v6855 = vpop.f32.mrb[0].mxu0
        %6856 = vmatprep.mubr.f32.mxu0 0.0
        %6857 = vmatmul.mubr.f32.gmra.mrb[0].mxu0 %v6687
        %v6858 = vpop.f32.mrb[0].mxu0
        %v6859 = vadd.f32 0.0, %v6858
        %v6860 = vpop.f32.mrb[0].mxu0
        %6861 = vmatprep.mubr.f32.mxu0 0.0
        %6862 = vmatmul.mubr.f32.gmra.mrb[0].mxu0 %v6688
        %v6863 = vpop.f32.mrb[0].mxu0
        %v6864 = vadd.f32 0.0, %v6863
        %v6865 = vpop.f32.mrb[0].mxu0
        %6866 = vmatprep.mubr.f32.mxu0 0.0
        %6867 = vmatmul.mubr.f32.gmra.mrb[0].mxu0 %v6689
        %v6868 = vpop.f32.mrb[0].mxu0
        %v6869 = vadd.f32 0.0, %v6868
        %v6870 = vpop.f32.mrb[0].mxu0
        %6871 = vmatprep.mubr.f32.mxu0 0.0
        %6872 = vmatmul.mubr.f32.gmra.mrb[0].mxu0 %v6690
        %v6873 = vpop.f32.mrb[0].mxu0
        %v6874 = vadd.f32 0.0, %v6873
        %v6875 = vpop.f32.mrb[0].mxu0
        %6876 = vmatprep.mubr.f32.mxu0 0.0
        %6877 = vmatmul.mubr.f32.gmra.mrb[0].mxu0 %v6691
        %v6878 = vpop.f32.mrb[0].mxu0
        %v6879 = vadd.f32 0.0, %v6878
        %v6880 = vpop.f32.mrb[0].mxu0
        %6881 = vmatprep.mubr.f32.mxu0 0.0
        %6882 = vmatmul.mubr.f32.gmra.mrb[0].mxu0 %v6692
        %v6883 = vpop.f32.mrb[0].mxu0
        %v6884 = vadd.f32 0.0, %v6883
        %v6885 = vpop.f32.mrb[0].mxu0
        %6886 = vmatprep.mubr.f32.mxu0 0.0
        %6887 = vmatmul.mubr.f32.gmra.mrb[0].mxu0 %v6693
        %v6888 = vpop.f32.mrb[0].mxu0
        %v6889 = vadd.f32 0.0, %v6888
        %v6890 = vpop.f32.mrb[0].mxu0
        %6891 = vmatprep.mubr.f32.mxu0 0.0
        %6892 = vmatmul.mubr.f32.gmra.mrb[0].mxu0 %v6694
        %v6893 = vpop.f32.mrb[0].mxu0
        %v6894 = vadd.f32 0.0, %v6893
        %v6895 = vpop.f32.mrb[0].mxu0
        %6896 = vmatprep.mubr.f32.mxu0 0.0
        %6897 = vmatmul.mubr.f32.gmra.mrb[0].mxu0 %v6695
        %v6898 = vpop.f32.mrb[0].mxu0
        %v6899 = vadd.f32 0.0, %v6898
        %v6900 = vpop.f32.mrb[0].mxu0
        %6901 = vmatprep.mubr.f32.mxu0 0.0
        %6902 = vmatmul.mubr.f32.gmra.mrb[0].mxu0 %v6696
        %v6903 = vpop.f32.mrb[0].mxu0
        %v6904 = vadd.f32 0.0, %v6903
        %v6905 = vpop.f32.mrb[0].mxu0
        %6906 = vmatprep.mubr.f32.mxu0 0.0
        %6907 = vmatmul.mubr.f32.gmra.mrb[0].mxu0 %v6697
        %v6908 = vpop.f32.mrb[0].mxu0
        %v6909 = vadd.f32 0.0, %v6908
        %v6910 = vpop.f32.mrb[0].mxu0
        %6911 = vmatprep.mubr.f32.mxu0 0.0
        %6912 = vmatmul.mubr.f32.gmra.mrb[0].mxu0 %v6698
        %v6913 = vpop.f32.mrb[0].mxu0
        %v6914 = vadd.f32 0.0, %v6913
        %v6915 = vpop.f32.mrb[0].mxu0
        %6916 = vmatprep.mubr.f32.mxu0 0.0
        %6917 = vmatmul.mubr.f32.gmra.mrb[0].mxu0 %v6699
        %v6918 = vpop.f32.mrb[0].mxu0
        %v6919 = vadd.f32 0.0, %v6918
        %v6920 = vpop.f32.mrb[0].mxu0
        %6921 = vmatprep.mubr.f32.mxu0 0.0
        %6922 = vmatmul.mubr.f32.gmra.mrb[0].mxu0 %v6700
        %v6923 = vpop.f32.mrb[0].mxu0
        %v6924 = vadd.f32 0.0, %v6923
        %v6925 = vpop.f32.mrb[0].mxu0
        %6926 = vmatprep.mubr.f32.mxu0 0.0
        %6927 = vmatmul.mubr.f32.gmra.mrb[0].mxu0 %v6701
        %v6928 = vpop.f32.mrb[0].mxu0
        %v6929 = vadd.f32 0.0, %v6928
        %v6930 = vpop.f32.mrb[0].mxu0
        %6931 = vmatprep.mubr.f32.mxu0 0.0
        %6932 = vmatmul.mubr.f32.gmra.mrb[0].mxu0 %v6702
        %v6933 = vpop.f32.mrb[0].mxu0
        %v6934 = vadd.f32 0.0, %v6933
        %v6935 = vpop.f32.mrb[0].mxu0
        %6936 = vmatprep.mubr.f32.mxu0 0.0
        %6937 = vmatmul.mubr.f32.gmra.mrb[0].mxu0 %v6703
        %v6938 = vpop.f32.mrb[0].mxu0
        %v6939 = vadd.f32 0.0, %v6938
        %v6940 = vpop.f32.mrb[0].mxu0
        %6941 = vmatprep.mubr.f32.mxu0 0.0
        %6942 = vmatmul.mubr.f32.gmra.mrb[0].mxu0 %v6704
        %v6943 = vpop.f32.mrb[0].mxu0
        %v6944 = vadd.f32 0.0, %v6943
        %v6945 = vpop.f32.mrb[0].mxu0
        %6946 = vdwg.mxu0
        %v6947 = vld [vmem:[#allocation3] sm:$0xff]
        %v6948 = vld [vmem:[#allocation3 + $0x8] sm:$0xff]
        %v6949 = vld [vmem:[#allocation3 + $0x10] sm:$0xff]
        %v6950 = vld [vmem:[#allocation3 + $0x18] sm:$0xff]
        %v6951 = vld [vmem:[#allocation3 + $0x20] sm:$0xff]
        %v6952 = vld [vmem:[#allocation3 + $0x28] sm:$0xff]
        %v6953 = vld [vmem:[#allocation3 + $0x30] sm:$0xff]
        %v6954 = vld [vmem:[#allocation3 + $0x38] sm:$0xff]
        %v6955 = vld [vmem:[#allocation3 + $0x40] sm:$0xff]
        %v6956 = vld [vmem:[#allocation3 + $0x48] sm:$0xff]
        %v6957 = vld [vmem:[#allocation3 + $0x50] sm:$0xff]
        %v6958 = vld [vmem:[#allocation3 + $0x58] sm:$0xff]
        %v6959 = vld [vmem:[#allocation3 + $0x60] sm:$0xff]
        %v6960 = vld [vmem:[#allocation3 + $0x68] sm:$0xff]
        %v6961 = vld [vmem:[#allocation3 + $0x70] sm:$0xff]
        %v6962 = vld [vmem:[#allocation3 + $0x78] sm:$0xff]
        %v6963 = vld [vmem:[#allocation3 + $0x80] sm:$0xff]
        %v6964 = vld [vmem:[#allocation3 + $0x88] sm:$0xff]
        %v6965 = vld [vmem:[#allocation3 + $0x90] sm:$0xff]
        %v6966 = vld [vmem:[#allocation3 + $0x98] sm:$0xff]
        %v6967 = vld [vmem:[#allocation3 + $0xa0] sm:$0xff]
        %v6968 = vld [vmem:[#allocation3 + $0xa8] sm:$0xff]
        %v6969 = vld [vmem:[#allocation3 + $0xb0] sm:$0xff]
        %v6970 = vld [vmem:[#allocation3 + $0xb8] sm:$0xff]
        %v6971 = vld [vmem:[#allocation3 + $0xc0] sm:$0xff]
        %v6972 = vld [vmem:[#allocation3 + $0xc8] sm:$0xff]
        %v6973 = vld [vmem:[#allocation3 + $0xd0] sm:$0xff]
        %v6974 = vld [vmem:[#allocation3 + $0xd8] sm:$0xff]
        %v6975 = vld [vmem:[#allocation3 + $0xe0] sm:$0xff]
        %v6976 = vld [vmem:[#allocation3 + $0xe8] sm:$0xff]
        %v6977 = vld [vmem:[#allocation3 + $0xf0] sm:$0xff]
        %v6978 = vld [vmem:[#allocation3 + $0xf8] sm:$0xff]
        %v6979 = vadd.f32 %v6947, %v6789
        %v6980 = vadd.f32 %v6948, %v6794
        %v6981 = vadd.f32 %v6949, %v6799
        %v6982 = vadd.f32 %v6950, %v6804
        %v6983 = vadd.f32 %v6951, %v6809
        %v6984 = vadd.f32 %v6952, %v6814
        %v6985 = vadd.f32 %v6953, %v6819
        %v6986 = vadd.f32 %v6954, %v6824
        %v6987 = vadd.f32 %v6955, %v6829
        %v6988 = vadd.f32 %v6956, %v6834
        %v6989 = vadd.f32 %v6957, %v6839
        %v6990 = vadd.f32 %v6958, %v6844
        %v6991 = vadd.f32 %v6959, %v6849
        %v6992 = vadd.f32 %v6960, %v6854
        %v6993 = vadd.f32 %v6961, %v6859
        %v6994 = vadd.f32 %v6962, %v6864
        %v6995 = vadd.f32 %v6963, %v6869
        %v6996 = vadd.f32 %v6964, %v6874
        %v6997 = vadd.f32 %v6965, %v6879
        %v6998 = vadd.f32 %v6966, %v6884
        %v6999 = vadd.f32 %v6967, %v6889
        %v7000 = vadd.f32 %v6968, %v6894
        %v7001 = vadd.f32 %v6969, %v6899
        %v7002 = vadd.f32 %v6970, %v6904
        %v7003 = vadd.f32 %v6971, %v6909
        %v7004 = vadd.f32 %v6972, %v6914
        %v7005 = vadd.f32 %v6973, %v6919
        %v7006 = vadd.f32 %v6974, %v6924
        %v7007 = vadd.f32 %v6975, %v6929
        %v7008 = vadd.f32 %v6976, %v6934
        %v7009 = vadd.f32 %v6977, %v6939
        %v7010 = vadd.f32 %v6978, %v6944
        %7011 = vst [vmem:[#allocation3] sm:$0xff] %v6979
        %7012 = vst [vmem:[#allocation3 + $0x8] sm:$0xff] %v6980
        %7013 = vst [vmem:[#allocation3 + $0x10] sm:$0xff] %v6981
        %7014 = vst [vmem:[#allocation3 + $0x18] sm:$0xff] %v6982
        %7015 = vst [vmem:[#allocation3 + $0x20] sm:$0xff] %v6983
        %7016 = vst [vmem:[#allocation3 + $0x28] sm:$0xff] %v6984
        %7017 = vst [vmem:[#allocation3 + $0x30] sm:$0xff] %v6985
        %7018 = vst [vmem:[#allocation3 + $0x38] sm:$0xff] %v6986
        %7019 = vst [vmem:[#allocation3 + $0x40] sm:$0xff] %v6987
        %7020 = vst [vmem:[#allocation3 + $0x48] sm:$0xff] %v6988
        %7021 = vst [vmem:[#allocation3 + $0x50] sm:$0xff] %v6989
        %7022 = vst [vmem:[#allocation3 + $0x58] sm:$0xff] %v6990
        %7023 = vst [vmem:[#allocation3 + $0x60] sm:$0xff] %v6991
        %7024 = vst [vmem:[#allocation3 + $0x68] sm:$0xff] %v6992
        %7025 = vst [vmem:[#allocation3 + $0x70] sm:$0xff] %v6993
        %7026 = vst [vmem:[#allocation3 + $0x78] sm:$0xff] %v6994
        %7027 = vst [vmem:[#allocation3 + $0x80] sm:$0xff] %v6995
        %7028 = vst [vmem:[#allocation3 + $0x88] sm:$0xff] %v6996
        %7029 = vst [vmem:[#allocation3 + $0x90] sm:$0xff] %v6997
        %7030 = vst [vmem:[#allocation3 + $0x98] sm:$0xff] %v6998
        %7031 = vst [vmem:[#allocation3 + $0xa0] sm:$0xff] %v6999
        %7032 = vst [vmem:[#allocation3 + $0xa8] sm:$0xff] %v7000
        %7033 = vst [vmem:[#allocation3 + $0xb0] sm:$0xff] %v7001
        %7034 = vst [vmem:[#allocation3 + $0xb8] sm:$0xff] %v7002
        %7035 = vst [vmem:[#allocation3 + $0xc0] sm:$0xff] %v7003
        %7036 = vst [vmem:[#allocation3 + $0xc8] sm:$0xff] %v7004
        %7037 = vst [vmem:[#allocation3 + $0xd0] sm:$0xff] %v7005
        %7038 = vst [vmem:[#allocation3 + $0xd8] sm:$0xff] %v7006
        %7039 = vst [vmem:[#allocation3 + $0xe0] sm:$0xff] %v7007
        %7040 = vst [vmem:[#allocation3 + $0xe8] sm:$0xff] %v7008
        %7041 = vst [vmem:[#allocation3 + $0xf0] sm:$0xff] %v7009
        %7042 = vst [vmem:[#allocation3 + $0xf8] sm:$0xff] %v7010
        %v7043 = vld [vmem:[#allocation3] sm:$0xff]
        %v7044 = vld [vmem:[#allocation3 + $0x8] sm:$0xff]
        %v7045 = vld [vmem:[#allocation3 + $0x10] sm:$0xff]
        %v7046 = vld [vmem:[#allocation3 + $0x18] sm:$0xff]
        %v7047 = vld [vmem:[#allocation3 + $0x20] sm:$0xff]
        %v7048 = vld [vmem:[#allocation3 + $0x28] sm:$0xff]
        %v7049 = vld [vmem:[#allocation3 + $0x30] sm:$0xff]
        %v7050 = vld [vmem:[#allocation3 + $0x38] sm:$0xff]
        %v7051 = vld [vmem:[#allocation3 + $0x40] sm:$0xff]
        %v7052 = vld [vmem:[#allocation3 + $0x48] sm:$0xff]
        %v7053 = vld [vmem:[#allocation3 + $0x50] sm:$0xff]
        %v7054 = vld [vmem:[#allocation3 + $0x58] sm:$0xff]
        %v7055 = vld [vmem:[#allocation3 + $0x60] sm:$0xff]
        %v7056 = vld [vmem:[#allocation3 + $0x68] sm:$0xff]
        %v7057 = vld [vmem:[#allocation3 + $0x70] sm:$0xff]
        %v7058 = vld [vmem:[#allocation3 + $0x78] sm:$0xff]
        %v7059 = vld [vmem:[#allocation3 + $0x80] sm:$0xff]
        %v7060 = vld [vmem:[#allocation3 + $0x88] sm:$0xff]
        %v7061 = vld [vmem:[#allocation3 + $0x90] sm:$0xff]
        %v7062 = vld [vmem:[#allocation3 + $0x98] sm:$0xff]
        %v7063 = vld [vmem:[#allocation3 + $0xa0] sm:$0xff]
        %v7064 = vld [vmem:[#allocation3 + $0xa8] sm:$0xff]
        %v7065 = vld [vmem:[#allocation3 + $0xb0] sm:$0xff]
        %v7066 = vld [vmem:[#allocation3 + $0xb8] sm:$0xff]
        %v7067 = vld [vmem:[#allocation3 + $0xc0] sm:$0xff]
        %v7068 = vld [vmem:[#allocation3 + $0xc8] sm:$0xff]
        %v7069 = vld [vmem:[#allocation3 + $0xd0] sm:$0xff]
        %v7070 = vld [vmem:[#allocation3 + $0xd8] sm:$0xff]
        %v7071 = vld [vmem:[#allocation3 + $0xe0] sm:$0xff]
        %v7072 = vld [vmem:[#allocation3 + $0xe8] sm:$0xff]
        %v7073 = vld [vmem:[#allocation3 + $0xf0] sm:$0xff]
        %v7074 = vld [vmem:[#allocation3 + $0xf8] sm:$0xff]
        %v7075 = vld [vmem:[%s5] sm:$0x1]
        %v7077 = vlaneseq
        %v7078 = vshrl.u32 %v7077, 7
        %v7079 = vsub.s32 0, %v7078
        %v7080 = vrot.slane %v7075, %v7079
        %v7082 = vmul.f32 %v7043, %v7080
        %v7083 = vmul.f32 %v7044, %v7080
        %v7084 = vmul.f32 %v7045, %v7080
        %v7085 = vmul.f32 %v7046, %v7080
        %v7086 = vmul.f32 %v7047, %v7080
        %v7087 = vmul.f32 %v7048, %v7080
        %v7088 = vmul.f32 %v7049, %v7080
        %v7089 = vmul.f32 %v7050, %v7080
        %v7090 = vmul.f32 %v7051, %v7080
        %v7091 = vmul.f32 %v7052, %v7080
        %v7092 = vmul.f32 %v7053, %v7080
        %v7093 = vmul.f32 %v7054, %v7080
        %v7094 = vmul.f32 %v7055, %v7080
        %v7095 = vmul.f32 %v7056, %v7080
        %v7096 = vmul.f32 %v7057, %v7080
        %v7097 = vmul.f32 %v7058, %v7080
        %v7098 = vmul.f32 %v7059, %v7080
        %v7099 = vmul.f32 %v7060, %v7080
        %v7100 = vmul.f32 %v7061, %v7080
        %v7101 = vmul.f32 %v7062, %v7080
        %v7102 = vmul.f32 %v7063, %v7080
        %v7103 = vmul.f32 %v7064, %v7080
        %v7104 = vmul.f32 %v7065, %v7080
        %v7105 = vmul.f32 %v7066, %v7080
        %v7106 = vmul.f32 %v7067, %v7080
        %v7107 = vmul.f32 %v7068, %v7080
        %v7108 = vmul.f32 %v7069, %v7080
        %v7109 = vmul.f32 %v7070, %v7080
        %v7110 = vmul.f32 %v7071, %v7080
        %v7111 = vmul.f32 %v7072, %v7080
        %v7112 = vmul.f32 %v7073, %v7080
        %v7113 = vmul.f32 %v7074, %v7080
        %v7114 = vld [vmem:[%s6] sm:$0x1]
        %v7116 = vlaneseq
        %v7117 = vshrl.u32 %v7116, 7
        %v7118 = vsub.s32 0, %v7117
        %v7119 = vrot.slane %v7114, %v7118
        %v7121 = vadd.f32 %v7082, %v7119
        %v7122 = vadd.f32 %v7083, %v7119
        %v7123 = vadd.f32 %v7084, %v7119
        %v7124 = vadd.f32 %v7085, %v7119
        %v7125 = vadd.f32 %v7086, %v7119
        %v7126 = vadd.f32 %v7087, %v7119
        %v7127 = vadd.f32 %v7088, %v7119
        %v7128 = vadd.f32 %v7089, %v7119
        %v7129 = vadd.f32 %v7090, %v7119
        %v7130 = vadd.f32 %v7091, %v7119
        %v7131 = vadd.f32 %v7092, %v7119
        %v7132 = vadd.f32 %v7093, %v7119
        %v7133 = vadd.f32 %v7094, %v7119
        %v7134 = vadd.f32 %v7095, %v7119
        %v7135 = vadd.f32 %v7096, %v7119
        %v7136 = vadd.f32 %v7097, %v7119
        %v7137 = vadd.f32 %v7098, %v7119
        %v7138 = vadd.f32 %v7099, %v7119
        %v7139 = vadd.f32 %v7100, %v7119
        %v7140 = vadd.f32 %v7101, %v7119
        %v7141 = vadd.f32 %v7102, %v7119
        %v7142 = vadd.f32 %v7103, %v7119
        %v7143 = vadd.f32 %v7104, %v7119
        %v7144 = vadd.f32 %v7105, %v7119
        %v7145 = vadd.f32 %v7106, %v7119
        %v7146 = vadd.f32 %v7107, %v7119
        %v7147 = vadd.f32 %v7108, %v7119
        %v7148 = vadd.f32 %v7109, %v7119
        %v7149 = vadd.f32 %v7110, %v7119
        %v7150 = vadd.f32 %v7111, %v7119
        %v7151 = vadd.f32 %v7112, %v7119
        %v7152 = vadd.f32 %v7113, %v7119
        %v7153 = vld [vmem:[%s1380 + $0x1] sm:$0xff]
        %v7154 = vld [vmem:[%s1380 + $0x9] sm:$0xff]
        %v7155 = vld [vmem:[%s1380 + $0x19] sm:$0xff]
        %v7156 = vld [vmem:[%s1380 + $0x21] sm:$0xff]
        %v7157 = vld [vmem:[%s1380 + $0x31] sm:$0xff]
        %v7158 = vld [vmem:[%s1380 + $0x39] sm:$0xff]
        %v7159 = vld [vmem:[%s1380 + $0x49] sm:$0xff]
        %v7160 = vld [vmem:[%s1380 + $0x51] sm:$0xff]
        %v7161 = vld [vmem:[%s1380 + $0x61] sm:$0xff]
        %v7162 = vld [vmem:[%s1380 + $0x69] sm:$0xff]
        %v7163 = vld [vmem:[%s1380 + $0x79] sm:$0xff]
        %v7164 = vld [vmem:[%s1380 + $0x81] sm:$0xff]
        %v7165 = vld [vmem:[%s1380 + $0x91] sm:$0xff]
        %v7166 = vld [vmem:[%s1380 + $0x99] sm:$0xff]
        %v7167 = vld [vmem:[%s1380 + $0xa9] sm:$0xff]
        %v7168 = vld [vmem:[%s1380 + $0xb1] sm:$0xff]
        %v7169 = vld [vmem:[%s1380 + $0xc1] sm:$0xff]
        %v7170 = vld [vmem:[%s1380 + $0xc9] sm:$0xff]
        %v7171 = vld [vmem:[%s1380 + $0xd9] sm:$0xff]
        %v7172 = vld [vmem:[%s1380 + $0xe1] sm:$0xff]
        %v7173 = vld [vmem:[%s1380 + $0xf1] sm:$0xff]
        %v7174 = vld [vmem:[%s1380 + $0xf9] sm:$0xff]
        %v7175 = vld [vmem:[%s1380 + $0x109] sm:$0xff]
        %v7176 = vld [vmem:[%s1380 + $0x111] sm:$0xff]
        %v7177 = vld [vmem:[%s1380 + $0x121] sm:$0xff]
        %v7178 = vld [vmem:[%s1380 + $0x129] sm:$0xff]
        %v7179 = vld [vmem:[%s1380 + $0x139] sm:$0xff]
        %v7180 = vld [vmem:[%s1380 + $0x141] sm:$0xff]
        %v7181 = vld [vmem:[%s1380 + $0x151] sm:$0xff]
        %v7182 = vld [vmem:[%s1380 + $0x159] sm:$0xff]
        %v7183 = vld [vmem:[%s1380 + $0x169] sm:$0xff]
        %v7184 = vld [vmem:[%s1380 + $0x171] sm:$0xff]
        %v7185 = vadd.f32 %v7121, %v7153
        %v7186 = vadd.f32 %v7122, %v7154
        %v7187 = vadd.f32 %v7123, %v7155
        %v7188 = vadd.f32 %v7124, %v7156
        %v7189 = vadd.f32 %v7125, %v7157
        %v7190 = vadd.f32 %v7126, %v7158
        %v7191 = vadd.f32 %v7127, %v7159
        %v7192 = vadd.f32 %v7128, %v7160
        %v7193 = vadd.f32 %v7129, %v7161
        %v7194 = vadd.f32 %v7130, %v7162
        %v7195 = vadd.f32 %v7131, %v7163
        %v7196 = vadd.f32 %v7132, %v7164
        %v7197 = vadd.f32 %v7133, %v7165
        %v7198 = vadd.f32 %v7134, %v7166
        %v7199 = vadd.f32 %v7135, %v7167
        %v7200 = vadd.f32 %v7136, %v7168
        %v7201 = vadd.f32 %v7137, %v7169
        %v7202 = vadd.f32 %v7138, %v7170
        %v7203 = vadd.f32 %v7139, %v7171
        %v7204 = vadd.f32 %v7140, %v7172
        %v7205 = vadd.f32 %v7141, %v7173
        %v7206 = vadd.f32 %v7142, %v7174
        %v7207 = vadd.f32 %v7143, %v7175
        %v7208 = vadd.f32 %v7144, %v7176
        %v7209 = vadd.f32 %v7145, %v7177
        %v7210 = vadd.f32 %v7146, %v7178
        %v7211 = vadd.f32 %v7147, %v7179
        %v7212 = vadd.f32 %v7148, %v7180
        %v7213 = vadd.f32 %v7149, %v7181
        %v7214 = vadd.f32 %v7150, %v7182
        %v7215 = vadd.f32 %v7151, %v7183
        %v7216 = vadd.f32 %v7152, %v7184
        %v7217 = vmax.f32 %v7185, 0.0
        %v7218 = vmax.f32 %v7186, 0.0
        %v7219 = vmax.f32 %v7187, 0.0
        %v7220 = vmax.f32 %v7188, 0.0
        %v7221 = vmax.f32 %v7189, 0.0
        %v7222 = vmax.f32 %v7190, 0.0
        %v7223 = vmax.f32 %v7191, 0.0
        %v7224 = vmax.f32 %v7192, 0.0
        %v7225 = vmax.f32 %v7193, 0.0
        %v7226 = vmax.f32 %v7194, 0.0
        %v7227 = vmax.f32 %v7195, 0.0
        %v7228 = vmax.f32 %v7196, 0.0
        %v7229 = vmax.f32 %v7197, 0.0
        %v7230 = vmax.f32 %v7198, 0.0
        %v7231 = vmax.f32 %v7199, 0.0
        %v7232 = vmax.f32 %v7200, 0.0
        %v7233 = vmax.f32 %v7201, 0.0
        %v7234 = vmax.f32 %v7202, 0.0
        %v7235 = vmax.f32 %v7203, 0.0
        %v7236 = vmax.f32 %v7204, 0.0
        %v7237 = vmax.f32 %v7205, 0.0
        %v7238 = vmax.f32 %v7206, 0.0
        %v7239 = vmax.f32 %v7207, 0.0
        %v7240 = vmax.f32 %v7208, 0.0
        %v7241 = vmax.f32 %v7209, 0.0
        %v7242 = vmax.f32 %v7210, 0.0
        %v7243 = vmax.f32 %v7211, 0.0
        %v7244 = vmax.f32 %v7212, 0.0
        %v7245 = vmax.f32 %v7213, 0.0
        %v7246 = vmax.f32 %v7214, 0.0
        %v7247 = vmax.f32 %v7215, 0.0
        %v7248 = vmax.f32 %v7216, 0.0
        %7249 = vst [vmem:[%s286] sm:$0xff] %v7217
        %7250 = vst [vmem:[%s286 + $0x8] sm:$0xff] %v7218
        %7251 = vst [vmem:[%s286 + $0x10] sm:$0xff] %v7219
        %7252 = vst [vmem:[%s286 + $0x18] sm:$0xff] %v7220
        %7253 = vst [vmem:[%s286 + $0x20] sm:$0xff] %v7221
        %7254 = vst [vmem:[%s286 + $0x28] sm:$0xff] %v7222
        %7255 = vst [vmem:[%s286 + $0x30] sm:$0xff] %v7223
        %7256 = vst [vmem:[%s286 + $0x38] sm:$0xff] %v7224
        %7257 = vst [vmem:[%s286 + $0x40] sm:$0xff] %v7225
        %7258 = vst [vmem:[%s286 + $0x48] sm:$0xff] %v7226
        %7259 = vst [vmem:[%s286 + $0x50] sm:$0xff] %v7227
        %7260 = vst [vmem:[%s286 + $0x58] sm:$0xff] %v7228
        %7261 = vst [vmem:[%s286 + $0x60] sm:$0xff] %v7229
        %7262 = vst [vmem:[%s286 + $0x68] sm:$0xff] %v7230
        %7263 = vst [vmem:[%s286 + $0x70] sm:$0xff] %v7231
        %7264 = vst [vmem:[%s286 + $0x78] sm:$0xff] %v7232
        %7265 = vst [vmem:[%s286 + $0x80] sm:$0xff] %v7233
        %7266 = vst [vmem:[%s286 + $0x88] sm:$0xff] %v7234
        %7267 = vst [vmem:[%s286 + $0x90] sm:$0xff] %v7235
        %7268 = vst [vmem:[%s286 + $0x98] sm:$0xff] %v7236
        %7269 = vst [vmem:[%s286 + $0xa0] sm:$0xff] %v7237
        %7270 = vst [vmem:[%s286 + $0xa8] sm:$0xff] %v7238
        %7271 = vst [vmem:[%s286 + $0xb0] sm:$0xff] %v7239
        %7272 = vst [vmem:[%s286 + $0xb8] sm:$0xff] %v7240
        %7273 = vst [vmem:[%s286 + $0xc0] sm:$0xff] %v7241
        %7274 = vst [vmem:[%s286 + $0xc8] sm:$0xff] %v7242
        %7275 = vst [vmem:[%s286 + $0xd0] sm:$0xff] %v7243
        %7276 = vst [vmem:[%s286 + $0xd8] sm:$0xff] %v7244
        %7277 = vst [vmem:[%s286 + $0xe0] sm:$0xff] %v7245
        %7278 = vst [vmem:[%s286 + $0xe8] sm:$0xff] %v7246
        %7279 = vst [vmem:[%s286 + $0xf0] sm:$0xff] %v7247
        %7280 = vst [vmem:[%s286 + $0xf8] sm:$0xff] %v7248
        %s7281 = sand.u32 %s182, 1
        %s7282 = scalar_lea.sflag [#allocation6], %s7281
        %s7283 = sand.u32 %s182, 1
        %s7284 = smul.addr %s7283, 256
        %s7285 = scalar_lea.vmem [#allocation7], %s7284
        // Predicated region
        $region53: #{tpu_custom_call.1} parent=47 // pred_check
          %p7286 = pneg %p192
        $region54: #{tpu_custom_call.1} parent=47 // pred_check_branch
          %7288 = sbr.rel (%p7286) target = $region56
        $region55: #{tpu_custom_call.1} parent=47 // pred_region
          %s7290 = ssub.s32 4096, 4096
          %7291 = vsyncadd %s7282, %s7290
          %s7292 = smul.addr %s22, 32
          %s7293 = smul.addr %s7292, 128
          %s7294 = scalar_lea.hbm %s7, %s7293
          %s7295 = sshll.u32 %s7285, 4
          %s7296 = int_to_ptr.vmem [resolvable:$true] %s7295
          %7301 = dma.vmem_to_hbm [thread:$0]  %s7296, 4096, %s7294, %s7282, 128, 128, 8
        $region56: #{tpu_custom_call.1} parent=47 // pred_fallthru
          _
      $region48: #{tpu_custom_call.1} parent=5 // pred_fallthru
        _
      %p7302 = scmp.le.s32.totalorder 2, %s17
      // Predicated region
      $region57: #{tpu_custom_call.1} parent=5 // pred_check
        %p7303 = pneg %p7302
      $region58: #{tpu_custom_call.1} parent=5 // pred_check_branch
        %7305 = sbr.rel (%p7303) target = $region60
      $region59: #{tpu_custom_call.1} parent=5 // pred_region
        %s7306 = ssub.s32 %s17, 2
        // Predicated region
        $region61: #{tpu_custom_call.1} parent=59 // pred_check
          %p7307 = pneg %p198
        $region62: #{tpu_custom_call.1} parent=59 // pred_check_branch
          %7309 = sbr.rel (%p7307) target = $region64
        $region63: #{tpu_custom_call.1} parent=59 // pred_region
          %s7310 = sand.u32 %s183, 1
          %s7311 = scalar_lea.sflag [#allocation6], %s7310
          %s7312 = sand.u32 %s183, 1
          %s7313 = smul.addr %s7312, 256
          %s7314 = scalar_lea.vmem [#allocation7], %s7313
          %7315 = dma.done %s7311, 4096
        $region64: #{tpu_custom_call.1} parent=59 // pred_fallthru
          _
      $region60: #{tpu_custom_call.1} parent=5 // pred_fallthru
        _
    $region6: #{tpu_custom_call.1} parent=1 // loop_footer
      %s21 = sadd.s32 1, %s17
    $region7: #{tpu_custom_call.1} parent=1 // loop_footer_branch
      %16 = sbr.rel target = $region3
    $region8: #{tpu_custom_call.1} parent=1 // loop_exit
      _
    %7316 = vsyncpa [#allocation5], 1
    %s7317 = scalar_lea.sflag [#allocation5], 1
    %7318 = vsyncpa %s7317, 1
    %7319 = vsyncpa [#allocation6], 1
    %s7320 = scalar_lea.sflag [#allocation6], 1
    %7321 = vsyncpa %s7320, 1

</llo_original>
